<compile_context>
chip_gen: v7x
topology: tpu7x:2x2x1
jax: 0.10.0
libtpu: 0.0.40
codegen_flags: <defaults>
</compile_context>

<pallas_src>
import functools
import math

import jax
import jax.numpy as jnp
from jax.experimental import pallas as pl
from jax.experimental.pallas import tpu as pltpu


# ------------------------------ fused kernel -------------------------------

def _decoder_kernel(x_ref, mem_ref, smask_ref, tmask_ref,
                    wqkv_ref, bqkv_ref, wo1_ref, bo1_ref,
                    wq2_ref, bq2_ref, wkv2_ref, bkv2_ref, wo2_ref, bo2_ref,
                    lng_ref, lnb_ref,
                    wff1_ref, bff1_ref, wff2_ref, bff2_ref,
                    fng_ref, fnb_ref,
                    o_ref, *, num_layers, num_heads):
    # Per grid step (one batch element):
    #   x:(T,D) memory:(S,D) smask:(1,S) tmask:(T,T)
    #   per-layer stacked weights have a leading layer axis of size num_layers.
    T, D = x_ref.shape
    H = num_heads
    dk = D // H
    inv_sqrt_dk = 1.0 / math.sqrt(dk)

    x = x_ref[...]
    mem = mem_ref[...]
    # Hoist the mask==0 compares out of the per-layer / per-head loops
    # (exact masked_fill(mask == 0, -1e9) semantics preserved).
    s_is_masked = smask_ref[...] == 0.0     # (1, S) — broadcasts over rows
    t_is_masked = tmask_ref[...] == 0.0     # (T, T)

    def layer_norm(v, g, b):
        # Matches torch LayerNorm in the module: unbiased std, eps added to std.
        mean = jnp.mean(v, axis=-1, keepdims=True)
        c = v - mean
        var = jnp.sum(c * c, axis=-1, keepdims=True) * (1.0 / (D - 1))
        std = jnp.sqrt(var)
        return g * c / (std + 1e-6) + b

    def masked_softmax(s, is_masked):
        # masked_fill(mask == 0, -1e9) then softmax over last dim.
        s = jnp.where(is_masked, jnp.float32(-1e9), s)
        s = s - jnp.max(s, axis=-1, keepdims=True)
        p = jnp.exp(s)
        denom = jnp.sum(p, axis=-1, keepdims=True)
        return p * pl.reciprocal(denom, approx=True)

    def mha(q, k, v, is_masked, wo, bo):
        # q:(T,D) k,v:(Sk,D) already projected.  Heads = static lane slices.
        # 1/sqrt(dk) folded into q once; output projection folded per head:
        #   out = sum_h (softmax(q_h k_h^T) @ v_h) @ Wo[h]  + bo
        q = q * inv_sqrt_dk
        out = jnp.zeros((T, D), jnp.float32)
        for h in range(H):
            sl = slice(h * dk, (h + 1) * dk)
            qh, kh, vh = q[:, sl], k[:, sl], v[:, sl]
            s = jax.lax.dot_general(
                qh, kh, (((1,), (1,)), ((), ())),
                preferred_element_type=jnp.float32)                   # (T, Sk)
            p = masked_softmax(s, is_masked)
            oh = jnp.dot(p, vh, preferred_element_type=jnp.float32)   # (T, dk)
            out = out + jnp.dot(oh, wo[sl, :],
                                preferred_element_type=jnp.float32)
        return out + bo

    for l in range(num_layers):
        lng = lng_ref[l]            # (3, D): LN1/LN2/LN3 gains
        lnb = lnb_ref[l]            # (3, D): LN1/LN2/LN3 biases

        # -- sublayer 1: masked self-attention (pre-norm residual) --
        xn = layer_norm(x, lng[0:1, :], lnb[0:1, :])
        qkv = jnp.dot(xn, wqkv_ref[l],
                      preferred_element_type=jnp.float32) + bqkv_ref[l]  # (T, 3D)
        q, k, v = qkv[:, :D], qkv[:, D:2 * D], qkv[:, 2 * D:]
        x = x + mha(q, k, v, t_is_masked, wo1_ref[l], bo1_ref[l])

        # -- sublayer 2: cross-attention over encoder memory --
        xn = layer_norm(x, lng[1:2, :], lnb[1:2, :])
        q = jnp.dot(xn, wq2_ref[l],
                    preferred_element_type=jnp.float32) + bq2_ref[l]      # (T, D)
        kv = jnp.dot(mem, wkv2_ref[l],
                     preferred_element_type=jnp.float32) + bkv2_ref[l]    # (S, 2D)
        k, v = kv[:, :D], kv[:, D:]
        x = x + mha(q, k, v, s_is_masked, wo2_ref[l], bo2_ref[l])

        # -- sublayer 3: position-wise FFN (ReLU) --
        xn = layer_norm(x, lng[2:3, :], lnb[2:3, :])
        h1 = jnp.maximum(
            jnp.dot(xn, wff1_ref[l],
                    preferred_element_type=jnp.float32) + bff1_ref[l], 0.0)
        x = x + jnp.dot(h1, wff2_ref[l],
                        preferred_element_type=jnp.float32) + bff2_ref[l]

    # final LayerNorm (Decoder.norm)
    o_ref[...] = layer_norm(x, fng_ref[...], fnb_ref[...])


# ------------------------------ forward wrapper -----------------------------

def decoder_forward(p, x, memory, src_mask, tgt_mask, num_heads):
    B, T, D = x.shape
    S = memory.shape[1]
    N = p["w_qkv"].shape[0]

    def bspec_batch(tail):
        n = len(tail)
        return pl.BlockSpec((None,) + tail, lambda b, _n=n: (b,) + (0,) * _n)

    def bspec_full(arr):
        nd = arr.ndim
        return pl.BlockSpec(arr.shape, lambda b, _nd=nd: (0,) * _nd)

    kernel = functools.partial(_decoder_kernel,
                               num_layers=N, num_heads=num_heads)

    return pl.pallas_call(
        kernel,
        out_shape=jax.ShapeDtypeStruct((B, T, D), jnp.float32),
        grid=(B,),
        in_specs=[
            bspec_batch((T, D)),          # x
            bspec_batch((S, D)),          # memory
            bspec_batch((1, S)),          # src_mask
            bspec_batch((T, T)),          # tgt_mask
            bspec_full(p["w_qkv"]), bspec_full(p["b_qkv"]),
            bspec_full(p["w_o1"]),  bspec_full(p["b_o1"]),
            bspec_full(p["w_q2"]),  bspec_full(p["b_q2"]),
            bspec_full(p["w_kv2"]), bspec_full(p["b_kv2"]),
            bspec_full(p["w_o2"]),  bspec_full(p["b_o2"]),
            bspec_full(p["ln_g"]),  bspec_full(p["ln_b"]),
            bspec_full(p["w_ff1"]), bspec_full(p["b_ff1"]),
            bspec_full(p["w_ff2"]), bspec_full(p["b_ff2"]),
            bspec_full(p["fn_g"]),  bspec_full(p["fn_b"]),
        ],
        out_specs=pl.BlockSpec((None, T, D), lambda b: (b, 0, 0)),
        compiler_params=pltpu.CompilerParams(
            dimension_semantics=("parallel",)),   # v7x: 2 TCs split the batch
    )(x, memory, src_mask, tgt_mask,
      p["w_qkv"], p["b_qkv"], p["w_o1"], p["b_o1"],
      p["w_q2"], p["b_q2"], p["w_kv2"], p["b_kv2"], p["w_o2"], p["b_o2"],
      p["ln_g"], p["ln_b"],
      p["w_ff1"], p["b_ff1"], p["w_ff2"], p["b_ff2"],
      p["fn_g"], p["fn_b"])


class DecoderPallas:
    """Mirrors Decoder.forward(x, memory, src_mask, tgt_mask, obj_indicator)."""

    def __init__(self, params, num_heads):
        self.p = params
        self.H = num_heads

    def __call__(self, x, memory, src_mask, tgt_mask, obj_indicator=None):
        if obj_indicator is not None:
            # torch.cat((obj_indicator, x), dim=1)
            x = jnp.concatenate((obj_indicator, x), axis=1)
        x = x.astype(jnp.float32)
        memory = memory.astype(jnp.float32)
        B, T, _ = x.shape
        S = memory.shape[1]
        # Masks: compact shapes; a missing mask means "attend everywhere".
        if src_mask is None:
            src_mask = jnp.ones((B, 1, S), jnp.float32)
        if tgt_mask is None:
            tgt_mask = jnp.ones((B, T, T), jnp.float32)
        src_mask = jnp.broadcast_to(
            src_mask.astype(jnp.float32).reshape(-1, 1, S), (B, 1, S))
        tgt_mask = jnp.broadcast_to(
            tgt_mask.astype(jnp.float32).reshape(-1, T, T), (B, T, T))
        return decoder_forward(self.p, x, memory, src_mask, tgt_mask, self.H)


# ------------------------------ parameter init ------------------------------

def init_params(key, num_layers, d_model, d_ff):
    N, D, Dff = num_layers, d_model, d_ff
    keys = iter(jax.random.split(key, 16))

    def dense(shape):
        return jax.random.normal(next(keys), shape, jnp.float32) * 0.05

    return dict(
        # self-attention: packed QKV projection + output projection
        w_qkv=dense((N, D, 3 * D)), b_qkv=jnp.zeros((N, 1, 3 * D), jnp.float32),
        w_o1=dense((N, D, D)),      b_o1=jnp.zeros((N, 1, D), jnp.float32),
        # cross-attention: Q from x, packed KV from memory, output projection
        w_q2=dense((N, D, D)),      b_q2=jnp.zeros((N, 1, D), jnp.float32),
        w_kv2=dense((N, D, 2 * D)), b_kv2=jnp.zeros((N, 1, 2 * D), jnp.float32),
        w_o2=dense((N, D, D)),      b_o2=jnp.zeros((N, 1, D), jnp.float32),
        # per-layer LayerNorms (rows: pre-self-attn, pre-cross-attn, pre-FFN)
        ln_g=jnp.ones((N, 3, D), jnp.float32),
        ln_b=jnp.zeros((N, 3, D), jnp.float32),
        # FFN
        w_ff1=dense((N, D, Dff)),   b_ff1=jnp.zeros((N, 1, Dff), jnp.float32),
        w_ff2=dense((N, Dff, D)),   b_ff2=jnp.zeros((N, 1, D), jnp.float32),
        # final LayerNorm (Decoder.norm)
        fn_g=jnp.ones((1, D), jnp.float32),
        fn_b=jnp.zeros((1, D), jnp.float32),
    )


# ----------------------------------- main -----------------------------------

if __name__ == "__main__":
    B, T, S = 2, 8, 8            # batch, target length, memory length
    d_model, d_ff, H, N = 32, 64, 4, 2

    key = jax.random.PRNGKey(0)
    kp, kx, km = jax.random.split(key, 3)

    params = init_params(kp, num_layers=N, d_model=d_model, d_ff=d_ff)

    x = jax.random.normal(kx, (B, T, d_model), jnp.float32)      # tgt embeddings
    memory = jax.random.normal(km, (B, S, d_model), jnp.float32) # encoder output
    src_mask = jnp.ones((B, 1, S), jnp.float32)                  # pad mask
    tgt_mask = jnp.tile(jnp.tril(jnp.ones((T, T), jnp.float32))[None],
                        (B, 1, 1))                               # causal mask

    model = DecoderPallas(params, num_heads=H)
    out = model(x, memory, src_mask, tgt_mask)                   # obj_indicator=None
    out = jax.block_until_ready(out)

    assert out.shape == (B, T, d_model), out.shape
    assert bool(jnp.all(jnp.isfinite(out)))
    print("KERNEL_OK")
</pallas_src>

<mosaic_0001>
module attributes {stable_mosaic.version = 11 : i64} {
  func.func @_decoder_kernel(%arg0: i32, %arg1: memref<1x8x32xf32, #tpu.memory_space<vmem>>, %arg2: memref<1x8x32xf32, #tpu.memory_space<vmem>>, %arg3: memref<1x1x8xf32, #tpu.memory_space<vmem>>, %arg4: memref<1x8x8xf32, #tpu.memory_space<vmem>>, %arg5: memref<2x32x96xf32, #tpu.memory_space<vmem>>, %arg6: memref<2x1x96xf32, #tpu.memory_space<vmem>>, %arg7: memref<2x32x32xf32, #tpu.memory_space<vmem>>, %arg8: memref<2x1x32xf32, #tpu.memory_space<vmem>>, %arg9: memref<2x32x32xf32, #tpu.memory_space<vmem>>, %arg10: memref<2x1x32xf32, #tpu.memory_space<vmem>>, %arg11: memref<2x32x64xf32, #tpu.memory_space<vmem>>, %arg12: memref<2x1x64xf32, #tpu.memory_space<vmem>>, %arg13: memref<2x32x32xf32, #tpu.memory_space<vmem>>, %arg14: memref<2x1x32xf32, #tpu.memory_space<vmem>>, %arg15: memref<2x3x32xf32, #tpu.memory_space<vmem>>, %arg16: memref<2x3x32xf32, #tpu.memory_space<vmem>>, %arg17: memref<2x32x64xf32, #tpu.memory_space<vmem>>, %arg18: memref<2x1x64xf32, #tpu.memory_space<vmem>>, %arg19: memref<2x64x32xf32, #tpu.memory_space<vmem>>, %arg20: memref<2x1x32xf32, #tpu.memory_space<vmem>>, %arg21: memref<1x32xf32, #tpu.memory_space<vmem>>, %arg22: memref<1x32xf32, #tpu.memory_space<vmem>>, %arg23: memref<1x8x32xf32, #tpu.memory_space<vmem>>) attributes {dimension_semantics = [#tpu.dimension_semantics<parallel>], iteration_bounds = array<i64: 2>, scalar_prefetch = 0 : i64, scratch_operands = 0 : i64, tpu.core_type = #tpu.core_type<tc>, window_params = [{transform_indices = @transform_0, window_bounds = array<i64: 1, 8, 32>}, {transform_indices = @transform_1, window_bounds = array<i64: 1, 8, 32>}, {transform_indices = @transform_2, window_bounds = array<i64: 1, 1, 8>}, {transform_indices = @transform_3, window_bounds = array<i64: 1, 8, 8>}, {pipeline_mode = #tpu.pipeline_mode<synchronous>, transform_indices = @transform_4, window_bounds = array<i64: 2, 32, 96>}, {pipeline_mode = #tpu.pipeline_mode<synchronous>, transform_indices = @transform_5, window_bounds = array<i64: 2, 1, 96>}, {pipeline_mode = #tpu.pipeline_mode<synchronous>, transform_indices = @transform_6, window_bounds = array<i64: 2, 32, 32>}, {pipeline_mode = #tpu.pipeline_mode<synchronous>, transform_indices = @transform_7, window_bounds = array<i64: 2, 1, 32>}, {pipeline_mode = #tpu.pipeline_mode<synchronous>, transform_indices = @transform_8, window_bounds = array<i64: 2, 32, 32>}, {pipeline_mode = #tpu.pipeline_mode<synchronous>, transform_indices = @transform_9, window_bounds = array<i64: 2, 1, 32>}, {pipeline_mode = #tpu.pipeline_mode<synchronous>, transform_indices = @transform_10, window_bounds = array<i64: 2, 32, 64>}, {pipeline_mode = #tpu.pipeline_mode<synchronous>, transform_indices = @transform_11, window_bounds = array<i64: 2, 1, 64>}, {pipeline_mode = #tpu.pipeline_mode<synchronous>, transform_indices = @transform_12, window_bounds = array<i64: 2, 32, 32>}, {pipeline_mode = #tpu.pipeline_mode<synchronous>, transform_indices = @transform_13, window_bounds = array<i64: 2, 1, 32>}, {pipeline_mode = #tpu.pipeline_mode<synchronous>, transform_indices = @transform_14, window_bounds = array<i64: 2, 3, 32>}, {pipeline_mode = #tpu.pipeline_mode<synchronous>, transform_indices = @transform_15, window_bounds = array<i64: 2, 3, 32>}, {pipeline_mode = #tpu.pipeline_mode<synchronous>, transform_indices = @transform_16, window_bounds = array<i64: 2, 32, 64>}, {pipeline_mode = #tpu.pipeline_mode<synchronous>, transform_indices = @transform_17, window_bounds = array<i64: 2, 1, 64>}, {pipeline_mode = #tpu.pipeline_mode<synchronous>, transform_indices = @transform_18, window_bounds = array<i64: 2, 64, 32>}, {pipeline_mode = #tpu.pipeline_mode<synchronous>, transform_indices = @transform_19, window_bounds = array<i64: 2, 1, 32>}, {pipeline_mode = #tpu.pipeline_mode<synchronous>, transform_indices = @transform_20, window_bounds = array<i64: 1, 32>}, {pipeline_mode = #tpu.pipeline_mode<synchronous>, transform_indices = @transform_21, window_bounds = array<i64: 1, 32>}, {transform_indices = @transform_22, window_bounds = array<i64: 1, 8, 32>}]} {
    %c0 = arith.constant 0 : index
    %c0_0 = arith.constant 0 : index
    %c0_1 = arith.constant 0 : index
    %0 = vector.load %arg1[%c0, %c0_0, %c0_1] : memref<1x8x32xf32, #tpu.memory_space<vmem>>, vector<1x8x32xf32>
    %1 = vector.shape_cast %0 : vector<1x8x32xf32> to vector<8x32xf32>
    %c0_2 = arith.constant 0 : index
    %c0_3 = arith.constant 0 : index
    %c0_4 = arith.constant 0 : index
    %2 = vector.load %arg2[%c0_2, %c0_3, %c0_4] : memref<1x8x32xf32, #tpu.memory_space<vmem>>, vector<1x8x32xf32>
    %3 = vector.shape_cast %2 : vector<1x8x32xf32> to vector<8x32xf32>
    %c0_5 = arith.constant 0 : index
    %c0_6 = arith.constant 0 : index
    %c0_7 = arith.constant 0 : index
    %4 = vector.load %arg3[%c0_5, %c0_6, %c0_7] : memref<1x1x8xf32, #tpu.memory_space<vmem>>, vector<1x1x8xf32>
    %5 = vector.shape_cast %4 : vector<1x1x8xf32> to vector<1x8xf32>
    %cst = arith.constant 0.000000e+00 : f32
    %6 = vector.broadcast %cst : f32 to vector<1x8xf32>
    %7 = arith.cmpf oeq, %5, %6 : vector<1x8xf32>
    %c0_8 = arith.constant 0 : index
    %c0_9 = arith.constant 0 : index
    %c0_10 = arith.constant 0 : index
    %8 = vector.load %arg4[%c0_8, %c0_9, %c0_10] : memref<1x8x8xf32, #tpu.memory_space<vmem>>, vector<1x8x8xf32>
    %9 = vector.shape_cast %8 : vector<1x8x8xf32> to vector<8x8xf32>
    %cst_11 = arith.constant 0.000000e+00 : f32
    %10 = vector.broadcast %cst_11 : f32 to vector<8x8xf32>
    %11 = arith.cmpf oeq, %9, %10 : vector<8x8xf32>
    %c0_12 = arith.constant 0 : index
    %c0_13 = arith.constant 0 : index
    %c0_14 = arith.constant 0 : index
    %12 = vector.load %arg15[%c0_12, %c0_13, %c0_14] : memref<2x3x32xf32, #tpu.memory_space<vmem>>, vector<1x3x32xf32>
    %13 = vector.shape_cast %12 : vector<1x3x32xf32> to vector<3x32xf32>
    %c0_15 = arith.constant 0 : index
    %c0_16 = arith.constant 0 : index
    %c0_17 = arith.constant 0 : index
    %14 = vector.load %arg16[%c0_15, %c0_16, %c0_17] : memref<2x3x32xf32, #tpu.memory_space<vmem>>, vector<1x3x32xf32>
    %15 = vector.shape_cast %14 : vector<1x3x32xf32> to vector<3x32xf32>
    %16 = vector.extract_strided_slice %13 {offsets = [0, 0], sizes = [1, 32], strides = [1, 1]} : vector<3x32xf32> to vector<1x32xf32>
    %17 = vector.extract_strided_slice %15 {offsets = [0, 0], sizes = [1, 32], strides = [1, 1]} : vector<3x32xf32> to vector<1x32xf32>
    %cst_18 = arith.constant dense<0.000000e+00> : vector<8xf32>
    %18 = vector.multi_reduction <add>, %1, %cst_18 [1] : vector<8x32xf32> to vector<8xf32>
    %19 = vector.shape_cast %18 : vector<8xf32> to vector<8x1xf32>
    %cst_19 = arith.constant 3.200000e+01 : f32
    %20 = vector.broadcast %cst_19 : f32 to vector<8x1xf32>
    %21 = arith.divf %19, %20 : vector<8x1xf32>
    %22 = vector.broadcast %21 : vector<8x1xf32> to vector<8x32xf32>
    %23 = arith.subf %1, %22 : vector<8x32xf32>
    %24 = arith.mulf %23, %23 : vector<8x32xf32>
    %cst_20 = arith.constant dense<0.000000e+00> : vector<8xf32>
    %25 = vector.multi_reduction <add>, %24, %cst_20 [1] : vector<8x32xf32> to vector<8xf32>
    %26 = vector.shape_cast %25 : vector<8xf32> to vector<8x1xf32>
    %cst_21 = arith.constant 0.0322580636 : f32
    %27 = vector.broadcast %cst_21 : f32 to vector<8x1xf32>
    %28 = arith.mulf %26, %27 : vector<8x1xf32>
    %29 = math.sqrt %28 : vector<8x1xf32>
    %30 = vector.broadcast %16 : vector<1x32xf32> to vector<8x32xf32>
    %31 = arith.mulf %30, %23 : vector<8x32xf32>
    %cst_22 = arith.constant 9.99999997E-7 : f32
    %32 = vector.broadcast %cst_22 : f32 to vector<8x1xf32>
    %33 = arith.addf %29, %32 : vector<8x1xf32>
    %34 = vector.broadcast %33 : vector<8x1xf32> to vector<8x32xf32>
    %35 = arith.divf %31, %34 : vector<8x32xf32>
    %36 = vector.broadcast %17 : vector<1x32xf32> to vector<8x32xf32>
    %37 = arith.addf %35, %36 : vector<8x32xf32>
    %c0_23 = arith.constant 0 : index
    %c0_24 = arith.constant 0 : index
    %c0_25 = arith.constant 0 : index
    %38 = vector.load %arg5[%c0_23, %c0_24, %c0_25] : memref<2x32x96xf32, #tpu.memory_space<vmem>>, vector<1x32x96xf32>
    %39 = vector.shape_cast %38 : vector<1x32x96xf32> to vector<32x96xf32>
    %cst_26 = arith.constant dense<0.000000e+00> : vector<8x96xf32>
    %40 = tpu.matmul %37, %39, %cst_26 {dimension_numbers = #tpu.dot_dimension_numbers<[1], [0], [0], [1], [0, 0, 1, 1], [], []>} : vector<8x32xf32>, vector<32x96xf32>, vector<8x96xf32> -> vector<8x96xf32>
    %c0_27 = arith.constant 0 : index
    %c0_28 = arith.constant 0 : index
    %c0_29 = arith.constant 0 : index
    %41 = vector.load %arg6[%c0_27, %c0_28, %c0_29] : memref<2x1x96xf32, #tpu.memory_space<vmem>>, vector<1x1x96xf32>
    %42 = vector.shape_cast %41 : vector<1x1x96xf32> to vector<1x96xf32>
    %43 = vector.broadcast %42 : vector<1x96xf32> to vector<8x96xf32>
    %44 = arith.addf %40, %43 : vector<8x96xf32>
    %45 = vector.extract_strided_slice %44 {offsets = [0, 0], sizes = [8, 32], strides = [1, 1]} : vector<8x96xf32> to vector<8x32xf32>
    %46 = vector.extract_strided_slice %44 {offsets = [0, 32], sizes = [8, 32], strides = [1, 1]} : vector<8x96xf32> to vector<8x32xf32>
    %47 = vector.extract_strided_slice %44 {offsets = [0, 64], sizes = [8, 32], strides = [1, 1]} : vector<8x96xf32> to vector<8x32xf32>
    %c0_30 = arith.constant 0 : index
    %c0_31 = arith.constant 0 : index
    %c0_32 = arith.constant 0 : index
    %48 = vector.load %arg7[%c0_30, %c0_31, %c0_32] : memref<2x32x32xf32, #tpu.memory_space<vmem>>, vector<1x32x32xf32>
    %49 = vector.shape_cast %48 : vector<1x32x32xf32> to vector<32x32xf32>
    %c0_33 = arith.constant 0 : index
    %c0_34 = arith.constant 0 : index
    %c0_35 = arith.constant 0 : index
    %50 = vector.load %arg8[%c0_33, %c0_34, %c0_35] : memref<2x1x32xf32, #tpu.memory_space<vmem>>, vector<1x1x32xf32>
    %51 = vector.shape_cast %50 : vector<1x1x32xf32> to vector<1x32xf32>
    %cst_36 = arith.constant 0.353553385 : f32
    %52 = vector.broadcast %cst_36 : f32 to vector<8x32xf32>
    %53 = arith.mulf %45, %52 : vector<8x32xf32>
    %cst_37 = arith.constant 0.000000e+00 : f32
    %54 = vector.broadcast %cst_37 : f32 to vector<8x32xf32>
    %55 = vector.extract_strided_slice %53 {offsets = [0, 0], sizes = [8, 8], strides = [1, 1]} : vector<8x32xf32> to vector<8x8xf32>
    %56 = vector.extract_strided_slice %46 {offsets = [0, 0], sizes = [8, 8], strides = [1, 1]} : vector<8x32xf32> to vector<8x8xf32>
    %57 = vector.extract_strided_slice %47 {offsets = [0, 0], sizes = [8, 8], strides = [1, 1]} : vector<8x32xf32> to vector<8x8xf32>
    %cst_38 = arith.constant dense<0.000000e+00> : vector<8x8xf32>
    %58 = tpu.matmul %55, %56, %cst_38 {dimension_numbers = #tpu.dot_dimension_numbers<[1], [1], [0], [0], [0, 0, 1, 0], [], []>} : vector<8x8xf32>, vector<8x8xf32>, vector<8x8xf32> -> vector<8x8xf32>
    %cst_39 = arith.constant -1.000000e+09 : f32
    %59 = vector.broadcast %cst_39 : f32 to vector<8x8xf32>
    %60 = arith.select %11, %59, %58 : vector<8x8xi1>, vector<8x8xf32>
    %cst_40 = arith.constant dense<0xFF800000> : vector<8xf32>
    %61 = vector.multi_reduction <maximumf>, %60, %cst_40 [1] : vector<8x8xf32> to vector<8xf32>
    %62 = vector.shape_cast %61 : vector<8xf32> to vector<8x1xf32>
    %63 = vector.broadcast %62 : vector<8x1xf32> to vector<8x8xf32>
    %64 = arith.subf %60, %63 : vector<8x8xf32>
    %65 = math.exp %64 : vector<8x8xf32>
    %cst_41 = arith.constant dense<0.000000e+00> : vector<8xf32>
    %66 = vector.multi_reduction <add>, %65, %cst_41 [1] : vector<8x8xf32> to vector<8xf32>
    %67 = vector.shape_cast %66 : vector<8xf32> to vector<8x1xf32>
    %68 = tpu.reciprocal %67 {approx = true} : vector<8x1xf32> -> vector<8x1xf32>
    %69 = vector.broadcast %68 : vector<8x1xf32> to vector<8x8xf32>
    %70 = arith.mulf %65, %69 : vector<8x8xf32>
    %cst_42 = arith.constant dense<0.000000e+00> : vector<8x8xf32>
    %71 = tpu.matmul %70, %57, %cst_42 {dimension_numbers = #tpu.dot_dimension_numbers<[1], [0], [0], [1], [0, 0, 1, 1], [], []>} : vector<8x8xf32>, vector<8x8xf32>, vector<8x8xf32> -> vector<8x8xf32>
    %72 = vector.extract_strided_slice %49 {offsets = [0, 0], sizes = [8, 32], strides = [1, 1]} : vector<32x32xf32> to vector<8x32xf32>
    %cst_43 = arith.constant dense<0.000000e+00> : vector<8x32xf32>
    %73 = tpu.matmul %71, %72, %cst_43 {dimension_numbers = #tpu.dot_dimension_numbers<[1], [0], [0], [1], [0, 0, 1, 1], [], []>} : vector<8x8xf32>, vector<8x32xf32>, vector<8x32xf32> -> vector<8x32xf32>
    %74 = arith.addf %54, %73 : vector<8x32xf32>
    %75 = vector.extract_strided_slice %53 {offsets = [0, 8], sizes = [8, 8], strides = [1, 1]} : vector<8x32xf32> to vector<8x8xf32>
    %76 = vector.extract_strided_slice %46 {offsets = [0, 8], sizes = [8, 8], strides = [1, 1]} : vector<8x32xf32> to vector<8x8xf32>
    %77 = vector.extract_strided_slice %47 {offsets = [0, 8], sizes = [8, 8], strides = [1, 1]} : vector<8x32xf32> to vector<8x8xf32>
    %cst_44 = arith.constant dense<0.000000e+00> : vector<8x8xf32>
    %78 = tpu.matmul %75, %76, %cst_44 {dimension_numbers = #tpu.dot_dimension_numbers<[1], [1], [0], [0], [0, 0, 1, 0], [], []>} : vector<8x8xf32>, vector<8x8xf32>, vector<8x8xf32> -> vector<8x8xf32>
    %cst_45 = arith.constant -1.000000e+09 : f32
    %79 = vector.broadcast %cst_45 : f32 to vector<8x8xf32>
    %80 = arith.select %11, %79, %78 : vector<8x8xi1>, vector<8x8xf32>
    %cst_46 = arith.constant dense<0xFF800000> : vector<8xf32>
    %81 = vector.multi_reduction <maximumf>, %80, %cst_46 [1] : vector<8x8xf32> to vector<8xf32>
    %82 = vector.shape_cast %81 : vector<8xf32> to vector<8x1xf32>
    %83 = vector.broadcast %82 : vector<8x1xf32> to vector<8x8xf32>
    %84 = arith.subf %80, %83 : vector<8x8xf32>
    %85 = math.exp %84 : vector<8x8xf32>
    %cst_47 = arith.constant dense<0.000000e+00> : vector<8xf32>
    %86 = vector.multi_reduction <add>, %85, %cst_47 [1] : vector<8x8xf32> to vector<8xf32>
    %87 = vector.shape_cast %86 : vector<8xf32> to vector<8x1xf32>
    %88 = tpu.reciprocal %87 {approx = true} : vector<8x1xf32> -> vector<8x1xf32>
    %89 = vector.broadcast %88 : vector<8x1xf32> to vector<8x8xf32>
    %90 = arith.mulf %85, %89 : vector<8x8xf32>
    %cst_48 = arith.constant dense<0.000000e+00> : vector<8x8xf32>
    %91 = tpu.matmul %90, %77, %cst_48 {dimension_numbers = #tpu.dot_dimension_numbers<[1], [0], [0], [1], [0, 0, 1, 1], [], []>} : vector<8x8xf32>, vector<8x8xf32>, vector<8x8xf32> -> vector<8x8xf32>
    %92 = vector.extract_strided_slice %49 {offsets = [8, 0], sizes = [8, 32], strides = [1, 1]} : vector<32x32xf32> to vector<8x32xf32>
    %cst_49 = arith.constant dense<0.000000e+00> : vector<8x32xf32>
    %93 = tpu.matmul %91, %92, %cst_49 {dimension_numbers = #tpu.dot_dimension_numbers<[1], [0], [0], [1], [0, 0, 1, 1], [], []>} : vector<8x8xf32>, vector<8x32xf32>, vector<8x32xf32> -> vector<8x32xf32>
    %94 = arith.addf %74, %93 : vector<8x32xf32>
    %95 = vector.extract_strided_slice %53 {offsets = [0, 16], sizes = [8, 8], strides = [1, 1]} : vector<8x32xf32> to vector<8x8xf32>
    %96 = vector.extract_strided_slice %46 {offsets = [0, 16], sizes = [8, 8], strides = [1, 1]} : vector<8x32xf32> to vector<8x8xf32>
    %97 = vector.extract_strided_slice %47 {offsets = [0, 16], sizes = [8, 8], strides = [1, 1]} : vector<8x32xf32> to vector<8x8xf32>
    %cst_50 = arith.constant dense<0.000000e+00> : vector<8x8xf32>
    %98 = tpu.matmul %95, %96, %cst_50 {dimension_numbers = #tpu.dot_dimension_numbers<[1], [1], [0], [0], [0, 0, 1, 0], [], []>} : vector<8x8xf32>, vector<8x8xf32>, vector<8x8xf32> -> vector<8x8xf32>
    %cst_51 = arith.constant -1.000000e+09 : f32
    %99 = vector.broadcast %cst_51 : f32 to vector<8x8xf32>
    %100 = arith.select %11, %99, %98 : vector<8x8xi1>, vector<8x8xf32>
    %cst_52 = arith.constant dense<0xFF800000> : vector<8xf32>
    %101 = vector.multi_reduction <maximumf>, %100, %cst_52 [1] : vector<8x8xf32> to vector<8xf32>
    %102 = vector.shape_cast %101 : vector<8xf32> to vector<8x1xf32>
    %103 = vector.broadcast %102 : vector<8x1xf32> to vector<8x8xf32>
    %104 = arith.subf %100, %103 : vector<8x8xf32>
    %105 = math.exp %104 : vector<8x8xf32>
    %cst_53 = arith.constant dense<0.000000e+00> : vector<8xf32>
    %106 = vector.multi_reduction <add>, %105, %cst_53 [1] : vector<8x8xf32> to vector<8xf32>
    %107 = vector.shape_cast %106 : vector<8xf32> to vector<8x1xf32>
    %108 = tpu.reciprocal %107 {approx = true} : vector<8x1xf32> -> vector<8x1xf32>
    %109 = vector.broadcast %108 : vector<8x1xf32> to vector<8x8xf32>
    %110 = arith.mulf %105, %109 : vector<8x8xf32>
    %cst_54 = arith.constant dense<0.000000e+00> : vector<8x8xf32>
    %111 = tpu.matmul %110, %97, %cst_54 {dimension_numbers = #tpu.dot_dimension_numbers<[1], [0], [0], [1], [0, 0, 1, 1], [], []>} : vector<8x8xf32>, vector<8x8xf32>, vector<8x8xf32> -> vector<8x8xf32>
    %112 = vector.extract_strided_slice %49 {offsets = [16, 0], sizes = [8, 32], strides = [1, 1]} : vector<32x32xf32> to vector<8x32xf32>
    %cst_55 = arith.constant dense<0.000000e+00> : vector<8x32xf32>
    %113 = tpu.matmul %111, %112, %cst_55 {dimension_numbers = #tpu.dot_dimension_numbers<[1], [0], [0], [1], [0, 0, 1, 1], [], []>} : vector<8x8xf32>, vector<8x32xf32>, vector<8x32xf32> -> vector<8x32xf32>
    %114 = arith.addf %94, %113 : vector<8x32xf32>
    %115 = vector.extract_strided_slice %53 {offsets = [0, 24], sizes = [8, 8], strides = [1, 1]} : vector<8x32xf32> to vector<8x8xf32>
    %116 = vector.extract_strided_slice %46 {offsets = [0, 24], sizes = [8, 8], strides = [1, 1]} : vector<8x32xf32> to vector<8x8xf32>
    %117 = vector.extract_strided_slice %47 {offsets = [0, 24], sizes = [8, 8], strides = [1, 1]} : vector<8x32xf32> to vector<8x8xf32>
    %cst_56 = arith.constant dense<0.000000e+00> : vector<8x8xf32>
    %118 = tpu.matmul %115, %116, %cst_56 {dimension_numbers = #tpu.dot_dimension_numbers<[1], [1], [0], [0], [0, 0, 1, 0], [], []>} : vector<8x8xf32>, vector<8x8xf32>, vector<8x8xf32> -> vector<8x8xf32>
    %cst_57 = arith.constant -1.000000e+09 : f32
    %119 = vector.broadcast %cst_57 : f32 to vector<8x8xf32>
    %120 = arith.select %11, %119, %118 : vector<8x8xi1>, vector<8x8xf32>
    %cst_58 = arith.constant dense<0xFF800000> : vector<8xf32>
    %121 = vector.multi_reduction <maximumf>, %120, %cst_58 [1] : vector<8x8xf32> to vector<8xf32>
    %122 = vector.shape_cast %121 : vector<8xf32> to vector<8x1xf32>
    %123 = vector.broadcast %122 : vector<8x1xf32> to vector<8x8xf32>
    %124 = arith.subf %120, %123 : vector<8x8xf32>
    %125 = math.exp %124 : vector<8x8xf32>
    %cst_59 = arith.constant dense<0.000000e+00> : vector<8xf32>
    %126 = vector.multi_reduction <add>, %125, %cst_59 [1] : vector<8x8xf32> to vector<8xf32>
    %127 = vector.shape_cast %126 : vector<8xf32> to vector<8x1xf32>
    %128 = tpu.reciprocal %127 {approx = true} : vector<8x1xf32> -> vector<8x1xf32>
    %129 = vector.broadcast %128 : vector<8x1xf32> to vector<8x8xf32>
    %130 = arith.mulf %125, %129 : vector<8x8xf32>
    %cst_60 = arith.constant dense<0.000000e+00> : vector<8x8xf32>
    %131 = tpu.matmul %130, %117, %cst_60 {dimension_numbers = #tpu.dot_dimension_numbers<[1], [0], [0], [1], [0, 0, 1, 1], [], []>} : vector<8x8xf32>, vector<8x8xf32>, vector<8x8xf32> -> vector<8x8xf32>
    %132 = vector.extract_strided_slice %49 {offsets = [24, 0], sizes = [8, 32], strides = [1, 1]} : vector<32x32xf32> to vector<8x32xf32>
    %cst_61 = arith.constant dense<0.000000e+00> : vector<8x32xf32>
    %133 = tpu.matmul %131, %132, %cst_61 {dimension_numbers = #tpu.dot_dimension_numbers<[1], [0], [0], [1], [0, 0, 1, 1], [], []>} : vector<8x8xf32>, vector<8x32xf32>, vector<8x32xf32> -> vector<8x32xf32>
    %134 = arith.addf %114, %133 : vector<8x32xf32>
    %135 = vector.broadcast %51 : vector<1x32xf32> to vector<8x32xf32>
    %136 = arith.addf %134, %135 : vector<8x32xf32>
    %137 = arith.addf %1, %136 : vector<8x32xf32>
    %138 = vector.extract_strided_slice %13 {offsets = [1, 0], sizes = [1, 32], strides = [1, 1]} : vector<3x32xf32> to vector<1x32xf32>
    %139 = vector.extract_strided_slice %15 {offsets = [1, 0], sizes = [1, 32], strides = [1, 1]} : vector<3x32xf32> to vector<1x32xf32>
    %cst_62 = arith.constant dense<0.000000e+00> : vector<8xf32>
    %140 = vector.multi_reduction <add>, %137, %cst_62 [1] : vector<8x32xf32> to vector<8xf32>
    %141 = vector.shape_cast %140 : vector<8xf32> to vector<8x1xf32>
    %cst_63 = arith.constant 3.200000e+01 : f32
    %142 = vector.broadcast %cst_63 : f32 to vector<8x1xf32>
    %143 = arith.divf %141, %142 : vector<8x1xf32>
    %144 = vector.broadcast %143 : vector<8x1xf32> to vector<8x32xf32>
    %145 = arith.subf %137, %144 : vector<8x32xf32>
    %146 = arith.mulf %145, %145 : vector<8x32xf32>
    %cst_64 = arith.constant dense<0.000000e+00> : vector<8xf32>
    %147 = vector.multi_reduction <add>, %146, %cst_64 [1] : vector<8x32xf32> to vector<8xf32>
    %148 = vector.shape_cast %147 : vector<8xf32> to vector<8x1xf32>
    %cst_65 = arith.constant 0.0322580636 : f32
    %149 = vector.broadcast %cst_65 : f32 to vector<8x1xf32>
    %150 = arith.mulf %148, %149 : vector<8x1xf32>
    %151 = math.sqrt %150 : vector<8x1xf32>
    %152 = vector.broadcast %138 : vector<1x32xf32> to vector<8x32xf32>
    %153 = arith.mulf %152, %145 : vector<8x32xf32>
    %cst_66 = arith.constant 9.99999997E-7 : f32
    %154 = vector.broadcast %cst_66 : f32 to vector<8x1xf32>
    %155 = arith.addf %151, %154 : vector<8x1xf32>
    %156 = vector.broadcast %155 : vector<8x1xf32> to vector<8x32xf32>
    %157 = arith.divf %153, %156 : vector<8x32xf32>
    %158 = vector.broadcast %139 : vector<1x32xf32> to vector<8x32xf32>
    %159 = arith.addf %157, %158 : vector<8x32xf32>
    %c0_67 = arith.constant 0 : index
    %c0_68 = arith.constant 0 : index
    %c0_69 = arith.constant 0 : index
    %160 = vector.load %arg9[%c0_67, %c0_68, %c0_69] : memref<2x32x32xf32, #tpu.memory_space<vmem>>, vector<1x32x32xf32>
    %161 = vector.shape_cast %160 : vector<1x32x32xf32> to vector<32x32xf32>
    %cst_70 = arith.constant dense<0.000000e+00> : vector<8x32xf32>
    %162 = tpu.matmul %159, %161, %cst_70 {dimension_numbers = #tpu.dot_dimension_numbers<[1], [0], [0], [1], [0, 0, 1, 1], [], []>} : vector<8x32xf32>, vector<32x32xf32>, vector<8x32xf32> -> vector<8x32xf32>
    %c0_71 = arith.constant 0 : index
    %c0_72 = arith.constant 0 : index
    %c0_73 = arith.constant 0 : index
    %163 = vector.load %arg10[%c0_71, %c0_72, %c0_73] : memref<2x1x32xf32, #tpu.memory_space<vmem>>, vector<1x1x32xf32>
    %164 = vector.shape_cast %163 : vector<1x1x32xf32> to vector<1x32xf32>
    %165 = vector.broadcast %164 : vector<1x32xf32> to vector<8x32xf32>
    %166 = arith.addf %162, %165 : vector<8x32xf32>
    %c0_74 = arith.constant 0 : index
    %c0_75 = arith.constant 0 : index
    %c0_76 = arith.constant 0 : index
    %167 = vector.load %arg11[%c0_74, %c0_75, %c0_76] : memref<2x32x64xf32, #tpu.memory_space<vmem>>, vector<1x32x64xf32>
    %168 = vector.shape_cast %167 : vector<1x32x64xf32> to vector<32x64xf32>
    %cst_77 = arith.constant dense<0.000000e+00> : vector<8x64xf32>
    %169 = tpu.matmul %3, %168, %cst_77 {dimension_numbers = #tpu.dot_dimension_numbers<[1], [0], [0], [1], [0, 0, 1, 1], [], []>} : vector<8x32xf32>, vector<32x64xf32>, vector<8x64xf32> -> vector<8x64xf32>
    %c0_78 = arith.constant 0 : index
    %c0_79 = arith.constant 0 : index
    %c0_80 = arith.constant 0 : index
    %170 = vector.load %arg12[%c0_78, %c0_79, %c0_80] : memref<2x1x64xf32, #tpu.memory_space<vmem>>, vector<1x1x64xf32>
    %171 = vector.shape_cast %170 : vector<1x1x64xf32> to vector<1x64xf32>
    %172 = vector.broadcast %171 : vector<1x64xf32> to vector<8x64xf32>
    %173 = arith.addf %169, %172 : vector<8x64xf32>
    %174 = vector.extract_strided_slice %173 {offsets = [0, 0], sizes = [8, 32], strides = [1, 1]} : vector<8x64xf32> to vector<8x32xf32>
    %175 = vector.extract_strided_slice %173 {offsets = [0, 32], sizes = [8, 32], strides = [1, 1]} : vector<8x64xf32> to vector<8x32xf32>
    %c0_81 = arith.constant 0 : index
    %c0_82 = arith.constant 0 : index
    %c0_83 = arith.constant 0 : index
    %176 = vector.load %arg13[%c0_81, %c0_82, %c0_83] : memref<2x32x32xf32, #tpu.memory_space<vmem>>, vector<1x32x32xf32>
    %177 = vector.shape_cast %176 : vector<1x32x32xf32> to vector<32x32xf32>
    %c0_84 = arith.constant 0 : index
    %c0_85 = arith.constant 0 : index
    %c0_86 = arith.constant 0 : index
    %178 = vector.load %arg14[%c0_84, %c0_85, %c0_86] : memref<2x1x32xf32, #tpu.memory_space<vmem>>, vector<1x1x32xf32>
    %179 = vector.shape_cast %178 : vector<1x1x32xf32> to vector<1x32xf32>
    %cst_87 = arith.constant 0.353553385 : f32
    %180 = vector.broadcast %cst_87 : f32 to vector<8x32xf32>
    %181 = arith.mulf %166, %180 : vector<8x32xf32>
    %cst_88 = arith.constant 0.000000e+00 : f32
    %182 = vector.broadcast %cst_88 : f32 to vector<8x32xf32>
    %183 = vector.extract_strided_slice %181 {offsets = [0, 0], sizes = [8, 8], strides = [1, 1]} : vector<8x32xf32> to vector<8x8xf32>
    %184 = vector.extract_strided_slice %174 {offsets = [0, 0], sizes = [8, 8], strides = [1, 1]} : vector<8x32xf32> to vector<8x8xf32>
    %185 = vector.extract_strided_slice %175 {offsets = [0, 0], sizes = [8, 8], strides = [1, 1]} : vector<8x32xf32> to vector<8x8xf32>
    %cst_89 = arith.constant dense<0.000000e+00> : vector<8x8xf32>
    %186 = tpu.matmul %183, %184, %cst_89 {dimension_numbers = #tpu.dot_dimension_numbers<[1], [1], [0], [0], [0, 0, 1, 0], [], []>} : vector<8x8xf32>, vector<8x8xf32>, vector<8x8xf32> -> vector<8x8xf32>
    %cst_90 = arith.constant -1.000000e+09 : f32
    %187 = vector.shape_cast %7 : vector<1x8xi1> to vector<1x8xi1>
    %188 = vector.broadcast %187 : vector<1x8xi1> to vector<8x8xi1>
    %189 = vector.broadcast %cst_90 : f32 to vector<8x8xf32>
    %190 = arith.select %188, %189, %186 : vector<8x8xi1>, vector<8x8xf32>
    %cst_91 = arith.constant dense<0xFF800000> : vector<8xf32>
    %191 = vector.multi_reduction <maximumf>, %190, %cst_91 [1] : vector<8x8xf32> to vector<8xf32>
    %192 = vector.shape_cast %191 : vector<8xf32> to vector<8x1xf32>
    %193 = vector.broadcast %192 : vector<8x1xf32> to vector<8x8xf32>
    %194 = arith.subf %190, %193 : vector<8x8xf32>
    %195 = math.exp %194 : vector<8x8xf32>
    %cst_92 = arith.constant dense<0.000000e+00> : vector<8xf32>
    %196 = vector.multi_reduction <add>, %195, %cst_92 [1] : vector<8x8xf32> to vector<8xf32>
    %197 = vector.shape_cast %196 : vector<8xf32> to vector<8x1xf32>
    %198 = tpu.reciprocal %197 {approx = true} : vector<8x1xf32> -> vector<8x1xf32>
    %199 = vector.broadcast %198 : vector<8x1xf32> to vector<8x8xf32>
    %200 = arith.mulf %195, %199 : vector<8x8xf32>
    %cst_93 = arith.constant dense<0.000000e+00> : vector<8x8xf32>
    %201 = tpu.matmul %200, %185, %cst_93 {dimension_numbers = #tpu.dot_dimension_numbers<[1], [0], [0], [1], [0, 0, 1, 1], [], []>} : vector<8x8xf32>, vector<8x8xf32>, vector<8x8xf32> -> vector<8x8xf32>
    %202 = vector.extract_strided_slice %177 {offsets = [0, 0], sizes = [8, 32], strides = [1, 1]} : vector<32x32xf32> to vector<8x32xf32>
    %cst_94 = arith.constant dense<0.000000e+00> : vector<8x32xf32>
    %203 = tpu.matmul %201, %202, %cst_94 {dimension_numbers = #tpu.dot_dimension_numbers<[1], [0], [0], [1], [0, 0, 1, 1], [], []>} : vector<8x8xf32>, vector<8x32xf32>, vector<8x32xf32> -> vector<8x32xf32>
    %204 = arith.addf %182, %203 : vector<8x32xf32>
    %205 = vector.extract_strided_slice %181 {offsets = [0, 8], sizes = [8, 8], strides = [1, 1]} : vector<8x32xf32> to vector<8x8xf32>
    %206 = vector.extract_strided_slice %174 {offsets = [0, 8], sizes = [8, 8], strides = [1, 1]} : vector<8x32xf32> to vector<8x8xf32>
    %207 = vector.extract_strided_slice %175 {offsets = [0, 8], sizes = [8, 8], strides = [1, 1]} : vector<8x32xf32> to vector<8x8xf32>
    %cst_95 = arith.constant dense<0.000000e+00> : vector<8x8xf32>
    %208 = tpu.matmul %205, %206, %cst_95 {dimension_numbers = #tpu.dot_dimension_numbers<[1], [1], [0], [0], [0, 0, 1, 0], [], []>} : vector<8x8xf32>, vector<8x8xf32>, vector<8x8xf32> -> vector<8x8xf32>
    %cst_96 = arith.constant -1.000000e+09 : f32
    %209 = vector.shape_cast %7 : vector<1x8xi1> to vector<1x8xi1>
    %210 = vector.broadcast %209 : vector<1x8xi1> to vector<8x8xi1>
    %211 = vector.broadcast %cst_96 : f32 to vector<8x8xf32>
    %212 = arith.select %210, %211, %208 : vector<8x8xi1>, vector<8x8xf32>
    %cst_97 = arith.constant dense<0xFF800000> : vector<8xf32>
    %213 = vector.multi_reduction <maximumf>, %212, %cst_97 [1] : vector<8x8xf32> to vector<8xf32>
    %214 = vector.shape_cast %213 : vector<8xf32> to vector<8x1xf32>
    %215 = vector.broadcast %214 : vector<8x1xf32> to vector<8x8xf32>
    %216 = arith.subf %212, %215 : vector<8x8xf32>
    %217 = math.exp %216 : vector<8x8xf32>
    %cst_98 = arith.constant dense<0.000000e+00> : vector<8xf32>
    %218 = vector.multi_reduction <add>, %217, %cst_98 [1] : vector<8x8xf32> to vector<8xf32>
    %219 = vector.shape_cast %218 : vector<8xf32> to vector<8x1xf32>
    %220 = tpu.reciprocal %219 {approx = true} : vector<8x1xf32> -> vector<8x1xf32>
    %221 = vector.broadcast %220 : vector<8x1xf32> to vector<8x8xf32>
    %222 = arith.mulf %217, %221 : vector<8x8xf32>
    %cst_99 = arith.constant dense<0.000000e+00> : vector<8x8xf32>
    %223 = tpu.matmul %222, %207, %cst_99 {dimension_numbers = #tpu.dot_dimension_numbers<[1], [0], [0], [1], [0, 0, 1, 1], [], []>} : vector<8x8xf32>, vector<8x8xf32>, vector<8x8xf32> -> vector<8x8xf32>
    %224 = vector.extract_strided_slice %177 {offsets = [8, 0], sizes = [8, 32], strides = [1, 1]} : vector<32x32xf32> to vector<8x32xf32>
    %cst_100 = arith.constant dense<0.000000e+00> : vector<8x32xf32>
    %225 = tpu.matmul %223, %224, %cst_100 {dimension_numbers = #tpu.dot_dimension_numbers<[1], [0], [0], [1], [0, 0, 1, 1], [], []>} : vector<8x8xf32>, vector<8x32xf32>, vector<8x32xf32> -> vector<8x32xf32>
    %226 = arith.addf %204, %225 : vector<8x32xf32>
    %227 = vector.extract_strided_slice %181 {offsets = [0, 16], sizes = [8, 8], strides = [1, 1]} : vector<8x32xf32> to vector<8x8xf32>
    %228 = vector.extract_strided_slice %174 {offsets = [0, 16], sizes = [8, 8], strides = [1, 1]} : vector<8x32xf32> to vector<8x8xf32>
    %229 = vector.extract_strided_slice %175 {offsets = [0, 16], sizes = [8, 8], strides = [1, 1]} : vector<8x32xf32> to vector<8x8xf32>
    %cst_101 = arith.constant dense<0.000000e+00> : vector<8x8xf32>
    %230 = tpu.matmul %227, %228, %cst_101 {dimension_numbers = #tpu.dot_dimension_numbers<[1], [1], [0], [0], [0, 0, 1, 0], [], []>} : vector<8x8xf32>, vector<8x8xf32>, vector<8x8xf32> -> vector<8x8xf32>
    %cst_102 = arith.constant -1.000000e+09 : f32
    %231 = vector.shape_cast %7 : vector<1x8xi1> to vector<1x8xi1>
    %232 = vector.broadcast %231 : vector<1x8xi1> to vector<8x8xi1>
    %233 = vector.broadcast %cst_102 : f32 to vector<8x8xf32>
    %234 = arith.select %232, %233, %230 : vector<8x8xi1>, vector<8x8xf32>
    %cst_103 = arith.constant dense<0xFF800000> : vector<8xf32>
    %235 = vector.multi_reduction <maximumf>, %234, %cst_103 [1] : vector<8x8xf32> to vector<8xf32>
    %236 = vector.shape_cast %235 : vector<8xf32> to vector<8x1xf32>
    %237 = vector.broadcast %236 : vector<8x1xf32> to vector<8x8xf32>
    %238 = arith.subf %234, %237 : vector<8x8xf32>
    %239 = math.exp %238 : vector<8x8xf32>
    %cst_104 = arith.constant dense<0.000000e+00> : vector<8xf32>
    %240 = vector.multi_reduction <add>, %239, %cst_104 [1] : vector<8x8xf32> to vector<8xf32>
    %241 = vector.shape_cast %240 : vector<8xf32> to vector<8x1xf32>
    %242 = tpu.reciprocal %241 {approx = true} : vector<8x1xf32> -> vector<8x1xf32>
    %243 = vector.broadcast %242 : vector<8x1xf32> to vector<8x8xf32>
    %244 = arith.mulf %239, %243 : vector<8x8xf32>
    %cst_105 = arith.constant dense<0.000000e+00> : vector<8x8xf32>
    %245 = tpu.matmul %244, %229, %cst_105 {dimension_numbers = #tpu.dot_dimension_numbers<[1], [0], [0], [1], [0, 0, 1, 1], [], []>} : vector<8x8xf32>, vector<8x8xf32>, vector<8x8xf32> -> vector<8x8xf32>
    %246 = vector.extract_strided_slice %177 {offsets = [16, 0], sizes = [8, 32], strides = [1, 1]} : vector<32x32xf32> to vector<8x32xf32>
    %cst_106 = arith.constant dense<0.000000e+00> : vector<8x32xf32>
    %247 = tpu.matmul %245, %246, %cst_106 {dimension_numbers = #tpu.dot_dimension_numbers<[1], [0], [0], [1], [0, 0, 1, 1], [], []>} : vector<8x8xf32>, vector<8x32xf32>, vector<8x32xf32> -> vector<8x32xf32>
    %248 = arith.addf %226, %247 : vector<8x32xf32>
    %249 = vector.extract_strided_slice %181 {offsets = [0, 24], sizes = [8, 8], strides = [1, 1]} : vector<8x32xf32> to vector<8x8xf32>
    %250 = vector.extract_strided_slice %174 {offsets = [0, 24], sizes = [8, 8], strides = [1, 1]} : vector<8x32xf32> to vector<8x8xf32>
    %251 = vector.extract_strided_slice %175 {offsets = [0, 24], sizes = [8, 8], strides = [1, 1]} : vector<8x32xf32> to vector<8x8xf32>
    %cst_107 = arith.constant dense<0.000000e+00> : vector<8x8xf32>
    %252 = tpu.matmul %249, %250, %cst_107 {dimension_numbers = #tpu.dot_dimension_numbers<[1], [1], [0], [0], [0, 0, 1, 0], [], []>} : vector<8x8xf32>, vector<8x8xf32>, vector<8x8xf32> -> vector<8x8xf32>
    %cst_108 = arith.constant -1.000000e+09 : f32
    %253 = vector.shape_cast %7 : vector<1x8xi1> to vector<1x8xi1>
    %254 = vector.broadcast %253 : vector<1x8xi1> to vector<8x8xi1>
    %255 = vector.broadcast %cst_108 : f32 to vector<8x8xf32>
    %256 = arith.select %254, %255, %252 : vector<8x8xi1>, vector<8x8xf32>
    %cst_109 = arith.constant dense<0xFF800000> : vector<8xf32>
    %257 = vector.multi_reduction <maximumf>, %256, %cst_109 [1] : vector<8x8xf32> to vector<8xf32>
    %258 = vector.shape_cast %257 : vector<8xf32> to vector<8x1xf32>
    %259 = vector.broadcast %258 : vector<8x1xf32> to vector<8x8xf32>
    %260 = arith.subf %256, %259 : vector<8x8xf32>
    %261 = math.exp %260 : vector<8x8xf32>
    %cst_110 = arith.constant dense<0.000000e+00> : vector<8xf32>
    %262 = vector.multi_reduction <add>, %261, %cst_110 [1] : vector<8x8xf32> to vector<8xf32>
    %263 = vector.shape_cast %262 : vector<8xf32> to vector<8x1xf32>
    %264 = tpu.reciprocal %263 {approx = true} : vector<8x1xf32> -> vector<8x1xf32>
    %265 = vector.broadcast %264 : vector<8x1xf32> to vector<8x8xf32>
    %266 = arith.mulf %261, %265 : vector<8x8xf32>
    %cst_111 = arith.constant dense<0.000000e+00> : vector<8x8xf32>
    %267 = tpu.matmul %266, %251, %cst_111 {dimension_numbers = #tpu.dot_dimension_numbers<[1], [0], [0], [1], [0, 0, 1, 1], [], []>} : vector<8x8xf32>, vector<8x8xf32>, vector<8x8xf32> -> vector<8x8xf32>
    %268 = vector.extract_strided_slice %177 {offsets = [24, 0], sizes = [8, 32], strides = [1, 1]} : vector<32x32xf32> to vector<8x32xf32>
    %cst_112 = arith.constant dense<0.000000e+00> : vector<8x32xf32>
    %269 = tpu.matmul %267, %268, %cst_112 {dimension_numbers = #tpu.dot_dimension_numbers<[1], [0], [0], [1], [0, 0, 1, 1], [], []>} : vector<8x8xf32>, vector<8x32xf32>, vector<8x32xf32> -> vector<8x32xf32>
    %270 = arith.addf %248, %269 : vector<8x32xf32>
    %271 = vector.broadcast %179 : vector<1x32xf32> to vector<8x32xf32>
    %272 = arith.addf %270, %271 : vector<8x32xf32>
    %273 = arith.addf %137, %272 : vector<8x32xf32>
    %274 = vector.extract_strided_slice %13 {offsets = [2, 0], sizes = [1, 32], strides = [1, 1]} : vector<3x32xf32> to vector<1x32xf32>
    %275 = vector.extract_strided_slice %15 {offsets = [2, 0], sizes = [1, 32], strides = [1, 1]} : vector<3x32xf32> to vector<1x32xf32>
    %cst_113 = arith.constant dense<0.000000e+00> : vector<8xf32>
    %276 = vector.multi_reduction <add>, %273, %cst_113 [1] : vector<8x32xf32> to vector<8xf32>
    %277 = vector.shape_cast %276 : vector<8xf32> to vector<8x1xf32>
    %cst_114 = arith.constant 3.200000e+01 : f32
    %278 = vector.broadcast %cst_114 : f32 to vector<8x1xf32>
    %279 = arith.divf %277, %278 : vector<8x1xf32>
    %280 = vector.broadcast %279 : vector<8x1xf32> to vector<8x32xf32>
    %281 = arith.subf %273, %280 : vector<8x32xf32>
    %282 = arith.mulf %281, %281 : vector<8x32xf32>
    %cst_115 = arith.constant dense<0.000000e+00> : vector<8xf32>
    %283 = vector.multi_reduction <add>, %282, %cst_115 [1] : vector<8x32xf32> to vector<8xf32>
    %284 = vector.shape_cast %283 : vector<8xf32> to vector<8x1xf32>
    %cst_116 = arith.constant 0.0322580636 : f32
    %285 = vector.broadcast %cst_116 : f32 to vector<8x1xf32>
    %286 = arith.mulf %284, %285 : vector<8x1xf32>
    %287 = math.sqrt %286 : vector<8x1xf32>
    %288 = vector.broadcast %274 : vector<1x32xf32> to vector<8x32xf32>
    %289 = arith.mulf %288, %281 : vector<8x32xf32>
    %cst_117 = arith.constant 9.99999997E-7 : f32
    %290 = vector.broadcast %cst_117 : f32 to vector<8x1xf32>
    %291 = arith.addf %287, %290 : vector<8x1xf32>
    %292 = vector.broadcast %291 : vector<8x1xf32> to vector<8x32xf32>
    %293 = arith.divf %289, %292 : vector<8x32xf32>
    %294 = vector.broadcast %275 : vector<1x32xf32> to vector<8x32xf32>
    %295 = arith.addf %293, %294 : vector<8x32xf32>
    %c0_118 = arith.constant 0 : index
    %c0_119 = arith.constant 0 : index
    %c0_120 = arith.constant 0 : index
    %296 = vector.load %arg17[%c0_118, %c0_119, %c0_120] : memref<2x32x64xf32, #tpu.memory_space<vmem>>, vector<1x32x64xf32>
    %297 = vector.shape_cast %296 : vector<1x32x64xf32> to vector<32x64xf32>
    %cst_121 = arith.constant dense<0.000000e+00> : vector<8x64xf32>
    %298 = tpu.matmul %295, %297, %cst_121 {dimension_numbers = #tpu.dot_dimension_numbers<[1], [0], [0], [1], [0, 0, 1, 1], [], []>} : vector<8x32xf32>, vector<32x64xf32>, vector<8x64xf32> -> vector<8x64xf32>
    %c0_122 = arith.constant 0 : index
    %c0_123 = arith.constant 0 : index
    %c0_124 = arith.constant 0 : index
    %299 = vector.load %arg18[%c0_122, %c0_123, %c0_124] : memref<2x1x64xf32, #tpu.memory_space<vmem>>, vector<1x1x64xf32>
    %300 = vector.shape_cast %299 : vector<1x1x64xf32> to vector<1x64xf32>
    %301 = vector.broadcast %300 : vector<1x64xf32> to vector<8x64xf32>
    %302 = arith.addf %298, %301 : vector<8x64xf32>
    %cst_125 = arith.constant 0.000000e+00 : f32
    %303 = vector.broadcast %cst_125 : f32 to vector<8x64xf32>
    %304 = arith.maximumf %302, %303 : vector<8x64xf32>
    %c0_126 = arith.constant 0 : index
    %c0_127 = arith.constant 0 : index
    %c0_128 = arith.constant 0 : index
    %305 = vector.load %arg19[%c0_126, %c0_127, %c0_128] : memref<2x64x32xf32, #tpu.memory_space<vmem>>, vector<1x64x32xf32>
    %306 = vector.shape_cast %305 : vector<1x64x32xf32> to vector<64x32xf32>
    %cst_129 = arith.constant dense<0.000000e+00> : vector<8x32xf32>
    %307 = tpu.matmul %304, %306, %cst_129 {dimension_numbers = #tpu.dot_dimension_numbers<[1], [0], [0], [1], [0, 0, 1, 1], [], []>} : vector<8x64xf32>, vector<64x32xf32>, vector<8x32xf32> -> vector<8x32xf32>
    %308 = arith.addf %273, %307 : vector<8x32xf32>
    %c0_130 = arith.constant 0 : index
    %c0_131 = arith.constant 0 : index
    %c0_132 = arith.constant 0 : index
    %309 = vector.load %arg20[%c0_130, %c0_131, %c0_132] : memref<2x1x32xf32, #tpu.memory_space<vmem>>, vector<1x1x32xf32>
    %310 = vector.shape_cast %309 : vector<1x1x32xf32> to vector<1x32xf32>
    %311 = vector.broadcast %310 : vector<1x32xf32> to vector<8x32xf32>
    %312 = arith.addf %308, %311 : vector<8x32xf32>
    %c1 = arith.constant 1 : index
    %c0_133 = arith.constant 0 : index
    %c0_134 = arith.constant 0 : index
    %313 = vector.load %arg15[%c1, %c0_133, %c0_134] : memref<2x3x32xf32, #tpu.memory_space<vmem>>, vector<1x3x32xf32>
    %314 = vector.shape_cast %313 : vector<1x3x32xf32> to vector<3x32xf32>
    %c1_135 = arith.constant 1 : index
    %c0_136 = arith.constant 0 : index
    %c0_137 = arith.constant 0 : index
    %315 = vector.load %arg16[%c1_135, %c0_136, %c0_137] : memref<2x3x32xf32, #tpu.memory_space<vmem>>, vector<1x3x32xf32>
    %316 = vector.shape_cast %315 : vector<1x3x32xf32> to vector<3x32xf32>
    %317 = vector.extract_strided_slice %314 {offsets = [0, 0], sizes = [1, 32], strides = [1, 1]} : vector<3x32xf32> to vector<1x32xf32>
    %318 = vector.extract_strided_slice %316 {offsets = [0, 0], sizes = [1, 32], strides = [1, 1]} : vector<3x32xf32> to vector<1x32xf32>
    %cst_138 = arith.constant dense<0.000000e+00> : vector<8xf32>
    %319 = vector.multi_reduction <add>, %312, %cst_138 [1] : vector<8x32xf32> to vector<8xf32>
    %320 = vector.shape_cast %319 : vector<8xf32> to vector<8x1xf32>
    %cst_139 = arith.constant 3.200000e+01 : f32
    %321 = vector.broadcast %cst_139 : f32 to vector<8x1xf32>
    %322 = arith.divf %320, %321 : vector<8x1xf32>
    %323 = vector.broadcast %322 : vector<8x1xf32> to vector<8x32xf32>
    %324 = arith.subf %312, %323 : vector<8x32xf32>
    %325 = arith.mulf %324, %324 : vector<8x32xf32>
    %cst_140 = arith.constant dense<0.000000e+00> : vector<8xf32>
    %326 = vector.multi_reduction <add>, %325, %cst_140 [1] : vector<8x32xf32> to vector<8xf32>
    %327 = vector.shape_cast %326 : vector<8xf32> to vector<8x1xf32>
    %cst_141 = arith.constant 0.0322580636 : f32
    %328 = vector.broadcast %cst_141 : f32 to vector<8x1xf32>
    %329 = arith.mulf %327, %328 : vector<8x1xf32>
    %330 = math.sqrt %329 : vector<8x1xf32>
    %331 = vector.broadcast %317 : vector<1x32xf32> to vector<8x32xf32>
    %332 = arith.mulf %331, %324 : vector<8x32xf32>
    %cst_142 = arith.constant 9.99999997E-7 : f32
    %333 = vector.broadcast %cst_142 : f32 to vector<8x1xf32>
    %334 = arith.addf %330, %333 : vector<8x1xf32>
    %335 = vector.broadcast %334 : vector<8x1xf32> to vector<8x32xf32>
    %336 = arith.divf %332, %335 : vector<8x32xf32>
    %337 = vector.broadcast %318 : vector<1x32xf32> to vector<8x32xf32>
    %338 = arith.addf %336, %337 : vector<8x32xf32>
    %c1_143 = arith.constant 1 : index
    %c0_144 = arith.constant 0 : index
    %c0_145 = arith.constant 0 : index
    %339 = vector.load %arg5[%c1_143, %c0_144, %c0_145] : memref<2x32x96xf32, #tpu.memory_space<vmem>>, vector<1x32x96xf32>
    %340 = vector.shape_cast %339 : vector<1x32x96xf32> to vector<32x96xf32>
    %cst_146 = arith.constant dense<0.000000e+00> : vector<8x96xf32>
    %341 = tpu.matmul %338, %340, %cst_146 {dimension_numbers = #tpu.dot_dimension_numbers<[1], [0], [0], [1], [0, 0, 1, 1], [], []>} : vector<8x32xf32>, vector<32x96xf32>, vector<8x96xf32> -> vector<8x96xf32>
    %c1_147 = arith.constant 1 : index
    %c0_148 = arith.constant 0 : index
    %c0_149 = arith.constant 0 : index
    %342 = vector.load %arg6[%c1_147, %c0_148, %c0_149] : memref<2x1x96xf32, #tpu.memory_space<vmem>>, vector<1x1x96xf32>
    %343 = vector.shape_cast %342 : vector<1x1x96xf32> to vector<1x96xf32>
    %344 = vector.broadcast %343 : vector<1x96xf32> to vector<8x96xf32>
    %345 = arith.addf %341, %344 : vector<8x96xf32>
    %346 = vector.extract_strided_slice %345 {offsets = [0, 0], sizes = [8, 32], strides = [1, 1]} : vector<8x96xf32> to vector<8x32xf32>
    %347 = vector.extract_strided_slice %345 {offsets = [0, 32], sizes = [8, 32], strides = [1, 1]} : vector<8x96xf32> to vector<8x32xf32>
    %348 = vector.extract_strided_slice %345 {offsets = [0, 64], sizes = [8, 32], strides = [1, 1]} : vector<8x96xf32> to vector<8x32xf32>
    %c1_150 = arith.constant 1 : index
    %c0_151 = arith.constant 0 : index
    %c0_152 = arith.constant 0 : index
    %349 = vector.load %arg7[%c1_150, %c0_151, %c0_152] : memref<2x32x32xf32, #tpu.memory_space<vmem>>, vector<1x32x32xf32>
    %350 = vector.shape_cast %349 : vector<1x32x32xf32> to vector<32x32xf32>
    %c1_153 = arith.constant 1 : index
    %c0_154 = arith.constant 0 : index
    %c0_155 = arith.constant 0 : index
    %351 = vector.load %arg8[%c1_153, %c0_154, %c0_155] : memref<2x1x32xf32, #tpu.memory_space<vmem>>, vector<1x1x32xf32>
    %352 = vector.shape_cast %351 : vector<1x1x32xf32> to vector<1x32xf32>
    %cst_156 = arith.constant 0.353553385 : f32
    %353 = vector.broadcast %cst_156 : f32 to vector<8x32xf32>
    %354 = arith.mulf %346, %353 : vector<8x32xf32>
    %cst_157 = arith.constant 0.000000e+00 : f32
    %355 = vector.broadcast %cst_157 : f32 to vector<8x32xf32>
    %356 = vector.extract_strided_slice %354 {offsets = [0, 0], sizes = [8, 8], strides = [1, 1]} : vector<8x32xf32> to vector<8x8xf32>
    %357 = vector.extract_strided_slice %347 {offsets = [0, 0], sizes = [8, 8], strides = [1, 1]} : vector<8x32xf32> to vector<8x8xf32>
    %358 = vector.extract_strided_slice %348 {offsets = [0, 0], sizes = [8, 8], strides = [1, 1]} : vector<8x32xf32> to vector<8x8xf32>
    %cst_158 = arith.constant dense<0.000000e+00> : vector<8x8xf32>
    %359 = tpu.matmul %356, %357, %cst_158 {dimension_numbers = #tpu.dot_dimension_numbers<[1], [1], [0], [0], [0, 0, 1, 0], [], []>} : vector<8x8xf32>, vector<8x8xf32>, vector<8x8xf32> -> vector<8x8xf32>
    %cst_159 = arith.constant -1.000000e+09 : f32
    %360 = vector.broadcast %cst_159 : f32 to vector<8x8xf32>
    %361 = arith.select %11, %360, %359 : vector<8x8xi1>, vector<8x8xf32>
    %cst_160 = arith.constant dense<0xFF800000> : vector<8xf32>
    %362 = vector.multi_reduction <maximumf>, %361, %cst_160 [1] : vector<8x8xf32> to vector<8xf32>
    %363 = vector.shape_cast %362 : vector<8xf32> to vector<8x1xf32>
    %364 = vector.broadcast %363 : vector<8x1xf32> to vector<8x8xf32>
    %365 = arith.subf %361, %364 : vector<8x8xf32>
    %366 = math.exp %365 : vector<8x8xf32>
    %cst_161 = arith.constant dense<0.000000e+00> : vector<8xf32>
    %367 = vector.multi_reduction <add>, %366, %cst_161 [1] : vector<8x8xf32> to vector<8xf32>
    %368 = vector.shape_cast %367 : vector<8xf32> to vector<8x1xf32>
    %369 = tpu.reciprocal %368 {approx = true} : vector<8x1xf32> -> vector<8x1xf32>
    %370 = vector.broadcast %369 : vector<8x1xf32> to vector<8x8xf32>
    %371 = arith.mulf %366, %370 : vector<8x8xf32>
    %cst_162 = arith.constant dense<0.000000e+00> : vector<8x8xf32>
    %372 = tpu.matmul %371, %358, %cst_162 {dimension_numbers = #tpu.dot_dimension_numbers<[1], [0], [0], [1], [0, 0, 1, 1], [], []>} : vector<8x8xf32>, vector<8x8xf32>, vector<8x8xf32> -> vector<8x8xf32>
    %373 = vector.extract_strided_slice %350 {offsets = [0, 0], sizes = [8, 32], strides = [1, 1]} : vector<32x32xf32> to vector<8x32xf32>
    %cst_163 = arith.constant dense<0.000000e+00> : vector<8x32xf32>
    %374 = tpu.matmul %372, %373, %cst_163 {dimension_numbers = #tpu.dot_dimension_numbers<[1], [0], [0], [1], [0, 0, 1, 1], [], []>} : vector<8x8xf32>, vector<8x32xf32>, vector<8x32xf32> -> vector<8x32xf32>
    %375 = arith.addf %355, %374 : vector<8x32xf32>
    %376 = vector.extract_strided_slice %354 {offsets = [0, 8], sizes = [8, 8], strides = [1, 1]} : vector<8x32xf32> to vector<8x8xf32>
    %377 = vector.extract_strided_slice %347 {offsets = [0, 8], sizes = [8, 8], strides = [1, 1]} : vector<8x32xf32> to vector<8x8xf32>
    %378 = vector.extract_strided_slice %348 {offsets = [0, 8], sizes = [8, 8], strides = [1, 1]} : vector<8x32xf32> to vector<8x8xf32>
    %cst_164 = arith.constant dense<0.000000e+00> : vector<8x8xf32>
    %379 = tpu.matmul %376, %377, %cst_164 {dimension_numbers = #tpu.dot_dimension_numbers<[1], [1], [0], [0], [0, 0, 1, 0], [], []>} : vector<8x8xf32>, vector<8x8xf32>, vector<8x8xf32> -> vector<8x8xf32>
    %cst_165 = arith.constant -1.000000e+09 : f32
    %380 = vector.broadcast %cst_165 : f32 to vector<8x8xf32>
    %381 = arith.select %11, %380, %379 : vector<8x8xi1>, vector<8x8xf32>
    %cst_166 = arith.constant dense<0xFF800000> : vector<8xf32>
    %382 = vector.multi_reduction <maximumf>, %381, %cst_166 [1] : vector<8x8xf32> to vector<8xf32>
    %383 = vector.shape_cast %382 : vector<8xf32> to vector<8x1xf32>
    %384 = vector.broadcast %383 : vector<8x1xf32> to vector<8x8xf32>
    %385 = arith.subf %381, %384 : vector<8x8xf32>
    %386 = math.exp %385 : vector<8x8xf32>
    %cst_167 = arith.constant dense<0.000000e+00> : vector<8xf32>
    %387 = vector.multi_reduction <add>, %386, %cst_167 [1] : vector<8x8xf32> to vector<8xf32>
    %388 = vector.shape_cast %387 : vector<8xf32> to vector<8x1xf32>
    %389 = tpu.reciprocal %388 {approx = true} : vector<8x1xf32> -> vector<8x1xf32>
    %390 = vector.broadcast %389 : vector<8x1xf32> to vector<8x8xf32>
    %391 = arith.mulf %386, %390 : vector<8x8xf32>
    %cst_168 = arith.constant dense<0.000000e+00> : vector<8x8xf32>
    %392 = tpu.matmul %391, %378, %cst_168 {dimension_numbers = #tpu.dot_dimension_numbers<[1], [0], [0], [1], [0, 0, 1, 1], [], []>} : vector<8x8xf32>, vector<8x8xf32>, vector<8x8xf32> -> vector<8x8xf32>
    %393 = vector.extract_strided_slice %350 {offsets = [8, 0], sizes = [8, 32], strides = [1, 1]} : vector<32x32xf32> to vector<8x32xf32>
    %cst_169 = arith.constant dense<0.000000e+00> : vector<8x32xf32>
    %394 = tpu.matmul %392, %393, %cst_169 {dimension_numbers = #tpu.dot_dimension_numbers<[1], [0], [0], [1], [0, 0, 1, 1], [], []>} : vector<8x8xf32>, vector<8x32xf32>, vector<8x32xf32> -> vector<8x32xf32>
    %395 = arith.addf %375, %394 : vector<8x32xf32>
    %396 = vector.extract_strided_slice %354 {offsets = [0, 16], sizes = [8, 8], strides = [1, 1]} : vector<8x32xf32> to vector<8x8xf32>
    %397 = vector.extract_strided_slice %347 {offsets = [0, 16], sizes = [8, 8], strides = [1, 1]} : vector<8x32xf32> to vector<8x8xf32>
    %398 = vector.extract_strided_slice %348 {offsets = [0, 16], sizes = [8, 8], strides = [1, 1]} : vector<8x32xf32> to vector<8x8xf32>
    %cst_170 = arith.constant dense<0.000000e+00> : vector<8x8xf32>
    %399 = tpu.matmul %396, %397, %cst_170 {dimension_numbers = #tpu.dot_dimension_numbers<[1], [1], [0], [0], [0, 0, 1, 0], [], []>} : vector<8x8xf32>, vector<8x8xf32>, vector<8x8xf32> -> vector<8x8xf32>
    %cst_171 = arith.constant -1.000000e+09 : f32
    %400 = vector.broadcast %cst_171 : f32 to vector<8x8xf32>
    %401 = arith.select %11, %400, %399 : vector<8x8xi1>, vector<8x8xf32>
    %cst_172 = arith.constant dense<0xFF800000> : vector<8xf32>
    %402 = vector.multi_reduction <maximumf>, %401, %cst_172 [1] : vector<8x8xf32> to vector<8xf32>
    %403 = vector.shape_cast %402 : vector<8xf32> to vector<8x1xf32>
    %404 = vector.broadcast %403 : vector<8x1xf32> to vector<8x8xf32>
    %405 = arith.subf %401, %404 : vector<8x8xf32>
    %406 = math.exp %405 : vector<8x8xf32>
    %cst_173 = arith.constant dense<0.000000e+00> : vector<8xf32>
    %407 = vector.multi_reduction <add>, %406, %cst_173 [1] : vector<8x8xf32> to vector<8xf32>
    %408 = vector.shape_cast %407 : vector<8xf32> to vector<8x1xf32>
    %409 = tpu.reciprocal %408 {approx = true} : vector<8x1xf32> -> vector<8x1xf32>
    %410 = vector.broadcast %409 : vector<8x1xf32> to vector<8x8xf32>
    %411 = arith.mulf %406, %410 : vector<8x8xf32>
    %cst_174 = arith.constant dense<0.000000e+00> : vector<8x8xf32>
    %412 = tpu.matmul %411, %398, %cst_174 {dimension_numbers = #tpu.dot_dimension_numbers<[1], [0], [0], [1], [0, 0, 1, 1], [], []>} : vector<8x8xf32>, vector<8x8xf32>, vector<8x8xf32> -> vector<8x8xf32>
    %413 = vector.extract_strided_slice %350 {offsets = [16, 0], sizes = [8, 32], strides = [1, 1]} : vector<32x32xf32> to vector<8x32xf32>
    %cst_175 = arith.constant dense<0.000000e+00> : vector<8x32xf32>
    %414 = tpu.matmul %412, %413, %cst_175 {dimension_numbers = #tpu.dot_dimension_numbers<[1], [0], [0], [1], [0, 0, 1, 1], [], []>} : vector<8x8xf32>, vector<8x32xf32>, vector<8x32xf32> -> vector<8x32xf32>
    %415 = arith.addf %395, %414 : vector<8x32xf32>
    %416 = vector.extract_strided_slice %354 {offsets = [0, 24], sizes = [8, 8], strides = [1, 1]} : vector<8x32xf32> to vector<8x8xf32>
    %417 = vector.extract_strided_slice %347 {offsets = [0, 24], sizes = [8, 8], strides = [1, 1]} : vector<8x32xf32> to vector<8x8xf32>
    %418 = vector.extract_strided_slice %348 {offsets = [0, 24], sizes = [8, 8], strides = [1, 1]} : vector<8x32xf32> to vector<8x8xf32>
    %cst_176 = arith.constant dense<0.000000e+00> : vector<8x8xf32>
    %419 = tpu.matmul %416, %417, %cst_176 {dimension_numbers = #tpu.dot_dimension_numbers<[1], [1], [0], [0], [0, 0, 1, 0], [], []>} : vector<8x8xf32>, vector<8x8xf32>, vector<8x8xf32> -> vector<8x8xf32>
    %cst_177 = arith.constant -1.000000e+09 : f32
    %420 = vector.broadcast %cst_177 : f32 to vector<8x8xf32>
    %421 = arith.select %11, %420, %419 : vector<8x8xi1>, vector<8x8xf32>
    %cst_178 = arith.constant dense<0xFF800000> : vector<8xf32>
    %422 = vector.multi_reduction <maximumf>, %421, %cst_178 [1] : vector<8x8xf32> to vector<8xf32>
    %423 = vector.shape_cast %422 : vector<8xf32> to vector<8x1xf32>
    %424 = vector.broadcast %423 : vector<8x1xf32> to vector<8x8xf32>
    %425 = arith.subf %421, %424 : vector<8x8xf32>
    %426 = math.exp %425 : vector<8x8xf32>
    %cst_179 = arith.constant dense<0.000000e+00> : vector<8xf32>
    %427 = vector.multi_reduction <add>, %426, %cst_179 [1] : vector<8x8xf32> to vector<8xf32>
    %428 = vector.shape_cast %427 : vector<8xf32> to vector<8x1xf32>
    %429 = tpu.reciprocal %428 {approx = true} : vector<8x1xf32> -> vector<8x1xf32>
    %430 = vector.broadcast %429 : vector<8x1xf32> to vector<8x8xf32>
    %431 = arith.mulf %426, %430 : vector<8x8xf32>
    %cst_180 = arith.constant dense<0.000000e+00> : vector<8x8xf32>
    %432 = tpu.matmul %431, %418, %cst_180 {dimension_numbers = #tpu.dot_dimension_numbers<[1], [0], [0], [1], [0, 0, 1, 1], [], []>} : vector<8x8xf32>, vector<8x8xf32>, vector<8x8xf32> -> vector<8x8xf32>
    %433 = vector.extract_strided_slice %350 {offsets = [24, 0], sizes = [8, 32], strides = [1, 1]} : vector<32x32xf32> to vector<8x32xf32>
    %cst_181 = arith.constant dense<0.000000e+00> : vector<8x32xf32>
    %434 = tpu.matmul %432, %433, %cst_181 {dimension_numbers = #tpu.dot_dimension_numbers<[1], [0], [0], [1], [0, 0, 1, 1], [], []>} : vector<8x8xf32>, vector<8x32xf32>, vector<8x32xf32> -> vector<8x32xf32>
    %435 = arith.addf %415, %434 : vector<8x32xf32>
    %436 = vector.broadcast %352 : vector<1x32xf32> to vector<8x32xf32>
    %437 = arith.addf %435, %436 : vector<8x32xf32>
    %438 = arith.addf %312, %437 : vector<8x32xf32>
    %439 = vector.extract_strided_slice %314 {offsets = [1, 0], sizes = [1, 32], strides = [1, 1]} : vector<3x32xf32> to vector<1x32xf32>
    %440 = vector.extract_strided_slice %316 {offsets = [1, 0], sizes = [1, 32], strides = [1, 1]} : vector<3x32xf32> to vector<1x32xf32>
    %cst_182 = arith.constant dense<0.000000e+00> : vector<8xf32>
    %441 = vector.multi_reduction <add>, %438, %cst_182 [1] : vector<8x32xf32> to vector<8xf32>
    %442 = vector.shape_cast %441 : vector<8xf32> to vector<8x1xf32>
    %cst_183 = arith.constant 3.200000e+01 : f32
    %443 = vector.broadcast %cst_183 : f32 to vector<8x1xf32>
    %444 = arith.divf %442, %443 : vector<8x1xf32>
    %445 = vector.broadcast %444 : vector<8x1xf32> to vector<8x32xf32>
    %446 = arith.subf %438, %445 : vector<8x32xf32>
    %447 = arith.mulf %446, %446 : vector<8x32xf32>
    %cst_184 = arith.constant dense<0.000000e+00> : vector<8xf32>
    %448 = vector.multi_reduction <add>, %447, %cst_184 [1] : vector<8x32xf32> to vector<8xf32>
    %449 = vector.shape_cast %448 : vector<8xf32> to vector<8x1xf32>
    %cst_185 = arith.constant 0.0322580636 : f32
    %450 = vector.broadcast %cst_185 : f32 to vector<8x1xf32>
    %451 = arith.mulf %449, %450 : vector<8x1xf32>
    %452 = math.sqrt %451 : vector<8x1xf32>
    %453 = vector.broadcast %439 : vector<1x32xf32> to vector<8x32xf32>
    %454 = arith.mulf %453, %446 : vector<8x32xf32>
    %cst_186 = arith.constant 9.99999997E-7 : f32
    %455 = vector.broadcast %cst_186 : f32 to vector<8x1xf32>
    %456 = arith.addf %452, %455 : vector<8x1xf32>
    %457 = vector.broadcast %456 : vector<8x1xf32> to vector<8x32xf32>
    %458 = arith.divf %454, %457 : vector<8x32xf32>
    %459 = vector.broadcast %440 : vector<1x32xf32> to vector<8x32xf32>
    %460 = arith.addf %458, %459 : vector<8x32xf32>
    %c1_187 = arith.constant 1 : index
    %c0_188 = arith.constant 0 : index
    %c0_189 = arith.constant 0 : index
    %461 = vector.load %arg9[%c1_187, %c0_188, %c0_189] : memref<2x32x32xf32, #tpu.memory_space<vmem>>, vector<1x32x32xf32>
    %462 = vector.shape_cast %461 : vector<1x32x32xf32> to vector<32x32xf32>
    %cst_190 = arith.constant dense<0.000000e+00> : vector<8x32xf32>
    %463 = tpu.matmul %460, %462, %cst_190 {dimension_numbers = #tpu.dot_dimension_numbers<[1], [0], [0], [1], [0, 0, 1, 1], [], []>} : vector<8x32xf32>, vector<32x32xf32>, vector<8x32xf32> -> vector<8x32xf32>
    %c1_191 = arith.constant 1 : index
    %c0_192 = arith.constant 0 : index
    %c0_193 = arith.constant 0 : index
    %464 = vector.load %arg10[%c1_191, %c0_192, %c0_193] : memref<2x1x32xf32, #tpu.memory_space<vmem>>, vector<1x1x32xf32>
    %465 = vector.shape_cast %464 : vector<1x1x32xf32> to vector<1x32xf32>
    %466 = vector.broadcast %465 : vector<1x32xf32> to vector<8x32xf32>
    %467 = arith.addf %463, %466 : vector<8x32xf32>
    %c1_194 = arith.constant 1 : index
    %c0_195 = arith.constant 0 : index
    %c0_196 = arith.constant 0 : index
    %468 = vector.load %arg11[%c1_194, %c0_195, %c0_196] : memref<2x32x64xf32, #tpu.memory_space<vmem>>, vector<1x32x64xf32>
    %469 = vector.shape_cast %468 : vector<1x32x64xf32> to vector<32x64xf32>
    %cst_197 = arith.constant dense<0.000000e+00> : vector<8x64xf32>
    %470 = tpu.matmul %3, %469, %cst_197 {dimension_numbers = #tpu.dot_dimension_numbers<[1], [0], [0], [1], [0, 0, 1, 1], [], []>} : vector<8x32xf32>, vector<32x64xf32>, vector<8x64xf32> -> vector<8x64xf32>
    %c1_198 = arith.constant 1 : index
    %c0_199 = arith.constant 0 : index
    %c0_200 = arith.constant 0 : index
    %471 = vector.load %arg12[%c1_198, %c0_199, %c0_200] : memref<2x1x64xf32, #tpu.memory_space<vmem>>, vector<1x1x64xf32>
    %472 = vector.shape_cast %471 : vector<1x1x64xf32> to vector<1x64xf32>
    %473 = vector.broadcast %472 : vector<1x64xf32> to vector<8x64xf32>
    %474 = arith.addf %470, %473 : vector<8x64xf32>
    %475 = vector.extract_strided_slice %474 {offsets = [0, 0], sizes = [8, 32], strides = [1, 1]} : vector<8x64xf32> to vector<8x32xf32>
    %476 = vector.extract_strided_slice %474 {offsets = [0, 32], sizes = [8, 32], strides = [1, 1]} : vector<8x64xf32> to vector<8x32xf32>
    %c1_201 = arith.constant 1 : index
    %c0_202 = arith.constant 0 : index
    %c0_203 = arith.constant 0 : index
    %477 = vector.load %arg13[%c1_201, %c0_202, %c0_203] : memref<2x32x32xf32, #tpu.memory_space<vmem>>, vector<1x32x32xf32>
    %478 = vector.shape_cast %477 : vector<1x32x32xf32> to vector<32x32xf32>
    %c1_204 = arith.constant 1 : index
    %c0_205 = arith.constant 0 : index
    %c0_206 = arith.constant 0 : index
    %479 = vector.load %arg14[%c1_204, %c0_205, %c0_206] : memref<2x1x32xf32, #tpu.memory_space<vmem>>, vector<1x1x32xf32>
    %480 = vector.shape_cast %479 : vector<1x1x32xf32> to vector<1x32xf32>
    %cst_207 = arith.constant 0.353553385 : f32
    %481 = vector.broadcast %cst_207 : f32 to vector<8x32xf32>
    %482 = arith.mulf %467, %481 : vector<8x32xf32>
    %cst_208 = arith.constant 0.000000e+00 : f32
    %483 = vector.broadcast %cst_208 : f32 to vector<8x32xf32>
    %484 = vector.extract_strided_slice %482 {offsets = [0, 0], sizes = [8, 8], strides = [1, 1]} : vector<8x32xf32> to vector<8x8xf32>
    %485 = vector.extract_strided_slice %475 {offsets = [0, 0], sizes = [8, 8], strides = [1, 1]} : vector<8x32xf32> to vector<8x8xf32>
    %486 = vector.extract_strided_slice %476 {offsets = [0, 0], sizes = [8, 8], strides = [1, 1]} : vector<8x32xf32> to vector<8x8xf32>
    %cst_209 = arith.constant dense<0.000000e+00> : vector<8x8xf32>
    %487 = tpu.matmul %484, %485, %cst_209 {dimension_numbers = #tpu.dot_dimension_numbers<[1], [1], [0], [0], [0, 0, 1, 0], [], []>} : vector<8x8xf32>, vector<8x8xf32>, vector<8x8xf32> -> vector<8x8xf32>
    %cst_210 = arith.constant -1.000000e+09 : f32
    %488 = vector.shape_cast %7 : vector<1x8xi1> to vector<1x8xi1>
    %489 = vector.broadcast %488 : vector<1x8xi1> to vector<8x8xi1>
    %490 = vector.broadcast %cst_210 : f32 to vector<8x8xf32>
    %491 = arith.select %489, %490, %487 : vector<8x8xi1>, vector<8x8xf32>
    %cst_211 = arith.constant dense<0xFF800000> : vector<8xf32>
    %492 = vector.multi_reduction <maximumf>, %491, %cst_211 [1] : vector<8x8xf32> to vector<8xf32>
    %493 = vector.shape_cast %492 : vector<8xf32> to vector<8x1xf32>
    %494 = vector.broadcast %493 : vector<8x1xf32> to vector<8x8xf32>
    %495 = arith.subf %491, %494 : vector<8x8xf32>
    %496 = math.exp %495 : vector<8x8xf32>
    %cst_212 = arith.constant dense<0.000000e+00> : vector<8xf32>
    %497 = vector.multi_reduction <add>, %496, %cst_212 [1] : vector<8x8xf32> to vector<8xf32>
    %498 = vector.shape_cast %497 : vector<8xf32> to vector<8x1xf32>
    %499 = tpu.reciprocal %498 {approx = true} : vector<8x1xf32> -> vector<8x1xf32>
    %500 = vector.broadcast %499 : vector<8x1xf32> to vector<8x8xf32>
    %501 = arith.mulf %496, %500 : vector<8x8xf32>
    %cst_213 = arith.constant dense<0.000000e+00> : vector<8x8xf32>
    %502 = tpu.matmul %501, %486, %cst_213 {dimension_numbers = #tpu.dot_dimension_numbers<[1], [0], [0], [1], [0, 0, 1, 1], [], []>} : vector<8x8xf32>, vector<8x8xf32>, vector<8x8xf32> -> vector<8x8xf32>
    %503 = vector.extract_strided_slice %478 {offsets = [0, 0], sizes = [8, 32], strides = [1, 1]} : vector<32x32xf32> to vector<8x32xf32>
    %cst_214 = arith.constant dense<0.000000e+00> : vector<8x32xf32>
    %504 = tpu.matmul %502, %503, %cst_214 {dimension_numbers = #tpu.dot_dimension_numbers<[1], [0], [0], [1], [0, 0, 1, 1], [], []>} : vector<8x8xf32>, vector<8x32xf32>, vector<8x32xf32> -> vector<8x32xf32>
    %505 = arith.addf %483, %504 : vector<8x32xf32>
    %506 = vector.extract_strided_slice %482 {offsets = [0, 8], sizes = [8, 8], strides = [1, 1]} : vector<8x32xf32> to vector<8x8xf32>
    %507 = vector.extract_strided_slice %475 {offsets = [0, 8], sizes = [8, 8], strides = [1, 1]} : vector<8x32xf32> to vector<8x8xf32>
    %508 = vector.extract_strided_slice %476 {offsets = [0, 8], sizes = [8, 8], strides = [1, 1]} : vector<8x32xf32> to vector<8x8xf32>
    %cst_215 = arith.constant dense<0.000000e+00> : vector<8x8xf32>
    %509 = tpu.matmul %506, %507, %cst_215 {dimension_numbers = #tpu.dot_dimension_numbers<[1], [1], [0], [0], [0, 0, 1, 0], [], []>} : vector<8x8xf32>, vector<8x8xf32>, vector<8x8xf32> -> vector<8x8xf32>
    %cst_216 = arith.constant -1.000000e+09 : f32
    %510 = vector.shape_cast %7 : vector<1x8xi1> to vector<1x8xi1>
    %511 = vector.broadcast %510 : vector<1x8xi1> to vector<8x8xi1>
    %512 = vector.broadcast %cst_216 : f32 to vector<8x8xf32>
    %513 = arith.select %511, %512, %509 : vector<8x8xi1>, vector<8x8xf32>
    %cst_217 = arith.constant dense<0xFF800000> : vector<8xf32>
    %514 = vector.multi_reduction <maximumf>, %513, %cst_217 [1] : vector<8x8xf32> to vector<8xf32>
    %515 = vector.shape_cast %514 : vector<8xf32> to vector<8x1xf32>
    %516 = vector.broadcast %515 : vector<8x1xf32> to vector<8x8xf32>
    %517 = arith.subf %513, %516 : vector<8x8xf32>
    %518 = math.exp %517 : vector<8x8xf32>
    %cst_218 = arith.constant dense<0.000000e+00> : vector<8xf32>
    %519 = vector.multi_reduction <add>, %518, %cst_218 [1] : vector<8x8xf32> to vector<8xf32>
    %520 = vector.shape_cast %519 : vector<8xf32> to vector<8x1xf32>
    %521 = tpu.reciprocal %520 {approx = true} : vector<8x1xf32> -> vector<8x1xf32>
    %522 = vector.broadcast %521 : vector<8x1xf32> to vector<8x8xf32>
    %523 = arith.mulf %518, %522 : vector<8x8xf32>
    %cst_219 = arith.constant dense<0.000000e+00> : vector<8x8xf32>
    %524 = tpu.matmul %523, %508, %cst_219 {dimension_numbers = #tpu.dot_dimension_numbers<[1], [0], [0], [1], [0, 0, 1, 1], [], []>} : vector<8x8xf32>, vector<8x8xf32>, vector<8x8xf32> -> vector<8x8xf32>
    %525 = vector.extract_strided_slice %478 {offsets = [8, 0], sizes = [8, 32], strides = [1, 1]} : vector<32x32xf32> to vector<8x32xf32>
    %cst_220 = arith.constant dense<0.000000e+00> : vector<8x32xf32>
    %526 = tpu.matmul %524, %525, %cst_220 {dimension_numbers = #tpu.dot_dimension_numbers<[1], [0], [0], [1], [0, 0, 1, 1], [], []>} : vector<8x8xf32>, vector<8x32xf32>, vector<8x32xf32> -> vector<8x32xf32>
    %527 = arith.addf %505, %526 : vector<8x32xf32>
    %528 = vector.extract_strided_slice %482 {offsets = [0, 16], sizes = [8, 8], strides = [1, 1]} : vector<8x32xf32> to vector<8x8xf32>
    %529 = vector.extract_strided_slice %475 {offsets = [0, 16], sizes = [8, 8], strides = [1, 1]} : vector<8x32xf32> to vector<8x8xf32>
    %530 = vector.extract_strided_slice %476 {offsets = [0, 16], sizes = [8, 8], strides = [1, 1]} : vector<8x32xf32> to vector<8x8xf32>
    %cst_221 = arith.constant dense<0.000000e+00> : vector<8x8xf32>
    %531 = tpu.matmul %528, %529, %cst_221 {dimension_numbers = #tpu.dot_dimension_numbers<[1], [1], [0], [0], [0, 0, 1, 0], [], []>} : vector<8x8xf32>, vector<8x8xf32>, vector<8x8xf32> -> vector<8x8xf32>
    %cst_222 = arith.constant -1.000000e+09 : f32
    %532 = vector.shape_cast %7 : vector<1x8xi1> to vector<1x8xi1>
    %533 = vector.broadcast %532 : vector<1x8xi1> to vector<8x8xi1>
    %534 = vector.broadcast %cst_222 : f32 to vector<8x8xf32>
    %535 = arith.select %533, %534, %531 : vector<8x8xi1>, vector<8x8xf32>
    %cst_223 = arith.constant dense<0xFF800000> : vector<8xf32>
    %536 = vector.multi_reduction <maximumf>, %535, %cst_223 [1] : vector<8x8xf32> to vector<8xf32>
    %537 = vector.shape_cast %536 : vector<8xf32> to vector<8x1xf32>
    %538 = vector.broadcast %537 : vector<8x1xf32> to vector<8x8xf32>
    %539 = arith.subf %535, %538 : vector<8x8xf32>
    %540 = math.exp %539 : vector<8x8xf32>
    %cst_224 = arith.constant dense<0.000000e+00> : vector<8xf32>
    %541 = vector.multi_reduction <add>, %540, %cst_224 [1] : vector<8x8xf32> to vector<8xf32>
    %542 = vector.shape_cast %541 : vector<8xf32> to vector<8x1xf32>
    %543 = tpu.reciprocal %542 {approx = true} : vector<8x1xf32> -> vector<8x1xf32>
    %544 = vector.broadcast %543 : vector<8x1xf32> to vector<8x8xf32>
    %545 = arith.mulf %540, %544 : vector<8x8xf32>
    %cst_225 = arith.constant dense<0.000000e+00> : vector<8x8xf32>
    %546 = tpu.matmul %545, %530, %cst_225 {dimension_numbers = #tpu.dot_dimension_numbers<[1], [0], [0], [1], [0, 0, 1, 1], [], []>} : vector<8x8xf32>, vector<8x8xf32>, vector<8x8xf32> -> vector<8x8xf32>
    %547 = vector.extract_strided_slice %478 {offsets = [16, 0], sizes = [8, 32], strides = [1, 1]} : vector<32x32xf32> to vector<8x32xf32>
    %cst_226 = arith.constant dense<0.000000e+00> : vector<8x32xf32>
    %548 = tpu.matmul %546, %547, %cst_226 {dimension_numbers = #tpu.dot_dimension_numbers<[1], [0], [0], [1], [0, 0, 1, 1], [], []>} : vector<8x8xf32>, vector<8x32xf32>, vector<8x32xf32> -> vector<8x32xf32>
    %549 = arith.addf %527, %548 : vector<8x32xf32>
    %550 = vector.extract_strided_slice %482 {offsets = [0, 24], sizes = [8, 8], strides = [1, 1]} : vector<8x32xf32> to vector<8x8xf32>
    %551 = vector.extract_strided_slice %475 {offsets = [0, 24], sizes = [8, 8], strides = [1, 1]} : vector<8x32xf32> to vector<8x8xf32>
    %552 = vector.extract_strided_slice %476 {offsets = [0, 24], sizes = [8, 8], strides = [1, 1]} : vector<8x32xf32> to vector<8x8xf32>
    %cst_227 = arith.constant dense<0.000000e+00> : vector<8x8xf32>
    %553 = tpu.matmul %550, %551, %cst_227 {dimension_numbers = #tpu.dot_dimension_numbers<[1], [1], [0], [0], [0, 0, 1, 0], [], []>} : vector<8x8xf32>, vector<8x8xf32>, vector<8x8xf32> -> vector<8x8xf32>
    %cst_228 = arith.constant -1.000000e+09 : f32
    %554 = vector.shape_cast %7 : vector<1x8xi1> to vector<1x8xi1>
    %555 = vector.broadcast %554 : vector<1x8xi1> to vector<8x8xi1>
    %556 = vector.broadcast %cst_228 : f32 to vector<8x8xf32>
    %557 = arith.select %555, %556, %553 : vector<8x8xi1>, vector<8x8xf32>
    %cst_229 = arith.constant dense<0xFF800000> : vector<8xf32>
    %558 = vector.multi_reduction <maximumf>, %557, %cst_229 [1] : vector<8x8xf32> to vector<8xf32>
    %559 = vector.shape_cast %558 : vector<8xf32> to vector<8x1xf32>
    %560 = vector.broadcast %559 : vector<8x1xf32> to vector<8x8xf32>
    %561 = arith.subf %557, %560 : vector<8x8xf32>
    %562 = math.exp %561 : vector<8x8xf32>
    %cst_230 = arith.constant dense<0.000000e+00> : vector<8xf32>
    %563 = vector.multi_reduction <add>, %562, %cst_230 [1] : vector<8x8xf32> to vector<8xf32>
    %564 = vector.shape_cast %563 : vector<8xf32> to vector<8x1xf32>
    %565 = tpu.reciprocal %564 {approx = true} : vector<8x1xf32> -> vector<8x1xf32>
    %566 = vector.broadcast %565 : vector<8x1xf32> to vector<8x8xf32>
    %567 = arith.mulf %562, %566 : vector<8x8xf32>
    %cst_231 = arith.constant dense<0.000000e+00> : vector<8x8xf32>
    %568 = tpu.matmul %567, %552, %cst_231 {dimension_numbers = #tpu.dot_dimension_numbers<[1], [0], [0], [1], [0, 0, 1, 1], [], []>} : vector<8x8xf32>, vector<8x8xf32>, vector<8x8xf32> -> vector<8x8xf32>
    %569 = vector.extract_strided_slice %478 {offsets = [24, 0], sizes = [8, 32], strides = [1, 1]} : vector<32x32xf32> to vector<8x32xf32>
    %cst_232 = arith.constant dense<0.000000e+00> : vector<8x32xf32>
    %570 = tpu.matmul %568, %569, %cst_232 {dimension_numbers = #tpu.dot_dimension_numbers<[1], [0], [0], [1], [0, 0, 1, 1], [], []>} : vector<8x8xf32>, vector<8x32xf32>, vector<8x32xf32> -> vector<8x32xf32>
    %571 = arith.addf %549, %570 : vector<8x32xf32>
    %572 = vector.broadcast %480 : vector<1x32xf32> to vector<8x32xf32>
    %573 = arith.addf %571, %572 : vector<8x32xf32>
    %574 = arith.addf %438, %573 : vector<8x32xf32>
    %575 = vector.extract_strided_slice %314 {offsets = [2, 0], sizes = [1, 32], strides = [1, 1]} : vector<3x32xf32> to vector<1x32xf32>
    %576 = vector.extract_strided_slice %316 {offsets = [2, 0], sizes = [1, 32], strides = [1, 1]} : vector<3x32xf32> to vector<1x32xf32>
    %cst_233 = arith.constant dense<0.000000e+00> : vector<8xf32>
    %577 = vector.multi_reduction <add>, %574, %cst_233 [1] : vector<8x32xf32> to vector<8xf32>
    %578 = vector.shape_cast %577 : vector<8xf32> to vector<8x1xf32>
    %cst_234 = arith.constant 3.200000e+01 : f32
    %579 = vector.broadcast %cst_234 : f32 to vector<8x1xf32>
    %580 = arith.divf %578, %579 : vector<8x1xf32>
    %581 = vector.broadcast %580 : vector<8x1xf32> to vector<8x32xf32>
    %582 = arith.subf %574, %581 : vector<8x32xf32>
    %583 = arith.mulf %582, %582 : vector<8x32xf32>
    %cst_235 = arith.constant dense<0.000000e+00> : vector<8xf32>
    %584 = vector.multi_reduction <add>, %583, %cst_235 [1] : vector<8x32xf32> to vector<8xf32>
    %585 = vector.shape_cast %584 : vector<8xf32> to vector<8x1xf32>
    %cst_236 = arith.constant 0.0322580636 : f32
    %586 = vector.broadcast %cst_236 : f32 to vector<8x1xf32>
    %587 = arith.mulf %585, %586 : vector<8x1xf32>
    %588 = math.sqrt %587 : vector<8x1xf32>
    %589 = vector.broadcast %575 : vector<1x32xf32> to vector<8x32xf32>
    %590 = arith.mulf %589, %582 : vector<8x32xf32>
    %cst_237 = arith.constant 9.99999997E-7 : f32
    %591 = vector.broadcast %cst_237 : f32 to vector<8x1xf32>
    %592 = arith.addf %588, %591 : vector<8x1xf32>
    %593 = vector.broadcast %592 : vector<8x1xf32> to vector<8x32xf32>
    %594 = arith.divf %590, %593 : vector<8x32xf32>
    %595 = vector.broadcast %576 : vector<1x32xf32> to vector<8x32xf32>
    %596 = arith.addf %594, %595 : vector<8x32xf32>
    %c1_238 = arith.constant 1 : index
    %c0_239 = arith.constant 0 : index
    %c0_240 = arith.constant 0 : index
    %597 = vector.load %arg17[%c1_238, %c0_239, %c0_240] : memref<2x32x64xf32, #tpu.memory_space<vmem>>, vector<1x32x64xf32>
    %598 = vector.shape_cast %597 : vector<1x32x64xf32> to vector<32x64xf32>
    %cst_241 = arith.constant dense<0.000000e+00> : vector<8x64xf32>
    %599 = tpu.matmul %596, %598, %cst_241 {dimension_numbers = #tpu.dot_dimension_numbers<[1], [0], [0], [1], [0, 0, 1, 1], [], []>} : vector<8x32xf32>, vector<32x64xf32>, vector<8x64xf32> -> vector<8x64xf32>
    %c1_242 = arith.constant 1 : index
    %c0_243 = arith.constant 0 : index
    %c0_244 = arith.constant 0 : index
    %600 = vector.load %arg18[%c1_242, %c0_243, %c0_244] : memref<2x1x64xf32, #tpu.memory_space<vmem>>, vector<1x1x64xf32>
    %601 = vector.shape_cast %600 : vector<1x1x64xf32> to vector<1x64xf32>
    %602 = vector.broadcast %601 : vector<1x64xf32> to vector<8x64xf32>
    %603 = arith.addf %599, %602 : vector<8x64xf32>
    %cst_245 = arith.constant 0.000000e+00 : f32
    %604 = vector.broadcast %cst_245 : f32 to vector<8x64xf32>
    %605 = arith.maximumf %603, %604 : vector<8x64xf32>
    %c1_246 = arith.constant 1 : index
    %c0_247 = arith.constant 0 : index
    %c0_248 = arith.constant 0 : index
    %606 = vector.load %arg19[%c1_246, %c0_247, %c0_248] : memref<2x64x32xf32, #tpu.memory_space<vmem>>, vector<1x64x32xf32>
    %607 = vector.shape_cast %606 : vector<1x64x32xf32> to vector<64x32xf32>
    %cst_249 = arith.constant dense<0.000000e+00> : vector<8x32xf32>
    %608 = tpu.matmul %605, %607, %cst_249 {dimension_numbers = #tpu.dot_dimension_numbers<[1], [0], [0], [1], [0, 0, 1, 1], [], []>} : vector<8x64xf32>, vector<64x32xf32>, vector<8x32xf32> -> vector<8x32xf32>
    %609 = arith.addf %574, %608 : vector<8x32xf32>
    %c1_250 = arith.constant 1 : index
    %c0_251 = arith.constant 0 : index
    %c0_252 = arith.constant 0 : index
    %610 = vector.load %arg20[%c1_250, %c0_251, %c0_252] : memref<2x1x32xf32, #tpu.memory_space<vmem>>, vector<1x1x32xf32>
    %611 = vector.shape_cast %610 : vector<1x1x32xf32> to vector<1x32xf32>
    %612 = vector.broadcast %611 : vector<1x32xf32> to vector<8x32xf32>
    %613 = arith.addf %609, %612 : vector<8x32xf32>
    %c0_253 = arith.constant 0 : index
    %c0_254 = arith.constant 0 : index
    %614 = vector.load %arg21[%c0_253, %c0_254] : memref<1x32xf32, #tpu.memory_space<vmem>>, vector<1x32xf32>
    %c0_255 = arith.constant 0 : index
    %c0_256 = arith.constant 0 : index
    %615 = vector.load %arg22[%c0_255, %c0_256] : memref<1x32xf32, #tpu.memory_space<vmem>>, vector<1x32xf32>
    %cst_257 = arith.constant dense<0.000000e+00> : vector<8xf32>
    %616 = vector.multi_reduction <add>, %613, %cst_257 [1] : vector<8x32xf32> to vector<8xf32>
    %617 = vector.shape_cast %616 : vector<8xf32> to vector<8x1xf32>
    %cst_258 = arith.constant 3.200000e+01 : f32
    %618 = vector.broadcast %cst_258 : f32 to vector<8x1xf32>
    %619 = arith.divf %617, %618 : vector<8x1xf32>
    %620 = vector.broadcast %619 : vector<8x1xf32> to vector<8x32xf32>
    %621 = arith.subf %613, %620 : vector<8x32xf32>
    %622 = arith.mulf %621, %621 : vector<8x32xf32>
    %cst_259 = arith.constant dense<0.000000e+00> : vector<8xf32>
    %623 = vector.multi_reduction <add>, %622, %cst_259 [1] : vector<8x32xf32> to vector<8xf32>
    %624 = vector.shape_cast %623 : vector<8xf32> to vector<8x1xf32>
    %cst_260 = arith.constant 0.0322580636 : f32
    %625 = vector.broadcast %cst_260 : f32 to vector<8x1xf32>
    %626 = arith.mulf %624, %625 : vector<8x1xf32>
    %627 = math.sqrt %626 : vector<8x1xf32>
    %628 = vector.broadcast %614 : vector<1x32xf32> to vector<8x32xf32>
    %629 = arith.mulf %628, %621 : vector<8x32xf32>
    %cst_261 = arith.constant 9.99999997E-7 : f32
    %630 = vector.broadcast %cst_261 : f32 to vector<8x1xf32>
    %631 = arith.addf %627, %630 : vector<8x1xf32>
    %632 = vector.broadcast %631 : vector<8x1xf32> to vector<8x32xf32>
    %633 = arith.divf %629, %632 : vector<8x32xf32>
    %634 = vector.broadcast %615 : vector<1x32xf32> to vector<8x32xf32>
    %635 = arith.addf %633, %634 : vector<8x32xf32>
    %c0_262 = arith.constant 0 : index
    %c0_263 = arith.constant 0 : index
    %c0_264 = arith.constant 0 : index
    %636 = vector.load %arg23[%c0_262, %c0_263, %c0_264] : memref<1x8x32xf32, #tpu.memory_space<vmem>>, vector<1x8x32xf32>
    %637 = vector.shape_cast %636 : vector<1x8x32xf32> to vector<8x32xf32>
    %638 = vector.shape_cast %635 : vector<8x32xf32> to vector<1x8x32xf32>
    tpu.vector_store %arg23[%c0_262, %c0_263, %c0_264], %638 {strides = array<i32>} : memref<1x8x32xf32, #tpu.memory_space<vmem>>, vector<1x8x32xf32>,
    return
  }
  func.func @transform_0(%arg0: i32) -> (i32, i32, i32) {
    %c0_i32 = arith.constant 0 : i32
    %c0_i32_0 = arith.constant 0 : i32
    %c0_i32_1 = arith.constant 0 : i32
    return %arg0, %c0_i32, %c0_i32_0 : i32, i32, i32
  }
  func.func @transform_1(%arg0: i32) -> (i32, i32, i32) {
    %c0_i32 = arith.constant 0 : i32
    %c0_i32_0 = arith.constant 0 : i32
    %c0_i32_1 = arith.constant 0 : i32
    return %arg0, %c0_i32, %c0_i32_0 : i32, i32, i32
  }
  func.func @transform_2(%arg0: i32) -> (i32, i32, i32) {
    %c0_i32 = arith.constant 0 : i32
    %c0_i32_0 = arith.constant 0 : i32
    %c0_i32_1 = arith.constant 0 : i32
    return %arg0, %c0_i32, %c0_i32_0 : i32, i32, i32
  }
  func.func @transform_3(%arg0: i32) -> (i32, i32, i32) {
    %c0_i32 = arith.constant 0 : i32
    %c0_i32_0 = arith.constant 0 : i32
    %c0_i32_1 = arith.constant 0 : i32
    return %arg0, %c0_i32, %c0_i32_0 : i32, i32, i32
  }
  func.func @transform_4(%arg0: i32) -> (i32, i32, i32) {
    %c0_i32 = arith.constant 0 : i32
    %c0_i32_0 = arith.constant 0 : i32
    %c0_i32_1 = arith.constant 0 : i32
    %c0_i32_2 = arith.constant 0 : i32
    return %c0_i32, %c0_i32_0, %c0_i32_1 : i32, i32, i32
  }
  func.func @transform_5(%arg0: i32) -> (i32, i32, i32) {
    %c0_i32 = arith.constant 0 : i32
    %c0_i32_0 = arith.constant 0 : i32
    %c0_i32_1 = arith.constant 0 : i32
    %c0_i32_2 = arith.constant 0 : i32
    return %c0_i32, %c0_i32_0, %c0_i32_1 : i32, i32, i32
  }
  func.func @transform_6(%arg0: i32) -> (i32, i32, i32) {
    %c0_i32 = arith.constant 0 : i32
    %c0_i32_0 = arith.constant 0 : i32
    %c0_i32_1 = arith.constant 0 : i32
    %c0_i32_2 = arith.constant 0 : i32
    return %c0_i32, %c0_i32_0, %c0_i32_1 : i32, i32, i32
  }
  func.func @transform_7(%arg0: i32) -> (i32, i32, i32) {
    %c0_i32 = arith.constant 0 : i32
    %c0_i32_0 = arith.constant 0 : i32
    %c0_i32_1 = arith.constant 0 : i32
    %c0_i32_2 = arith.constant 0 : i32
    return %c0_i32, %c0_i32_0, %c0_i32_1 : i32, i32, i32
  }
  func.func @transform_8(%arg0: i32) -> (i32, i32, i32) {
    %c0_i32 = arith.constant 0 : i32
    %c0_i32_0 = arith.constant 0 : i32
    %c0_i32_1 = arith.constant 0 : i32
    %c0_i32_2 = arith.constant 0 : i32
    return %c0_i32, %c0_i32_0, %c0_i32_1 : i32, i32, i32
  }
  func.func @transform_9(%arg0: i32) -> (i32, i32, i32) {
    %c0_i32 = arith.constant 0 : i32
    %c0_i32_0 = arith.constant 0 : i32
    %c0_i32_1 = arith.constant 0 : i32
    %c0_i32_2 = arith.constant 0 : i32
    return %c0_i32, %c0_i32_0, %c0_i32_1 : i32, i32, i32
  }
  func.func @transform_10(%arg0: i32) -> (i32, i32, i32) {
    %c0_i32 = arith.constant 0 : i32
    %c0_i32_0 = arith.constant 0 : i32
    %c0_i32_1 = arith.constant 0 : i32
    %c0_i32_2 = arith.constant 0 : i32
    return %c0_i32, %c0_i32_0, %c0_i32_1 : i32, i32, i32
  }
  func.func @transform_11(%arg0: i32) -> (i32, i32, i32) {
    %c0_i32 = arith.constant 0 : i32
    %c0_i32_0 = arith.constant 0 : i32
    %c0_i32_1 = arith.constant 0 : i32
    %c0_i32_2 = arith.constant 0 : i32
    return %c0_i32, %c0_i32_0, %c0_i32_1 : i32, i32, i32
  }
  func.func @transform_12(%arg0: i32) -> (i32, i32, i32) {
    %c0_i32 = arith.constant 0 : i32
    %c0_i32_0 = arith.constant 0 : i32
    %c0_i32_1 = arith.constant 0 : i32
    %c0_i32_2 = arith.constant 0 : i32
    return %c0_i32, %c0_i32_0, %c0_i32_1 : i32, i32, i32
  }
  func.func @transform_13(%arg0: i32) -> (i32, i32, i32) {
    %c0_i32 = arith.constant 0 : i32
    %c0_i32_0 = arith.constant 0 : i32
    %c0_i32_1 = arith.constant 0 : i32
    %c0_i32_2 = arith.constant 0 : i32
    return %c0_i32, %c0_i32_0, %c0_i32_1 : i32, i32, i32
  }
  func.func @transform_14(%arg0: i32) -> (i32, i32, i32) {
    %c0_i32 = arith.constant 0 : i32
    %c0_i32_0 = arith.constant 0 : i32
    %c0_i32_1 = arith.constant 0 : i32
    %c0_i32_2 = arith.constant 0 : i32
    return %c0_i32, %c0_i32_0, %c0_i32_1 : i32, i32, i32
  }
  func.func @transform_15(%arg0: i32) -> (i32, i32, i32) {
    %c0_i32 = arith.constant 0 : i32
    %c0_i32_0 = arith.constant 0 : i32
    %c0_i32_1 = arith.constant 0 : i32
    %c0_i32_2 = arith.constant 0 : i32
    return %c0_i32, %c0_i32_0, %c0_i32_1 : i32, i32, i32
  }
  func.func @transform_16(%arg0: i32) -> (i32, i32, i32) {
    %c0_i32 = arith.constant 0 : i32
    %c0_i32_0 = arith.constant 0 : i32
    %c0_i32_1 = arith.constant 0 : i32
    %c0_i32_2 = arith.constant 0 : i32
    return %c0_i32, %c0_i32_0, %c0_i32_1 : i32, i32, i32
  }
  func.func @transform_17(%arg0: i32) -> (i32, i32, i32) {
    %c0_i32 = arith.constant 0 : i32
    %c0_i32_0 = arith.constant 0 : i32
    %c0_i32_1 = arith.constant 0 : i32
    %c0_i32_2 = arith.constant 0 : i32
    return %c0_i32, %c0_i32_0, %c0_i32_1 : i32, i32, i32
  }
  func.func @transform_18(%arg0: i32) -> (i32, i32, i32) {
    %c0_i32 = arith.constant 0 : i32
    %c0_i32_0 = arith.constant 0 : i32
    %c0_i32_1 = arith.constant 0 : i32
    %c0_i32_2 = arith.constant 0 : i32
    return %c0_i32, %c0_i32_0, %c0_i32_1 : i32, i32, i32
  }
  func.func @transform_19(%arg0: i32) -> (i32, i32, i32) {
    %c0_i32 = arith.constant 0 : i32
    %c0_i32_0 = arith.constant 0 : i32
    %c0_i32_1 = arith.constant 0 : i32
    %c0_i32_2 = arith.constant 0 : i32
    return %c0_i32, %c0_i32_0, %c0_i32_1 : i32, i32, i32
  }
  func.func @transform_20(%arg0: i32) -> (i32, i32) {
    %c0_i32 = arith.constant 0 : i32
    %c0_i32_0 = arith.constant 0 : i32
    %c0_i32_1 = arith.constant 0 : i32
    return %c0_i32, %c0_i32_0 : i32, i32
  }
  func.func @transform_21(%arg0: i32) -> (i32, i32) {
    %c0_i32 = arith.constant 0 : i32
    %c0_i32_0 = arith.constant 0 : i32
    %c0_i32_1 = arith.constant 0 : i32
    return %c0_i32, %c0_i32_0 : i32, i32
  }
  func.func @transform_22(%arg0: i32) -> (i32, i32, i32) {
    %c0_i32 = arith.constant 0 : i32
    %c0_i32_0 = arith.constant 0 : i32
    %c0_i32_1 = arith.constant 0 : i32
    return %arg0, %c0_i32, %c0_i32_0 : i32, i32, i32
  }
}

</mosaic_0001>

<llo_original>
// kernel: tpu_custom_call.1
$region0: #{tpu_custom_call.1}
  #allocation0 [shape = 'u32[]', space=smem, size = 0x4, offset = 0x4, fixed_abs, tag = 'smem constant byte address 0x4 - core index']
  #allocation1 [shape = 'u32[144,128]{1,0:T(1,128)}', space=vmem, size = 0x12000, scoped, tag = 'internal scratch']
  %s0 = inlined_call_operand.vmem [shape: f32[2,8,32], index: 0, kind: input, shape index: {}]
  %s1 = inlined_call_operand.hbm [shape: f32[2,8,32], index: 1, kind: input, shape index: {}]
  %s2 = inlined_call_operand.hbm [shape: f32[2,1,8], index: 2, kind: input, shape index: {}]
  %s3 = inlined_call_operand.vmem [shape: f32[2,8,8], index: 3, kind: input, shape index: {}]
  %s4 = inlined_call_operand.vmem [shape: f32[2,32,96], index: 4, kind: input, shape index: {}]
  %s5 = inlined_call_operand.hbm [shape: f32[2,1,96], index: 5, kind: input, shape index: {}]
  %s6 = inlined_call_operand.vmem [shape: f32[2,32,32], index: 6, kind: input, shape index: {}]
  %s7 = inlined_call_operand.hbm [shape: f32[2,1,32], index: 7, kind: input, shape index: {}]
  %s8 = inlined_call_operand.vmem [shape: f32[2,32,32], index: 8, kind: input, shape index: {}]
  %s9 = inlined_call_operand.hbm [shape: f32[2,1,32], index: 9, kind: input, shape index: {}]
  %s10 = inlined_call_operand.hbm [shape: f32[2,32,64], index: 10, kind: input, shape index: {}]
  %s11 = inlined_call_operand.hbm [shape: f32[2,1,64], index: 11, kind: input, shape index: {}]
  %s12 = inlined_call_operand.hbm [shape: f32[2,32,32], index: 12, kind: input, shape index: {}]
  %s13 = inlined_call_operand.hbm [shape: f32[2,1,32], index: 13, kind: input, shape index: {}]
  %s14 = inlined_call_operand.vmem [shape: f32[2,3,32], index: 14, kind: input, shape index: {}]
  %s15 = inlined_call_operand.vmem [shape: f32[2,3,32], index: 15, kind: input, shape index: {}]
  %s16 = inlined_call_operand.hbm [shape: f32[2,32,64], index: 16, kind: input, shape index: {}]
  %s17 = inlined_call_operand.hbm [shape: f32[2,1,64], index: 17, kind: input, shape index: {}]
  %s18 = inlined_call_operand.vmem [shape: f32[2,64,32], index: 18, kind: input, shape index: {}]
  %s19 = inlined_call_operand.vmem [shape: f32[2,1,32], index: 19, kind: input, shape index: {}]
  %s20 = inlined_call_operand.vmem [shape: f32[1,32], index: 20, kind: input, shape index: {}]
  %s21 = inlined_call_operand.vmem [shape: f32[1,32], index: 21, kind: input, shape index: {}]
  %s22 = inlined_call_operand.hbm [shape: f32[2,8,32], index: 22, kind: output, shape index: {}]
  %s23 = sld [smem:[#allocation0]]
  $region165: #{tpu_custom_call.1} parent=0
    _
  %s25 = ssub.s32 1, %s23
  %s26 = scalar_select 0, %s25, %s23
  $region1: #{tpu_custom_call.1} parent=0
    #allocation2 [shape = 'u8[8192]{0}', space=vmem, size = 0x2000, scoped, tag = 'input window, operand 1']
    #allocation3 [shape = 's32[2]{0}', space=sflag, size = 0x8, scoped, tag = 'scoped memory for tpu_custom_call.1']
    #allocation4 [shape = 's32[2]{0}', space=sflag, size = 0x8, scoped, tag = 'scoped memory for tpu_custom_call.1']
    #allocation5 [shape = 'u8[1024]{0}', space=vmem, size = 0x400, scoped, tag = 'input window, operand 2']
    #allocation6 [shape = 's32[2]{0}', space=sflag, size = 0x8, scoped, tag = 'scoped memory for tpu_custom_call.1']
    #allocation7 [shape = 'u8[1024]{0}', space=vmem, size = 0x400, scoped, tag = 'input window, operand 5, single buffered']
    #allocation8 [shape = 'u8[1024]{0}', space=vmem, size = 0x400, scoped, tag = 'input window, operand 7, single buffered']
    #allocation9 [shape = 's32[1]{0}', space=sflag, size = 0x4, scoped, tag = 'scoped memory for tpu_custom_call.1']
    #allocation10 [shape = 'u8[1024]{0}', space=vmem, size = 0x400, scoped, tag = 'input window, operand 9, single buffered']
    #allocation11 [shape = 'u8[32768]{0}', space=vmem, size = 0x8000, scoped, tag = 'input window, operand 10, single buffered']
    #allocation12 [shape = 's32[1]{0}', space=sflag, size = 0x4, scoped, tag = 'scoped memory for tpu_custom_call.1']
    #allocation13 [shape = 'u8[1024]{0}', space=vmem, size = 0x400, scoped, tag = 'input window, operand 11, single buffered']
    #allocation14 [shape = 'u8[32768]{0}', space=vmem, size = 0x8000, scoped, tag = 'input window, operand 12, single buffered']
    #allocation15 [shape = 's32[1]{0}', space=sflag, size = 0x4, scoped, tag = 'scoped memory for tpu_custom_call.1']
    #allocation16 [shape = 'u8[1024]{0}', space=vmem, size = 0x400, scoped, tag = 'input window, operand 13, single buffered']
    #allocation17 [shape = 'u8[32768]{0}', space=vmem, size = 0x8000, scoped, tag = 'input window, operand 16, single buffered']
    #allocation18 [shape = 's32[1]{0}', space=sflag, size = 0x4, scoped, tag = 'scoped memory for tpu_custom_call.1']
    #allocation19 [shape = 'u8[1024]{0}', space=vmem, size = 0x400, scoped, tag = 'input window, operand 17, single buffered']
    #allocation20 [shape = 'u8[8192]{0}', space=vmem, size = 0x2000, scoped, tag = 'output window, operand 0']
    %27 = vsyncpa [#allocation3], 0
    %s28 = scalar_lea.sflag [#allocation3], 1
    %29 = vsyncpa %s28, 0
    %30 = vsyncpa [#allocation6], 0
    %s31 = scalar_lea.sflag [#allocation6], 1
    %32 = vsyncpa %s31, 0
    %33 = vsyncpa [#allocation9], 0
    %34 = vsyncpa [#allocation12], 0
    %35 = vsyncpa [#allocation15], 0
    %36 = vsyncpa [#allocation18], 0
    %37 = vsyncpa [#allocation4], 0
    %s38 = scalar_lea.sflag [#allocation4], 1
    %39 = vsyncpa %s38, 0
    loop: start=0, step=1, limit=4
    $region2: #{tpu_custom_call.1} parent=1 // loop_pre_header
      _
    $region3: #{tpu_custom_call.1} parent=1 // loop_header
      %s41 = sphi 0, %s45
      %p42 = scmp.ge.s32.totalorder %s41, 4
      %s51 = sphi 0, %s53
      %s54 = sphi 0, %s51
      %s55 = sphi 0, %s54
      %s71 = sphi 0, %s55
      %s77 = sphi 0, %s79
      %s80 = sphi 0, %s77
      %s81 = sphi 0, %s80
      %s97 = sphi 0, %s81
      %s103 = sphi 0, %s105
      %s106 = sphi 0, %s103
      %s107 = sphi 0, %s106
      %s123 = sphi 0, %s107
      %s129 = sphi 0, %s131
      %s132 = sphi 0, %s129
      %s133 = sphi 0, %s132
      %s149 = sphi 0, %s133
      %s153 = sphi 0, %s153
      %s155 = sphi 0, %s153
      %s156 = sphi 0, %s155
      %s170 = sphi 0, %s156
      %s174 = sphi 0, %s174
      %s176 = sphi 0, %s174
      %s177 = sphi 0, %s176
      %s191 = sphi 0, %s177
      %s195 = sphi 0, %s195
      %s197 = sphi 0, %s195
      %s198 = sphi 0, %s197
      %s212 = sphi 0, %s198
      %s216 = sphi 0, %s216
      %s218 = sphi 0, %s216
      %s219 = sphi 0, %s218
      %s233 = sphi 0, %s219
      %s237 = sphi 0, %s237
      %s239 = sphi 0, %s237
      %s240 = sphi 0, %s239
      %s254 = sphi 0, %s240
      %s258 = sphi 0, %s258
      %s260 = sphi 0, %s258
      %s261 = sphi 0, %s260
      %s275 = sphi 0, %s261
      %s279 = sphi 0, %s279
      %s281 = sphi 0, %s279
      %s282 = sphi 0, %s281
      %s296 = sphi 0, %s282
      %s300 = sphi 0, %s300
      %s302 = sphi 0, %s300
      %s303 = sphi 0, %s302
      %s317 = sphi 0, %s303
      %s321 = sphi 0, %s321
      %s323 = sphi 0, %s321
      %s324 = sphi 0, %s323
      %s338 = sphi 0, %s324
      %s342 = sphi 0, %s342
      %s344 = sphi 0, %s342
      %s345 = sphi 0, %s344
      %s359 = sphi 0, %s345
      %s363 = sphi 0, %s363
      %s365 = sphi 0, %s363
      %s366 = sphi 0, %s365
      %s380 = sphi 0, %s366
      %s384 = sphi 0, %s384
      %s386 = sphi 0, %s384
      %s387 = sphi 0, %s386
      %s401 = sphi 0, %s387
      %s405 = sphi 0, %s405
      %s407 = sphi 0, %s405
      %s408 = sphi 0, %s407
      %s422 = sphi 0, %s408
      %s426 = sphi 0, %s426
      %s428 = sphi 0, %s426
      %s429 = sphi 0, %s428
      %s443 = sphi 0, %s429
      %s447 = sphi 0, %s447
      %s449 = sphi 0, %s447
      %s450 = sphi 0, %s449
      %s464 = sphi 0, %s450
      %s468 = sphi 0, %s468
      %s470 = sphi 0, %s468
      %s471 = sphi 0, %s470
      %s485 = sphi 0, %s471
      %s489 = sphi 0, %s489
      %s491 = sphi 0, %s489
      %s492 = sphi 0, %s491
      %s506 = sphi 0, %s492
      %s510 = sphi 0, %s510
      %s512 = sphi 0, %s510
      %s513 = sphi 0, %s512
      %s527 = sphi 0, %s513
      %s533 = sphi 0, %s535
      %s536 = sphi 0, %s533
      %s537 = sphi 0, %s536
      %s553 = sphi 0, %s537
    $region4: #{tpu_custom_call.1} parent=1 // loop_header_branch
      %44 = sbr.rel (%p42) target = $region8
    $region5: #{tpu_custom_call.1} parent=1 // loop_body
      %s46 = ssub.s32 %s41, 1
      %s47 = ssub.s32 %s41, 2
      %s48 = sadd.s32 %s41, 1
      %s49 = ssub.s32 %s41, %s48
      %p50 = scmp.eq.s32.totalorder %s49, 0
      %s52 = sadd.s32 %s51, 1
      %s53 = scalar_select %p50, %s51, %s52
      %p56 = pneg %p50
      %p57 = scmp.eq.s32.totalorder %s41, 1
      %p58 = por %p56, %p57
      %p59 = scmp.ne.s32.totalorder %s51, %s54
      %p60 = scmp.eq.s32.totalorder %s41, 0
      %p61 = por %p59, %p60
      %p62 = scmp.ne.s32.totalorder %s51, %s54
      %p63 = scmp.eq.s32.totalorder %s46, 1
      %p64 = por %p62, %p63
      %p65 = scmp.ne.s32.totalorder %s54, %s55
      %p66 = scmp.eq.s32.totalorder %s46, 0
      %p67 = por %p65, %p66
      %p68 = scmp.ne.s32.totalorder %s54, %s55
      %p69 = scmp.eq.s32.totalorder %s47, 1
      %p70 = por %p68, %p69
      %p72 = scmp.ne.s32.totalorder %s55, %s71
      %p73 = scmp.eq.s32.totalorder %s47, 0
      %p74 = por %p72, %p73
      %s75 = ssub.s32 %s41, %s48
      %p76 = scmp.eq.s32.totalorder %s75, 0
      %s78 = sadd.s32 %s77, 1
      %s79 = scalar_select %p76, %s77, %s78
      %p82 = pneg %p76
      %p83 = scmp.eq.s32.totalorder %s41, 1
      %p84 = por %p82, %p83
      %p85 = scmp.ne.s32.totalorder %s77, %s80
      %p86 = scmp.eq.s32.totalorder %s41, 0
      %p87 = por %p85, %p86
      %p88 = scmp.ne.s32.totalorder %s77, %s80
      %p89 = scmp.eq.s32.totalorder %s46, 1
      %p90 = por %p88, %p89
      %p91 = scmp.ne.s32.totalorder %s80, %s81
      %p92 = scmp.eq.s32.totalorder %s46, 0
      %p93 = por %p91, %p92
      %p94 = scmp.ne.s32.totalorder %s80, %s81
      %p95 = scmp.eq.s32.totalorder %s47, 1
      %p96 = por %p94, %p95
      %p98 = scmp.ne.s32.totalorder %s81, %s97
      %p99 = scmp.eq.s32.totalorder %s47, 0
      %p100 = por %p98, %p99
      %s101 = ssub.s32 %s41, %s48
      %p102 = scmp.eq.s32.totalorder %s101, 0
      %s104 = sadd.s32 %s103, 1
      %s105 = scalar_select %p102, %s103, %s104
      %p108 = pneg %p102
      %p109 = scmp.eq.s32.totalorder %s41, 1
      %p110 = por %p108, %p109
      %p111 = scmp.ne.s32.totalorder %s103, %s106
      %p112 = scmp.eq.s32.totalorder %s41, 0
      %p113 = por %p111, %p112
      %p114 = scmp.ne.s32.totalorder %s103, %s106
      %p115 = scmp.eq.s32.totalorder %s46, 1
      %p116 = por %p114, %p115
      %p117 = scmp.ne.s32.totalorder %s106, %s107
      %p118 = scmp.eq.s32.totalorder %s46, 0
      %p119 = por %p117, %p118
      %p120 = scmp.ne.s32.totalorder %s106, %s107
      %p121 = scmp.eq.s32.totalorder %s47, 1
      %p122 = por %p120, %p121
      %p124 = scmp.ne.s32.totalorder %s107, %s123
      %p125 = scmp.eq.s32.totalorder %s47, 0
      %p126 = por %p124, %p125
      %s127 = ssub.s32 %s41, %s48
      %p128 = scmp.eq.s32.totalorder %s127, 0
      %s130 = sadd.s32 %s129, 1
      %s131 = scalar_select %p128, %s129, %s130
      %p134 = pneg %p128
      %p135 = scmp.eq.s32.totalorder %s41, 1
      %p136 = por %p134, %p135
      %p137 = scmp.ne.s32.totalorder %s129, %s132
      %p138 = scmp.eq.s32.totalorder %s41, 0
      %p139 = por %p137, %p138
      %p140 = scmp.ne.s32.totalorder %s129, %s132
      %p141 = scmp.eq.s32.totalorder %s46, 1
      %p142 = por %p140, %p141
      %p143 = scmp.ne.s32.totalorder %s132, %s133
      %p144 = scmp.eq.s32.totalorder %s46, 0
      %p145 = por %p143, %p144
      %p146 = scmp.ne.s32.totalorder %s132, %s133
      %p147 = scmp.eq.s32.totalorder %s47, 1
      %p148 = por %p146, %p147
      %p150 = scmp.ne.s32.totalorder %s133, %s149
      %p151 = scmp.eq.s32.totalorder %s47, 0
      %p152 = por %p150, %p151
      %s154 = sadd.s32 %s153, 1
      %p157 = scmp.eq.s32.totalorder %s41, 1
      %p158 = scmp.ne.s32.totalorder %s153, %s155
      %p159 = scmp.eq.s32.totalorder %s41, 0
      %p160 = por %p158, %p159
      %p161 = scmp.ne.s32.totalorder %s153, %s155
      %p162 = scmp.eq.s32.totalorder %s46, 1
      %p163 = por %p161, %p162
      %p164 = scmp.ne.s32.totalorder %s155, %s156
      %p165 = scmp.eq.s32.totalorder %s46, 0
      %p166 = por %p164, %p165
      %p167 = scmp.ne.s32.totalorder %s155, %s156
      %p168 = scmp.eq.s32.totalorder %s47, 1
      %p169 = por %p167, %p168
      %p171 = scmp.ne.s32.totalorder %s156, %s170
      %p172 = scmp.eq.s32.totalorder %s47, 0
      %p173 = por %p171, %p172
      %s175 = sadd.s32 %s174, 1
      %p178 = scmp.eq.s32.totalorder %s41, 1
      %p179 = scmp.ne.s32.totalorder %s174, %s176
      %p180 = scmp.eq.s32.totalorder %s41, 0
      %p181 = por %p179, %p180
      %p182 = scmp.ne.s32.totalorder %s174, %s176
      %p183 = scmp.eq.s32.totalorder %s46, 1
      %p184 = por %p182, %p183
      %p185 = scmp.ne.s32.totalorder %s176, %s177
      %p186 = scmp.eq.s32.totalorder %s46, 0
      %p187 = por %p185, %p186
      %p188 = scmp.ne.s32.totalorder %s176, %s177
      %p189 = scmp.eq.s32.totalorder %s47, 1
      %p190 = por %p188, %p189
      %p192 = scmp.ne.s32.totalorder %s177, %s191
      %p193 = scmp.eq.s32.totalorder %s47, 0
      %p194 = por %p192, %p193
      %s196 = sadd.s32 %s195, 1
      %p199 = scmp.eq.s32.totalorder %s41, 1
      %p200 = scmp.ne.s32.totalorder %s195, %s197
      %p201 = scmp.eq.s32.totalorder %s41, 0
      %p202 = por %p200, %p201
      %p203 = scmp.ne.s32.totalorder %s195, %s197
      %p204 = scmp.eq.s32.totalorder %s46, 1
      %p205 = por %p203, %p204
      %p206 = scmp.ne.s32.totalorder %s197, %s198
      %p207 = scmp.eq.s32.totalorder %s46, 0
      %p208 = por %p206, %p207
      %p209 = scmp.ne.s32.totalorder %s197, %s198
      %p210 = scmp.eq.s32.totalorder %s47, 1
      %p211 = por %p209, %p210
      %p213 = scmp.ne.s32.totalorder %s198, %s212
      %p214 = scmp.eq.s32.totalorder %s47, 0
      %p215 = por %p213, %p214
      %s217 = sadd.s32 %s216, 1
      %p220 = scmp.eq.s32.totalorder %s41, 1
      %p221 = scmp.ne.s32.totalorder %s216, %s218
      %p222 = scmp.eq.s32.totalorder %s41, 0
      %p223 = por %p221, %p222
      %p224 = scmp.ne.s32.totalorder %s216, %s218
      %p225 = scmp.eq.s32.totalorder %s46, 1
      %p226 = por %p224, %p225
      %p227 = scmp.ne.s32.totalorder %s218, %s219
      %p228 = scmp.eq.s32.totalorder %s46, 0
      %p229 = por %p227, %p228
      %p230 = scmp.ne.s32.totalorder %s218, %s219
      %p231 = scmp.eq.s32.totalorder %s47, 1
      %p232 = por %p230, %p231
      %p234 = scmp.ne.s32.totalorder %s219, %s233
      %p235 = scmp.eq.s32.totalorder %s47, 0
      %p236 = por %p234, %p235
      %s238 = sadd.s32 %s237, 1
      %p241 = scmp.eq.s32.totalorder %s41, 1
      %p242 = scmp.ne.s32.totalorder %s237, %s239
      %p243 = scmp.eq.s32.totalorder %s41, 0
      %p244 = por %p242, %p243
      %p245 = scmp.ne.s32.totalorder %s237, %s239
      %p246 = scmp.eq.s32.totalorder %s46, 1
      %p247 = por %p245, %p246
      %p248 = scmp.ne.s32.totalorder %s239, %s240
      %p249 = scmp.eq.s32.totalorder %s46, 0
      %p250 = por %p248, %p249
      %p251 = scmp.ne.s32.totalorder %s239, %s240
      %p252 = scmp.eq.s32.totalorder %s47, 1
      %p253 = por %p251, %p252
      %p255 = scmp.ne.s32.totalorder %s240, %s254
      %p256 = scmp.eq.s32.totalorder %s47, 0
      %p257 = por %p255, %p256
      %s259 = sadd.s32 %s258, 1
      %p262 = scmp.eq.s32.totalorder %s41, 1
      %p263 = scmp.ne.s32.totalorder %s258, %s260
      %p264 = scmp.eq.s32.totalorder %s41, 0
      %p265 = por %p263, %p264
      %p266 = scmp.ne.s32.totalorder %s258, %s260
      %p267 = scmp.eq.s32.totalorder %s46, 1
      %p268 = por %p266, %p267
      %p269 = scmp.ne.s32.totalorder %s260, %s261
      %p270 = scmp.eq.s32.totalorder %s46, 0
      %p271 = por %p269, %p270
      %p272 = scmp.ne.s32.totalorder %s260, %s261
      %p273 = scmp.eq.s32.totalorder %s47, 1
      %p274 = por %p272, %p273
      %p276 = scmp.ne.s32.totalorder %s261, %s275
      %p277 = scmp.eq.s32.totalorder %s47, 0
      %p278 = por %p276, %p277
      %s280 = sadd.s32 %s279, 1
      %p283 = scmp.eq.s32.totalorder %s41, 1
      %p284 = scmp.ne.s32.totalorder %s279, %s281
      %p285 = scmp.eq.s32.totalorder %s41, 0
      %p286 = por %p284, %p285
      %p287 = scmp.ne.s32.totalorder %s279, %s281
      %p288 = scmp.eq.s32.totalorder %s46, 1
      %p289 = por %p287, %p288
      %p290 = scmp.ne.s32.totalorder %s281, %s282
      %p291 = scmp.eq.s32.totalorder %s46, 0
      %p292 = por %p290, %p291
      %p293 = scmp.ne.s32.totalorder %s281, %s282
      %p294 = scmp.eq.s32.totalorder %s47, 1
      %p295 = por %p293, %p294
      %p297 = scmp.ne.s32.totalorder %s282, %s296
      %p298 = scmp.eq.s32.totalorder %s47, 0
      %p299 = por %p297, %p298
      %s301 = sadd.s32 %s300, 1
      %p304 = scmp.eq.s32.totalorder %s41, 1
      %p305 = scmp.ne.s32.totalorder %s300, %s302
      %p306 = scmp.eq.s32.totalorder %s41, 0
      %p307 = por %p305, %p306
      %p308 = scmp.ne.s32.totalorder %s300, %s302
      %p309 = scmp.eq.s32.totalorder %s46, 1
      %p310 = por %p308, %p309
      %p311 = scmp.ne.s32.totalorder %s302, %s303
      %p312 = scmp.eq.s32.totalorder %s46, 0
      %p313 = por %p311, %p312
      %p314 = scmp.ne.s32.totalorder %s302, %s303
      %p315 = scmp.eq.s32.totalorder %s47, 1
      %p316 = por %p314, %p315
      %p318 = scmp.ne.s32.totalorder %s303, %s317
      %p319 = scmp.eq.s32.totalorder %s47, 0
      %p320 = por %p318, %p319
      %s322 = sadd.s32 %s321, 1
      %p325 = scmp.eq.s32.totalorder %s41, 1
      %p326 = scmp.ne.s32.totalorder %s321, %s323
      %p327 = scmp.eq.s32.totalorder %s41, 0
      %p328 = por %p326, %p327
      %p329 = scmp.ne.s32.totalorder %s321, %s323
      %p330 = scmp.eq.s32.totalorder %s46, 1
      %p331 = por %p329, %p330
      %p332 = scmp.ne.s32.totalorder %s323, %s324
      %p333 = scmp.eq.s32.totalorder %s46, 0
      %p334 = por %p332, %p333
      %p335 = scmp.ne.s32.totalorder %s323, %s324
      %p336 = scmp.eq.s32.totalorder %s47, 1
      %p337 = por %p335, %p336
      %p339 = scmp.ne.s32.totalorder %s324, %s338
      %p340 = scmp.eq.s32.totalorder %s47, 0
      %p341 = por %p339, %p340
      %s343 = sadd.s32 %s342, 1
      %p346 = scmp.eq.s32.totalorder %s41, 1
      %p347 = scmp.ne.s32.totalorder %s342, %s344
      %p348 = scmp.eq.s32.totalorder %s41, 0
      %p349 = por %p347, %p348
      %p350 = scmp.ne.s32.totalorder %s342, %s344
      %p351 = scmp.eq.s32.totalorder %s46, 1
      %p352 = por %p350, %p351
      %p353 = scmp.ne.s32.totalorder %s344, %s345
      %p354 = scmp.eq.s32.totalorder %s46, 0
      %p355 = por %p353, %p354
      %p356 = scmp.ne.s32.totalorder %s344, %s345
      %p357 = scmp.eq.s32.totalorder %s47, 1
      %p358 = por %p356, %p357
      %p360 = scmp.ne.s32.totalorder %s345, %s359
      %p361 = scmp.eq.s32.totalorder %s47, 0
      %p362 = por %p360, %p361
      %s364 = sadd.s32 %s363, 1
      %p367 = scmp.eq.s32.totalorder %s41, 1
      %p368 = scmp.ne.s32.totalorder %s363, %s365
      %p369 = scmp.eq.s32.totalorder %s41, 0
      %p370 = por %p368, %p369
      %p371 = scmp.ne.s32.totalorder %s363, %s365
      %p372 = scmp.eq.s32.totalorder %s46, 1
      %p373 = por %p371, %p372
      %p374 = scmp.ne.s32.totalorder %s365, %s366
      %p375 = scmp.eq.s32.totalorder %s46, 0
      %p376 = por %p374, %p375
      %p377 = scmp.ne.s32.totalorder %s365, %s366
      %p378 = scmp.eq.s32.totalorder %s47, 1
      %p379 = por %p377, %p378
      %p381 = scmp.ne.s32.totalorder %s366, %s380
      %p382 = scmp.eq.s32.totalorder %s47, 0
      %p383 = por %p381, %p382
      %s385 = sadd.s32 %s384, 1
      %p388 = scmp.eq.s32.totalorder %s41, 1
      %p389 = scmp.ne.s32.totalorder %s384, %s386
      %p390 = scmp.eq.s32.totalorder %s41, 0
      %p391 = por %p389, %p390
      %p392 = scmp.ne.s32.totalorder %s384, %s386
      %p393 = scmp.eq.s32.totalorder %s46, 1
      %p394 = por %p392, %p393
      %p395 = scmp.ne.s32.totalorder %s386, %s387
      %p396 = scmp.eq.s32.totalorder %s46, 0
      %p397 = por %p395, %p396
      %p398 = scmp.ne.s32.totalorder %s386, %s387
      %p399 = scmp.eq.s32.totalorder %s47, 1
      %p400 = por %p398, %p399
      %p402 = scmp.ne.s32.totalorder %s387, %s401
      %p403 = scmp.eq.s32.totalorder %s47, 0
      %p404 = por %p402, %p403
      %s406 = sadd.s32 %s405, 1
      %p409 = scmp.eq.s32.totalorder %s41, 1
      %p410 = scmp.ne.s32.totalorder %s405, %s407
      %p411 = scmp.eq.s32.totalorder %s41, 0
      %p412 = por %p410, %p411
      %p413 = scmp.ne.s32.totalorder %s405, %s407
      %p414 = scmp.eq.s32.totalorder %s46, 1
      %p415 = por %p413, %p414
      %p416 = scmp.ne.s32.totalorder %s407, %s408
      %p417 = scmp.eq.s32.totalorder %s46, 0
      %p418 = por %p416, %p417
      %p419 = scmp.ne.s32.totalorder %s407, %s408
      %p420 = scmp.eq.s32.totalorder %s47, 1
      %p421 = por %p419, %p420
      %p423 = scmp.ne.s32.totalorder %s408, %s422
      %p424 = scmp.eq.s32.totalorder %s47, 0
      %p425 = por %p423, %p424
      %s427 = sadd.s32 %s426, 1
      %p430 = scmp.eq.s32.totalorder %s41, 1
      %p431 = scmp.ne.s32.totalorder %s426, %s428
      %p432 = scmp.eq.s32.totalorder %s41, 0
      %p433 = por %p431, %p432
      %p434 = scmp.ne.s32.totalorder %s426, %s428
      %p435 = scmp.eq.s32.totalorder %s46, 1
      %p436 = por %p434, %p435
      %p437 = scmp.ne.s32.totalorder %s428, %s429
      %p438 = scmp.eq.s32.totalorder %s46, 0
      %p439 = por %p437, %p438
      %p440 = scmp.ne.s32.totalorder %s428, %s429
      %p441 = scmp.eq.s32.totalorder %s47, 1
      %p442 = por %p440, %p441
      %p444 = scmp.ne.s32.totalorder %s429, %s443
      %p445 = scmp.eq.s32.totalorder %s47, 0
      %p446 = por %p444, %p445
      %s448 = sadd.s32 %s447, 1
      %p451 = scmp.eq.s32.totalorder %s41, 1
      %p452 = scmp.ne.s32.totalorder %s447, %s449
      %p453 = scmp.eq.s32.totalorder %s41, 0
      %p454 = por %p452, %p453
      %p455 = scmp.ne.s32.totalorder %s447, %s449
      %p456 = scmp.eq.s32.totalorder %s46, 1
      %p457 = por %p455, %p456
      %p458 = scmp.ne.s32.totalorder %s449, %s450
      %p459 = scmp.eq.s32.totalorder %s46, 0
      %p460 = por %p458, %p459
      %p461 = scmp.ne.s32.totalorder %s449, %s450
      %p462 = scmp.eq.s32.totalorder %s47, 1
      %p463 = por %p461, %p462
      %p465 = scmp.ne.s32.totalorder %s450, %s464
      %p466 = scmp.eq.s32.totalorder %s47, 0
      %p467 = por %p465, %p466
      %s469 = sadd.s32 %s468, 1
      %p472 = scmp.eq.s32.totalorder %s41, 1
      %p473 = scmp.ne.s32.totalorder %s468, %s470
      %p474 = scmp.eq.s32.totalorder %s41, 0
      %p475 = por %p473, %p474
      %p476 = scmp.ne.s32.totalorder %s468, %s470
      %p477 = scmp.eq.s32.totalorder %s46, 1
      %p478 = por %p476, %p477
      %p479 = scmp.ne.s32.totalorder %s470, %s471
      %p480 = scmp.eq.s32.totalorder %s46, 0
      %p481 = por %p479, %p480
      %p482 = scmp.ne.s32.totalorder %s470, %s471
      %p483 = scmp.eq.s32.totalorder %s47, 1
      %p484 = por %p482, %p483
      %p486 = scmp.ne.s32.totalorder %s471, %s485
      %p487 = scmp.eq.s32.totalorder %s47, 0
      %p488 = por %p486, %p487
      %s490 = sadd.s32 %s489, 1
      %p493 = scmp.eq.s32.totalorder %s41, 1
      %p494 = scmp.ne.s32.totalorder %s489, %s491
      %p495 = scmp.eq.s32.totalorder %s41, 0
      %p496 = por %p494, %p495
      %p497 = scmp.ne.s32.totalorder %s489, %s491
      %p498 = scmp.eq.s32.totalorder %s46, 1
      %p499 = por %p497, %p498
      %p500 = scmp.ne.s32.totalorder %s491, %s492
      %p501 = scmp.eq.s32.totalorder %s46, 0
      %p502 = por %p500, %p501
      %p503 = scmp.ne.s32.totalorder %s491, %s492
      %p504 = scmp.eq.s32.totalorder %s47, 1
      %p505 = por %p503, %p504
      %p507 = scmp.ne.s32.totalorder %s492, %s506
      %p508 = scmp.eq.s32.totalorder %s47, 0
      %p509 = por %p507, %p508
      %s511 = sadd.s32 %s510, 1
      %p514 = scmp.eq.s32.totalorder %s41, 1
      %p515 = scmp.ne.s32.totalorder %s510, %s512
      %p516 = scmp.eq.s32.totalorder %s41, 0
      %p517 = por %p515, %p516
      %p518 = scmp.ne.s32.totalorder %s510, %s512
      %p519 = scmp.eq.s32.totalorder %s46, 1
      %p520 = por %p518, %p519
      %p521 = scmp.ne.s32.totalorder %s512, %s513
      %p522 = scmp.eq.s32.totalorder %s46, 0
      %p523 = por %p521, %p522
      %p524 = scmp.ne.s32.totalorder %s512, %s513
      %p525 = scmp.eq.s32.totalorder %s47, 1
      %p526 = por %p524, %p525
      %p528 = scmp.ne.s32.totalorder %s513, %s527
      %p529 = scmp.eq.s32.totalorder %s47, 0
      %p530 = por %p528, %p529
      %s531 = ssub.s32 %s41, %s48
      %p532 = scmp.eq.s32.totalorder %s531, 0
      %s534 = sadd.s32 %s533, 1
      %s535 = scalar_select %p532, %s533, %s534
      %p538 = pneg %p532
      %p539 = scmp.eq.s32.totalorder %s41, 1
      %p540 = por %p538, %p539
      %p541 = scmp.ne.s32.totalorder %s533, %s536
      %p542 = scmp.eq.s32.totalorder %s41, 0
      %p543 = por %p541, %p542
      %p544 = scmp.ne.s32.totalorder %s533, %s536
      %p545 = scmp.eq.s32.totalorder %s46, 1
      %p546 = por %p544, %p545
      %p547 = scmp.ne.s32.totalorder %s536, %s537
      %p548 = scmp.eq.s32.totalorder %s46, 0
      %p549 = por %p547, %p548
      %p550 = scmp.ne.s32.totalorder %s536, %s537
      %p551 = scmp.eq.s32.totalorder %s47, 1
      %p552 = por %p550, %p551
      %p554 = scmp.ne.s32.totalorder %s537, %s553
      %p555 = scmp.eq.s32.totalorder %s47, 0
      %p556 = por %p554, %p555
      %p557 = scmp.le.s32.totalorder 1, %s41
      %p558 = scmp.lt.s32.totalorder %s41, 3
      %p559 = pnand %p557, %p558
      %p560 = pneg %p559
      // Predicated region
      $region9: #{tpu_custom_call.1} parent=5 // pred_check
        _
      $region10: #{tpu_custom_call.1} parent=5 // pred_check_branch
        %562 = sbr.rel (%p559) target = $region12
      $region11: #{tpu_custom_call.1} parent=5 // pred_region
        %s563 = ssub.s32 %s41, 1
        // Predicated region
        $region13: #{tpu_custom_call.1} parent=11 // pred_check
          %p564 = pneg %p166
        $region14: #{tpu_custom_call.1} parent=11 // pred_check_branch
          %566 = sbr.rel (%p564) target = $region16
        $region15: #{tpu_custom_call.1} parent=11 // pred_region
          _
        $region16: #{tpu_custom_call.1} parent=11 // pred_fallthru
          _
        // Predicated region
        $region17: #{tpu_custom_call.1} parent=11 // pred_check
          %p567 = pneg %p187
        $region18: #{tpu_custom_call.1} parent=11 // pred_check_branch
          %569 = sbr.rel (%p567) target = $region20
        $region19: #{tpu_custom_call.1} parent=11 // pred_region
          %s571 = ssub.s32 32, 32
          %572 = vsyncadd [#allocation6], %s571
          %s573 = sshll.u32 [#allocation7], 4
          %s574 = int_to_ptr.vmem [resolvable:$true] %s573
          %579 = dma.hbm_to_vmem [thread:$0]  %s5, 32, %s574, [#allocation6], 16, 16, 1
        $region20: #{tpu_custom_call.1} parent=11 // pred_fallthru
          _
        // Predicated region
        $region21: #{tpu_custom_call.1} parent=11 // pred_check
          %p580 = pneg %p208
        $region22: #{tpu_custom_call.1} parent=11 // pred_check_branch
          %582 = sbr.rel (%p580) target = $region24
        $region23: #{tpu_custom_call.1} parent=11 // pred_region
          _
        $region24: #{tpu_custom_call.1} parent=11 // pred_fallthru
          _
        // Predicated region
        $region25: #{tpu_custom_call.1} parent=11 // pred_check
          %p583 = pneg %p229
        $region26: #{tpu_custom_call.1} parent=11 // pred_check_branch
          %585 = sbr.rel (%p583) target = $region28
        $region27: #{tpu_custom_call.1} parent=11 // pred_region
          %s587 = ssub.s32 32, 32
          %588 = vsyncadd [#allocation9], %s587
          %s589 = sshll.u32 [#allocation8], 4
          %s590 = int_to_ptr.vmem [resolvable:$true] %s589
          %595 = dma.hbm_to_vmem [thread:$0]  %s7, 32, %s590, [#allocation9], 16, 16, 1
        $region28: #{tpu_custom_call.1} parent=11 // pred_fallthru
          _
        // Predicated region
        $region29: #{tpu_custom_call.1} parent=11 // pred_check
          %p596 = pneg %p250
        $region30: #{tpu_custom_call.1} parent=11 // pred_check_branch
          %598 = sbr.rel (%p596) target = $region32
        $region31: #{tpu_custom_call.1} parent=11 // pred_region
          _
        $region32: #{tpu_custom_call.1} parent=11 // pred_fallthru
          _
        // Predicated region
        $region33: #{tpu_custom_call.1} parent=11 // pred_check
          %p599 = pneg %p271
        $region34: #{tpu_custom_call.1} parent=11 // pred_check_branch
          %601 = sbr.rel (%p599) target = $region36
        $region35: #{tpu_custom_call.1} parent=11 // pred_region
          %s603 = ssub.s32 32, 32
          %604 = vsyncadd [#allocation9], %s603
          %s605 = sshll.u32 [#allocation10], 4
          %s606 = int_to_ptr.vmem [resolvable:$true] %s605
          %611 = dma.hbm_to_vmem [thread:$0]  %s9, 32, %s606, [#allocation9], 16, 16, 1
        $region36: #{tpu_custom_call.1} parent=11 // pred_fallthru
          _
        // Predicated region
        $region37: #{tpu_custom_call.1} parent=11 // pred_check
          %p612 = pneg %p292
        $region38: #{tpu_custom_call.1} parent=11 // pred_check_branch
          %614 = sbr.rel (%p612) target = $region40
        $region39: #{tpu_custom_call.1} parent=11 // pred_region
          %s616 = ssub.s32 1024, 1024
          %617 = vsyncadd [#allocation12], %s616
          %s618 = sshll.u32 [#allocation11], 4
          %s619 = int_to_ptr.vmem [resolvable:$true] %s618
          %624 = dma.hbm_to_vmem [thread:$0]  %s10, 1024, %s619, [#allocation12], 128, 128, 8
        $region40: #{tpu_custom_call.1} parent=11 // pred_fallthru
          _
        // Predicated region
        $region41: #{tpu_custom_call.1} parent=11 // pred_check
          %p625 = pneg %p313
        $region42: #{tpu_custom_call.1} parent=11 // pred_check_branch
          %627 = sbr.rel (%p625) target = $region44
        $region43: #{tpu_custom_call.1} parent=11 // pred_region
          %s629 = ssub.s32 32, 32
          %630 = vsyncadd [#allocation12], %s629
          %s631 = sshll.u32 [#allocation13], 4
          %s632 = int_to_ptr.vmem [resolvable:$true] %s631
          %637 = dma.hbm_to_vmem [thread:$0]  %s11, 32, %s632, [#allocation12], 16, 16, 1
        $region44: #{tpu_custom_call.1} parent=11 // pred_fallthru
          _
        // Predicated region
        $region45: #{tpu_custom_call.1} parent=11 // pred_check
          %p638 = pneg %p334
        $region46: #{tpu_custom_call.1} parent=11 // pred_check_branch
          %640 = sbr.rel (%p638) target = $region48
        $region47: #{tpu_custom_call.1} parent=11 // pred_region
          %s642 = ssub.s32 1024, 1024
          %643 = vsyncadd [#allocation15], %s642
          %s644 = sshll.u32 [#allocation14], 4
          %s645 = int_to_ptr.vmem [resolvable:$true] %s644
          %650 = dma.hbm_to_vmem [thread:$0]  %s12, 1024, %s645, [#allocation15], 128, 128, 8
        $region48: #{tpu_custom_call.1} parent=11 // pred_fallthru
          _
        // Predicated region
        $region49: #{tpu_custom_call.1} parent=11 // pred_check
          %p651 = pneg %p355
        $region50: #{tpu_custom_call.1} parent=11 // pred_check_branch
          %653 = sbr.rel (%p651) target = $region52
        $region51: #{tpu_custom_call.1} parent=11 // pred_region
          %s655 = ssub.s32 32, 32
          %656 = vsyncadd [#allocation15], %s655
          %s657 = sshll.u32 [#allocation16], 4
          %s658 = int_to_ptr.vmem [resolvable:$true] %s657
          %663 = dma.hbm_to_vmem [thread:$0]  %s13, 32, %s658, [#allocation15], 16, 16, 1
        $region52: #{tpu_custom_call.1} parent=11 // pred_fallthru
          _
        // Predicated region
        $region53: #{tpu_custom_call.1} parent=11 // pred_check
          %p664 = pneg %p376
        $region54: #{tpu_custom_call.1} parent=11 // pred_check_branch
          %666 = sbr.rel (%p664) target = $region56
        $region55: #{tpu_custom_call.1} parent=11 // pred_region
          _
        $region56: #{tpu_custom_call.1} parent=11 // pred_fallthru
          _
        // Predicated region
        $region57: #{tpu_custom_call.1} parent=11 // pred_check
          %p667 = pneg %p397
        $region58: #{tpu_custom_call.1} parent=11 // pred_check_branch
          %669 = sbr.rel (%p667) target = $region60
        $region59: #{tpu_custom_call.1} parent=11 // pred_region
          _
        $region60: #{tpu_custom_call.1} parent=11 // pred_fallthru
          _
        // Predicated region
        $region61: #{tpu_custom_call.1} parent=11 // pred_check
          %p670 = pneg %p418
        $region62: #{tpu_custom_call.1} parent=11 // pred_check_branch
          %672 = sbr.rel (%p670) target = $region64
        $region63: #{tpu_custom_call.1} parent=11 // pred_region
          %s674 = ssub.s32 1024, 1024
          %675 = vsyncadd [#allocation18], %s674
          %s676 = sshll.u32 [#allocation17], 4
          %s677 = int_to_ptr.vmem [resolvable:$true] %s676
          %682 = dma.hbm_to_vmem [thread:$0]  %s16, 1024, %s677, [#allocation18], 128, 128, 8
        $region64: #{tpu_custom_call.1} parent=11 // pred_fallthru
          _
        // Predicated region
        $region65: #{tpu_custom_call.1} parent=11 // pred_check
          %p683 = pneg %p439
        $region66: #{tpu_custom_call.1} parent=11 // pred_check_branch
          %685 = sbr.rel (%p683) target = $region68
        $region67: #{tpu_custom_call.1} parent=11 // pred_region
          %s687 = ssub.s32 32, 32
          %688 = vsyncadd [#allocation18], %s687
          %s689 = sshll.u32 [#allocation19], 4
          %s690 = int_to_ptr.vmem [resolvable:$true] %s689
          %695 = dma.hbm_to_vmem [thread:$0]  %s17, 32, %s690, [#allocation18], 16, 16, 1
        $region68: #{tpu_custom_call.1} parent=11 // pred_fallthru
          _
        // Predicated region
        $region69: #{tpu_custom_call.1} parent=11 // pred_check
          %p696 = pneg %p460
        $region70: #{tpu_custom_call.1} parent=11 // pred_check_branch
          %698 = sbr.rel (%p696) target = $region72
        $region71: #{tpu_custom_call.1} parent=11 // pred_region
          _
        $region72: #{tpu_custom_call.1} parent=11 // pred_fallthru
          _
        // Predicated region
        $region73: #{tpu_custom_call.1} parent=11 // pred_check
          %p699 = pneg %p481
        $region74: #{tpu_custom_call.1} parent=11 // pred_check_branch
          %701 = sbr.rel (%p699) target = $region76
        $region75: #{tpu_custom_call.1} parent=11 // pred_region
          _
        $region76: #{tpu_custom_call.1} parent=11 // pred_fallthru
          _
        // Predicated region
        $region77: #{tpu_custom_call.1} parent=11 // pred_check
          %p702 = pneg %p502
        $region78: #{tpu_custom_call.1} parent=11 // pred_check_branch
          %704 = sbr.rel (%p702) target = $region80
        $region79: #{tpu_custom_call.1} parent=11 // pred_region
          _
        $region80: #{tpu_custom_call.1} parent=11 // pred_fallthru
          _
        // Predicated region
        $region81: #{tpu_custom_call.1} parent=11 // pred_check
          %p705 = pneg %p523
        $region82: #{tpu_custom_call.1} parent=11 // pred_check_branch
          %707 = sbr.rel (%p705) target = $region84
        $region83: #{tpu_custom_call.1} parent=11 // pred_region
          _
        $region84: #{tpu_custom_call.1} parent=11 // pred_fallthru
          _
      $region12: #{tpu_custom_call.1} parent=5 // pred_fallthru
        _
      %p708 = scmp.lt.s32.totalorder %s41, 2
      // Predicated region
      $region85: #{tpu_custom_call.1} parent=5 // pred_check
        %p709 = pneg %p708
      $region86: #{tpu_custom_call.1} parent=5 // pred_check_branch
        %711 = sbr.rel (%p709) target = $region88
      $region87: #{tpu_custom_call.1} parent=5 // pred_region
        // Predicated region
        $region89: #{tpu_custom_call.1} parent=87 // pred_check
          %p712 = pneg %p61
        $region90: #{tpu_custom_call.1} parent=87 // pred_check_branch
          %714 = sbr.rel (%p712) target = $region92
        $region91: #{tpu_custom_call.1} parent=87 // pred_region
          %p715 = scmp.lt.s32.totalorder %s41, 1
          %s716 = scalar_select %p715, %s41, 1
          %s717 = smul.addr %s716, 8
          %s718 = scalar_lea.vmem %s0, %s717
        $region92: #{tpu_custom_call.1} parent=87 // pred_fallthru
          _
        // Predicated region
        $region93: #{tpu_custom_call.1} parent=87 // pred_check
          %p719 = pneg %p87
        $region94: #{tpu_custom_call.1} parent=87 // pred_check_branch
          %721 = sbr.rel (%p719) target = $region96
        $region95: #{tpu_custom_call.1} parent=87 // pred_region
          %s722 = sand.u32 %s77, 1
          %s723 = scalar_lea.sflag [#allocation3], %s722
          %s724 = sand.u32 %s77, 1
          %s725 = smul.addr %s724, 8
          %s726 = scalar_lea.vmem [#allocation2], %s725
          %s728 = ssub.s32 128, 128
          %729 = vsyncadd %s723, %s728
          %s730 = smul.addr %s41, 128
          %s731 = scalar_lea.hbm %s1, %s730
          %s733 = sshll.u32 %s726, 4
          %s734 = int_to_ptr.vmem [resolvable:$true] %s733
          %736 = dma.hbm_to_vmem [thread:$0]  %s731, 128, %s734, %s723
        $region96: #{tpu_custom_call.1} parent=87 // pred_fallthru
          _
        // Predicated region
        $region97: #{tpu_custom_call.1} parent=87 // pred_check
          %p737 = pneg %p113
        $region98: #{tpu_custom_call.1} parent=87 // pred_check_branch
          %739 = sbr.rel (%p737) target = $region100
        $region99: #{tpu_custom_call.1} parent=87 // pred_region
          %s740 = sand.u32 %s41, 1
          %s741 = scalar_lea.sflag [#allocation6], %s740
          %s742 = sand.u32 %s103, 1
          %s743 = scalar_lea.vmem [#allocation5], %s742
          %s745 = ssub.s32 16, 16
          %746 = vsyncadd %s741, %s745
          %s747 = smul.addr %s41, 16
          %s748 = scalar_lea.hbm %s2, %s747
          %s750 = sshll.u32 %s743, 4
          %s751 = int_to_ptr.vmem [resolvable:$true] %s750
          %753 = dma.hbm_to_vmem [thread:$0]  %s748, 16, %s751, %s741
        $region100: #{tpu_custom_call.1} parent=87 // pred_fallthru
          _
        // Predicated region
        $region101: #{tpu_custom_call.1} parent=87 // pred_check
          %p754 = pneg %p139
        $region102: #{tpu_custom_call.1} parent=87 // pred_check_branch
          %756 = sbr.rel (%p754) target = $region104
        $region103: #{tpu_custom_call.1} parent=87 // pred_region
          %p757 = scmp.lt.s32.totalorder %s41, 1
          %s758 = scalar_select %p757, %s41, 1
          %s759 = smul.addr %s758, 8
          %s760 = scalar_lea.vmem %s3, %s759
        $region104: #{tpu_custom_call.1} parent=87 // pred_fallthru
          _
      $region88: #{tpu_custom_call.1} parent=5 // pred_fallthru
        _
      %p761 = scmp.le.s32.totalorder 1, %s41
      %p762 = scmp.lt.s32.totalorder %s41, 3
      %p763 = pnand %p761, %p762
      %p764 = pneg %p763
      // Predicated region
      $region105: #{tpu_custom_call.1} parent=5 // pred_check
        _
      $region106: #{tpu_custom_call.1} parent=5 // pred_check_branch
        %766 = sbr.rel (%p763) target = $region108
      $region107: #{tpu_custom_call.1} parent=5 // pred_region
        %s767 = ssub.s32 %s41, 1
        %s768 = sand.u32 %s80, 1
        %s769 = scalar_lea.sflag [#allocation3], %s768
        %s770 = sand.u32 %s80, 1
        %s771 = smul.addr %s770, 8
        %s772 = scalar_lea.vmem [#allocation2], %s771
        // Predicated region
        $region109: #{tpu_custom_call.1} parent=107 // pred_check
          %p773 = pneg %p93
        $region110: #{tpu_custom_call.1} parent=107 // pred_check_branch
          %775 = sbr.rel (%p773) target = $region112
        $region111: #{tpu_custom_call.1} parent=107 // pred_region
          %776 = dma.done %s769, 128
        $region112: #{tpu_custom_call.1} parent=107 // pred_fallthru
          _
        %s777 = sand.u32 %s46, 1
        %s778 = scalar_lea.sflag [#allocation6], %s777
        %s779 = sand.u32 %s106, 1
        %s780 = scalar_lea.vmem [#allocation5], %s779
        // Predicated region
        $region113: #{tpu_custom_call.1} parent=107 // pred_check
          %p781 = pneg %p119
        $region114: #{tpu_custom_call.1} parent=107 // pred_check_branch
          %783 = sbr.rel (%p781) target = $region116
        $region115: #{tpu_custom_call.1} parent=107 // pred_region
          %784 = dma.done %s778, 16
        $region116: #{tpu_custom_call.1} parent=107 // pred_fallthru
          _
        // Predicated region
        $region117: #{tpu_custom_call.1} parent=107 // pred_check
          %p785 = pneg %p187
        $region118: #{tpu_custom_call.1} parent=107 // pred_check_branch
          %787 = sbr.rel (%p785) target = $region120
        $region119: #{tpu_custom_call.1} parent=107 // pred_region
          %788 = dma.done [#allocation6], 32
        $region120: #{tpu_custom_call.1} parent=107 // pred_fallthru
          _
        // Predicated region
        $region121: #{tpu_custom_call.1} parent=107 // pred_check
          %p789 = pneg %p229
        $region122: #{tpu_custom_call.1} parent=107 // pred_check_branch
          %791 = sbr.rel (%p789) target = $region124
        $region123: #{tpu_custom_call.1} parent=107 // pred_region
          %792 = dma.done [#allocation9], 32
        $region124: #{tpu_custom_call.1} parent=107 // pred_fallthru
          _
        // Predicated region
        $region125: #{tpu_custom_call.1} parent=107 // pred_check
          %p793 = pneg %p271
        $region126: #{tpu_custom_call.1} parent=107 // pred_check_branch
          %795 = sbr.rel (%p793) target = $region128
        $region127: #{tpu_custom_call.1} parent=107 // pred_region
          %796 = dma.done [#allocation9], 32
        $region128: #{tpu_custom_call.1} parent=107 // pred_fallthru
          _
        // Predicated region
        $region129: #{tpu_custom_call.1} parent=107 // pred_check
          %p797 = pneg %p292
        $region130: #{tpu_custom_call.1} parent=107 // pred_check_branch
          %799 = sbr.rel (%p797) target = $region132
        $region131: #{tpu_custom_call.1} parent=107 // pred_region
          %800 = dma.done [#allocation12], 1024
        $region132: #{tpu_custom_call.1} parent=107 // pred_fallthru
          _
        // Predicated region
        $region133: #{tpu_custom_call.1} parent=107 // pred_check
          %p801 = pneg %p313
        $region134: #{tpu_custom_call.1} parent=107 // pred_check_branch
          %803 = sbr.rel (%p801) target = $region136
        $region135: #{tpu_custom_call.1} parent=107 // pred_region
          %804 = dma.done [#allocation12], 32
        $region136: #{tpu_custom_call.1} parent=107 // pred_fallthru
          _
        // Predicated region
        $region137: #{tpu_custom_call.1} parent=107 // pred_check
          %p805 = pneg %p334
        $region138: #{tpu_custom_call.1} parent=107 // pred_check_branch
          %807 = sbr.rel (%p805) target = $region140
        $region139: #{tpu_custom_call.1} parent=107 // pred_region
          %808 = dma.done [#allocation15], 1024
        $region140: #{tpu_custom_call.1} parent=107 // pred_fallthru
          _
        // Predicated region
        $region141: #{tpu_custom_call.1} parent=107 // pred_check
          %p809 = pneg %p355
        $region142: #{tpu_custom_call.1} parent=107 // pred_check_branch
          %811 = sbr.rel (%p809) target = $region144
        $region143: #{tpu_custom_call.1} parent=107 // pred_region
          %812 = dma.done [#allocation15], 32
        $region144: #{tpu_custom_call.1} parent=107 // pred_fallthru
          _
        // Predicated region
        $region145: #{tpu_custom_call.1} parent=107 // pred_check
          %p813 = pneg %p418
        $region146: #{tpu_custom_call.1} parent=107 // pred_check_branch
          %815 = sbr.rel (%p813) target = $region148
        $region147: #{tpu_custom_call.1} parent=107 // pred_region
          %816 = dma.done [#allocation18], 1024
        $region148: #{tpu_custom_call.1} parent=107 // pred_fallthru
          _
        // Predicated region
        $region149: #{tpu_custom_call.1} parent=107 // pred_check
          %p817 = pneg %p439
        $region150: #{tpu_custom_call.1} parent=107 // pred_check_branch
          %819 = sbr.rel (%p817) target = $region152
        $region151: #{tpu_custom_call.1} parent=107 // pred_region
          %820 = dma.done [#allocation18], 32
        $region152: #{tpu_custom_call.1} parent=107 // pred_fallthru
          _
        %p821 = scmp.lt.s32.totalorder %s46, 1
        %s822 = scalar_select %p821, %s46, 1
        %s823 = smul.addr %s822, 8
        %s824 = scalar_lea.vmem %s0, %s823
        %p825 = pneg %p67
        %p826 = pneg %p64
        %s827 = sand.u32 %s80, 1
        %s828 = scalar_lea.sflag [#allocation3], %s827
        %s829 = sand.u32 %s80, 1
        %s830 = smul.addr %s829, 8
        %s831 = scalar_lea.vmem [#allocation2], %s830
        %p832 = pneg %p93
        %p833 = pneg %p90
        %s834 = sand.u32 %s46, 1
        %s835 = scalar_lea.sflag [#allocation6], %s834
        %s836 = sand.u32 %s106, 1
        %s837 = scalar_lea.vmem [#allocation5], %s836
        %p838 = pneg %p119
        %p839 = pneg %p116
        %p840 = scmp.lt.s32.totalorder %s46, 1
        %s841 = scalar_select %p840, %s46, 1
        %s842 = smul.addr %s841, 8
        %s843 = scalar_lea.vmem %s3, %s842
        %p844 = pneg %p145
        %p845 = pneg %p142
        %p846 = pneg %p166
        %p847 = pneg %p163
        %p848 = pneg %p187
        %p849 = pneg %p184
        %p850 = pneg %p208
        %p851 = pneg %p205
        %p852 = pneg %p229
        %p853 = pneg %p226
        %p854 = pneg %p250
        %p855 = pneg %p247
        %p856 = pneg %p271
        %p857 = pneg %p268
        %p858 = pneg %p292
        %p859 = pneg %p289
        %p860 = pneg %p313
        %p861 = pneg %p310
        %p862 = pneg %p334
        %p863 = pneg %p331
        %p864 = pneg %p355
        %p865 = pneg %p352
        %p866 = pneg %p376
        %p867 = pneg %p373
        %p868 = pneg %p397
        %p869 = pneg %p394
        %p870 = pneg %p418
        %p871 = pneg %p415
        %p872 = pneg %p439
        %p873 = pneg %p436
        %p874 = pneg %p460
        %p875 = pneg %p457
        %p876 = pneg %p481
        %p877 = pneg %p478
        %p878 = pneg %p502
        %p879 = pneg %p499
        %p880 = pneg %p523
        %p881 = pneg %p520
        %p882 = pneg %p549
        %p883 = pneg %p546
        %s884 = sand.u32 %s536, 1
        %s885 = scalar_lea.sflag [#allocation4], %s884
        %s886 = sand.u32 %s536, 1
        %s887 = smul.addr %s886, 8
        %s888 = scalar_lea.vmem [#allocation20], %s887
        %p889 = scmp.lt.s32.totalorder %s46, 1
        %s890 = scalar_select %p889, %s46, 1
        %s891 = smul.addr %s890, 8
        %s892 = scalar_lea.vmem %s0, %s891
        %p893 = scmp.lt.s32.totalorder %s46, 1
        %s894 = scalar_select %p893, %s46, 1
        %s895 = smul.addr %s894, 8
        %s896 = scalar_lea.vmem %s3, %s895
        %v897 = vld [vmem:[%s892] sm:$0xff]
        %v898 = vld [vmem:[%s772] sm:$0xff]
        %v899 = vld [vmem:[%s780] sm:$0x1]
        %vm900 = vcmp.eq.f32.partialorder %v899, 0.0
        %v901 = vld [vmem:[%s896] sm:$0xff]
        %vm902 = vcmp.eq.f32.partialorder %v901, 0.0
        %v903 = vld [vmem:[%s14] sm:$0x7]
        %v904 = vld [vmem:[%s15] sm:$0x7]
        %vm905 = vcmask 261120
        %v906 = vsel %vm905, %v897, 0.0
        %907 = vadd.xlane.f32.xlu0 %v906
        %v908 = vpop.xlane.xlu0 %907
        %v909 = vrcp.pop 32.0
        %v910 = vmul.f32 %v908, %v909
        %v911 = vsub.f32 %v897, %v910
        %v912 = vmul.f32 %v911, %v911
        %v913 = vsel %vm905, %v912, 0.0
        %914 = vadd.xlane.f32.xlu0 %v913
        %v915 = vpop.xlane.xlu0 %914
        %v916 = vmul.f32 %v915, 0.032258064
        %v917 = vrsqrt.pop %v916
        %v918 = vmul.f32 %v916, %v917
        %vm919 = vcmp.eq.f32.partialorder %v916, inf
        %v920 = vsel %vm919, %v916, %v918
        %vm921 = vcmp.eq.f32.partialorder %v916, 0.0
        %v922 = vand.u32 %v916, 2147483648
        %v923 = vsel %vm921, %v922, %v920
        %v924 = vlaneseq
        %v925 = vshrl.u32 %v924, 7
        %v926 = vsub.s32 0, %v925
        %v927 = vrot.slane %v903, %v926
        %v928 = vmul.f32 %v927, %v911
        %v929 = vadd.f32 %v923, 1e-06
        %v930 = vrcp.pop %v929
        %v931 = vmul.f32 %v928, %v930
        %v932 = vlaneseq
        %v933 = vshrl.u32 %v932, 7
        %v934 = vsub.s32 0, %v933
        %v935 = vrot.slane %v904, %v934
        %v936 = vadd.f32 %v931, %v935
        %v937 = vld [vmem:[%s4] sm:$0xff]
        %v938 = vld [vmem:[%s4 + $0x8] sm:$0xff]
        %v939 = vld [vmem:[%s4 + $0x10] sm:$0xff]
        %v940 = vld [vmem:[%s4 + $0x18] sm:$0xff]
        %v941 = vld [vmem:[#allocation7] sm:$0x1]
        %v943 = vlaneseq
        %v944 = vshrl.u32 %v943, 7
        %v945 = vsub.s32 0, %v944
        %v946 = vrot.slane %v941, %v945
        %v949 = vsel %vm905, %v936, 0
        %951 = vmatprep.subr.mxu0 0.0
        %952 = vmatpush1.msra.mxu0 %v937
        %953 = vmatprep.subr.mxu0 0.0
        %954 = vmatpush1.msra.mxu0 %v938
        %955 = vmatprep.subr.mxu0 0.0
        %956 = vmatpush1.msra.mxu0 %v939
        %957 = vmatprep.subr.mxu0 0.0
        %958 = vmatpush1.msra.mxu0 %v940
        %959 = vmatprep.subr.mxu0 0.0
        %960 = vmatpush1.msra.mxu0 0.0
        %961 = vmatprep.subr.mxu0 0.0
        %962 = vmatpush1.msra.mxu0 0.0
        %963 = vmatprep.subr.mxu0 0.0
        %964 = vmatpush1.msra.mxu0 0.0
        %965 = vmatprep.subr.mxu0 0.0
        %966 = vmatpush1.msra.mxu0 0.0
        %967 = vmatprep.subr.mxu0 0.0
        %968 = vmatpush1.msra.mxu0 0.0
        %969 = vmatprep.subr.mxu0 0.0
        %970 = vmatpush1.msra.mxu0 0.0
        %971 = vmatprep.subr.mxu0 0.0
        %972 = vmatpush1.msra.mxu0 0.0
        %973 = vmatprep.subr.mxu0 0.0
        %974 = vmatpush1.msra.mxu0 0.0
        %975 = vmatprep.subr.mxu0 0.0
        %976 = vmatpush1.msra.mxu0 0.0
        %977 = vmatprep.subr.mxu0 0.0
        %978 = vmatpush1.msra.mxu0 0.0
        %979 = vmatprep.subr.mxu0 0.0
        %980 = vmatpush1.msra.mxu0 0.0
        %981 = vmatprep.subr.mxu0 0.0
        %982 = vmatpush1.msra.mxu0 0.0
        %983 = vmatprep.subr.mxu0 0.0
        %984 = vmatpush1.msra.mxu0 0.0
        %985 = vmatprep.subr.mxu0 0.0
        %986 = vmatpush1.msra.mxu0 0.0
        %987 = vmatprep.subr.mxu0 0.0
        %988 = vmatpush1.msra.mxu0 0.0
        %989 = vmatprep.subr.mxu0 0.0
        %990 = vmatpush1.msra.mxu0 0.0
        %991 = vmatprep.subr.mxu0 0.0
        %992 = vmatpush1.msra.mxu0 0.0
        %993 = vmatprep.subr.mxu0 0.0
        %994 = vmatpush1.msra.mxu0 0.0
        %995 = vmatprep.subr.mxu0 0.0
        %996 = vmatpush1.msra.mxu0 0.0
        %997 = vmatprep.subr.mxu0 0.0
        %998 = vmatpush1.msra.mxu0 0.0
        %999 = vmatprep.subr.mxu0 0.0
        %1000 = vmatpush1.msra.mxu0 0.0
        %1001 = vmatprep.subr.mxu0 0.0
        %1002 = vmatpush1.msra.mxu0 0.0
        %1003 = vmatprep.subr.mxu0 0.0
        %1004 = vmatpush1.msra.mxu0 0.0
        %1005 = vmatprep.subr.mxu0 0.0
        %1006 = vmatpush1.msra.mxu0 0.0
        %1007 = vmatprep.subr.mxu0 0.0
        %1008 = vmatpush1.msra.mxu0 0.0
        %1009 = vmatprep.subr.mxu0 0.0
        %1010 = vmatpush1.msra.mxu0 0.0
        %1011 = vmatprep.subr.mxu0 0.0
        %1012 = vmatpush1.msra.mxu0 0.0
        %1013 = vmatprep.subr.mxu0 0.0
        %1014 = vmatpush1.msra.mxu0 0.0
        %1015 = vmatprep.mubr.f32.mxu0 0.0
        %1016 = vmatmul.mubr.f32.gmra.mrb[0].mxu0 %v949
        %v1017 = vpop.f32.mrb[0].mxu0
        %v1018 = vadd.f32 %v946, %v1017
        %v1019 = vpop.f32.mrb[0].mxu0
        %1020 = vdwg.mxu0
        %v1021 = vld [vmem:[%s6] sm:$0xff]
        %v1022 = vld [vmem:[%s6 + $0x8] sm:$0xff]
        %v1023 = vld [vmem:[%s6 + $0x10] sm:$0xff]
        %v1024 = vld [vmem:[%s6 + $0x18] sm:$0xff]
        %v1025 = vld [vmem:[#allocation8] sm:$0x1]
        %v1026 = vmul.f32 %v1018, 0.35355338
        %1028 = vrot.lane.b32.xlu0 %v1018, 96
        %v1029 = vpop.permute.xlu0 %1028
        %vm1030 = vcmask 64512
        %v1032 = vsel %vm1030, %v1026, 0
        %v1034 = vsel %vm1030, %v1029, 0
        %1036 = vmatprep.subr.mxu0 0.0
        %1037 = vmatpush1.xpose.msra.mxu0 %v1034
        %1038 = vmatprep.subr.mxu0 0.0
        %1039 = vmatpush1.xpose.msra.mxu0 0.0
        %1040 = vmatprep.subr.mxu0 0.0
        %1041 = vmatpush1.xpose.msra.mxu0 0.0
        %1042 = vmatprep.subr.mxu0 0.0
        %1043 = vmatpush1.xpose.msra.mxu0 0.0
        %1044 = vmatprep.subr.mxu0 0.0
        %1045 = vmatpush1.xpose.msra.mxu0 0.0
        %1046 = vmatprep.subr.mxu0 0.0
        %1047 = vmatpush1.xpose.msra.mxu0 0.0
        %1048 = vmatprep.subr.mxu0 0.0
        %1049 = vmatpush1.xpose.msra.mxu0 0.0
        %1050 = vmatprep.subr.mxu0 0.0
        %1051 = vmatpush1.xpose.msra.mxu0 0.0
        %1052 = vmatprep.subr.mxu0 0.0
        %1053 = vmatpush1.xpose.msra.mxu0 0.0
        %1054 = vmatprep.subr.mxu0 0.0
        %1055 = vmatpush1.xpose.msra.mxu0 0.0
        %1056 = vmatprep.subr.mxu0 0.0
        %1057 = vmatpush1.xpose.msra.mxu0 0.0
        %1058 = vmatprep.subr.mxu0 0.0
        %1059 = vmatpush1.xpose.msra.mxu0 0.0
        %1060 = vmatprep.subr.mxu0 0.0
        %1061 = vmatpush1.xpose.msra.mxu0 0.0
        %1062 = vmatprep.subr.mxu0 0.0
        %1063 = vmatpush1.xpose.msra.mxu0 0.0
        %1064 = vmatprep.subr.mxu0 0.0
        %1065 = vmatpush1.xpose.msra.mxu0 0.0
        %1066 = vmatprep.subr.mxu0 0.0
        %1067 = vmatpush1.xpose.msra.mxu0 0.0
        %1068 = vmatprep.subr.mxu0 0.0
        %1069 = vmatpush1.xpose.msra.mxu0 0.0
        %1070 = vmatprep.subr.mxu0 0.0
        %1071 = vmatpush1.xpose.msra.mxu0 0.0
        %1072 = vmatprep.subr.mxu0 0.0
        %1073 = vmatpush1.xpose.msra.mxu0 0.0
        %1074 = vmatprep.subr.mxu0 0.0
        %1075 = vmatpush1.xpose.msra.mxu0 0.0
        %1076 = vmatprep.subr.mxu0 0.0
        %1077 = vmatpush1.xpose.msra.mxu0 0.0
        %1078 = vmatprep.subr.mxu0 0.0
        %1079 = vmatpush1.xpose.msra.mxu0 0.0
        %1080 = vmatprep.subr.mxu0 0.0
        %1081 = vmatpush1.xpose.msra.mxu0 0.0
        %1082 = vmatprep.subr.mxu0 0.0
        %1083 = vmatpush1.xpose.msra.mxu0 0.0
        %1084 = vmatprep.subr.mxu0 0.0
        %1085 = vmatpush1.xpose.msra.mxu0 0.0
        %1086 = vmatprep.subr.mxu0 0.0
        %1087 = vmatpush1.xpose.msra.mxu0 0.0
        %1088 = vmatprep.subr.mxu0 0.0
        %1089 = vmatpush1.xpose.msra.mxu0 0.0
        %1090 = vmatprep.subr.mxu0 0.0
        %1091 = vmatpush1.xpose.msra.mxu0 0.0
        %1092 = vmatprep.subr.mxu0 0.0
        %1093 = vmatpush1.xpose.msra.mxu0 0.0
        %1094 = vmatprep.subr.mxu0 0.0
        %1095 = vmatpush1.xpose.msra.mxu0 0.0
        %1096 = vmatprep.subr.mxu0 0.0
        %1097 = vmatpush1.xpose.msra.mxu0 0.0
        %1098 = vmatprep.subr.mxu0 0.0
        %1099 = vmatpush1.xpose.msra.mxu0 0.0
        %1100 = vmatprep.mubr.f32.mxu0 0.0
        %1101 = vmatmul.mubr.f32.gmra.mrb[0].mxu0 %v1032
        %v1102 = vpop.f32.mrb[0].mxu0
        %v1103 = vadd.f32 0.0, %v1102
        %v1104 = vpop.f32.mrb[0].mxu0
        %1105 = vdwg.mxu0
        %v1106 = vsel %vm902, -1e+09, %v1103
        %v1107 = vsel %vm1030, %v1106, -inf
        %1108 = vmax.xlane.f32.xlu0 %v1107
        %v1109 = vpop.xlane.xlu0 %1108
        %v1110 = vsub.f32 %v1106, %v1109
        %v1111 = vmul.f32 %v1110, 1.442695
        %v1112 = vpow.pop %v1111
        %v1113 = vsel %vm1030, %v1112, 0.0
        %1114 = vadd.xlane.f32.xlu0 %v1113
        %v1115 = vpop.xlane.xlu0 %1114
        %v1116 = vrcp.pop %v1115
        %v1117 = vmul.f32 %v1112, %v1116
        %1118 = vrot.lane.b32.xlu0 %v1018, 64
        %v1119 = vpop.permute.xlu0 %1118
        %v1122 = vsel %vm1030, %v1117, 0
        %1124 = vmatprep.subr.mxu0 0.0
        %1125 = vmatpush1.msra.mxu0 %v1119
        %1126 = vmatprep.subr.mxu0 0.0
        %1127 = vmatpush1.msra.mxu0 0.0
        %1128 = vmatprep.subr.mxu0 0.0
        %1129 = vmatpush1.msra.mxu0 0.0
        %1130 = vmatprep.subr.mxu0 0.0
        %1131 = vmatpush1.msra.mxu0 0.0
        %1132 = vmatprep.subr.mxu0 0.0
        %1133 = vmatpush1.msra.mxu0 0.0
        %1134 = vmatprep.subr.mxu0 0.0
        %1135 = vmatpush1.msra.mxu0 0.0
        %1136 = vmatprep.subr.mxu0 0.0
        %1137 = vmatpush1.msra.mxu0 0.0
        %1138 = vmatprep.subr.mxu0 0.0
        %1139 = vmatpush1.msra.mxu0 0.0
        %1140 = vmatprep.subr.mxu0 0.0
        %1141 = vmatpush1.msra.mxu0 0.0
        %1142 = vmatprep.subr.mxu0 0.0
        %1143 = vmatpush1.msra.mxu0 0.0
        %1144 = vmatprep.subr.mxu0 0.0
        %1145 = vmatpush1.msra.mxu0 0.0
        %1146 = vmatprep.subr.mxu0 0.0
        %1147 = vmatpush1.msra.mxu0 0.0
        %1148 = vmatprep.subr.mxu0 0.0
        %1149 = vmatpush1.msra.mxu0 0.0
        %1150 = vmatprep.subr.mxu0 0.0
        %1151 = vmatpush1.msra.mxu0 0.0
        %1152 = vmatprep.subr.mxu0 0.0
        %1153 = vmatpush1.msra.mxu0 0.0
        %1154 = vmatprep.subr.mxu0 0.0
        %1155 = vmatpush1.msra.mxu0 0.0
        %1156 = vmatprep.subr.mxu0 0.0
        %1157 = vmatpush1.msra.mxu0 0.0
        %1158 = vmatprep.subr.mxu0 0.0
        %1159 = vmatpush1.msra.mxu0 0.0
        %1160 = vmatprep.subr.mxu0 0.0
        %1161 = vmatpush1.msra.mxu0 0.0
        %1162 = vmatprep.subr.mxu0 0.0
        %1163 = vmatpush1.msra.mxu0 0.0
        %1164 = vmatprep.subr.mxu0 0.0
        %1165 = vmatpush1.msra.mxu0 0.0
        %1166 = vmatprep.subr.mxu0 0.0
        %1167 = vmatpush1.msra.mxu0 0.0
        %1168 = vmatprep.subr.mxu0 0.0
        %1169 = vmatpush1.msra.mxu0 0.0
        %1170 = vmatprep.subr.mxu0 0.0
        %1171 = vmatpush1.msra.mxu0 0.0
        %1172 = vmatprep.subr.mxu0 0.0
        %1173 = vmatpush1.msra.mxu0 0.0
        %1174 = vmatprep.subr.mxu0 0.0
        %1175 = vmatpush1.msra.mxu0 0.0
        %1176 = vmatprep.subr.mxu0 0.0
        %1177 = vmatpush1.msra.mxu0 0.0
        %1178 = vmatprep.subr.mxu0 0.0
        %1179 = vmatpush1.msra.mxu0 0.0
        %1180 = vmatprep.subr.mxu0 0.0
        %1181 = vmatpush1.msra.mxu0 0.0
        %1182 = vmatprep.subr.mxu0 0.0
        %1183 = vmatpush1.msra.mxu0 0.0
        %1184 = vmatprep.subr.mxu0 0.0
        %1185 = vmatpush1.msra.mxu0 0.0
        %1186 = vmatprep.subr.mxu0 0.0
        %1187 = vmatpush1.msra.mxu0 0.0
        %1188 = vmatprep.mubr.f32.mxu0 0.0
        %1189 = vmatmul.mubr.f32.gmra.mrb[0].mxu0 %v1122
        %v1190 = vpop.f32.mrb[0].mxu0
        %v1191 = vadd.f32 0.0, %v1190
        %v1192 = vpop.f32.mrb[0].mxu0
        %1193 = vdwg.mxu0
        %1194 = vrot.lane.b32.xlu0 %v1026, 120
        %v1195 = vpop.permute.xlu0 %1194
        %1196 = vrot.lane.b32.xlu0 %v1018, 88
        %v1197 = vpop.permute.xlu0 %1196
        %v1198 = vsel %vm1030, %v1195, 0
        %v1200 = vsel %vm1030, %v1197, 0
        %1202 = vmatprep.subr.mxu0 0.0
        %1203 = vmatpush1.xpose.msra.mxu0 %v1200
        %1204 = vmatprep.subr.mxu0 0.0
        %1205 = vmatpush1.xpose.msra.mxu0 0.0
        %1206 = vmatprep.subr.mxu0 0.0
        %1207 = vmatpush1.xpose.msra.mxu0 0.0
        %1208 = vmatprep.subr.mxu0 0.0
        %1209 = vmatpush1.xpose.msra.mxu0 0.0
        %1210 = vmatprep.subr.mxu0 0.0
        %1211 = vmatpush1.xpose.msra.mxu0 0.0
        %1212 = vmatprep.subr.mxu0 0.0
        %1213 = vmatpush1.xpose.msra.mxu0 0.0
        %1214 = vmatprep.subr.mxu0 0.0
        %1215 = vmatpush1.xpose.msra.mxu0 0.0
        %1216 = vmatprep.subr.mxu0 0.0
        %1217 = vmatpush1.xpose.msra.mxu0 0.0
        %1218 = vmatprep.subr.mxu0 0.0
        %1219 = vmatpush1.xpose.msra.mxu0 0.0
        %1220 = vmatprep.subr.mxu0 0.0
        %1221 = vmatpush1.xpose.msra.mxu0 0.0
        %1222 = vmatprep.subr.mxu0 0.0
        %1223 = vmatpush1.xpose.msra.mxu0 0.0
        %1224 = vmatprep.subr.mxu0 0.0
        %1225 = vmatpush1.xpose.msra.mxu0 0.0
        %1226 = vmatprep.subr.mxu0 0.0
        %1227 = vmatpush1.xpose.msra.mxu0 0.0
        %1228 = vmatprep.subr.mxu0 0.0
        %1229 = vmatpush1.xpose.msra.mxu0 0.0
        %1230 = vmatprep.subr.mxu0 0.0
        %1231 = vmatpush1.xpose.msra.mxu0 0.0
        %1232 = vmatprep.subr.mxu0 0.0
        %1233 = vmatpush1.xpose.msra.mxu0 0.0
        %1234 = vmatprep.subr.mxu0 0.0
        %1235 = vmatpush1.xpose.msra.mxu0 0.0
        %1236 = vmatprep.subr.mxu0 0.0
        %1237 = vmatpush1.xpose.msra.mxu0 0.0
        %1238 = vmatprep.subr.mxu0 0.0
        %1239 = vmatpush1.xpose.msra.mxu0 0.0
        %1240 = vmatprep.subr.mxu0 0.0
        %1241 = vmatpush1.xpose.msra.mxu0 0.0
        %1242 = vmatprep.subr.mxu0 0.0
        %1243 = vmatpush1.xpose.msra.mxu0 0.0
        %1244 = vmatprep.subr.mxu0 0.0
        %1245 = vmatpush1.xpose.msra.mxu0 0.0
        %1246 = vmatprep.subr.mxu0 0.0
        %1247 = vmatpush1.xpose.msra.mxu0 0.0
        %1248 = vmatprep.subr.mxu0 0.0
        %1249 = vmatpush1.xpose.msra.mxu0 0.0
        %1250 = vmatprep.subr.mxu0 0.0
        %1251 = vmatpush1.xpose.msra.mxu0 0.0
        %1252 = vmatprep.subr.mxu0 0.0
        %1253 = vmatpush1.xpose.msra.mxu0 0.0
        %1254 = vmatprep.subr.mxu0 0.0
        %1255 = vmatpush1.xpose.msra.mxu0 0.0
        %1256 = vmatprep.subr.mxu0 0.0
        %1257 = vmatpush1.xpose.msra.mxu0 0.0
        %1258 = vmatprep.subr.mxu0 0.0
        %1259 = vmatpush1.xpose.msra.mxu0 0.0
        %1260 = vmatprep.subr.mxu0 0.0
        %1261 = vmatpush1.xpose.msra.mxu0 0.0
        %1262 = vmatprep.subr.mxu0 0.0
        %1263 = vmatpush1.xpose.msra.mxu0 0.0
        %1264 = vmatprep.subr.mxu0 0.0
        %1265 = vmatpush1.xpose.msra.mxu0 0.0
        %1266 = vmatprep.mubr.f32.mxu0 0.0
        %1267 = vmatmul.mubr.f32.gmra.mrb[0].mxu0 %v1198
        %v1268 = vpop.f32.mrb[0].mxu0
        %v1269 = vadd.f32 0.0, %v1268
        %v1270 = vpop.f32.mrb[0].mxu0
        %1271 = vdwg.mxu0
        %v1272 = vsel %vm902, -1e+09, %v1269
        %v1273 = vsel %vm1030, %v1272, -inf
        %1274 = vmax.xlane.f32.xlu0 %v1273
        %v1275 = vpop.xlane.xlu0 %1274
        %v1276 = vsub.f32 %v1272, %v1275
        %v1277 = vmul.f32 %v1276, 1.442695
        %v1278 = vpow.pop %v1277
        %v1279 = vsel %vm1030, %v1278, 0.0
        %1280 = vadd.xlane.f32.xlu0 %v1279
        %v1281 = vpop.xlane.xlu0 %1280
        %v1282 = vrcp.pop %v1281
        %v1283 = vmul.f32 %v1278, %v1282
        %1284 = vrot.lane.b32.xlu0 %v1018, 56
        %v1285 = vpop.permute.xlu0 %1284
        %v1288 = vsel %vm1030, %v1283, 0
        %1290 = vmatprep.subr.mxu0 0.0
        %1291 = vmatpush1.msra.mxu0 %v1285
        %1292 = vmatprep.subr.mxu0 0.0
        %1293 = vmatpush1.msra.mxu0 0.0
        %1294 = vmatprep.subr.mxu0 0.0
        %1295 = vmatpush1.msra.mxu0 0.0
        %1296 = vmatprep.subr.mxu0 0.0
        %1297 = vmatpush1.msra.mxu0 0.0
        %1298 = vmatprep.subr.mxu0 0.0
        %1299 = vmatpush1.msra.mxu0 0.0
        %1300 = vmatprep.subr.mxu0 0.0
        %1301 = vmatpush1.msra.mxu0 0.0
        %1302 = vmatprep.subr.mxu0 0.0
        %1303 = vmatpush1.msra.mxu0 0.0
        %1304 = vmatprep.subr.mxu0 0.0
        %1305 = vmatpush1.msra.mxu0 0.0
        %1306 = vmatprep.subr.mxu0 0.0
        %1307 = vmatpush1.msra.mxu0 0.0
        %1308 = vmatprep.subr.mxu0 0.0
        %1309 = vmatpush1.msra.mxu0 0.0
        %1310 = vmatprep.subr.mxu0 0.0
        %1311 = vmatpush1.msra.mxu0 0.0
        %1312 = vmatprep.subr.mxu0 0.0
        %1313 = vmatpush1.msra.mxu0 0.0
        %1314 = vmatprep.subr.mxu0 0.0
        %1315 = vmatpush1.msra.mxu0 0.0
        %1316 = vmatprep.subr.mxu0 0.0
        %1317 = vmatpush1.msra.mxu0 0.0
        %1318 = vmatprep.subr.mxu0 0.0
        %1319 = vmatpush1.msra.mxu0 0.0
        %1320 = vmatprep.subr.mxu0 0.0
        %1321 = vmatpush1.msra.mxu0 0.0
        %1322 = vmatprep.subr.mxu0 0.0
        %1323 = vmatpush1.msra.mxu0 0.0
        %1324 = vmatprep.subr.mxu0 0.0
        %1325 = vmatpush1.msra.mxu0 0.0
        %1326 = vmatprep.subr.mxu0 0.0
        %1327 = vmatpush1.msra.mxu0 0.0
        %1328 = vmatprep.subr.mxu0 0.0
        %1329 = vmatpush1.msra.mxu0 0.0
        %1330 = vmatprep.subr.mxu0 0.0
        %1331 = vmatpush1.msra.mxu0 0.0
        %1332 = vmatprep.subr.mxu0 0.0
        %1333 = vmatpush1.msra.mxu0 0.0
        %1334 = vmatprep.subr.mxu0 0.0
        %1335 = vmatpush1.msra.mxu0 0.0
        %1336 = vmatprep.subr.mxu0 0.0
        %1337 = vmatpush1.msra.mxu0 0.0
        %1338 = vmatprep.subr.mxu0 0.0
        %1339 = vmatpush1.msra.mxu0 0.0
        %1340 = vmatprep.subr.mxu0 0.0
        %1341 = vmatpush1.msra.mxu0 0.0
        %1342 = vmatprep.subr.mxu0 0.0
        %1343 = vmatpush1.msra.mxu0 0.0
        %1344 = vmatprep.subr.mxu0 0.0
        %1345 = vmatpush1.msra.mxu0 0.0
        %1346 = vmatprep.subr.mxu0 0.0
        %1347 = vmatpush1.msra.mxu0 0.0
        %1348 = vmatprep.subr.mxu0 0.0
        %1349 = vmatpush1.msra.mxu0 0.0
        %1350 = vmatprep.subr.mxu0 0.0
        %1351 = vmatpush1.msra.mxu0 0.0
        %1352 = vmatprep.subr.mxu0 0.0
        %1353 = vmatpush1.msra.mxu0 0.0
        %1354 = vmatprep.mubr.f32.mxu0 0.0
        %1355 = vmatmul.mubr.f32.gmra.mrb[0].mxu0 %v1288
        %v1356 = vpop.f32.mrb[0].mxu0
        %v1357 = vadd.f32 0.0, %v1356
        %v1358 = vpop.f32.mrb[0].mxu0
        %1359 = vdwg.mxu0
        %v1361 = vsel %vm1030, %v1357, 0
        %1363 = vmatprep.subr.mxu0 0.0
        %1364 = vmatpush1.msra.mxu0 %v1022
        %1365 = vmatprep.subr.mxu0 0.0
        %1366 = vmatpush1.msra.mxu0 0.0
        %1367 = vmatprep.subr.mxu0 0.0
        %1368 = vmatpush1.msra.mxu0 0.0
        %1369 = vmatprep.subr.mxu0 0.0
        %1370 = vmatpush1.msra.mxu0 0.0
        %1371 = vmatprep.subr.mxu0 0.0
        %1372 = vmatpush1.msra.mxu0 0.0
        %1373 = vmatprep.subr.mxu0 0.0
        %1374 = vmatpush1.msra.mxu0 0.0
        %1375 = vmatprep.subr.mxu0 0.0
        %1376 = vmatpush1.msra.mxu0 0.0
        %1377 = vmatprep.subr.mxu0 0.0
        %1378 = vmatpush1.msra.mxu0 0.0
        %1379 = vmatprep.subr.mxu0 0.0
        %1380 = vmatpush1.msra.mxu0 0.0
        %1381 = vmatprep.subr.mxu0 0.0
        %1382 = vmatpush1.msra.mxu0 0.0
        %1383 = vmatprep.subr.mxu0 0.0
        %1384 = vmatpush1.msra.mxu0 0.0
        %1385 = vmatprep.subr.mxu0 0.0
        %1386 = vmatpush1.msra.mxu0 0.0
        %1387 = vmatprep.subr.mxu0 0.0
        %1388 = vmatpush1.msra.mxu0 0.0
        %1389 = vmatprep.subr.mxu0 0.0
        %1390 = vmatpush1.msra.mxu0 0.0
        %1391 = vmatprep.subr.mxu0 0.0
        %1392 = vmatpush1.msra.mxu0 0.0
        %1393 = vmatprep.subr.mxu0 0.0
        %1394 = vmatpush1.msra.mxu0 0.0
        %1395 = vmatprep.subr.mxu0 0.0
        %1396 = vmatpush1.msra.mxu0 0.0
        %1397 = vmatprep.subr.mxu0 0.0
        %1398 = vmatpush1.msra.mxu0 0.0
        %1399 = vmatprep.subr.mxu0 0.0
        %1400 = vmatpush1.msra.mxu0 0.0
        %1401 = vmatprep.subr.mxu0 0.0
        %1402 = vmatpush1.msra.mxu0 0.0
        %1403 = vmatprep.subr.mxu0 0.0
        %1404 = vmatpush1.msra.mxu0 0.0
        %1405 = vmatprep.subr.mxu0 0.0
        %1406 = vmatpush1.msra.mxu0 0.0
        %1407 = vmatprep.subr.mxu0 0.0
        %1408 = vmatpush1.msra.mxu0 0.0
        %1409 = vmatprep.subr.mxu0 0.0
        %1410 = vmatpush1.msra.mxu0 0.0
        %1411 = vmatprep.subr.mxu0 0.0
        %1412 = vmatpush1.msra.mxu0 0.0
        %1413 = vmatprep.subr.mxu0 0.0
        %1414 = vmatpush1.msra.mxu0 0.0
        %1415 = vmatprep.subr.mxu0 0.0
        %1416 = vmatpush1.msra.mxu0 0.0
        %1417 = vmatprep.subr.mxu0 0.0
        %1418 = vmatpush1.msra.mxu0 0.0
        %1419 = vmatprep.subr.mxu0 0.0
        %1420 = vmatpush1.msra.mxu0 0.0
        %1421 = vmatprep.subr.mxu0 0.0
        %1422 = vmatpush1.msra.mxu0 0.0
        %1423 = vmatprep.subr.mxu0 0.0
        %1424 = vmatpush1.msra.mxu0 0.0
        %1425 = vmatprep.subr.mxu0 0.0
        %1426 = vmatpush1.msra.mxu0 0.0
        %1427 = vmatprep.mubr.f32.mxu0 0.0
        %1428 = vmatmul.mubr.f32.gmra.mrb[0].mxu0 %v1361
        %v1429 = vpop.f32.mrb[0].mxu0
        %v1430 = vadd.f32 0.0, %v1429
        %v1431 = vpop.f32.mrb[0].mxu0
        %1432 = vdwg.mxu0
        %v1434 = vsel %vm1030, %v1191, 0
        %1436 = vmatprep.subr.mxu0 0.0
        %1437 = vmatpush1.msra.mxu0 %v1021
        %1438 = vmatprep.subr.mxu0 0.0
        %1439 = vmatpush1.msra.mxu0 0.0
        %1440 = vmatprep.subr.mxu0 0.0
        %1441 = vmatpush1.msra.mxu0 0.0
        %1442 = vmatprep.subr.mxu0 0.0
        %1443 = vmatpush1.msra.mxu0 0.0
        %1444 = vmatprep.subr.mxu0 0.0
        %1445 = vmatpush1.msra.mxu0 0.0
        %1446 = vmatprep.subr.mxu0 0.0
        %1447 = vmatpush1.msra.mxu0 0.0
        %1448 = vmatprep.subr.mxu0 0.0
        %1449 = vmatpush1.msra.mxu0 0.0
        %1450 = vmatprep.subr.mxu0 0.0
        %1451 = vmatpush1.msra.mxu0 0.0
        %1452 = vmatprep.subr.mxu0 0.0
        %1453 = vmatpush1.msra.mxu0 0.0
        %1454 = vmatprep.subr.mxu0 0.0
        %1455 = vmatpush1.msra.mxu0 0.0
        %1456 = vmatprep.subr.mxu0 0.0
        %1457 = vmatpush1.msra.mxu0 0.0
        %1458 = vmatprep.subr.mxu0 0.0
        %1459 = vmatpush1.msra.mxu0 0.0
        %1460 = vmatprep.subr.mxu0 0.0
        %1461 = vmatpush1.msra.mxu0 0.0
        %1462 = vmatprep.subr.mxu0 0.0
        %1463 = vmatpush1.msra.mxu0 0.0
        %1464 = vmatprep.subr.mxu0 0.0
        %1465 = vmatpush1.msra.mxu0 0.0
        %1466 = vmatprep.subr.mxu0 0.0
        %1467 = vmatpush1.msra.mxu0 0.0
        %1468 = vmatprep.subr.mxu0 0.0
        %1469 = vmatpush1.msra.mxu0 0.0
        %1470 = vmatprep.subr.mxu0 0.0
        %1471 = vmatpush1.msra.mxu0 0.0
        %1472 = vmatprep.subr.mxu0 0.0
        %1473 = vmatpush1.msra.mxu0 0.0
        %1474 = vmatprep.subr.mxu0 0.0
        %1475 = vmatpush1.msra.mxu0 0.0
        %1476 = vmatprep.subr.mxu0 0.0
        %1477 = vmatpush1.msra.mxu0 0.0
        %1478 = vmatprep.subr.mxu0 0.0
        %1479 = vmatpush1.msra.mxu0 0.0
        %1480 = vmatprep.subr.mxu0 0.0
        %1481 = vmatpush1.msra.mxu0 0.0
        %1482 = vmatprep.subr.mxu0 0.0
        %1483 = vmatpush1.msra.mxu0 0.0
        %1484 = vmatprep.subr.mxu0 0.0
        %1485 = vmatpush1.msra.mxu0 0.0
        %1486 = vmatprep.subr.mxu0 0.0
        %1487 = vmatpush1.msra.mxu0 0.0
        %1488 = vmatprep.subr.mxu0 0.0
        %1489 = vmatpush1.msra.mxu0 0.0
        %1490 = vmatprep.subr.mxu0 0.0
        %1491 = vmatpush1.msra.mxu0 0.0
        %1492 = vmatprep.subr.mxu0 0.0
        %1493 = vmatpush1.msra.mxu0 0.0
        %1494 = vmatprep.subr.mxu0 0.0
        %1495 = vmatpush1.msra.mxu0 0.0
        %1496 = vmatprep.subr.mxu0 0.0
        %1497 = vmatpush1.msra.mxu0 0.0
        %1498 = vmatprep.subr.mxu0 0.0
        %1499 = vmatpush1.msra.mxu0 0.0
        %1500 = vmatprep.mubr.f32.mxu0 0.0
        %1501 = vmatmul.mubr.f32.gmra.mrb[0].mxu0 %v1434
        %v1502 = vpop.f32.mrb[0].mxu0
        %v1503 = vadd.f32 %v1430, %v1502
        %v1504 = vpop.f32.mrb[0].mxu0
        %1505 = vdwg.mxu0
        %1506 = vrot.lane.b32.xlu0 %v1026, 112
        %v1507 = vpop.permute.xlu0 %1506
        %1508 = vrot.lane.b32.xlu0 %v1018, 80
        %v1509 = vpop.permute.xlu0 %1508
        %v1510 = vsel %vm1030, %v1507, 0
        %v1512 = vsel %vm1030, %v1509, 0
        %1514 = vmatprep.subr.mxu0 0.0
        %1515 = vmatpush1.xpose.msra.mxu0 %v1512
        %1516 = vmatprep.subr.mxu0 0.0
        %1517 = vmatpush1.xpose.msra.mxu0 0.0
        %1518 = vmatprep.subr.mxu0 0.0
        %1519 = vmatpush1.xpose.msra.mxu0 0.0
        %1520 = vmatprep.subr.mxu0 0.0
        %1521 = vmatpush1.xpose.msra.mxu0 0.0
        %1522 = vmatprep.subr.mxu0 0.0
        %1523 = vmatpush1.xpose.msra.mxu0 0.0
        %1524 = vmatprep.subr.mxu0 0.0
        %1525 = vmatpush1.xpose.msra.mxu0 0.0
        %1526 = vmatprep.subr.mxu0 0.0
        %1527 = vmatpush1.xpose.msra.mxu0 0.0
        %1528 = vmatprep.subr.mxu0 0.0
        %1529 = vmatpush1.xpose.msra.mxu0 0.0
        %1530 = vmatprep.subr.mxu0 0.0
        %1531 = vmatpush1.xpose.msra.mxu0 0.0
        %1532 = vmatprep.subr.mxu0 0.0
        %1533 = vmatpush1.xpose.msra.mxu0 0.0
        %1534 = vmatprep.subr.mxu0 0.0
        %1535 = vmatpush1.xpose.msra.mxu0 0.0
        %1536 = vmatprep.subr.mxu0 0.0
        %1537 = vmatpush1.xpose.msra.mxu0 0.0
        %1538 = vmatprep.subr.mxu0 0.0
        %1539 = vmatpush1.xpose.msra.mxu0 0.0
        %1540 = vmatprep.subr.mxu0 0.0
        %1541 = vmatpush1.xpose.msra.mxu0 0.0
        %1542 = vmatprep.subr.mxu0 0.0
        %1543 = vmatpush1.xpose.msra.mxu0 0.0
        %1544 = vmatprep.subr.mxu0 0.0
        %1545 = vmatpush1.xpose.msra.mxu0 0.0
        %1546 = vmatprep.subr.mxu0 0.0
        %1547 = vmatpush1.xpose.msra.mxu0 0.0
        %1548 = vmatprep.subr.mxu0 0.0
        %1549 = vmatpush1.xpose.msra.mxu0 0.0
        %1550 = vmatprep.subr.mxu0 0.0
        %1551 = vmatpush1.xpose.msra.mxu0 0.0
        %1552 = vmatprep.subr.mxu0 0.0
        %1553 = vmatpush1.xpose.msra.mxu0 0.0
        %1554 = vmatprep.subr.mxu0 0.0
        %1555 = vmatpush1.xpose.msra.mxu0 0.0
        %1556 = vmatprep.subr.mxu0 0.0
        %1557 = vmatpush1.xpose.msra.mxu0 0.0
        %1558 = vmatprep.subr.mxu0 0.0
        %1559 = vmatpush1.xpose.msra.mxu0 0.0
        %1560 = vmatprep.subr.mxu0 0.0
        %1561 = vmatpush1.xpose.msra.mxu0 0.0
        %1562 = vmatprep.subr.mxu0 0.0
        %1563 = vmatpush1.xpose.msra.mxu0 0.0
        %1564 = vmatprep.subr.mxu0 0.0
        %1565 = vmatpush1.xpose.msra.mxu0 0.0
        %1566 = vmatprep.subr.mxu0 0.0
        %1567 = vmatpush1.xpose.msra.mxu0 0.0
        %1568 = vmatprep.subr.mxu0 0.0
        %1569 = vmatpush1.xpose.msra.mxu0 0.0
        %1570 = vmatprep.subr.mxu0 0.0
        %1571 = vmatpush1.xpose.msra.mxu0 0.0
        %1572 = vmatprep.subr.mxu0 0.0
        %1573 = vmatpush1.xpose.msra.mxu0 0.0
        %1574 = vmatprep.subr.mxu0 0.0
        %1575 = vmatpush1.xpose.msra.mxu0 0.0
        %1576 = vmatprep.subr.mxu0 0.0
        %1577 = vmatpush1.xpose.msra.mxu0 0.0
        %1578 = vmatprep.mubr.f32.mxu0 0.0
        %1579 = vmatmul.mubr.f32.gmra.mrb[0].mxu0 %v1510
        %v1580 = vpop.f32.mrb[0].mxu0
        %v1581 = vadd.f32 0.0, %v1580
        %v1582 = vpop.f32.mrb[0].mxu0
        %1583 = vdwg.mxu0
        %v1584 = vsel %vm902, -1e+09, %v1581
        %v1585 = vsel %vm1030, %v1584, -inf
        %1586 = vmax.xlane.f32.xlu0 %v1585
        %v1587 = vpop.xlane.xlu0 %1586
        %v1588 = vsub.f32 %v1584, %v1587
        %v1589 = vmul.f32 %v1588, 1.442695
        %v1590 = vpow.pop %v1589
        %v1591 = vsel %vm1030, %v1590, 0.0
        %1592 = vadd.xlane.f32.xlu0 %v1591
        %v1593 = vpop.xlane.xlu0 %1592
        %v1594 = vrcp.pop %v1593
        %v1595 = vmul.f32 %v1590, %v1594
        %1596 = vrot.lane.b32.xlu0 %v1018, 48
        %v1597 = vpop.permute.xlu0 %1596
        %v1600 = vsel %vm1030, %v1595, 0
        %1602 = vmatprep.subr.mxu0 0.0
        %1603 = vmatpush1.msra.mxu0 %v1597
        %1604 = vmatprep.subr.mxu0 0.0
        %1605 = vmatpush1.msra.mxu0 0.0
        %1606 = vmatprep.subr.mxu0 0.0
        %1607 = vmatpush1.msra.mxu0 0.0
        %1608 = vmatprep.subr.mxu0 0.0
        %1609 = vmatpush1.msra.mxu0 0.0
        %1610 = vmatprep.subr.mxu0 0.0
        %1611 = vmatpush1.msra.mxu0 0.0
        %1612 = vmatprep.subr.mxu0 0.0
        %1613 = vmatpush1.msra.mxu0 0.0
        %1614 = vmatprep.subr.mxu0 0.0
        %1615 = vmatpush1.msra.mxu0 0.0
        %1616 = vmatprep.subr.mxu0 0.0
        %1617 = vmatpush1.msra.mxu0 0.0
        %1618 = vmatprep.subr.mxu0 0.0
        %1619 = vmatpush1.msra.mxu0 0.0
        %1620 = vmatprep.subr.mxu0 0.0
        %1621 = vmatpush1.msra.mxu0 0.0
        %1622 = vmatprep.subr.mxu0 0.0
        %1623 = vmatpush1.msra.mxu0 0.0
        %1624 = vmatprep.subr.mxu0 0.0
        %1625 = vmatpush1.msra.mxu0 0.0
        %1626 = vmatprep.subr.mxu0 0.0
        %1627 = vmatpush1.msra.mxu0 0.0
        %1628 = vmatprep.subr.mxu0 0.0
        %1629 = vmatpush1.msra.mxu0 0.0
        %1630 = vmatprep.subr.mxu0 0.0
        %1631 = vmatpush1.msra.mxu0 0.0
        %1632 = vmatprep.subr.mxu0 0.0
        %1633 = vmatpush1.msra.mxu0 0.0
        %1634 = vmatprep.subr.mxu0 0.0
        %1635 = vmatpush1.msra.mxu0 0.0
        %1636 = vmatprep.subr.mxu0 0.0
        %1637 = vmatpush1.msra.mxu0 0.0
        %1638 = vmatprep.subr.mxu0 0.0
        %1639 = vmatpush1.msra.mxu0 0.0
        %1640 = vmatprep.subr.mxu0 0.0
        %1641 = vmatpush1.msra.mxu0 0.0
        %1642 = vmatprep.subr.mxu0 0.0
        %1643 = vmatpush1.msra.mxu0 0.0
        %1644 = vmatprep.subr.mxu0 0.0
        %1645 = vmatpush1.msra.mxu0 0.0
        %1646 = vmatprep.subr.mxu0 0.0
        %1647 = vmatpush1.msra.mxu0 0.0
        %1648 = vmatprep.subr.mxu0 0.0
        %1649 = vmatpush1.msra.mxu0 0.0
        %1650 = vmatprep.subr.mxu0 0.0
        %1651 = vmatpush1.msra.mxu0 0.0
        %1652 = vmatprep.subr.mxu0 0.0
        %1653 = vmatpush1.msra.mxu0 0.0
        %1654 = vmatprep.subr.mxu0 0.0
        %1655 = vmatpush1.msra.mxu0 0.0
        %1656 = vmatprep.subr.mxu0 0.0
        %1657 = vmatpush1.msra.mxu0 0.0
        %1658 = vmatprep.subr.mxu0 0.0
        %1659 = vmatpush1.msra.mxu0 0.0
        %1660 = vmatprep.subr.mxu0 0.0
        %1661 = vmatpush1.msra.mxu0 0.0
        %1662 = vmatprep.subr.mxu0 0.0
        %1663 = vmatpush1.msra.mxu0 0.0
        %1664 = vmatprep.subr.mxu0 0.0
        %1665 = vmatpush1.msra.mxu0 0.0
        %1666 = vmatprep.mubr.f32.mxu0 0.0
        %1667 = vmatmul.mubr.f32.gmra.mrb[0].mxu0 %v1600
        %v1668 = vpop.f32.mrb[0].mxu0
        %v1669 = vadd.f32 0.0, %v1668
        %v1670 = vpop.f32.mrb[0].mxu0
        %1671 = vdwg.mxu0
        %v1673 = vsel %vm1030, %v1669, 0
        %1675 = vmatprep.subr.mxu0 0.0
        %1676 = vmatpush1.msra.mxu0 %v1023
        %1677 = vmatprep.subr.mxu0 0.0
        %1678 = vmatpush1.msra.mxu0 0.0
        %1679 = vmatprep.subr.mxu0 0.0
        %1680 = vmatpush1.msra.mxu0 0.0
        %1681 = vmatprep.subr.mxu0 0.0
        %1682 = vmatpush1.msra.mxu0 0.0
        %1683 = vmatprep.subr.mxu0 0.0
        %1684 = vmatpush1.msra.mxu0 0.0
        %1685 = vmatprep.subr.mxu0 0.0
        %1686 = vmatpush1.msra.mxu0 0.0
        %1687 = vmatprep.subr.mxu0 0.0
        %1688 = vmatpush1.msra.mxu0 0.0
        %1689 = vmatprep.subr.mxu0 0.0
        %1690 = vmatpush1.msra.mxu0 0.0
        %1691 = vmatprep.subr.mxu0 0.0
        %1692 = vmatpush1.msra.mxu0 0.0
        %1693 = vmatprep.subr.mxu0 0.0
        %1694 = vmatpush1.msra.mxu0 0.0
        %1695 = vmatprep.subr.mxu0 0.0
        %1696 = vmatpush1.msra.mxu0 0.0
        %1697 = vmatprep.subr.mxu0 0.0
        %1698 = vmatpush1.msra.mxu0 0.0
        %1699 = vmatprep.subr.mxu0 0.0
        %1700 = vmatpush1.msra.mxu0 0.0
        %1701 = vmatprep.subr.mxu0 0.0
        %1702 = vmatpush1.msra.mxu0 0.0
        %1703 = vmatprep.subr.mxu0 0.0
        %1704 = vmatpush1.msra.mxu0 0.0
        %1705 = vmatprep.subr.mxu0 0.0
        %1706 = vmatpush1.msra.mxu0 0.0
        %1707 = vmatprep.subr.mxu0 0.0
        %1708 = vmatpush1.msra.mxu0 0.0
        %1709 = vmatprep.subr.mxu0 0.0
        %1710 = vmatpush1.msra.mxu0 0.0
        %1711 = vmatprep.subr.mxu0 0.0
        %1712 = vmatpush1.msra.mxu0 0.0
        %1713 = vmatprep.subr.mxu0 0.0
        %1714 = vmatpush1.msra.mxu0 0.0
        %1715 = vmatprep.subr.mxu0 0.0
        %1716 = vmatpush1.msra.mxu0 0.0
        %1717 = vmatprep.subr.mxu0 0.0
        %1718 = vmatpush1.msra.mxu0 0.0
        %1719 = vmatprep.subr.mxu0 0.0
        %1720 = vmatpush1.msra.mxu0 0.0
        %1721 = vmatprep.subr.mxu0 0.0
        %1722 = vmatpush1.msra.mxu0 0.0
        %1723 = vmatprep.subr.mxu0 0.0
        %1724 = vmatpush1.msra.mxu0 0.0
        %1725 = vmatprep.subr.mxu0 0.0
        %1726 = vmatpush1.msra.mxu0 0.0
        %1727 = vmatprep.subr.mxu0 0.0
        %1728 = vmatpush1.msra.mxu0 0.0
        %1729 = vmatprep.subr.mxu0 0.0
        %1730 = vmatpush1.msra.mxu0 0.0
        %1731 = vmatprep.subr.mxu0 0.0
        %1732 = vmatpush1.msra.mxu0 0.0
        %1733 = vmatprep.subr.mxu0 0.0
        %1734 = vmatpush1.msra.mxu0 0.0
        %1735 = vmatprep.subr.mxu0 0.0
        %1736 = vmatpush1.msra.mxu0 0.0
        %1737 = vmatprep.subr.mxu0 0.0
        %1738 = vmatpush1.msra.mxu0 0.0
        %1739 = vmatprep.mubr.f32.mxu0 0.0
        %1740 = vmatmul.mubr.f32.gmra.mrb[0].mxu0 %v1673
        %v1741 = vpop.f32.mrb[0].mxu0
        %v1742 = vadd.f32 0.0, %v1741
        %v1743 = vpop.f32.mrb[0].mxu0
        %1744 = vdwg.mxu0
        %v1745 = vadd.f32 %v1503, %v1742
        %1746 = vrot.lane.b32.xlu0 %v1026, 104
        %v1747 = vpop.permute.xlu0 %1746
        %1748 = vrot.lane.b32.xlu0 %v1018, 72
        %v1749 = vpop.permute.xlu0 %1748
        %v1750 = vsel %vm1030, %v1747, 0
        %v1752 = vsel %vm1030, %v1749, 0
        %1754 = vmatprep.subr.mxu0 0.0
        %1755 = vmatpush1.xpose.msra.mxu0 %v1752
        %1756 = vmatprep.subr.mxu0 0.0
        %1757 = vmatpush1.xpose.msra.mxu0 0.0
        %1758 = vmatprep.subr.mxu0 0.0
        %1759 = vmatpush1.xpose.msra.mxu0 0.0
        %1760 = vmatprep.subr.mxu0 0.0
        %1761 = vmatpush1.xpose.msra.mxu0 0.0
        %1762 = vmatprep.subr.mxu0 0.0
        %1763 = vmatpush1.xpose.msra.mxu0 0.0
        %1764 = vmatprep.subr.mxu0 0.0
        %1765 = vmatpush1.xpose.msra.mxu0 0.0
        %1766 = vmatprep.subr.mxu0 0.0
        %1767 = vmatpush1.xpose.msra.mxu0 0.0
        %1768 = vmatprep.subr.mxu0 0.0
        %1769 = vmatpush1.xpose.msra.mxu0 0.0
        %1770 = vmatprep.subr.mxu0 0.0
        %1771 = vmatpush1.xpose.msra.mxu0 0.0
        %1772 = vmatprep.subr.mxu0 0.0
        %1773 = vmatpush1.xpose.msra.mxu0 0.0
        %1774 = vmatprep.subr.mxu0 0.0
        %1775 = vmatpush1.xpose.msra.mxu0 0.0
        %1776 = vmatprep.subr.mxu0 0.0
        %1777 = vmatpush1.xpose.msra.mxu0 0.0
        %1778 = vmatprep.subr.mxu0 0.0
        %1779 = vmatpush1.xpose.msra.mxu0 0.0
        %1780 = vmatprep.subr.mxu0 0.0
        %1781 = vmatpush1.xpose.msra.mxu0 0.0
        %1782 = vmatprep.subr.mxu0 0.0
        %1783 = vmatpush1.xpose.msra.mxu0 0.0
        %1784 = vmatprep.subr.mxu0 0.0
        %1785 = vmatpush1.xpose.msra.mxu0 0.0
        %1786 = vmatprep.subr.mxu0 0.0
        %1787 = vmatpush1.xpose.msra.mxu0 0.0
        %1788 = vmatprep.subr.mxu0 0.0
        %1789 = vmatpush1.xpose.msra.mxu0 0.0
        %1790 = vmatprep.subr.mxu0 0.0
        %1791 = vmatpush1.xpose.msra.mxu0 0.0
        %1792 = vmatprep.subr.mxu0 0.0
        %1793 = vmatpush1.xpose.msra.mxu0 0.0
        %1794 = vmatprep.subr.mxu0 0.0
        %1795 = vmatpush1.xpose.msra.mxu0 0.0
        %1796 = vmatprep.subr.mxu0 0.0
        %1797 = vmatpush1.xpose.msra.mxu0 0.0
        %1798 = vmatprep.subr.mxu0 0.0
        %1799 = vmatpush1.xpose.msra.mxu0 0.0
        %1800 = vmatprep.subr.mxu0 0.0
        %1801 = vmatpush1.xpose.msra.mxu0 0.0
        %1802 = vmatprep.subr.mxu0 0.0
        %1803 = vmatpush1.xpose.msra.mxu0 0.0
        %1804 = vmatprep.subr.mxu0 0.0
        %1805 = vmatpush1.xpose.msra.mxu0 0.0
        %1806 = vmatprep.subr.mxu0 0.0
        %1807 = vmatpush1.xpose.msra.mxu0 0.0
        %1808 = vmatprep.subr.mxu0 0.0
        %1809 = vmatpush1.xpose.msra.mxu0 0.0
        %1810 = vmatprep.subr.mxu0 0.0
        %1811 = vmatpush1.xpose.msra.mxu0 0.0
        %1812 = vmatprep.subr.mxu0 0.0
        %1813 = vmatpush1.xpose.msra.mxu0 0.0
        %1814 = vmatprep.subr.mxu0 0.0
        %1815 = vmatpush1.xpose.msra.mxu0 0.0
        %1816 = vmatprep.subr.mxu0 0.0
        %1817 = vmatpush1.xpose.msra.mxu0 0.0
        %1818 = vmatprep.mubr.f32.mxu0 0.0
        %1819 = vmatmul.mubr.f32.gmra.mrb[0].mxu0 %v1750
        %v1820 = vpop.f32.mrb[0].mxu0
        %v1821 = vadd.f32 0.0, %v1820
        %v1822 = vpop.f32.mrb[0].mxu0
        %1823 = vdwg.mxu0
        %v1824 = vsel %vm902, -1e+09, %v1821
        %v1825 = vsel %vm1030, %v1824, -inf
        %1826 = vmax.xlane.f32.xlu0 %v1825
        %v1827 = vpop.xlane.xlu0 %1826
        %v1828 = vsub.f32 %v1824, %v1827
        %v1829 = vmul.f32 %v1828, 1.442695
        %v1830 = vpow.pop %v1829
        %v1831 = vsel %vm1030, %v1830, 0.0
        %1832 = vadd.xlane.f32.xlu0 %v1831
        %v1833 = vpop.xlane.xlu0 %1832
        %v1834 = vrcp.pop %v1833
        %v1835 = vmul.f32 %v1830, %v1834
        %1836 = vrot.lane.b32.xlu0 %v1018, 40
        %v1837 = vpop.permute.xlu0 %1836
        %v1840 = vsel %vm1030, %v1835, 0
        %1842 = vmatprep.subr.mxu0 0.0
        %1843 = vmatpush1.msra.mxu0 %v1837
        %1844 = vmatprep.subr.mxu0 0.0
        %1845 = vmatpush1.msra.mxu0 0.0
        %1846 = vmatprep.subr.mxu0 0.0
        %1847 = vmatpush1.msra.mxu0 0.0
        %1848 = vmatprep.subr.mxu0 0.0
        %1849 = vmatpush1.msra.mxu0 0.0
        %1850 = vmatprep.subr.mxu0 0.0
        %1851 = vmatpush1.msra.mxu0 0.0
        %1852 = vmatprep.subr.mxu0 0.0
        %1853 = vmatpush1.msra.mxu0 0.0
        %1854 = vmatprep.subr.mxu0 0.0
        %1855 = vmatpush1.msra.mxu0 0.0
        %1856 = vmatprep.subr.mxu0 0.0
        %1857 = vmatpush1.msra.mxu0 0.0
        %1858 = vmatprep.subr.mxu0 0.0
        %1859 = vmatpush1.msra.mxu0 0.0
        %1860 = vmatprep.subr.mxu0 0.0
        %1861 = vmatpush1.msra.mxu0 0.0
        %1862 = vmatprep.subr.mxu0 0.0
        %1863 = vmatpush1.msra.mxu0 0.0
        %1864 = vmatprep.subr.mxu0 0.0
        %1865 = vmatpush1.msra.mxu0 0.0
        %1866 = vmatprep.subr.mxu0 0.0
        %1867 = vmatpush1.msra.mxu0 0.0
        %1868 = vmatprep.subr.mxu0 0.0
        %1869 = vmatpush1.msra.mxu0 0.0
        %1870 = vmatprep.subr.mxu0 0.0
        %1871 = vmatpush1.msra.mxu0 0.0
        %1872 = vmatprep.subr.mxu0 0.0
        %1873 = vmatpush1.msra.mxu0 0.0
        %1874 = vmatprep.subr.mxu0 0.0
        %1875 = vmatpush1.msra.mxu0 0.0
        %1876 = vmatprep.subr.mxu0 0.0
        %1877 = vmatpush1.msra.mxu0 0.0
        %1878 = vmatprep.subr.mxu0 0.0
        %1879 = vmatpush1.msra.mxu0 0.0
        %1880 = vmatprep.subr.mxu0 0.0
        %1881 = vmatpush1.msra.mxu0 0.0
        %1882 = vmatprep.subr.mxu0 0.0
        %1883 = vmatpush1.msra.mxu0 0.0
        %1884 = vmatprep.subr.mxu0 0.0
        %1885 = vmatpush1.msra.mxu0 0.0
        %1886 = vmatprep.subr.mxu0 0.0
        %1887 = vmatpush1.msra.mxu0 0.0
        %1888 = vmatprep.subr.mxu0 0.0
        %1889 = vmatpush1.msra.mxu0 0.0
        %1890 = vmatprep.subr.mxu0 0.0
        %1891 = vmatpush1.msra.mxu0 0.0
        %1892 = vmatprep.subr.mxu0 0.0
        %1893 = vmatpush1.msra.mxu0 0.0
        %1894 = vmatprep.subr.mxu0 0.0
        %1895 = vmatpush1.msra.mxu0 0.0
        %1896 = vmatprep.subr.mxu0 0.0
        %1897 = vmatpush1.msra.mxu0 0.0
        %1898 = vmatprep.subr.mxu0 0.0
        %1899 = vmatpush1.msra.mxu0 0.0
        %1900 = vmatprep.subr.mxu0 0.0
        %1901 = vmatpush1.msra.mxu0 0.0
        %1902 = vmatprep.subr.mxu0 0.0
        %1903 = vmatpush1.msra.mxu0 0.0
        %1904 = vmatprep.subr.mxu0 0.0
        %1905 = vmatpush1.msra.mxu0 0.0
        %1906 = vmatprep.mubr.f32.mxu0 0.0
        %1907 = vmatmul.mubr.f32.gmra.mrb[0].mxu0 %v1840
        %v1908 = vpop.f32.mrb[0].mxu0
        %v1909 = vadd.f32 0.0, %v1908
        %v1910 = vpop.f32.mrb[0].mxu0
        %1911 = vdwg.mxu0
        %v1913 = vsel %vm1030, %v1909, 0
        %1915 = vmatprep.subr.mxu0 0.0
        %1916 = vmatpush1.msra.mxu0 %v1024
        %1917 = vmatprep.subr.mxu0 0.0
        %1918 = vmatpush1.msra.mxu0 0.0
        %1919 = vmatprep.subr.mxu0 0.0
        %1920 = vmatpush1.msra.mxu0 0.0
        %1921 = vmatprep.subr.mxu0 0.0
        %1922 = vmatpush1.msra.mxu0 0.0
        %1923 = vmatprep.subr.mxu0 0.0
        %1924 = vmatpush1.msra.mxu0 0.0
        %1925 = vmatprep.subr.mxu0 0.0
        %1926 = vmatpush1.msra.mxu0 0.0
        %1927 = vmatprep.subr.mxu0 0.0
        %1928 = vmatpush1.msra.mxu0 0.0
        %1929 = vmatprep.subr.mxu0 0.0
        %1930 = vmatpush1.msra.mxu0 0.0
        %1931 = vmatprep.subr.mxu0 0.0
        %1932 = vmatpush1.msra.mxu0 0.0
        %1933 = vmatprep.subr.mxu0 0.0
        %1934 = vmatpush1.msra.mxu0 0.0
        %1935 = vmatprep.subr.mxu0 0.0
        %1936 = vmatpush1.msra.mxu0 0.0
        %1937 = vmatprep.subr.mxu0 0.0
        %1938 = vmatpush1.msra.mxu0 0.0
        %1939 = vmatprep.subr.mxu0 0.0
        %1940 = vmatpush1.msra.mxu0 0.0
        %1941 = vmatprep.subr.mxu0 0.0
        %1942 = vmatpush1.msra.mxu0 0.0
        %1943 = vmatprep.subr.mxu0 0.0
        %1944 = vmatpush1.msra.mxu0 0.0
        %1945 = vmatprep.subr.mxu0 0.0
        %1946 = vmatpush1.msra.mxu0 0.0
        %1947 = vmatprep.subr.mxu0 0.0
        %1948 = vmatpush1.msra.mxu0 0.0
        %1949 = vmatprep.subr.mxu0 0.0
        %1950 = vmatpush1.msra.mxu0 0.0
        %1951 = vmatprep.subr.mxu0 0.0
        %1952 = vmatpush1.msra.mxu0 0.0
        %1953 = vmatprep.subr.mxu0 0.0
        %1954 = vmatpush1.msra.mxu0 0.0
        %1955 = vmatprep.subr.mxu0 0.0
        %1956 = vmatpush1.msra.mxu0 0.0
        %1957 = vmatprep.subr.mxu0 0.0
        %1958 = vmatpush1.msra.mxu0 0.0
        %1959 = vmatprep.subr.mxu0 0.0
        %1960 = vmatpush1.msra.mxu0 0.0
        %1961 = vmatprep.subr.mxu0 0.0
        %1962 = vmatpush1.msra.mxu0 0.0
        %1963 = vmatprep.subr.mxu0 0.0
        %1964 = vmatpush1.msra.mxu0 0.0
        %1965 = vmatprep.subr.mxu0 0.0
        %1966 = vmatpush1.msra.mxu0 0.0
        %1967 = vmatprep.subr.mxu0 0.0
        %1968 = vmatpush1.msra.mxu0 0.0
        %1969 = vmatprep.subr.mxu0 0.0
        %1970 = vmatpush1.msra.mxu0 0.0
        %1971 = vmatprep.subr.mxu0 0.0
        %1972 = vmatpush1.msra.mxu0 0.0
        %1973 = vmatprep.subr.mxu0 0.0
        %1974 = vmatpush1.msra.mxu0 0.0
        %1975 = vmatprep.subr.mxu0 0.0
        %1976 = vmatpush1.msra.mxu0 0.0
        %1977 = vmatprep.subr.mxu0 0.0
        %1978 = vmatpush1.msra.mxu0 0.0
        %1979 = vmatprep.mubr.f32.mxu0 0.0
        %1980 = vmatmul.mubr.f32.gmra.mrb[0].mxu0 %v1913
        %v1981 = vpop.f32.mrb[0].mxu0
        %v1982 = vadd.f32 0.0, %v1981
        %v1983 = vpop.f32.mrb[0].mxu0
        %1984 = vdwg.mxu0
        %v1985 = vadd.f32 %v1745, %v1982
        %v1987 = vlaneseq
        %v1988 = vshrl.u32 %v1987, 7
        %v1989 = vsub.s32 0, %v1988
        %v1990 = vrot.slane %v1025, %v1989
        %v1992 = vadd.f32 %v1985, %v1990
        %v1993 = vadd.f32 %v897, %v1992
        %v1994 = vsel %vm905, %v1993, 0.0
        %1995 = vadd.xlane.f32.xlu0 %v1994
        %v1996 = vpop.xlane.xlu0 %1995
        %v1997 = vmul.f32 %v1996, %v909
        %v1998 = vsub.f32 %v1993, %v1997
        %v1999 = vmul.f32 %v1998, %v1998
        %v2000 = vsel %vm905, %v1999, 0.0
        %2001 = vadd.xlane.f32.xlu0 %v2000
        %v2002 = vpop.xlane.xlu0 %2001
        %v2003 = vmul.f32 %v2002, 0.032258064
        %v2004 = vrsqrt.pop %v2003
        %v2005 = vmul.f32 %v2003, %v2004
        %vm2006 = vcmp.eq.f32.partialorder %v2003, inf
        %v2007 = vsel %vm2006, %v2003, %v2005
        %vm2008 = vcmp.eq.f32.partialorder %v2003, 0.0
        %v2009 = vand.u32 %v2003, 2147483648
        %v2010 = vsel %vm2008, %v2009, %v2007
        %v2011 = vlaneseq
        %v2012 = vshrl.u32 %v2011, 7
        %v2013 = vsub.s32 1, %v2012
        %v2014 = vrot.slane %v903, %v2013
        %v2015 = vmul.f32 %v2014, %v1998
        %v2016 = vadd.f32 %v2010, 1e-06
        %v2017 = vrcp.pop %v2016
        %v2018 = vmul.f32 %v2015, %v2017
        %v2019 = vlaneseq
        %v2020 = vshrl.u32 %v2019, 7
        %v2021 = vsub.s32 1, %v2020
        %v2022 = vrot.slane %v904, %v2021
        %v2023 = vadd.f32 %v2018, %v2022
        %v2024 = vld [vmem:[%s8] sm:$0xff]
        %v2025 = vld [vmem:[%s8 + $0x8] sm:$0xff]
        %v2026 = vld [vmem:[%s8 + $0x10] sm:$0xff]
        %v2027 = vld [vmem:[%s8 + $0x18] sm:$0xff]
        %v2028 = vld [vmem:[#allocation10] sm:$0x1]
        %v2030 = vlaneseq
        %v2031 = vshrl.u32 %v2030, 7
        %v2032 = vsub.s32 0, %v2031
        %v2033 = vrot.slane %v2028, %v2032
        %v2036 = vsel %vm905, %v2023, 0
        %2038 = vmatprep.subr.mxu0 0.0
        %2039 = vmatpush1.msra.mxu0 %v2024
        %2040 = vmatprep.subr.mxu0 0.0
        %2041 = vmatpush1.msra.mxu0 %v2025
        %2042 = vmatprep.subr.mxu0 0.0
        %2043 = vmatpush1.msra.mxu0 %v2026
        %2044 = vmatprep.subr.mxu0 0.0
        %2045 = vmatpush1.msra.mxu0 %v2027
        %2046 = vmatprep.subr.mxu0 0.0
        %2047 = vmatpush1.msra.mxu0 0.0
        %2048 = vmatprep.subr.mxu0 0.0
        %2049 = vmatpush1.msra.mxu0 0.0
        %2050 = vmatprep.subr.mxu0 0.0
        %2051 = vmatpush1.msra.mxu0 0.0
        %2052 = vmatprep.subr.mxu0 0.0
        %2053 = vmatpush1.msra.mxu0 0.0
        %2054 = vmatprep.subr.mxu0 0.0
        %2055 = vmatpush1.msra.mxu0 0.0
        %2056 = vmatprep.subr.mxu0 0.0
        %2057 = vmatpush1.msra.mxu0 0.0
        %2058 = vmatprep.subr.mxu0 0.0
        %2059 = vmatpush1.msra.mxu0 0.0
        %2060 = vmatprep.subr.mxu0 0.0
        %2061 = vmatpush1.msra.mxu0 0.0
        %2062 = vmatprep.subr.mxu0 0.0
        %2063 = vmatpush1.msra.mxu0 0.0
        %2064 = vmatprep.subr.mxu0 0.0
        %2065 = vmatpush1.msra.mxu0 0.0
        %2066 = vmatprep.subr.mxu0 0.0
        %2067 = vmatpush1.msra.mxu0 0.0
        %2068 = vmatprep.subr.mxu0 0.0
        %2069 = vmatpush1.msra.mxu0 0.0
        %2070 = vmatprep.subr.mxu0 0.0
        %2071 = vmatpush1.msra.mxu0 0.0
        %2072 = vmatprep.subr.mxu0 0.0
        %2073 = vmatpush1.msra.mxu0 0.0
        %2074 = vmatprep.subr.mxu0 0.0
        %2075 = vmatpush1.msra.mxu0 0.0
        %2076 = vmatprep.subr.mxu0 0.0
        %2077 = vmatpush1.msra.mxu0 0.0
        %2078 = vmatprep.subr.mxu0 0.0
        %2079 = vmatpush1.msra.mxu0 0.0
        %2080 = vmatprep.subr.mxu0 0.0
        %2081 = vmatpush1.msra.mxu0 0.0
        %2082 = vmatprep.subr.mxu0 0.0
        %2083 = vmatpush1.msra.mxu0 0.0
        %2084 = vmatprep.subr.mxu0 0.0
        %2085 = vmatpush1.msra.mxu0 0.0
        %2086 = vmatprep.subr.mxu0 0.0
        %2087 = vmatpush1.msra.mxu0 0.0
        %2088 = vmatprep.subr.mxu0 0.0
        %2089 = vmatpush1.msra.mxu0 0.0
        %2090 = vmatprep.subr.mxu0 0.0
        %2091 = vmatpush1.msra.mxu0 0.0
        %2092 = vmatprep.subr.mxu0 0.0
        %2093 = vmatpush1.msra.mxu0 0.0
        %2094 = vmatprep.subr.mxu0 0.0
        %2095 = vmatpush1.msra.mxu0 0.0
        %2096 = vmatprep.subr.mxu0 0.0
        %2097 = vmatpush1.msra.mxu0 0.0
        %2098 = vmatprep.subr.mxu0 0.0
        %2099 = vmatpush1.msra.mxu0 0.0
        %2100 = vmatprep.subr.mxu0 0.0
        %2101 = vmatpush1.msra.mxu0 0.0
        %2102 = vmatprep.mubr.f32.mxu0 0.0
        %2103 = vmatmul.mubr.f32.gmra.mrb[0].mxu0 %v2036
        %v2104 = vpop.f32.mrb[0].mxu0
        %v2105 = vadd.f32 %v2033, %v2104
        %v2106 = vpop.f32.mrb[0].mxu0
        %2107 = vdwg.mxu0
        %v2108 = vld [vmem:[#allocation11] sm:$0xff]
        %v2109 = vld [vmem:[#allocation11 + $0x8] sm:$0xff]
        %v2110 = vld [vmem:[#allocation11 + $0x10] sm:$0xff]
        %v2111 = vld [vmem:[#allocation11 + $0x18] sm:$0xff]
        %v2112 = vld [vmem:[#allocation13] sm:$0x1]
        %v2114 = vlaneseq
        %v2115 = vshrl.u32 %v2114, 7
        %v2116 = vsub.s32 0, %v2115
        %v2117 = vrot.slane %v2112, %v2116
        %v2120 = vsel %vm905, %v898, 0
        %2122 = vmatprep.subr.mxu0 0.0
        %2123 = vmatpush1.msra.mxu0 %v2108
        %2124 = vmatprep.subr.mxu0 0.0
        %2125 = vmatpush1.msra.mxu0 %v2109
        %2126 = vmatprep.subr.mxu0 0.0
        %2127 = vmatpush1.msra.mxu0 %v2110
        %2128 = vmatprep.subr.mxu0 0.0
        %2129 = vmatpush1.msra.mxu0 %v2111
        %2130 = vmatprep.subr.mxu0 0.0
        %2131 = vmatpush1.msra.mxu0 0.0
        %2132 = vmatprep.subr.mxu0 0.0
        %2133 = vmatpush1.msra.mxu0 0.0
        %2134 = vmatprep.subr.mxu0 0.0
        %2135 = vmatpush1.msra.mxu0 0.0
        %2136 = vmatprep.subr.mxu0 0.0
        %2137 = vmatpush1.msra.mxu0 0.0
        %2138 = vmatprep.subr.mxu0 0.0
        %2139 = vmatpush1.msra.mxu0 0.0
        %2140 = vmatprep.subr.mxu0 0.0
        %2141 = vmatpush1.msra.mxu0 0.0
        %2142 = vmatprep.subr.mxu0 0.0
        %2143 = vmatpush1.msra.mxu0 0.0
        %2144 = vmatprep.subr.mxu0 0.0
        %2145 = vmatpush1.msra.mxu0 0.0
        %2146 = vmatprep.subr.mxu0 0.0
        %2147 = vmatpush1.msra.mxu0 0.0
        %2148 = vmatprep.subr.mxu0 0.0
        %2149 = vmatpush1.msra.mxu0 0.0
        %2150 = vmatprep.subr.mxu0 0.0
        %2151 = vmatpush1.msra.mxu0 0.0
        %2152 = vmatprep.subr.mxu0 0.0
        %2153 = vmatpush1.msra.mxu0 0.0
        %2154 = vmatprep.subr.mxu0 0.0
        %2155 = vmatpush1.msra.mxu0 0.0
        %2156 = vmatprep.subr.mxu0 0.0
        %2157 = vmatpush1.msra.mxu0 0.0
        %2158 = vmatprep.subr.mxu0 0.0
        %2159 = vmatpush1.msra.mxu0 0.0
        %2160 = vmatprep.subr.mxu0 0.0
        %2161 = vmatpush1.msra.mxu0 0.0
        %2162 = vmatprep.subr.mxu0 0.0
        %2163 = vmatpush1.msra.mxu0 0.0
        %2164 = vmatprep.subr.mxu0 0.0
        %2165 = vmatpush1.msra.mxu0 0.0
        %2166 = vmatprep.subr.mxu0 0.0
        %2167 = vmatpush1.msra.mxu0 0.0
        %2168 = vmatprep.subr.mxu0 0.0
        %2169 = vmatpush1.msra.mxu0 0.0
        %2170 = vmatprep.subr.mxu0 0.0
        %2171 = vmatpush1.msra.mxu0 0.0
        %2172 = vmatprep.subr.mxu0 0.0
        %2173 = vmatpush1.msra.mxu0 0.0
        %2174 = vmatprep.subr.mxu0 0.0
        %2175 = vmatpush1.msra.mxu0 0.0
        %2176 = vmatprep.subr.mxu0 0.0
        %2177 = vmatpush1.msra.mxu0 0.0
        %2178 = vmatprep.subr.mxu0 0.0
        %2179 = vmatpush1.msra.mxu0 0.0
        %2180 = vmatprep.subr.mxu0 0.0
        %2181 = vmatpush1.msra.mxu0 0.0
        %2182 = vmatprep.subr.mxu0 0.0
        %2183 = vmatpush1.msra.mxu0 0.0
        %2184 = vmatprep.subr.mxu0 0.0
        %2185 = vmatpush1.msra.mxu0 0.0
        %2186 = vmatprep.mubr.f32.mxu0 0.0
        %2187 = vmatmul.mubr.f32.gmra.mrb[0].mxu0 %v2120
        %v2188 = vpop.f32.mrb[0].mxu0
        %v2189 = vadd.f32 %v2117, %v2188
        %v2190 = vpop.f32.mrb[0].mxu0
        %2191 = vdwg.mxu0
        %v2192 = vld [vmem:[#allocation14] sm:$0xff]
        %v2193 = vld [vmem:[#allocation14 + $0x8] sm:$0xff]
        %v2194 = vld [vmem:[#allocation14 + $0x10] sm:$0xff]
        %v2195 = vld [vmem:[#allocation14 + $0x18] sm:$0xff]
        %v2196 = vld [vmem:[#allocation16] sm:$0x1]
        %v2197 = vmul.f32 %v2105, 0.35355338
        %v2199 = vsel %vm1030, %v2197, 0
        %v2202 = vsel %vm1030, %v2189, 0
        %2204 = vmatprep.subr.mxu0 0.0
        %2205 = vmatpush1.xpose.msra.mxu0 %v2202
        %2206 = vmatprep.subr.mxu0 0.0
        %2207 = vmatpush1.xpose.msra.mxu0 0.0
        %2208 = vmatprep.subr.mxu0 0.0
        %2209 = vmatpush1.xpose.msra.mxu0 0.0
        %2210 = vmatprep.subr.mxu0 0.0
        %2211 = vmatpush1.xpose.msra.mxu0 0.0
        %2212 = vmatprep.subr.mxu0 0.0
        %2213 = vmatpush1.xpose.msra.mxu0 0.0
        %2214 = vmatprep.subr.mxu0 0.0
        %2215 = vmatpush1.xpose.msra.mxu0 0.0
        %2216 = vmatprep.subr.mxu0 0.0
        %2217 = vmatpush1.xpose.msra.mxu0 0.0
        %2218 = vmatprep.subr.mxu0 0.0
        %2219 = vmatpush1.xpose.msra.mxu0 0.0
        %2220 = vmatprep.subr.mxu0 0.0
        %2221 = vmatpush1.xpose.msra.mxu0 0.0
        %2222 = vmatprep.subr.mxu0 0.0
        %2223 = vmatpush1.xpose.msra.mxu0 0.0
        %2224 = vmatprep.subr.mxu0 0.0
        %2225 = vmatpush1.xpose.msra.mxu0 0.0
        %2226 = vmatprep.subr.mxu0 0.0
        %2227 = vmatpush1.xpose.msra.mxu0 0.0
        %2228 = vmatprep.subr.mxu0 0.0
        %2229 = vmatpush1.xpose.msra.mxu0 0.0
        %2230 = vmatprep.subr.mxu0 0.0
        %2231 = vmatpush1.xpose.msra.mxu0 0.0
        %2232 = vmatprep.subr.mxu0 0.0
        %2233 = vmatpush1.xpose.msra.mxu0 0.0
        %2234 = vmatprep.subr.mxu0 0.0
        %2235 = vmatpush1.xpose.msra.mxu0 0.0
        %2236 = vmatprep.subr.mxu0 0.0
        %2237 = vmatpush1.xpose.msra.mxu0 0.0
        %2238 = vmatprep.subr.mxu0 0.0
        %2239 = vmatpush1.xpose.msra.mxu0 0.0
        %2240 = vmatprep.subr.mxu0 0.0
        %2241 = vmatpush1.xpose.msra.mxu0 0.0
        %2242 = vmatprep.subr.mxu0 0.0
        %2243 = vmatpush1.xpose.msra.mxu0 0.0
        %2244 = vmatprep.subr.mxu0 0.0
        %2245 = vmatpush1.xpose.msra.mxu0 0.0
        %2246 = vmatprep.subr.mxu0 0.0
        %2247 = vmatpush1.xpose.msra.mxu0 0.0
        %2248 = vmatprep.subr.mxu0 0.0
        %2249 = vmatpush1.xpose.msra.mxu0 0.0
        %2250 = vmatprep.subr.mxu0 0.0
        %2251 = vmatpush1.xpose.msra.mxu0 0.0
        %2252 = vmatprep.subr.mxu0 0.0
        %2253 = vmatpush1.xpose.msra.mxu0 0.0
        %2254 = vmatprep.subr.mxu0 0.0
        %2255 = vmatpush1.xpose.msra.mxu0 0.0
        %2256 = vmatprep.subr.mxu0 0.0
        %2257 = vmatpush1.xpose.msra.mxu0 0.0
        %2258 = vmatprep.subr.mxu0 0.0
        %2259 = vmatpush1.xpose.msra.mxu0 0.0
        %2260 = vmatprep.subr.mxu0 0.0
        %2261 = vmatpush1.xpose.msra.mxu0 0.0
        %2262 = vmatprep.subr.mxu0 0.0
        %2263 = vmatpush1.xpose.msra.mxu0 0.0
        %2264 = vmatprep.subr.mxu0 0.0
        %2265 = vmatpush1.xpose.msra.mxu0 0.0
        %2266 = vmatprep.subr.mxu0 0.0
        %2267 = vmatpush1.xpose.msra.mxu0 0.0
        %2268 = vmatprep.mubr.f32.mxu0 0.0
        %2269 = vmatmul.mubr.f32.gmra.mrb[0].mxu0 %v2199
        %v2270 = vpop.f32.mrb[0].mxu0
        %v2271 = vadd.f32 0.0, %v2270
        %v2272 = vpop.f32.mrb[0].mxu0
        %2273 = vdwg.mxu0
        %v2274 = vsel %vm900, 1, 0
        %v2275 = vlaneseq
        %v2276 = vshrl.u32 %v2275, 7
        %v2277 = vsub.s32 0, %v2276
        %v2278 = vrot.slane %v2274, %v2277
        %vm2279 = vcmp.eq.s32.totalorder %v2278, 1
        %v2280 = vsel %vm2279, -1e+09, %v2271
        %v2281 = vsel %vm1030, %v2280, -inf
        %2282 = vmax.xlane.f32.xlu0 %v2281
        %v2283 = vpop.xlane.xlu0 %2282
        %v2284 = vsub.f32 %v2280, %v2283
        %v2285 = vmul.f32 %v2284, 1.442695
        %v2286 = vpow.pop %v2285
        %v2287 = vsel %vm1030, %v2286, 0.0
        %2288 = vadd.xlane.f32.xlu0 %v2287
        %v2289 = vpop.xlane.xlu0 %2288
        %v2290 = vrcp.pop %v2289
        %v2291 = vmul.f32 %v2286, %v2290
        %2292 = vrot.lane.b32.xlu0 %v2189, 96
        %v2293 = vpop.permute.xlu0 %2292
        %v2296 = vsel %vm1030, %v2291, 0
        %2298 = vmatprep.subr.mxu0 0.0
        %2299 = vmatpush1.msra.mxu0 %v2293
        %2300 = vmatprep.subr.mxu0 0.0
        %2301 = vmatpush1.msra.mxu0 0.0
        %2302 = vmatprep.subr.mxu0 0.0
        %2303 = vmatpush1.msra.mxu0 0.0
        %2304 = vmatprep.subr.mxu0 0.0
        %2305 = vmatpush1.msra.mxu0 0.0
        %2306 = vmatprep.subr.mxu0 0.0
        %2307 = vmatpush1.msra.mxu0 0.0
        %2308 = vmatprep.subr.mxu0 0.0
        %2309 = vmatpush1.msra.mxu0 0.0
        %2310 = vmatprep.subr.mxu0 0.0
        %2311 = vmatpush1.msra.mxu0 0.0
        %2312 = vmatprep.subr.mxu0 0.0
        %2313 = vmatpush1.msra.mxu0 0.0
        %2314 = vmatprep.subr.mxu0 0.0
        %2315 = vmatpush1.msra.mxu0 0.0
        %2316 = vmatprep.subr.mxu0 0.0
        %2317 = vmatpush1.msra.mxu0 0.0
        %2318 = vmatprep.subr.mxu0 0.0
        %2319 = vmatpush1.msra.mxu0 0.0
        %2320 = vmatprep.subr.mxu0 0.0
        %2321 = vmatpush1.msra.mxu0 0.0
        %2322 = vmatprep.subr.mxu0 0.0
        %2323 = vmatpush1.msra.mxu0 0.0
        %2324 = vmatprep.subr.mxu0 0.0
        %2325 = vmatpush1.msra.mxu0 0.0
        %2326 = vmatprep.subr.mxu0 0.0
        %2327 = vmatpush1.msra.mxu0 0.0
        %2328 = vmatprep.subr.mxu0 0.0
        %2329 = vmatpush1.msra.mxu0 0.0
        %2330 = vmatprep.subr.mxu0 0.0
        %2331 = vmatpush1.msra.mxu0 0.0
        %2332 = vmatprep.subr.mxu0 0.0
        %2333 = vmatpush1.msra.mxu0 0.0
        %2334 = vmatprep.subr.mxu0 0.0
        %2335 = vmatpush1.msra.mxu0 0.0
        %2336 = vmatprep.subr.mxu0 0.0
        %2337 = vmatpush1.msra.mxu0 0.0
        %2338 = vmatprep.subr.mxu0 0.0
        %2339 = vmatpush1.msra.mxu0 0.0
        %2340 = vmatprep.subr.mxu0 0.0
        %2341 = vmatpush1.msra.mxu0 0.0
        %2342 = vmatprep.subr.mxu0 0.0
        %2343 = vmatpush1.msra.mxu0 0.0
        %2344 = vmatprep.subr.mxu0 0.0
        %2345 = vmatpush1.msra.mxu0 0.0
        %2346 = vmatprep.subr.mxu0 0.0
        %2347 = vmatpush1.msra.mxu0 0.0
        %2348 = vmatprep.subr.mxu0 0.0
        %2349 = vmatpush1.msra.mxu0 0.0
        %2350 = vmatprep.subr.mxu0 0.0
        %2351 = vmatpush1.msra.mxu0 0.0
        %2352 = vmatprep.subr.mxu0 0.0
        %2353 = vmatpush1.msra.mxu0 0.0
        %2354 = vmatprep.subr.mxu0 0.0
        %2355 = vmatpush1.msra.mxu0 0.0
        %2356 = vmatprep.subr.mxu0 0.0
        %2357 = vmatpush1.msra.mxu0 0.0
        %2358 = vmatprep.subr.mxu0 0.0
        %2359 = vmatpush1.msra.mxu0 0.0
        %2360 = vmatprep.subr.mxu0 0.0
        %2361 = vmatpush1.msra.mxu0 0.0
        %2362 = vmatprep.mubr.f32.mxu0 0.0
        %2363 = vmatmul.mubr.f32.gmra.mrb[0].mxu0 %v2296
        %v2364 = vpop.f32.mrb[0].mxu0
        %v2365 = vadd.f32 0.0, %v2364
        %v2366 = vpop.f32.mrb[0].mxu0
        %2367 = vdwg.mxu0
        %2368 = vrot.lane.b32.xlu0 %v2197, 120
        %v2369 = vpop.permute.xlu0 %2368
        %2370 = vrot.lane.b32.xlu0 %v2189, 120
        %v2371 = vpop.permute.xlu0 %2370
        %v2372 = vsel %vm1030, %v2369, 0
        %v2374 = vsel %vm1030, %v2371, 0
        %2376 = vmatprep.subr.mxu0 0.0
        %2377 = vmatpush1.xpose.msra.mxu0 %v2374
        %2378 = vmatprep.subr.mxu0 0.0
        %2379 = vmatpush1.xpose.msra.mxu0 0.0
        %2380 = vmatprep.subr.mxu0 0.0
        %2381 = vmatpush1.xpose.msra.mxu0 0.0
        %2382 = vmatprep.subr.mxu0 0.0
        %2383 = vmatpush1.xpose.msra.mxu0 0.0
        %2384 = vmatprep.subr.mxu0 0.0
        %2385 = vmatpush1.xpose.msra.mxu0 0.0
        %2386 = vmatprep.subr.mxu0 0.0
        %2387 = vmatpush1.xpose.msra.mxu0 0.0
        %2388 = vmatprep.subr.mxu0 0.0
        %2389 = vmatpush1.xpose.msra.mxu0 0.0
        %2390 = vmatprep.subr.mxu0 0.0
        %2391 = vmatpush1.xpose.msra.mxu0 0.0
        %2392 = vmatprep.subr.mxu0 0.0
        %2393 = vmatpush1.xpose.msra.mxu0 0.0
        %2394 = vmatprep.subr.mxu0 0.0
        %2395 = vmatpush1.xpose.msra.mxu0 0.0
        %2396 = vmatprep.subr.mxu0 0.0
        %2397 = vmatpush1.xpose.msra.mxu0 0.0
        %2398 = vmatprep.subr.mxu0 0.0
        %2399 = vmatpush1.xpose.msra.mxu0 0.0
        %2400 = vmatprep.subr.mxu0 0.0
        %2401 = vmatpush1.xpose.msra.mxu0 0.0
        %2402 = vmatprep.subr.mxu0 0.0
        %2403 = vmatpush1.xpose.msra.mxu0 0.0
        %2404 = vmatprep.subr.mxu0 0.0
        %2405 = vmatpush1.xpose.msra.mxu0 0.0
        %2406 = vmatprep.subr.mxu0 0.0
        %2407 = vmatpush1.xpose.msra.mxu0 0.0
        %2408 = vmatprep.subr.mxu0 0.0
        %2409 = vmatpush1.xpose.msra.mxu0 0.0
        %2410 = vmatprep.subr.mxu0 0.0
        %2411 = vmatpush1.xpose.msra.mxu0 0.0
        %2412 = vmatprep.subr.mxu0 0.0
        %2413 = vmatpush1.xpose.msra.mxu0 0.0
        %2414 = vmatprep.subr.mxu0 0.0
        %2415 = vmatpush1.xpose.msra.mxu0 0.0
        %2416 = vmatprep.subr.mxu0 0.0
        %2417 = vmatpush1.xpose.msra.mxu0 0.0
        %2418 = vmatprep.subr.mxu0 0.0
        %2419 = vmatpush1.xpose.msra.mxu0 0.0
        %2420 = vmatprep.subr.mxu0 0.0
        %2421 = vmatpush1.xpose.msra.mxu0 0.0
        %2422 = vmatprep.subr.mxu0 0.0
        %2423 = vmatpush1.xpose.msra.mxu0 0.0
        %2424 = vmatprep.subr.mxu0 0.0
        %2425 = vmatpush1.xpose.msra.mxu0 0.0
        %2426 = vmatprep.subr.mxu0 0.0
        %2427 = vmatpush1.xpose.msra.mxu0 0.0
        %2428 = vmatprep.subr.mxu0 0.0
        %2429 = vmatpush1.xpose.msra.mxu0 0.0
        %2430 = vmatprep.subr.mxu0 0.0
        %2431 = vmatpush1.xpose.msra.mxu0 0.0
        %2432 = vmatprep.subr.mxu0 0.0
        %2433 = vmatpush1.xpose.msra.mxu0 0.0
        %2434 = vmatprep.subr.mxu0 0.0
        %2435 = vmatpush1.xpose.msra.mxu0 0.0
        %2436 = vmatprep.subr.mxu0 0.0
        %2437 = vmatpush1.xpose.msra.mxu0 0.0
        %2438 = vmatprep.subr.mxu0 0.0
        %2439 = vmatpush1.xpose.msra.mxu0 0.0
        %2440 = vmatprep.mubr.f32.mxu0 0.0
        %2441 = vmatmul.mubr.f32.gmra.mrb[0].mxu0 %v2372
        %v2442 = vpop.f32.mrb[0].mxu0
        %v2443 = vadd.f32 0.0, %v2442
        %v2444 = vpop.f32.mrb[0].mxu0
        %2445 = vdwg.mxu0
        %v2446 = vsel %vm2279, -1e+09, %v2443
        %v2447 = vsel %vm1030, %v2446, -inf
        %2448 = vmax.xlane.f32.xlu0 %v2447
        %v2449 = vpop.xlane.xlu0 %2448
        %v2450 = vsub.f32 %v2446, %v2449
        %v2451 = vmul.f32 %v2450, 1.442695
        %v2452 = vpow.pop %v2451
        %v2453 = vsel %vm1030, %v2452, 0.0
        %2454 = vadd.xlane.f32.xlu0 %v2453
        %v2455 = vpop.xlane.xlu0 %2454
        %v2456 = vrcp.pop %v2455
        %v2457 = vmul.f32 %v2452, %v2456
        %2458 = vrot.lane.b32.xlu0 %v2189, 88
        %v2459 = vpop.permute.xlu0 %2458
        %v2462 = vsel %vm1030, %v2457, 0
        %2464 = vmatprep.subr.mxu0 0.0
        %2465 = vmatpush1.msra.mxu0 %v2459
        %2466 = vmatprep.subr.mxu0 0.0
        %2467 = vmatpush1.msra.mxu0 0.0
        %2468 = vmatprep.subr.mxu0 0.0
        %2469 = vmatpush1.msra.mxu0 0.0
        %2470 = vmatprep.subr.mxu0 0.0
        %2471 = vmatpush1.msra.mxu0 0.0
        %2472 = vmatprep.subr.mxu0 0.0
        %2473 = vmatpush1.msra.mxu0 0.0
        %2474 = vmatprep.subr.mxu0 0.0
        %2475 = vmatpush1.msra.mxu0 0.0
        %2476 = vmatprep.subr.mxu0 0.0
        %2477 = vmatpush1.msra.mxu0 0.0
        %2478 = vmatprep.subr.mxu0 0.0
        %2479 = vmatpush1.msra.mxu0 0.0
        %2480 = vmatprep.subr.mxu0 0.0
        %2481 = vmatpush1.msra.mxu0 0.0
        %2482 = vmatprep.subr.mxu0 0.0
        %2483 = vmatpush1.msra.mxu0 0.0
        %2484 = vmatprep.subr.mxu0 0.0
        %2485 = vmatpush1.msra.mxu0 0.0
        %2486 = vmatprep.subr.mxu0 0.0
        %2487 = vmatpush1.msra.mxu0 0.0
        %2488 = vmatprep.subr.mxu0 0.0
        %2489 = vmatpush1.msra.mxu0 0.0
        %2490 = vmatprep.subr.mxu0 0.0
        %2491 = vmatpush1.msra.mxu0 0.0
        %2492 = vmatprep.subr.mxu0 0.0
        %2493 = vmatpush1.msra.mxu0 0.0
        %2494 = vmatprep.subr.mxu0 0.0
        %2495 = vmatpush1.msra.mxu0 0.0
        %2496 = vmatprep.subr.mxu0 0.0
        %2497 = vmatpush1.msra.mxu0 0.0
        %2498 = vmatprep.subr.mxu0 0.0
        %2499 = vmatpush1.msra.mxu0 0.0
        %2500 = vmatprep.subr.mxu0 0.0
        %2501 = vmatpush1.msra.mxu0 0.0
        %2502 = vmatprep.subr.mxu0 0.0
        %2503 = vmatpush1.msra.mxu0 0.0
        %2504 = vmatprep.subr.mxu0 0.0
        %2505 = vmatpush1.msra.mxu0 0.0
        %2506 = vmatprep.subr.mxu0 0.0
        %2507 = vmatpush1.msra.mxu0 0.0
        %2508 = vmatprep.subr.mxu0 0.0
        %2509 = vmatpush1.msra.mxu0 0.0
        %2510 = vmatprep.subr.mxu0 0.0
        %2511 = vmatpush1.msra.mxu0 0.0
        %2512 = vmatprep.subr.mxu0 0.0
        %2513 = vmatpush1.msra.mxu0 0.0
        %2514 = vmatprep.subr.mxu0 0.0
        %2515 = vmatpush1.msra.mxu0 0.0
        %2516 = vmatprep.subr.mxu0 0.0
        %2517 = vmatpush1.msra.mxu0 0.0
        %2518 = vmatprep.subr.mxu0 0.0
        %2519 = vmatpush1.msra.mxu0 0.0
        %2520 = vmatprep.subr.mxu0 0.0
        %2521 = vmatpush1.msra.mxu0 0.0
        %2522 = vmatprep.subr.mxu0 0.0
        %2523 = vmatpush1.msra.mxu0 0.0
        %2524 = vmatprep.subr.mxu0 0.0
        %2525 = vmatpush1.msra.mxu0 0.0
        %2526 = vmatprep.subr.mxu0 0.0
        %2527 = vmatpush1.msra.mxu0 0.0
        %2528 = vmatprep.mubr.f32.mxu0 0.0
        %2529 = vmatmul.mubr.f32.gmra.mrb[0].mxu0 %v2462
        %v2530 = vpop.f32.mrb[0].mxu0
        %v2531 = vadd.f32 0.0, %v2530
        %v2532 = vpop.f32.mrb[0].mxu0
        %2533 = vdwg.mxu0
        %v2535 = vsel %vm1030, %v2531, 0
        %2537 = vmatprep.subr.mxu0 0.0
        %2538 = vmatpush1.msra.mxu0 %v2193
        %2539 = vmatprep.subr.mxu0 0.0
        %2540 = vmatpush1.msra.mxu0 0.0
        %2541 = vmatprep.subr.mxu0 0.0
        %2542 = vmatpush1.msra.mxu0 0.0
        %2543 = vmatprep.subr.mxu0 0.0
        %2544 = vmatpush1.msra.mxu0 0.0
        %2545 = vmatprep.subr.mxu0 0.0
        %2546 = vmatpush1.msra.mxu0 0.0
        %2547 = vmatprep.subr.mxu0 0.0
        %2548 = vmatpush1.msra.mxu0 0.0
        %2549 = vmatprep.subr.mxu0 0.0
        %2550 = vmatpush1.msra.mxu0 0.0
        %2551 = vmatprep.subr.mxu0 0.0
        %2552 = vmatpush1.msra.mxu0 0.0
        %2553 = vmatprep.subr.mxu0 0.0
        %2554 = vmatpush1.msra.mxu0 0.0
        %2555 = vmatprep.subr.mxu0 0.0
        %2556 = vmatpush1.msra.mxu0 0.0
        %2557 = vmatprep.subr.mxu0 0.0
        %2558 = vmatpush1.msra.mxu0 0.0
        %2559 = vmatprep.subr.mxu0 0.0
        %2560 = vmatpush1.msra.mxu0 0.0
        %2561 = vmatprep.subr.mxu0 0.0
        %2562 = vmatpush1.msra.mxu0 0.0
        %2563 = vmatprep.subr.mxu0 0.0
        %2564 = vmatpush1.msra.mxu0 0.0
        %2565 = vmatprep.subr.mxu0 0.0
        %2566 = vmatpush1.msra.mxu0 0.0
        %2567 = vmatprep.subr.mxu0 0.0
        %2568 = vmatpush1.msra.mxu0 0.0
        %2569 = vmatprep.subr.mxu0 0.0
        %2570 = vmatpush1.msra.mxu0 0.0
        %2571 = vmatprep.subr.mxu0 0.0
        %2572 = vmatpush1.msra.mxu0 0.0
        %2573 = vmatprep.subr.mxu0 0.0
        %2574 = vmatpush1.msra.mxu0 0.0
        %2575 = vmatprep.subr.mxu0 0.0
        %2576 = vmatpush1.msra.mxu0 0.0
        %2577 = vmatprep.subr.mxu0 0.0
        %2578 = vmatpush1.msra.mxu0 0.0
        %2579 = vmatprep.subr.mxu0 0.0
        %2580 = vmatpush1.msra.mxu0 0.0
        %2581 = vmatprep.subr.mxu0 0.0
        %2582 = vmatpush1.msra.mxu0 0.0
        %2583 = vmatprep.subr.mxu0 0.0
        %2584 = vmatpush1.msra.mxu0 0.0
        %2585 = vmatprep.subr.mxu0 0.0
        %2586 = vmatpush1.msra.mxu0 0.0
        %2587 = vmatprep.subr.mxu0 0.0
        %2588 = vmatpush1.msra.mxu0 0.0
        %2589 = vmatprep.subr.mxu0 0.0
        %2590 = vmatpush1.msra.mxu0 0.0
        %2591 = vmatprep.subr.mxu0 0.0
        %2592 = vmatpush1.msra.mxu0 0.0
        %2593 = vmatprep.subr.mxu0 0.0
        %2594 = vmatpush1.msra.mxu0 0.0
        %2595 = vmatprep.subr.mxu0 0.0
        %2596 = vmatpush1.msra.mxu0 0.0
        %2597 = vmatprep.subr.mxu0 0.0
        %2598 = vmatpush1.msra.mxu0 0.0
        %2599 = vmatprep.subr.mxu0 0.0
        %2600 = vmatpush1.msra.mxu0 0.0
        %2601 = vmatprep.mubr.f32.mxu0 0.0
        %2602 = vmatmul.mubr.f32.gmra.mrb[0].mxu0 %v2535
        %v2603 = vpop.f32.mrb[0].mxu0
        %v2604 = vadd.f32 0.0, %v2603
        %v2605 = vpop.f32.mrb[0].mxu0
        %2606 = vdwg.mxu0
        %v2608 = vsel %vm1030, %v2365, 0
        %2610 = vmatprep.subr.mxu0 0.0
        %2611 = vmatpush1.msra.mxu0 %v2192
        %2612 = vmatprep.subr.mxu0 0.0
        %2613 = vmatpush1.msra.mxu0 0.0
        %2614 = vmatprep.subr.mxu0 0.0
        %2615 = vmatpush1.msra.mxu0 0.0
        %2616 = vmatprep.subr.mxu0 0.0
        %2617 = vmatpush1.msra.mxu0 0.0
        %2618 = vmatprep.subr.mxu0 0.0
        %2619 = vmatpush1.msra.mxu0 0.0
        %2620 = vmatprep.subr.mxu0 0.0
        %2621 = vmatpush1.msra.mxu0 0.0
        %2622 = vmatprep.subr.mxu0 0.0
        %2623 = vmatpush1.msra.mxu0 0.0
        %2624 = vmatprep.subr.mxu0 0.0
        %2625 = vmatpush1.msra.mxu0 0.0
        %2626 = vmatprep.subr.mxu0 0.0
        %2627 = vmatpush1.msra.mxu0 0.0
        %2628 = vmatprep.subr.mxu0 0.0
        %2629 = vmatpush1.msra.mxu0 0.0
        %2630 = vmatprep.subr.mxu0 0.0
        %2631 = vmatpush1.msra.mxu0 0.0
        %2632 = vmatprep.subr.mxu0 0.0
        %2633 = vmatpush1.msra.mxu0 0.0
        %2634 = vmatprep.subr.mxu0 0.0
        %2635 = vmatpush1.msra.mxu0 0.0
        %2636 = vmatprep.subr.mxu0 0.0
        %2637 = vmatpush1.msra.mxu0 0.0
        %2638 = vmatprep.subr.mxu0 0.0
        %2639 = vmatpush1.msra.mxu0 0.0
        %2640 = vmatprep.subr.mxu0 0.0
        %2641 = vmatpush1.msra.mxu0 0.0
        %2642 = vmatprep.subr.mxu0 0.0
        %2643 = vmatpush1.msra.mxu0 0.0
        %2644 = vmatprep.subr.mxu0 0.0
        %2645 = vmatpush1.msra.mxu0 0.0
        %2646 = vmatprep.subr.mxu0 0.0
        %2647 = vmatpush1.msra.mxu0 0.0
        %2648 = vmatprep.subr.mxu0 0.0
        %2649 = vmatpush1.msra.mxu0 0.0
        %2650 = vmatprep.subr.mxu0 0.0
        %2651 = vmatpush1.msra.mxu0 0.0
        %2652 = vmatprep.subr.mxu0 0.0
        %2653 = vmatpush1.msra.mxu0 0.0
        %2654 = vmatprep.subr.mxu0 0.0
        %2655 = vmatpush1.msra.mxu0 0.0
        %2656 = vmatprep.subr.mxu0 0.0
        %2657 = vmatpush1.msra.mxu0 0.0
        %2658 = vmatprep.subr.mxu0 0.0
        %2659 = vmatpush1.msra.mxu0 0.0
        %2660 = vmatprep.subr.mxu0 0.0
        %2661 = vmatpush1.msra.mxu0 0.0
        %2662 = vmatprep.subr.mxu0 0.0
        %2663 = vmatpush1.msra.mxu0 0.0
        %2664 = vmatprep.subr.mxu0 0.0
        %2665 = vmatpush1.msra.mxu0 0.0
        %2666 = vmatprep.subr.mxu0 0.0
        %2667 = vmatpush1.msra.mxu0 0.0
        %2668 = vmatprep.subr.mxu0 0.0
        %2669 = vmatpush1.msra.mxu0 0.0
        %2670 = vmatprep.subr.mxu0 0.0
        %2671 = vmatpush1.msra.mxu0 0.0
        %2672 = vmatprep.subr.mxu0 0.0
        %2673 = vmatpush1.msra.mxu0 0.0
        %2674 = vmatprep.mubr.f32.mxu0 0.0
        %2675 = vmatmul.mubr.f32.gmra.mrb[0].mxu0 %v2608
        %v2676 = vpop.f32.mrb[0].mxu0
        %v2677 = vadd.f32 %v2604, %v2676
        %v2678 = vpop.f32.mrb[0].mxu0
        %2679 = vdwg.mxu0
        %2680 = vrot.lane.b32.xlu0 %v2197, 112
        %v2681 = vpop.permute.xlu0 %2680
        %2682 = vrot.lane.b32.xlu0 %v2189, 112
        %v2683 = vpop.permute.xlu0 %2682
        %v2684 = vsel %vm1030, %v2681, 0
        %v2686 = vsel %vm1030, %v2683, 0
        %2688 = vmatprep.subr.mxu0 0.0
        %2689 = vmatpush1.xpose.msra.mxu0 %v2686
        %2690 = vmatprep.subr.mxu0 0.0
        %2691 = vmatpush1.xpose.msra.mxu0 0.0
        %2692 = vmatprep.subr.mxu0 0.0
        %2693 = vmatpush1.xpose.msra.mxu0 0.0
        %2694 = vmatprep.subr.mxu0 0.0
        %2695 = vmatpush1.xpose.msra.mxu0 0.0
        %2696 = vmatprep.subr.mxu0 0.0
        %2697 = vmatpush1.xpose.msra.mxu0 0.0
        %2698 = vmatprep.subr.mxu0 0.0
        %2699 = vmatpush1.xpose.msra.mxu0 0.0
        %2700 = vmatprep.subr.mxu0 0.0
        %2701 = vmatpush1.xpose.msra.mxu0 0.0
        %2702 = vmatprep.subr.mxu0 0.0
        %2703 = vmatpush1.xpose.msra.mxu0 0.0
        %2704 = vmatprep.subr.mxu0 0.0
        %2705 = vmatpush1.xpose.msra.mxu0 0.0
        %2706 = vmatprep.subr.mxu0 0.0
        %2707 = vmatpush1.xpose.msra.mxu0 0.0
        %2708 = vmatprep.subr.mxu0 0.0
        %2709 = vmatpush1.xpose.msra.mxu0 0.0
        %2710 = vmatprep.subr.mxu0 0.0
        %2711 = vmatpush1.xpose.msra.mxu0 0.0
        %2712 = vmatprep.subr.mxu0 0.0
        %2713 = vmatpush1.xpose.msra.mxu0 0.0
        %2714 = vmatprep.subr.mxu0 0.0
        %2715 = vmatpush1.xpose.msra.mxu0 0.0
        %2716 = vmatprep.subr.mxu0 0.0
        %2717 = vmatpush1.xpose.msra.mxu0 0.0
        %2718 = vmatprep.subr.mxu0 0.0
        %2719 = vmatpush1.xpose.msra.mxu0 0.0
        %2720 = vmatprep.subr.mxu0 0.0
        %2721 = vmatpush1.xpose.msra.mxu0 0.0
        %2722 = vmatprep.subr.mxu0 0.0
        %2723 = vmatpush1.xpose.msra.mxu0 0.0
        %2724 = vmatprep.subr.mxu0 0.0
        %2725 = vmatpush1.xpose.msra.mxu0 0.0
        %2726 = vmatprep.subr.mxu0 0.0
        %2727 = vmatpush1.xpose.msra.mxu0 0.0
        %2728 = vmatprep.subr.mxu0 0.0
        %2729 = vmatpush1.xpose.msra.mxu0 0.0
        %2730 = vmatprep.subr.mxu0 0.0
        %2731 = vmatpush1.xpose.msra.mxu0 0.0
        %2732 = vmatprep.subr.mxu0 0.0
        %2733 = vmatpush1.xpose.msra.mxu0 0.0
        %2734 = vmatprep.subr.mxu0 0.0
        %2735 = vmatpush1.xpose.msra.mxu0 0.0
        %2736 = vmatprep.subr.mxu0 0.0
        %2737 = vmatpush1.xpose.msra.mxu0 0.0
        %2738 = vmatprep.subr.mxu0 0.0
        %2739 = vmatpush1.xpose.msra.mxu0 0.0
        %2740 = vmatprep.subr.mxu0 0.0
        %2741 = vmatpush1.xpose.msra.mxu0 0.0
        %2742 = vmatprep.subr.mxu0 0.0
        %2743 = vmatpush1.xpose.msra.mxu0 0.0
        %2744 = vmatprep.subr.mxu0 0.0
        %2745 = vmatpush1.xpose.msra.mxu0 0.0
        %2746 = vmatprep.subr.mxu0 0.0
        %2747 = vmatpush1.xpose.msra.mxu0 0.0
        %2748 = vmatprep.subr.mxu0 0.0
        %2749 = vmatpush1.xpose.msra.mxu0 0.0
        %2750 = vmatprep.subr.mxu0 0.0
        %2751 = vmatpush1.xpose.msra.mxu0 0.0
        %2752 = vmatprep.mubr.f32.mxu0 0.0
        %2753 = vmatmul.mubr.f32.gmra.mrb[0].mxu0 %v2684
        %v2754 = vpop.f32.mrb[0].mxu0
        %v2755 = vadd.f32 0.0, %v2754
        %v2756 = vpop.f32.mrb[0].mxu0
        %2757 = vdwg.mxu0
        %v2758 = vsel %vm2279, -1e+09, %v2755
        %v2759 = vsel %vm1030, %v2758, -inf
        %2760 = vmax.xlane.f32.xlu0 %v2759
        %v2761 = vpop.xlane.xlu0 %2760
        %v2762 = vsub.f32 %v2758, %v2761
        %v2763 = vmul.f32 %v2762, 1.442695
        %v2764 = vpow.pop %v2763
        %v2765 = vsel %vm1030, %v2764, 0.0
        %2766 = vadd.xlane.f32.xlu0 %v2765
        %v2767 = vpop.xlane.xlu0 %2766
        %v2768 = vrcp.pop %v2767
        %v2769 = vmul.f32 %v2764, %v2768
        %2770 = vrot.lane.b32.xlu0 %v2189, 80
        %v2771 = vpop.permute.xlu0 %2770
        %v2774 = vsel %vm1030, %v2769, 0
        %2776 = vmatprep.subr.mxu0 0.0
        %2777 = vmatpush1.msra.mxu0 %v2771
        %2778 = vmatprep.subr.mxu0 0.0
        %2779 = vmatpush1.msra.mxu0 0.0
        %2780 = vmatprep.subr.mxu0 0.0
        %2781 = vmatpush1.msra.mxu0 0.0
        %2782 = vmatprep.subr.mxu0 0.0
        %2783 = vmatpush1.msra.mxu0 0.0
        %2784 = vmatprep.subr.mxu0 0.0
        %2785 = vmatpush1.msra.mxu0 0.0
        %2786 = vmatprep.subr.mxu0 0.0
        %2787 = vmatpush1.msra.mxu0 0.0
        %2788 = vmatprep.subr.mxu0 0.0
        %2789 = vmatpush1.msra.mxu0 0.0
        %2790 = vmatprep.subr.mxu0 0.0
        %2791 = vmatpush1.msra.mxu0 0.0
        %2792 = vmatprep.subr.mxu0 0.0
        %2793 = vmatpush1.msra.mxu0 0.0
        %2794 = vmatprep.subr.mxu0 0.0
        %2795 = vmatpush1.msra.mxu0 0.0
        %2796 = vmatprep.subr.mxu0 0.0
        %2797 = vmatpush1.msra.mxu0 0.0
        %2798 = vmatprep.subr.mxu0 0.0
        %2799 = vmatpush1.msra.mxu0 0.0
        %2800 = vmatprep.subr.mxu0 0.0
        %2801 = vmatpush1.msra.mxu0 0.0
        %2802 = vmatprep.subr.mxu0 0.0
        %2803 = vmatpush1.msra.mxu0 0.0
        %2804 = vmatprep.subr.mxu0 0.0
        %2805 = vmatpush1.msra.mxu0 0.0
        %2806 = vmatprep.subr.mxu0 0.0
        %2807 = vmatpush1.msra.mxu0 0.0
        %2808 = vmatprep.subr.mxu0 0.0
        %2809 = vmatpush1.msra.mxu0 0.0
        %2810 = vmatprep.subr.mxu0 0.0
        %2811 = vmatpush1.msra.mxu0 0.0
        %2812 = vmatprep.subr.mxu0 0.0
        %2813 = vmatpush1.msra.mxu0 0.0
        %2814 = vmatprep.subr.mxu0 0.0
        %2815 = vmatpush1.msra.mxu0 0.0
        %2816 = vmatprep.subr.mxu0 0.0
        %2817 = vmatpush1.msra.mxu0 0.0
        %2818 = vmatprep.subr.mxu0 0.0
        %2819 = vmatpush1.msra.mxu0 0.0
        %2820 = vmatprep.subr.mxu0 0.0
        %2821 = vmatpush1.msra.mxu0 0.0
        %2822 = vmatprep.subr.mxu0 0.0
        %2823 = vmatpush1.msra.mxu0 0.0
        %2824 = vmatprep.subr.mxu0 0.0
        %2825 = vmatpush1.msra.mxu0 0.0
        %2826 = vmatprep.subr.mxu0 0.0
        %2827 = vmatpush1.msra.mxu0 0.0
        %2828 = vmatprep.subr.mxu0 0.0
        %2829 = vmatpush1.msra.mxu0 0.0
        %2830 = vmatprep.subr.mxu0 0.0
        %2831 = vmatpush1.msra.mxu0 0.0
        %2832 = vmatprep.subr.mxu0 0.0
        %2833 = vmatpush1.msra.mxu0 0.0
        %2834 = vmatprep.subr.mxu0 0.0
        %2835 = vmatpush1.msra.mxu0 0.0
        %2836 = vmatprep.subr.mxu0 0.0
        %2837 = vmatpush1.msra.mxu0 0.0
        %2838 = vmatprep.subr.mxu0 0.0
        %2839 = vmatpush1.msra.mxu0 0.0
        %2840 = vmatprep.mubr.f32.mxu0 0.0
        %2841 = vmatmul.mubr.f32.gmra.mrb[0].mxu0 %v2774
        %v2842 = vpop.f32.mrb[0].mxu0
        %v2843 = vadd.f32 0.0, %v2842
        %v2844 = vpop.f32.mrb[0].mxu0
        %2845 = vdwg.mxu0
        %v2847 = vsel %vm1030, %v2843, 0
        %2849 = vmatprep.subr.mxu0 0.0
        %2850 = vmatpush1.msra.mxu0 %v2194
        %2851 = vmatprep.subr.mxu0 0.0
        %2852 = vmatpush1.msra.mxu0 0.0
        %2853 = vmatprep.subr.mxu0 0.0
        %2854 = vmatpush1.msra.mxu0 0.0
        %2855 = vmatprep.subr.mxu0 0.0
        %2856 = vmatpush1.msra.mxu0 0.0
        %2857 = vmatprep.subr.mxu0 0.0
        %2858 = vmatpush1.msra.mxu0 0.0
        %2859 = vmatprep.subr.mxu0 0.0
        %2860 = vmatpush1.msra.mxu0 0.0
        %2861 = vmatprep.subr.mxu0 0.0
        %2862 = vmatpush1.msra.mxu0 0.0
        %2863 = vmatprep.subr.mxu0 0.0
        %2864 = vmatpush1.msra.mxu0 0.0
        %2865 = vmatprep.subr.mxu0 0.0
        %2866 = vmatpush1.msra.mxu0 0.0
        %2867 = vmatprep.subr.mxu0 0.0
        %2868 = vmatpush1.msra.mxu0 0.0
        %2869 = vmatprep.subr.mxu0 0.0
        %2870 = vmatpush1.msra.mxu0 0.0
        %2871 = vmatprep.subr.mxu0 0.0
        %2872 = vmatpush1.msra.mxu0 0.0
        %2873 = vmatprep.subr.mxu0 0.0
        %2874 = vmatpush1.msra.mxu0 0.0
        %2875 = vmatprep.subr.mxu0 0.0
        %2876 = vmatpush1.msra.mxu0 0.0
        %2877 = vmatprep.subr.mxu0 0.0
        %2878 = vmatpush1.msra.mxu0 0.0
        %2879 = vmatprep.subr.mxu0 0.0
        %2880 = vmatpush1.msra.mxu0 0.0
        %2881 = vmatprep.subr.mxu0 0.0
        %2882 = vmatpush1.msra.mxu0 0.0
        %2883 = vmatprep.subr.mxu0 0.0
        %2884 = vmatpush1.msra.mxu0 0.0
        %2885 = vmatprep.subr.mxu0 0.0
        %2886 = vmatpush1.msra.mxu0 0.0
        %2887 = vmatprep.subr.mxu0 0.0
        %2888 = vmatpush1.msra.mxu0 0.0
        %2889 = vmatprep.subr.mxu0 0.0
        %2890 = vmatpush1.msra.mxu0 0.0
        %2891 = vmatprep.subr.mxu0 0.0
        %2892 = vmatpush1.msra.mxu0 0.0
        %2893 = vmatprep.subr.mxu0 0.0
        %2894 = vmatpush1.msra.mxu0 0.0
        %2895 = vmatprep.subr.mxu0 0.0
        %2896 = vmatpush1.msra.mxu0 0.0
        %2897 = vmatprep.subr.mxu0 0.0
        %2898 = vmatpush1.msra.mxu0 0.0
        %2899 = vmatprep.subr.mxu0 0.0
        %2900 = vmatpush1.msra.mxu0 0.0
        %2901 = vmatprep.subr.mxu0 0.0
        %2902 = vmatpush1.msra.mxu0 0.0
        %2903 = vmatprep.subr.mxu0 0.0
        %2904 = vmatpush1.msra.mxu0 0.0
        %2905 = vmatprep.subr.mxu0 0.0
        %2906 = vmatpush1.msra.mxu0 0.0
        %2907 = vmatprep.subr.mxu0 0.0
        %2908 = vmatpush1.msra.mxu0 0.0
        %2909 = vmatprep.subr.mxu0 0.0
        %2910 = vmatpush1.msra.mxu0 0.0
        %2911 = vmatprep.subr.mxu0 0.0
        %2912 = vmatpush1.msra.mxu0 0.0
        %2913 = vmatprep.mubr.f32.mxu0 0.0
        %2914 = vmatmul.mubr.f32.gmra.mrb[0].mxu0 %v2847
        %v2915 = vpop.f32.mrb[0].mxu0
        %v2916 = vadd.f32 0.0, %v2915
        %v2917 = vpop.f32.mrb[0].mxu0
        %2918 = vdwg.mxu0
        %v2919 = vadd.f32 %v2677, %v2916
        %2920 = vrot.lane.b32.xlu0 %v2197, 104
        %v2921 = vpop.permute.xlu0 %2920
        %2922 = vrot.lane.b32.xlu0 %v2189, 104
        %v2923 = vpop.permute.xlu0 %2922
        %v2924 = vsel %vm1030, %v2921, 0
        %v2926 = vsel %vm1030, %v2923, 0
        %2928 = vmatprep.subr.mxu0 0.0
        %2929 = vmatpush1.xpose.msra.mxu0 %v2926
        %2930 = vmatprep.subr.mxu0 0.0
        %2931 = vmatpush1.xpose.msra.mxu0 0.0
        %2932 = vmatprep.subr.mxu0 0.0
        %2933 = vmatpush1.xpose.msra.mxu0 0.0
        %2934 = vmatprep.subr.mxu0 0.0
        %2935 = vmatpush1.xpose.msra.mxu0 0.0
        %2936 = vmatprep.subr.mxu0 0.0
        %2937 = vmatpush1.xpose.msra.mxu0 0.0
        %2938 = vmatprep.subr.mxu0 0.0
        %2939 = vmatpush1.xpose.msra.mxu0 0.0
        %2940 = vmatprep.subr.mxu0 0.0
        %2941 = vmatpush1.xpose.msra.mxu0 0.0
        %2942 = vmatprep.subr.mxu0 0.0
        %2943 = vmatpush1.xpose.msra.mxu0 0.0
        %2944 = vmatprep.subr.mxu0 0.0
        %2945 = vmatpush1.xpose.msra.mxu0 0.0
        %2946 = vmatprep.subr.mxu0 0.0
        %2947 = vmatpush1.xpose.msra.mxu0 0.0
        %2948 = vmatprep.subr.mxu0 0.0
        %2949 = vmatpush1.xpose.msra.mxu0 0.0
        %2950 = vmatprep.subr.mxu0 0.0
        %2951 = vmatpush1.xpose.msra.mxu0 0.0
        %2952 = vmatprep.subr.mxu0 0.0
        %2953 = vmatpush1.xpose.msra.mxu0 0.0
        %2954 = vmatprep.subr.mxu0 0.0
        %2955 = vmatpush1.xpose.msra.mxu0 0.0
        %2956 = vmatprep.subr.mxu0 0.0
        %2957 = vmatpush1.xpose.msra.mxu0 0.0
        %2958 = vmatprep.subr.mxu0 0.0
        %2959 = vmatpush1.xpose.msra.mxu0 0.0
        %2960 = vmatprep.subr.mxu0 0.0
        %2961 = vmatpush1.xpose.msra.mxu0 0.0
        %2962 = vmatprep.subr.mxu0 0.0
        %2963 = vmatpush1.xpose.msra.mxu0 0.0
        %2964 = vmatprep.subr.mxu0 0.0
        %2965 = vmatpush1.xpose.msra.mxu0 0.0
        %2966 = vmatprep.subr.mxu0 0.0
        %2967 = vmatpush1.xpose.msra.mxu0 0.0
        %2968 = vmatprep.subr.mxu0 0.0
        %2969 = vmatpush1.xpose.msra.mxu0 0.0
        %2970 = vmatprep.subr.mxu0 0.0
        %2971 = vmatpush1.xpose.msra.mxu0 0.0
        %2972 = vmatprep.subr.mxu0 0.0
        %2973 = vmatpush1.xpose.msra.mxu0 0.0
        %2974 = vmatprep.subr.mxu0 0.0
        %2975 = vmatpush1.xpose.msra.mxu0 0.0
        %2976 = vmatprep.subr.mxu0 0.0
        %2977 = vmatpush1.xpose.msra.mxu0 0.0
        %2978 = vmatprep.subr.mxu0 0.0
        %2979 = vmatpush1.xpose.msra.mxu0 0.0
        %2980 = vmatprep.subr.mxu0 0.0
        %2981 = vmatpush1.xpose.msra.mxu0 0.0
        %2982 = vmatprep.subr.mxu0 0.0
        %2983 = vmatpush1.xpose.msra.mxu0 0.0
        %2984 = vmatprep.subr.mxu0 0.0
        %2985 = vmatpush1.xpose.msra.mxu0 0.0
        %2986 = vmatprep.subr.mxu0 0.0
        %2987 = vmatpush1.xpose.msra.mxu0 0.0
        %2988 = vmatprep.subr.mxu0 0.0
        %2989 = vmatpush1.xpose.msra.mxu0 0.0
        %2990 = vmatprep.subr.mxu0 0.0
        %2991 = vmatpush1.xpose.msra.mxu0 0.0
        %2992 = vmatprep.mubr.f32.mxu0 0.0
        %2993 = vmatmul.mubr.f32.gmra.mrb[0].mxu0 %v2924
        %v2994 = vpop.f32.mrb[0].mxu0
        %v2995 = vadd.f32 0.0, %v2994
        %v2996 = vpop.f32.mrb[0].mxu0
        %2997 = vdwg.mxu0
        %v2998 = vsel %vm2279, -1e+09, %v2995
        %v2999 = vsel %vm1030, %v2998, -inf
        %3000 = vmax.xlane.f32.xlu0 %v2999
        %v3001 = vpop.xlane.xlu0 %3000
        %v3002 = vsub.f32 %v2998, %v3001
        %v3003 = vmul.f32 %v3002, 1.442695
        %v3004 = vpow.pop %v3003
        %v3005 = vsel %vm1030, %v3004, 0.0
        %3006 = vadd.xlane.f32.xlu0 %v3005
        %v3007 = vpop.xlane.xlu0 %3006
        %v3008 = vrcp.pop %v3007
        %v3009 = vmul.f32 %v3004, %v3008
        %3010 = vrot.lane.b32.xlu0 %v2189, 72
        %v3011 = vpop.permute.xlu0 %3010
        %v3014 = vsel %vm1030, %v3009, 0
        %3016 = vmatprep.subr.mxu0 0.0
        %3017 = vmatpush1.msra.mxu0 %v3011
        %3018 = vmatprep.subr.mxu0 0.0
        %3019 = vmatpush1.msra.mxu0 0.0
        %3020 = vmatprep.subr.mxu0 0.0
        %3021 = vmatpush1.msra.mxu0 0.0
        %3022 = vmatprep.subr.mxu0 0.0
        %3023 = vmatpush1.msra.mxu0 0.0
        %3024 = vmatprep.subr.mxu0 0.0
        %3025 = vmatpush1.msra.mxu0 0.0
        %3026 = vmatprep.subr.mxu0 0.0
        %3027 = vmatpush1.msra.mxu0 0.0
        %3028 = vmatprep.subr.mxu0 0.0
        %3029 = vmatpush1.msra.mxu0 0.0
        %3030 = vmatprep.subr.mxu0 0.0
        %3031 = vmatpush1.msra.mxu0 0.0
        %3032 = vmatprep.subr.mxu0 0.0
        %3033 = vmatpush1.msra.mxu0 0.0
        %3034 = vmatprep.subr.mxu0 0.0
        %3035 = vmatpush1.msra.mxu0 0.0
        %3036 = vmatprep.subr.mxu0 0.0
        %3037 = vmatpush1.msra.mxu0 0.0
        %3038 = vmatprep.subr.mxu0 0.0
        %3039 = vmatpush1.msra.mxu0 0.0
        %3040 = vmatprep.subr.mxu0 0.0
        %3041 = vmatpush1.msra.mxu0 0.0
        %3042 = vmatprep.subr.mxu0 0.0
        %3043 = vmatpush1.msra.mxu0 0.0
        %3044 = vmatprep.subr.mxu0 0.0
        %3045 = vmatpush1.msra.mxu0 0.0
        %3046 = vmatprep.subr.mxu0 0.0
        %3047 = vmatpush1.msra.mxu0 0.0
        %3048 = vmatprep.subr.mxu0 0.0
        %3049 = vmatpush1.msra.mxu0 0.0
        %3050 = vmatprep.subr.mxu0 0.0
        %3051 = vmatpush1.msra.mxu0 0.0
        %3052 = vmatprep.subr.mxu0 0.0
        %3053 = vmatpush1.msra.mxu0 0.0
        %3054 = vmatprep.subr.mxu0 0.0
        %3055 = vmatpush1.msra.mxu0 0.0
        %3056 = vmatprep.subr.mxu0 0.0
        %3057 = vmatpush1.msra.mxu0 0.0
        %3058 = vmatprep.subr.mxu0 0.0
        %3059 = vmatpush1.msra.mxu0 0.0
        %3060 = vmatprep.subr.mxu0 0.0
        %3061 = vmatpush1.msra.mxu0 0.0
        %3062 = vmatprep.subr.mxu0 0.0
        %3063 = vmatpush1.msra.mxu0 0.0
        %3064 = vmatprep.subr.mxu0 0.0
        %3065 = vmatpush1.msra.mxu0 0.0
        %3066 = vmatprep.subr.mxu0 0.0
        %3067 = vmatpush1.msra.mxu0 0.0
        %3068 = vmatprep.subr.mxu0 0.0
        %3069 = vmatpush1.msra.mxu0 0.0
        %3070 = vmatprep.subr.mxu0 0.0
        %3071 = vmatpush1.msra.mxu0 0.0
        %3072 = vmatprep.subr.mxu0 0.0
        %3073 = vmatpush1.msra.mxu0 0.0
        %3074 = vmatprep.subr.mxu0 0.0
        %3075 = vmatpush1.msra.mxu0 0.0
        %3076 = vmatprep.subr.mxu0 0.0
        %3077 = vmatpush1.msra.mxu0 0.0
        %3078 = vmatprep.subr.mxu0 0.0
        %3079 = vmatpush1.msra.mxu0 0.0
        %3080 = vmatprep.mubr.f32.mxu0 0.0
        %3081 = vmatmul.mubr.f32.gmra.mrb[0].mxu0 %v3014
        %v3082 = vpop.f32.mrb[0].mxu0
        %v3083 = vadd.f32 0.0, %v3082
        %v3084 = vpop.f32.mrb[0].mxu0
        %3085 = vdwg.mxu0
        %v3087 = vsel %vm1030, %v3083, 0
        %3089 = vmatprep.subr.mxu0 0.0
        %3090 = vmatpush1.msra.mxu0 %v2195
        %3091 = vmatprep.subr.mxu0 0.0
        %3092 = vmatpush1.msra.mxu0 0.0
        %3093 = vmatprep.subr.mxu0 0.0
        %3094 = vmatpush1.msra.mxu0 0.0
        %3095 = vmatprep.subr.mxu0 0.0
        %3096 = vmatpush1.msra.mxu0 0.0
        %3097 = vmatprep.subr.mxu0 0.0
        %3098 = vmatpush1.msra.mxu0 0.0
        %3099 = vmatprep.subr.mxu0 0.0
        %3100 = vmatpush1.msra.mxu0 0.0
        %3101 = vmatprep.subr.mxu0 0.0
        %3102 = vmatpush1.msra.mxu0 0.0
        %3103 = vmatprep.subr.mxu0 0.0
        %3104 = vmatpush1.msra.mxu0 0.0
        %3105 = vmatprep.subr.mxu0 0.0
        %3106 = vmatpush1.msra.mxu0 0.0
        %3107 = vmatprep.subr.mxu0 0.0
        %3108 = vmatpush1.msra.mxu0 0.0
        %3109 = vmatprep.subr.mxu0 0.0
        %3110 = vmatpush1.msra.mxu0 0.0
        %3111 = vmatprep.subr.mxu0 0.0
        %3112 = vmatpush1.msra.mxu0 0.0
        %3113 = vmatprep.subr.mxu0 0.0
        %3114 = vmatpush1.msra.mxu0 0.0
        %3115 = vmatprep.subr.mxu0 0.0
        %3116 = vmatpush1.msra.mxu0 0.0
        %3117 = vmatprep.subr.mxu0 0.0
        %3118 = vmatpush1.msra.mxu0 0.0
        %3119 = vmatprep.subr.mxu0 0.0
        %3120 = vmatpush1.msra.mxu0 0.0
        %3121 = vmatprep.subr.mxu0 0.0
        %3122 = vmatpush1.msra.mxu0 0.0
        %3123 = vmatprep.subr.mxu0 0.0
        %3124 = vmatpush1.msra.mxu0 0.0
        %3125 = vmatprep.subr.mxu0 0.0
        %3126 = vmatpush1.msra.mxu0 0.0
        %3127 = vmatprep.subr.mxu0 0.0
        %3128 = vmatpush1.msra.mxu0 0.0
        %3129 = vmatprep.subr.mxu0 0.0
        %3130 = vmatpush1.msra.mxu0 0.0
        %3131 = vmatprep.subr.mxu0 0.0
        %3132 = vmatpush1.msra.mxu0 0.0
        %3133 = vmatprep.subr.mxu0 0.0
        %3134 = vmatpush1.msra.mxu0 0.0
        %3135 = vmatprep.subr.mxu0 0.0
        %3136 = vmatpush1.msra.mxu0 0.0
        %3137 = vmatprep.subr.mxu0 0.0
        %3138 = vmatpush1.msra.mxu0 0.0
        %3139 = vmatprep.subr.mxu0 0.0
        %3140 = vmatpush1.msra.mxu0 0.0
        %3141 = vmatprep.subr.mxu0 0.0
        %3142 = vmatpush1.msra.mxu0 0.0
        %3143 = vmatprep.subr.mxu0 0.0
        %3144 = vmatpush1.msra.mxu0 0.0
        %3145 = vmatprep.subr.mxu0 0.0
        %3146 = vmatpush1.msra.mxu0 0.0
        %3147 = vmatprep.subr.mxu0 0.0
        %3148 = vmatpush1.msra.mxu0 0.0
        %3149 = vmatprep.subr.mxu0 0.0
        %3150 = vmatpush1.msra.mxu0 0.0
        %3151 = vmatprep.subr.mxu0 0.0
        %3152 = vmatpush1.msra.mxu0 0.0
        %3153 = vmatprep.mubr.f32.mxu0 0.0
        %3154 = vmatmul.mubr.f32.gmra.mrb[0].mxu0 %v3087
        %v3155 = vpop.f32.mrb[0].mxu0
        %v3156 = vadd.f32 0.0, %v3155
        %v3157 = vpop.f32.mrb[0].mxu0
        %3158 = vdwg.mxu0
        %v3159 = vadd.f32 %v2919, %v3156
        %v3161 = vlaneseq
        %v3162 = vshrl.u32 %v3161, 7
        %v3163 = vsub.s32 0, %v3162
        %v3164 = vrot.slane %v2196, %v3163
        %v3166 = vadd.f32 %v3159, %v3164
        %v3167 = vadd.f32 %v1993, %v3166
        %v3168 = vsel %vm905, %v3167, 0.0
        %3169 = vadd.xlane.f32.xlu0 %v3168
        %v3170 = vpop.xlane.xlu0 %3169
        %v3171 = vmul.f32 %v3170, %v909
        %v3172 = vsub.f32 %v3167, %v3171
        %v3173 = vmul.f32 %v3172, %v3172
        %v3174 = vsel %vm905, %v3173, 0.0
        %3175 = vadd.xlane.f32.xlu0 %v3174
        %v3176 = vpop.xlane.xlu0 %3175
        %v3177 = vmul.f32 %v3176, 0.032258064
        %v3178 = vrsqrt.pop %v3177
        %v3179 = vmul.f32 %v3177, %v3178
        %vm3180 = vcmp.eq.f32.partialorder %v3177, inf
        %v3181 = vsel %vm3180, %v3177, %v3179
        %vm3182 = vcmp.eq.f32.partialorder %v3177, 0.0
        %v3183 = vand.u32 %v3177, 2147483648
        %v3184 = vsel %vm3182, %v3183, %v3181
        %v3185 = vlaneseq
        %v3186 = vshrl.u32 %v3185, 7
        %v3187 = vsub.s32 2, %v3186
        %v3188 = vrot.slane %v903, %v3187
        %v3189 = vmul.f32 %v3188, %v3172
        %v3190 = vadd.f32 %v3184, 1e-06
        %v3191 = vrcp.pop %v3190
        %v3192 = vmul.f32 %v3189, %v3191
        %v3193 = vlaneseq
        %v3194 = vshrl.u32 %v3193, 7
        %v3195 = vsub.s32 2, %v3194
        %v3196 = vrot.slane %v904, %v3195
        %v3197 = vadd.f32 %v3192, %v3196
        %v3198 = vld [vmem:[#allocation17] sm:$0xff]
        %v3199 = vld [vmem:[#allocation17 + $0x8] sm:$0xff]
        %v3200 = vld [vmem:[#allocation17 + $0x10] sm:$0xff]
        %v3201 = vld [vmem:[#allocation17 + $0x18] sm:$0xff]
        %v3202 = vld [vmem:[#allocation19] sm:$0x1]
        %v3204 = vlaneseq
        %v3205 = vshrl.u32 %v3204, 7
        %v3206 = vsub.s32 0, %v3205
        %v3207 = vrot.slane %v3202, %v3206
        %v3210 = vsel %vm905, %v3197, 0
        %3212 = vmatprep.subr.mxu0 0.0
        %3213 = vmatpush1.msra.mxu0 %v3198
        %3214 = vmatprep.subr.mxu0 0.0
        %3215 = vmatpush1.msra.mxu0 %v3199
        %3216 = vmatprep.subr.mxu0 0.0
        %3217 = vmatpush1.msra.mxu0 %v3200
        %3218 = vmatprep.subr.mxu0 0.0
        %3219 = vmatpush1.msra.mxu0 %v3201
        %3220 = vmatprep.subr.mxu0 0.0
        %3221 = vmatpush1.msra.mxu0 0.0
        %3222 = vmatprep.subr.mxu0 0.0
        %3223 = vmatpush1.msra.mxu0 0.0
        %3224 = vmatprep.subr.mxu0 0.0
        %3225 = vmatpush1.msra.mxu0 0.0
        %3226 = vmatprep.subr.mxu0 0.0
        %3227 = vmatpush1.msra.mxu0 0.0
        %3228 = vmatprep.subr.mxu0 0.0
        %3229 = vmatpush1.msra.mxu0 0.0
        %3230 = vmatprep.subr.mxu0 0.0
        %3231 = vmatpush1.msra.mxu0 0.0
        %3232 = vmatprep.subr.mxu0 0.0
        %3233 = vmatpush1.msra.mxu0 0.0
        %3234 = vmatprep.subr.mxu0 0.0
        %3235 = vmatpush1.msra.mxu0 0.0
        %3236 = vmatprep.subr.mxu0 0.0
        %3237 = vmatpush1.msra.mxu0 0.0
        %3238 = vmatprep.subr.mxu0 0.0
        %3239 = vmatpush1.msra.mxu0 0.0
        %3240 = vmatprep.subr.mxu0 0.0
        %3241 = vmatpush1.msra.mxu0 0.0
        %3242 = vmatprep.subr.mxu0 0.0
        %3243 = vmatpush1.msra.mxu0 0.0
        %3244 = vmatprep.subr.mxu0 0.0
        %3245 = vmatpush1.msra.mxu0 0.0
        %3246 = vmatprep.subr.mxu0 0.0
        %3247 = vmatpush1.msra.mxu0 0.0
        %3248 = vmatprep.subr.mxu0 0.0
        %3249 = vmatpush1.msra.mxu0 0.0
        %3250 = vmatprep.subr.mxu0 0.0
        %3251 = vmatpush1.msra.mxu0 0.0
        %3252 = vmatprep.subr.mxu0 0.0
        %3253 = vmatpush1.msra.mxu0 0.0
        %3254 = vmatprep.subr.mxu0 0.0
        %3255 = vmatpush1.msra.mxu0 0.0
        %3256 = vmatprep.subr.mxu0 0.0
        %3257 = vmatpush1.msra.mxu0 0.0
        %3258 = vmatprep.subr.mxu0 0.0
        %3259 = vmatpush1.msra.mxu0 0.0
        %3260 = vmatprep.subr.mxu0 0.0
        %3261 = vmatpush1.msra.mxu0 0.0
        %3262 = vmatprep.subr.mxu0 0.0
        %3263 = vmatpush1.msra.mxu0 0.0
        %3264 = vmatprep.subr.mxu0 0.0
        %3265 = vmatpush1.msra.mxu0 0.0
        %3266 = vmatprep.subr.mxu0 0.0
        %3267 = vmatpush1.msra.mxu0 0.0
        %3268 = vmatprep.subr.mxu0 0.0
        %3269 = vmatpush1.msra.mxu0 0.0
        %3270 = vmatprep.subr.mxu0 0.0
        %3271 = vmatpush1.msra.mxu0 0.0
        %3272 = vmatprep.subr.mxu0 0.0
        %3273 = vmatpush1.msra.mxu0 0.0
        %3274 = vmatprep.subr.mxu0 0.0
        %3275 = vmatpush1.msra.mxu0 0.0
        %3276 = vmatprep.mubr.f32.mxu0 0.0
        %3277 = vmatmul.mubr.f32.gmra.mrb[0].mxu0 %v3210
        %v3278 = vpop.f32.mrb[0].mxu0
        %v3279 = vadd.f32 %v3207, %v3278
        %v3280 = vpop.f32.mrb[0].mxu0
        %3281 = vdwg.mxu0
        %v3282 = vmax.f32 %v3279, 0.0
        %v3283 = vld [vmem:[%s18] sm:$0xff]
        %v3284 = vld [vmem:[%s18 + $0x8] sm:$0xff]
        %v3285 = vld [vmem:[%s18 + $0x10] sm:$0xff]
        %v3286 = vld [vmem:[%s18 + $0x18] sm:$0xff]
        %v3287 = vld [vmem:[%s18 + $0x20] sm:$0xff]
        %v3288 = vld [vmem:[%s18 + $0x28] sm:$0xff]
        %v3289 = vld [vmem:[%s18 + $0x30] sm:$0xff]
        %v3290 = vld [vmem:[%s18 + $0x38] sm:$0xff]
        %vm3291 = vcmask 523264
        %v3293 = vsel %vm3291, %v3282, 0
        %3295 = vmatprep.subr.mxu0 0.0
        %3296 = vmatpush1.msra.mxu0 %v3283
        %3297 = vmatprep.subr.mxu0 0.0
        %3298 = vmatpush1.msra.mxu0 %v3284
        %3299 = vmatprep.subr.mxu0 0.0
        %3300 = vmatpush1.msra.mxu0 %v3285
        %3301 = vmatprep.subr.mxu0 0.0
        %3302 = vmatpush1.msra.mxu0 %v3286
        %3303 = vmatprep.subr.mxu0 0.0
        %3304 = vmatpush1.msra.mxu0 %v3287
        %3305 = vmatprep.subr.mxu0 0.0
        %3306 = vmatpush1.msra.mxu0 %v3288
        %3307 = vmatprep.subr.mxu0 0.0
        %3308 = vmatpush1.msra.mxu0 %v3289
        %3309 = vmatprep.subr.mxu0 0.0
        %3310 = vmatpush1.msra.mxu0 %v3290
        %3311 = vmatprep.subr.mxu0 0.0
        %3312 = vmatpush1.msra.mxu0 0.0
        %3313 = vmatprep.subr.mxu0 0.0
        %3314 = vmatpush1.msra.mxu0 0.0
        %3315 = vmatprep.subr.mxu0 0.0
        %3316 = vmatpush1.msra.mxu0 0.0
        %3317 = vmatprep.subr.mxu0 0.0
        %3318 = vmatpush1.msra.mxu0 0.0
        %3319 = vmatprep.subr.mxu0 0.0
        %3320 = vmatpush1.msra.mxu0 0.0
        %3321 = vmatprep.subr.mxu0 0.0
        %3322 = vmatpush1.msra.mxu0 0.0
        %3323 = vmatprep.subr.mxu0 0.0
        %3324 = vmatpush1.msra.mxu0 0.0
        %3325 = vmatprep.subr.mxu0 0.0
        %3326 = vmatpush1.msra.mxu0 0.0
        %3327 = vmatprep.subr.mxu0 0.0
        %3328 = vmatpush1.msra.mxu0 0.0
        %3329 = vmatprep.subr.mxu0 0.0
        %3330 = vmatpush1.msra.mxu0 0.0
        %3331 = vmatprep.subr.mxu0 0.0
        %3332 = vmatpush1.msra.mxu0 0.0
        %3333 = vmatprep.subr.mxu0 0.0
        %3334 = vmatpush1.msra.mxu0 0.0
        %3335 = vmatprep.subr.mxu0 0.0
        %3336 = vmatpush1.msra.mxu0 0.0
        %3337 = vmatprep.subr.mxu0 0.0
        %3338 = vmatpush1.msra.mxu0 0.0
        %3339 = vmatprep.subr.mxu0 0.0
        %3340 = vmatpush1.msra.mxu0 0.0
        %3341 = vmatprep.subr.mxu0 0.0
        %3342 = vmatpush1.msra.mxu0 0.0
        %3343 = vmatprep.subr.mxu0 0.0
        %3344 = vmatpush1.msra.mxu0 0.0
        %3345 = vmatprep.subr.mxu0 0.0
        %3346 = vmatpush1.msra.mxu0 0.0
        %3347 = vmatprep.subr.mxu0 0.0
        %3348 = vmatpush1.msra.mxu0 0.0
        %3349 = vmatprep.subr.mxu0 0.0
        %3350 = vmatpush1.msra.mxu0 0.0
        %3351 = vmatprep.subr.mxu0 0.0
        %3352 = vmatpush1.msra.mxu0 0.0
        %3353 = vmatprep.subr.mxu0 0.0
        %3354 = vmatpush1.msra.mxu0 0.0
        %3355 = vmatprep.subr.mxu0 0.0
        %3356 = vmatpush1.msra.mxu0 0.0
        %3357 = vmatprep.subr.mxu0 0.0
        %3358 = vmatpush1.msra.mxu0 0.0
        %3359 = vmatprep.mubr.f32.mxu0 0.0
        %3360 = vmatmul.mubr.f32.gmra.mrb[0].mxu0 %v3293
        %v3361 = vpop.f32.mrb[0].mxu0
        %v3362 = vadd.f32 0.0, %v3361
        %v3363 = vpop.f32.mrb[0].mxu0
        %3364 = vdwg.mxu0
        %v3365 = vadd.f32 %v3167, %v3362
        %v3366 = vld [vmem:[%s19] sm:$0x1]
        %v3368 = vlaneseq
        %v3369 = vshrl.u32 %v3368, 7
        %v3370 = vsub.s32 0, %v3369
        %v3371 = vrot.slane %v3366, %v3370
        %v3373 = vadd.f32 %v3365, %v3371
        %s3374 = scalar_lea.vmem %s14, 4
        %v3375 = vld [vmem:[%s3374] sm:$0x7]
        %s3376 = scalar_lea.vmem %s15, 4
        %v3377 = vld [vmem:[%s3376] sm:$0x7]
        %v3378 = vsel %vm905, %v3373, 0.0
        %3379 = vadd.xlane.f32.xlu0 %v3378
        %v3380 = vpop.xlane.xlu0 %3379
        %v3381 = vmul.f32 %v3380, %v909
        %v3382 = vsub.f32 %v3373, %v3381
        %v3383 = vmul.f32 %v3382, %v3382
        %v3384 = vsel %vm905, %v3383, 0.0
        %3385 = vadd.xlane.f32.xlu0 %v3384
        %v3386 = vpop.xlane.xlu0 %3385
        %v3387 = vmul.f32 %v3386, 0.032258064
        %v3388 = vrsqrt.pop %v3387
        %v3389 = vmul.f32 %v3387, %v3388
        %vm3390 = vcmp.eq.f32.partialorder %v3387, inf
        %v3391 = vsel %vm3390, %v3387, %v3389
        %vm3392 = vcmp.eq.f32.partialorder %v3387, 0.0
        %v3393 = vand.u32 %v3387, 2147483648
        %v3394 = vsel %vm3392, %v3393, %v3391
        %v3395 = vlaneseq
        %v3396 = vshrl.u32 %v3395, 7
        %v3397 = vsub.s32 0, %v3396
        %v3398 = vrot.slane %v3375, %v3397
        %v3399 = vmul.f32 %v3398, %v3382
        %v3400 = vadd.f32 %v3394, 1e-06
        %v3401 = vrcp.pop %v3400
        %v3402 = vmul.f32 %v3399, %v3401
        %v3403 = vlaneseq
        %v3404 = vshrl.u32 %v3403, 7
        %v3405 = vsub.s32 0, %v3404
        %v3406 = vrot.slane %v3377, %v3405
        %v3407 = vadd.f32 %v3402, %v3406
        %s3408 = scalar_lea.vmem %s4, 32
        %v3409 = vld [vmem:[%s3408] sm:$0xff]
        %v3410 = vld [vmem:[%s3408 + $0x8] sm:$0xff]
        %v3411 = vld [vmem:[%s3408 + $0x10] sm:$0xff]
        %v3412 = vld [vmem:[%s3408 + $0x18] sm:$0xff]
        %s3413 = scalar_lea.vmem [#allocation7], 1
        %v3414 = vld [vmem:[%s3413] sm:$0x1]
        %v3416 = vlaneseq
        %v3417 = vshrl.u32 %v3416, 7
        %v3418 = vsub.s32 0, %v3417
        %v3419 = vrot.slane %v3414, %v3418
        %v3422 = vsel %vm905, %v3407, 0
        %3424 = vmatprep.subr.mxu0 0.0
        %3425 = vmatpush1.msra.mxu0 %v3409
        %3426 = vmatprep.subr.mxu0 0.0
        %3427 = vmatpush1.msra.mxu0 %v3410
        %3428 = vmatprep.subr.mxu0 0.0
        %3429 = vmatpush1.msra.mxu0 %v3411
        %3430 = vmatprep.subr.mxu0 0.0
        %3431 = vmatpush1.msra.mxu0 %v3412
        %3432 = vmatprep.subr.mxu0 0.0
        %3433 = vmatpush1.msra.mxu0 0.0
        %3434 = vmatprep.subr.mxu0 0.0
        %3435 = vmatpush1.msra.mxu0 0.0
        %3436 = vmatprep.subr.mxu0 0.0
        %3437 = vmatpush1.msra.mxu0 0.0
        %3438 = vmatprep.subr.mxu0 0.0
        %3439 = vmatpush1.msra.mxu0 0.0
        %3440 = vmatprep.subr.mxu0 0.0
        %3441 = vmatpush1.msra.mxu0 0.0
        %3442 = vmatprep.subr.mxu0 0.0
        %3443 = vmatpush1.msra.mxu0 0.0
        %3444 = vmatprep.subr.mxu0 0.0
        %3445 = vmatpush1.msra.mxu0 0.0
        %3446 = vmatprep.subr.mxu0 0.0
        %3447 = vmatpush1.msra.mxu0 0.0
        %3448 = vmatprep.subr.mxu0 0.0
        %3449 = vmatpush1.msra.mxu0 0.0
        %3450 = vmatprep.subr.mxu0 0.0
        %3451 = vmatpush1.msra.mxu0 0.0
        %3452 = vmatprep.subr.mxu0 0.0
        %3453 = vmatpush1.msra.mxu0 0.0
        %3454 = vmatprep.subr.mxu0 0.0
        %3455 = vmatpush1.msra.mxu0 0.0
        %3456 = vmatprep.subr.mxu0 0.0
        %3457 = vmatpush1.msra.mxu0 0.0
        %3458 = vmatprep.subr.mxu0 0.0
        %3459 = vmatpush1.msra.mxu0 0.0
        %3460 = vmatprep.subr.mxu0 0.0
        %3461 = vmatpush1.msra.mxu0 0.0
        %3462 = vmatprep.subr.mxu0 0.0
        %3463 = vmatpush1.msra.mxu0 0.0
        %3464 = vmatprep.subr.mxu0 0.0
        %3465 = vmatpush1.msra.mxu0 0.0
        %3466 = vmatprep.subr.mxu0 0.0
        %3467 = vmatpush1.msra.mxu0 0.0
        %3468 = vmatprep.subr.mxu0 0.0
        %3469 = vmatpush1.msra.mxu0 0.0
        %3470 = vmatprep.subr.mxu0 0.0
        %3471 = vmatpush1.msra.mxu0 0.0
        %3472 = vmatprep.subr.mxu0 0.0
        %3473 = vmatpush1.msra.mxu0 0.0
        %3474 = vmatprep.subr.mxu0 0.0
        %3475 = vmatpush1.msra.mxu0 0.0
        %3476 = vmatprep.subr.mxu0 0.0
        %3477 = vmatpush1.msra.mxu0 0.0
        %3478 = vmatprep.subr.mxu0 0.0
        %3479 = vmatpush1.msra.mxu0 0.0
        %3480 = vmatprep.subr.mxu0 0.0
        %3481 = vmatpush1.msra.mxu0 0.0
        %3482 = vmatprep.subr.mxu0 0.0
        %3483 = vmatpush1.msra.mxu0 0.0
        %3484 = vmatprep.subr.mxu0 0.0
        %3485 = vmatpush1.msra.mxu0 0.0
        %3486 = vmatprep.subr.mxu0 0.0
        %3487 = vmatpush1.msra.mxu0 0.0
        %3488 = vmatprep.mubr.f32.mxu0 0.0
        %3489 = vmatmul.mubr.f32.gmra.mrb[0].mxu0 %v3422
        %v3490 = vpop.f32.mrb[0].mxu0
        %v3491 = vadd.f32 %v3419, %v3490
        %v3492 = vpop.f32.mrb[0].mxu0
        %3493 = vdwg.mxu0
        %s3494 = scalar_lea.vmem %s6, 32
        %v3495 = vld [vmem:[%s3494] sm:$0xff]
        %v3496 = vld [vmem:[%s3494 + $0x8] sm:$0xff]
        %v3497 = vld [vmem:[%s3494 + $0x10] sm:$0xff]
        %v3498 = vld [vmem:[%s3494 + $0x18] sm:$0xff]
        %s3499 = scalar_lea.vmem [#allocation8], 1
        %v3500 = vld [vmem:[%s3499] sm:$0x1]
        %v3501 = vmul.f32 %v3491, 0.35355338
        %3503 = vrot.lane.b32.xlu0 %v3491, 96
        %v3504 = vpop.permute.xlu0 %3503
        %v3506 = vsel %vm1030, %v3501, 0
        %v3508 = vsel %vm1030, %v3504, 0
        %3510 = vmatprep.subr.mxu0 0.0
        %3511 = vmatpush1.xpose.msra.mxu0 %v3508
        %3512 = vmatprep.subr.mxu0 0.0
        %3513 = vmatpush1.xpose.msra.mxu0 0.0
        %3514 = vmatprep.subr.mxu0 0.0
        %3515 = vmatpush1.xpose.msra.mxu0 0.0
        %3516 = vmatprep.subr.mxu0 0.0
        %3517 = vmatpush1.xpose.msra.mxu0 0.0
        %3518 = vmatprep.subr.mxu0 0.0
        %3519 = vmatpush1.xpose.msra.mxu0 0.0
        %3520 = vmatprep.subr.mxu0 0.0
        %3521 = vmatpush1.xpose.msra.mxu0 0.0
        %3522 = vmatprep.subr.mxu0 0.0
        %3523 = vmatpush1.xpose.msra.mxu0 0.0
        %3524 = vmatprep.subr.mxu0 0.0
        %3525 = vmatpush1.xpose.msra.mxu0 0.0
        %3526 = vmatprep.subr.mxu0 0.0
        %3527 = vmatpush1.xpose.msra.mxu0 0.0
        %3528 = vmatprep.subr.mxu0 0.0
        %3529 = vmatpush1.xpose.msra.mxu0 0.0
        %3530 = vmatprep.subr.mxu0 0.0
        %3531 = vmatpush1.xpose.msra.mxu0 0.0
        %3532 = vmatprep.subr.mxu0 0.0
        %3533 = vmatpush1.xpose.msra.mxu0 0.0
        %3534 = vmatprep.subr.mxu0 0.0
        %3535 = vmatpush1.xpose.msra.mxu0 0.0
        %3536 = vmatprep.subr.mxu0 0.0
        %3537 = vmatpush1.xpose.msra.mxu0 0.0
        %3538 = vmatprep.subr.mxu0 0.0
        %3539 = vmatpush1.xpose.msra.mxu0 0.0
        %3540 = vmatprep.subr.mxu0 0.0
        %3541 = vmatpush1.xpose.msra.mxu0 0.0
        %3542 = vmatprep.subr.mxu0 0.0
        %3543 = vmatpush1.xpose.msra.mxu0 0.0
        %3544 = vmatprep.subr.mxu0 0.0
        %3545 = vmatpush1.xpose.msra.mxu0 0.0
        %3546 = vmatprep.subr.mxu0 0.0
        %3547 = vmatpush1.xpose.msra.mxu0 0.0
        %3548 = vmatprep.subr.mxu0 0.0
        %3549 = vmatpush1.xpose.msra.mxu0 0.0
        %3550 = vmatprep.subr.mxu0 0.0
        %3551 = vmatpush1.xpose.msra.mxu0 0.0
        %3552 = vmatprep.subr.mxu0 0.0
        %3553 = vmatpush1.xpose.msra.mxu0 0.0
        %3554 = vmatprep.subr.mxu0 0.0
        %3555 = vmatpush1.xpose.msra.mxu0 0.0
        %3556 = vmatprep.subr.mxu0 0.0
        %3557 = vmatpush1.xpose.msra.mxu0 0.0
        %3558 = vmatprep.subr.mxu0 0.0
        %3559 = vmatpush1.xpose.msra.mxu0 0.0
        %3560 = vmatprep.subr.mxu0 0.0
        %3561 = vmatpush1.xpose.msra.mxu0 0.0
        %3562 = vmatprep.subr.mxu0 0.0
        %3563 = vmatpush1.xpose.msra.mxu0 0.0
        %3564 = vmatprep.subr.mxu0 0.0
        %3565 = vmatpush1.xpose.msra.mxu0 0.0
        %3566 = vmatprep.subr.mxu0 0.0
        %3567 = vmatpush1.xpose.msra.mxu0 0.0
        %3568 = vmatprep.subr.mxu0 0.0
        %3569 = vmatpush1.xpose.msra.mxu0 0.0
        %3570 = vmatprep.subr.mxu0 0.0
        %3571 = vmatpush1.xpose.msra.mxu0 0.0
        %3572 = vmatprep.subr.mxu0 0.0
        %3573 = vmatpush1.xpose.msra.mxu0 0.0
        %3574 = vmatprep.mubr.f32.mxu0 0.0
        %3575 = vmatmul.mubr.f32.gmra.mrb[0].mxu0 %v3506
        %v3576 = vpop.f32.mrb[0].mxu0
        %v3577 = vadd.f32 0.0, %v3576
        %v3578 = vpop.f32.mrb[0].mxu0
        %3579 = vdwg.mxu0
        %v3580 = vsel %vm902, -1e+09, %v3577
        %v3581 = vsel %vm1030, %v3580, -inf
        %3582 = vmax.xlane.f32.xlu0 %v3581
        %v3583 = vpop.xlane.xlu0 %3582
        %v3584 = vsub.f32 %v3580, %v3583
        %v3585 = vmul.f32 %v3584, 1.442695
        %v3586 = vpow.pop %v3585
        %v3587 = vsel %vm1030, %v3586, 0.0
        %3588 = vadd.xlane.f32.xlu0 %v3587
        %v3589 = vpop.xlane.xlu0 %3588
        %v3590 = vrcp.pop %v3589
        %v3591 = vmul.f32 %v3586, %v3590
        %3592 = vrot.lane.b32.xlu0 %v3491, 64
        %v3593 = vpop.permute.xlu0 %3592
        %v3596 = vsel %vm1030, %v3591, 0
        %3598 = vmatprep.subr.mxu0 0.0
        %3599 = vmatpush1.msra.mxu0 %v3593
        %3600 = vmatprep.subr.mxu0 0.0
        %3601 = vmatpush1.msra.mxu0 0.0
        %3602 = vmatprep.subr.mxu0 0.0
        %3603 = vmatpush1.msra.mxu0 0.0
        %3604 = vmatprep.subr.mxu0 0.0
        %3605 = vmatpush1.msra.mxu0 0.0
        %3606 = vmatprep.subr.mxu0 0.0
        %3607 = vmatpush1.msra.mxu0 0.0
        %3608 = vmatprep.subr.mxu0 0.0
        %3609 = vmatpush1.msra.mxu0 0.0
        %3610 = vmatprep.subr.mxu0 0.0
        %3611 = vmatpush1.msra.mxu0 0.0
        %3612 = vmatprep.subr.mxu0 0.0
        %3613 = vmatpush1.msra.mxu0 0.0
        %3614 = vmatprep.subr.mxu0 0.0
        %3615 = vmatpush1.msra.mxu0 0.0
        %3616 = vmatprep.subr.mxu0 0.0
        %3617 = vmatpush1.msra.mxu0 0.0
        %3618 = vmatprep.subr.mxu0 0.0
        %3619 = vmatpush1.msra.mxu0 0.0
        %3620 = vmatprep.subr.mxu0 0.0
        %3621 = vmatpush1.msra.mxu0 0.0
        %3622 = vmatprep.subr.mxu0 0.0
        %3623 = vmatpush1.msra.mxu0 0.0
        %3624 = vmatprep.subr.mxu0 0.0
        %3625 = vmatpush1.msra.mxu0 0.0
        %3626 = vmatprep.subr.mxu0 0.0
        %3627 = vmatpush1.msra.mxu0 0.0
        %3628 = vmatprep.subr.mxu0 0.0
        %3629 = vmatpush1.msra.mxu0 0.0
        %3630 = vmatprep.subr.mxu0 0.0
        %3631 = vmatpush1.msra.mxu0 0.0
        %3632 = vmatprep.subr.mxu0 0.0
        %3633 = vmatpush1.msra.mxu0 0.0
        %3634 = vmatprep.subr.mxu0 0.0
        %3635 = vmatpush1.msra.mxu0 0.0
        %3636 = vmatprep.subr.mxu0 0.0
        %3637 = vmatpush1.msra.mxu0 0.0
        %3638 = vmatprep.subr.mxu0 0.0
        %3639 = vmatpush1.msra.mxu0 0.0
        %3640 = vmatprep.subr.mxu0 0.0
        %3641 = vmatpush1.msra.mxu0 0.0
        %3642 = vmatprep.subr.mxu0 0.0
        %3643 = vmatpush1.msra.mxu0 0.0
        %3644 = vmatprep.subr.mxu0 0.0
        %3645 = vmatpush1.msra.mxu0 0.0
        %3646 = vmatprep.subr.mxu0 0.0
        %3647 = vmatpush1.msra.mxu0 0.0
        %3648 = vmatprep.subr.mxu0 0.0
        %3649 = vmatpush1.msra.mxu0 0.0
        %3650 = vmatprep.subr.mxu0 0.0
        %3651 = vmatpush1.msra.mxu0 0.0
        %3652 = vmatprep.subr.mxu0 0.0
        %3653 = vmatpush1.msra.mxu0 0.0
        %3654 = vmatprep.subr.mxu0 0.0
        %3655 = vmatpush1.msra.mxu0 0.0
        %3656 = vmatprep.subr.mxu0 0.0
        %3657 = vmatpush1.msra.mxu0 0.0
        %3658 = vmatprep.subr.mxu0 0.0
        %3659 = vmatpush1.msra.mxu0 0.0
        %3660 = vmatprep.subr.mxu0 0.0
        %3661 = vmatpush1.msra.mxu0 0.0
        %3662 = vmatprep.mubr.f32.mxu0 0.0
        %3663 = vmatmul.mubr.f32.gmra.mrb[0].mxu0 %v3596
        %v3664 = vpop.f32.mrb[0].mxu0
        %v3665 = vadd.f32 0.0, %v3664
        %v3666 = vpop.f32.mrb[0].mxu0
        %3667 = vdwg.mxu0
        %3668 = vrot.lane.b32.xlu0 %v3501, 120
        %v3669 = vpop.permute.xlu0 %3668
        %3670 = vrot.lane.b32.xlu0 %v3491, 88
        %v3671 = vpop.permute.xlu0 %3670
        %v3672 = vsel %vm1030, %v3669, 0
        %v3674 = vsel %vm1030, %v3671, 0
        %3676 = vmatprep.subr.mxu0 0.0
        %3677 = vmatpush1.xpose.msra.mxu0 %v3674
        %3678 = vmatprep.subr.mxu0 0.0
        %3679 = vmatpush1.xpose.msra.mxu0 0.0
        %3680 = vmatprep.subr.mxu0 0.0
        %3681 = vmatpush1.xpose.msra.mxu0 0.0
        %3682 = vmatprep.subr.mxu0 0.0
        %3683 = vmatpush1.xpose.msra.mxu0 0.0
        %3684 = vmatprep.subr.mxu0 0.0
        %3685 = vmatpush1.xpose.msra.mxu0 0.0
        %3686 = vmatprep.subr.mxu0 0.0
        %3687 = vmatpush1.xpose.msra.mxu0 0.0
        %3688 = vmatprep.subr.mxu0 0.0
        %3689 = vmatpush1.xpose.msra.mxu0 0.0
        %3690 = vmatprep.subr.mxu0 0.0
        %3691 = vmatpush1.xpose.msra.mxu0 0.0
        %3692 = vmatprep.subr.mxu0 0.0
        %3693 = vmatpush1.xpose.msra.mxu0 0.0
        %3694 = vmatprep.subr.mxu0 0.0
        %3695 = vmatpush1.xpose.msra.mxu0 0.0
        %3696 = vmatprep.subr.mxu0 0.0
        %3697 = vmatpush1.xpose.msra.mxu0 0.0
        %3698 = vmatprep.subr.mxu0 0.0
        %3699 = vmatpush1.xpose.msra.mxu0 0.0
        %3700 = vmatprep.subr.mxu0 0.0
        %3701 = vmatpush1.xpose.msra.mxu0 0.0
        %3702 = vmatprep.subr.mxu0 0.0
        %3703 = vmatpush1.xpose.msra.mxu0 0.0
        %3704 = vmatprep.subr.mxu0 0.0
        %3705 = vmatpush1.xpose.msra.mxu0 0.0
        %3706 = vmatprep.subr.mxu0 0.0
        %3707 = vmatpush1.xpose.msra.mxu0 0.0
        %3708 = vmatprep.subr.mxu0 0.0
        %3709 = vmatpush1.xpose.msra.mxu0 0.0
        %3710 = vmatprep.subr.mxu0 0.0
        %3711 = vmatpush1.xpose.msra.mxu0 0.0
        %3712 = vmatprep.subr.mxu0 0.0
        %3713 = vmatpush1.xpose.msra.mxu0 0.0
        %3714 = vmatprep.subr.mxu0 0.0
        %3715 = vmatpush1.xpose.msra.mxu0 0.0
        %3716 = vmatprep.subr.mxu0 0.0
        %3717 = vmatpush1.xpose.msra.mxu0 0.0
        %3718 = vmatprep.subr.mxu0 0.0
        %3719 = vmatpush1.xpose.msra.mxu0 0.0
        %3720 = vmatprep.subr.mxu0 0.0
        %3721 = vmatpush1.xpose.msra.mxu0 0.0
        %3722 = vmatprep.subr.mxu0 0.0
        %3723 = vmatpush1.xpose.msra.mxu0 0.0
        %3724 = vmatprep.subr.mxu0 0.0
        %3725 = vmatpush1.xpose.msra.mxu0 0.0
        %3726 = vmatprep.subr.mxu0 0.0
        %3727 = vmatpush1.xpose.msra.mxu0 0.0
        %3728 = vmatprep.subr.mxu0 0.0
        %3729 = vmatpush1.xpose.msra.mxu0 0.0
        %3730 = vmatprep.subr.mxu0 0.0
        %3731 = vmatpush1.xpose.msra.mxu0 0.0
        %3732 = vmatprep.subr.mxu0 0.0
        %3733 = vmatpush1.xpose.msra.mxu0 0.0
        %3734 = vmatprep.subr.mxu0 0.0
        %3735 = vmatpush1.xpose.msra.mxu0 0.0
        %3736 = vmatprep.subr.mxu0 0.0
        %3737 = vmatpush1.xpose.msra.mxu0 0.0
        %3738 = vmatprep.subr.mxu0 0.0
        %3739 = vmatpush1.xpose.msra.mxu0 0.0
        %3740 = vmatprep.mubr.f32.mxu0 0.0
        %3741 = vmatmul.mubr.f32.gmra.mrb[0].mxu0 %v3672
        %v3742 = vpop.f32.mrb[0].mxu0
        %v3743 = vadd.f32 0.0, %v3742
        %v3744 = vpop.f32.mrb[0].mxu0
        %3745 = vdwg.mxu0
        %v3746 = vsel %vm902, -1e+09, %v3743
        %v3747 = vsel %vm1030, %v3746, -inf
        %3748 = vmax.xlane.f32.xlu0 %v3747
        %v3749 = vpop.xlane.xlu0 %3748
        %v3750 = vsub.f32 %v3746, %v3749
        %v3751 = vmul.f32 %v3750, 1.442695
        %v3752 = vpow.pop %v3751
        %v3753 = vsel %vm1030, %v3752, 0.0
        %3754 = vadd.xlane.f32.xlu0 %v3753
        %v3755 = vpop.xlane.xlu0 %3754
        %v3756 = vrcp.pop %v3755
        %v3757 = vmul.f32 %v3752, %v3756
        %3758 = vrot.lane.b32.xlu0 %v3491, 56
        %v3759 = vpop.permute.xlu0 %3758
        %v3762 = vsel %vm1030, %v3757, 0
        %3764 = vmatprep.subr.mxu0 0.0
        %3765 = vmatpush1.msra.mxu0 %v3759
        %3766 = vmatprep.subr.mxu0 0.0
        %3767 = vmatpush1.msra.mxu0 0.0
        %3768 = vmatprep.subr.mxu0 0.0
        %3769 = vmatpush1.msra.mxu0 0.0
        %3770 = vmatprep.subr.mxu0 0.0
        %3771 = vmatpush1.msra.mxu0 0.0
        %3772 = vmatprep.subr.mxu0 0.0
        %3773 = vmatpush1.msra.mxu0 0.0
        %3774 = vmatprep.subr.mxu0 0.0
        %3775 = vmatpush1.msra.mxu0 0.0
        %3776 = vmatprep.subr.mxu0 0.0
        %3777 = vmatpush1.msra.mxu0 0.0
        %3778 = vmatprep.subr.mxu0 0.0
        %3779 = vmatpush1.msra.mxu0 0.0
        %3780 = vmatprep.subr.mxu0 0.0
        %3781 = vmatpush1.msra.mxu0 0.0
        %3782 = vmatprep.subr.mxu0 0.0
        %3783 = vmatpush1.msra.mxu0 0.0
        %3784 = vmatprep.subr.mxu0 0.0
        %3785 = vmatpush1.msra.mxu0 0.0
        %3786 = vmatprep.subr.mxu0 0.0
        %3787 = vmatpush1.msra.mxu0 0.0
        %3788 = vmatprep.subr.mxu0 0.0
        %3789 = vmatpush1.msra.mxu0 0.0
        %3790 = vmatprep.subr.mxu0 0.0
        %3791 = vmatpush1.msra.mxu0 0.0
        %3792 = vmatprep.subr.mxu0 0.0
        %3793 = vmatpush1.msra.mxu0 0.0
        %3794 = vmatprep.subr.mxu0 0.0
        %3795 = vmatpush1.msra.mxu0 0.0
        %3796 = vmatprep.subr.mxu0 0.0
        %3797 = vmatpush1.msra.mxu0 0.0
        %3798 = vmatprep.subr.mxu0 0.0
        %3799 = vmatpush1.msra.mxu0 0.0
        %3800 = vmatprep.subr.mxu0 0.0
        %3801 = vmatpush1.msra.mxu0 0.0
        %3802 = vmatprep.subr.mxu0 0.0
        %3803 = vmatpush1.msra.mxu0 0.0
        %3804 = vmatprep.subr.mxu0 0.0
        %3805 = vmatpush1.msra.mxu0 0.0
        %3806 = vmatprep.subr.mxu0 0.0
        %3807 = vmatpush1.msra.mxu0 0.0
        %3808 = vmatprep.subr.mxu0 0.0
        %3809 = vmatpush1.msra.mxu0 0.0
        %3810 = vmatprep.subr.mxu0 0.0
        %3811 = vmatpush1.msra.mxu0 0.0
        %3812 = vmatprep.subr.mxu0 0.0
        %3813 = vmatpush1.msra.mxu0 0.0
        %3814 = vmatprep.subr.mxu0 0.0
        %3815 = vmatpush1.msra.mxu0 0.0
        %3816 = vmatprep.subr.mxu0 0.0
        %3817 = vmatpush1.msra.mxu0 0.0
        %3818 = vmatprep.subr.mxu0 0.0
        %3819 = vmatpush1.msra.mxu0 0.0
        %3820 = vmatprep.subr.mxu0 0.0
        %3821 = vmatpush1.msra.mxu0 0.0
        %3822 = vmatprep.subr.mxu0 0.0
        %3823 = vmatpush1.msra.mxu0 0.0
        %3824 = vmatprep.subr.mxu0 0.0
        %3825 = vmatpush1.msra.mxu0 0.0
        %3826 = vmatprep.subr.mxu0 0.0
        %3827 = vmatpush1.msra.mxu0 0.0
        %3828 = vmatprep.mubr.f32.mxu0 0.0
        %3829 = vmatmul.mubr.f32.gmra.mrb[0].mxu0 %v3762
        %v3830 = vpop.f32.mrb[0].mxu0
        %v3831 = vadd.f32 0.0, %v3830
        %v3832 = vpop.f32.mrb[0].mxu0
        %3833 = vdwg.mxu0
        %v3835 = vsel %vm1030, %v3831, 0
        %3837 = vmatprep.subr.mxu0 0.0
        %3838 = vmatpush1.msra.mxu0 %v3496
        %3839 = vmatprep.subr.mxu0 0.0
        %3840 = vmatpush1.msra.mxu0 0.0
        %3841 = vmatprep.subr.mxu0 0.0
        %3842 = vmatpush1.msra.mxu0 0.0
        %3843 = vmatprep.subr.mxu0 0.0
        %3844 = vmatpush1.msra.mxu0 0.0
        %3845 = vmatprep.subr.mxu0 0.0
        %3846 = vmatpush1.msra.mxu0 0.0
        %3847 = vmatprep.subr.mxu0 0.0
        %3848 = vmatpush1.msra.mxu0 0.0
        %3849 = vmatprep.subr.mxu0 0.0
        %3850 = vmatpush1.msra.mxu0 0.0
        %3851 = vmatprep.subr.mxu0 0.0
        %3852 = vmatpush1.msra.mxu0 0.0
        %3853 = vmatprep.subr.mxu0 0.0
        %3854 = vmatpush1.msra.mxu0 0.0
        %3855 = vmatprep.subr.mxu0 0.0
        %3856 = vmatpush1.msra.mxu0 0.0
        %3857 = vmatprep.subr.mxu0 0.0
        %3858 = vmatpush1.msra.mxu0 0.0
        %3859 = vmatprep.subr.mxu0 0.0
        %3860 = vmatpush1.msra.mxu0 0.0
        %3861 = vmatprep.subr.mxu0 0.0
        %3862 = vmatpush1.msra.mxu0 0.0
        %3863 = vmatprep.subr.mxu0 0.0
        %3864 = vmatpush1.msra.mxu0 0.0
        %3865 = vmatprep.subr.mxu0 0.0
        %3866 = vmatpush1.msra.mxu0 0.0
        %3867 = vmatprep.subr.mxu0 0.0
        %3868 = vmatpush1.msra.mxu0 0.0
        %3869 = vmatprep.subr.mxu0 0.0
        %3870 = vmatpush1.msra.mxu0 0.0
        %3871 = vmatprep.subr.mxu0 0.0
        %3872 = vmatpush1.msra.mxu0 0.0
        %3873 = vmatprep.subr.mxu0 0.0
        %3874 = vmatpush1.msra.mxu0 0.0
        %3875 = vmatprep.subr.mxu0 0.0
        %3876 = vmatpush1.msra.mxu0 0.0
        %3877 = vmatprep.subr.mxu0 0.0
        %3878 = vmatpush1.msra.mxu0 0.0
        %3879 = vmatprep.subr.mxu0 0.0
        %3880 = vmatpush1.msra.mxu0 0.0
        %3881 = vmatprep.subr.mxu0 0.0
        %3882 = vmatpush1.msra.mxu0 0.0
        %3883 = vmatprep.subr.mxu0 0.0
        %3884 = vmatpush1.msra.mxu0 0.0
        %3885 = vmatprep.subr.mxu0 0.0
        %3886 = vmatpush1.msra.mxu0 0.0
        %3887 = vmatprep.subr.mxu0 0.0
        %3888 = vmatpush1.msra.mxu0 0.0
        %3889 = vmatprep.subr.mxu0 0.0
        %3890 = vmatpush1.msra.mxu0 0.0
        %3891 = vmatprep.subr.mxu0 0.0
        %3892 = vmatpush1.msra.mxu0 0.0
        %3893 = vmatprep.subr.mxu0 0.0
        %3894 = vmatpush1.msra.mxu0 0.0
        %3895 = vmatprep.subr.mxu0 0.0
        %3896 = vmatpush1.msra.mxu0 0.0
        %3897 = vmatprep.subr.mxu0 0.0
        %3898 = vmatpush1.msra.mxu0 0.0
        %3899 = vmatprep.subr.mxu0 0.0
        %3900 = vmatpush1.msra.mxu0 0.0
        %3901 = vmatprep.mubr.f32.mxu0 0.0
        %3902 = vmatmul.mubr.f32.gmra.mrb[0].mxu0 %v3835
        %v3903 = vpop.f32.mrb[0].mxu0
        %v3904 = vadd.f32 0.0, %v3903
        %v3905 = vpop.f32.mrb[0].mxu0
        %3906 = vdwg.mxu0
        %v3908 = vsel %vm1030, %v3665, 0
        %3910 = vmatprep.subr.mxu0 0.0
        %3911 = vmatpush1.msra.mxu0 %v3495
        %3912 = vmatprep.subr.mxu0 0.0
        %3913 = vmatpush1.msra.mxu0 0.0
        %3914 = vmatprep.subr.mxu0 0.0
        %3915 = vmatpush1.msra.mxu0 0.0
        %3916 = vmatprep.subr.mxu0 0.0
        %3917 = vmatpush1.msra.mxu0 0.0
        %3918 = vmatprep.subr.mxu0 0.0
        %3919 = vmatpush1.msra.mxu0 0.0
        %3920 = vmatprep.subr.mxu0 0.0
        %3921 = vmatpush1.msra.mxu0 0.0
        %3922 = vmatprep.subr.mxu0 0.0
        %3923 = vmatpush1.msra.mxu0 0.0
        %3924 = vmatprep.subr.mxu0 0.0
        %3925 = vmatpush1.msra.mxu0 0.0
        %3926 = vmatprep.subr.mxu0 0.0
        %3927 = vmatpush1.msra.mxu0 0.0
        %3928 = vmatprep.subr.mxu0 0.0
        %3929 = vmatpush1.msra.mxu0 0.0
        %3930 = vmatprep.subr.mxu0 0.0
        %3931 = vmatpush1.msra.mxu0 0.0
        %3932 = vmatprep.subr.mxu0 0.0
        %3933 = vmatpush1.msra.mxu0 0.0
        %3934 = vmatprep.subr.mxu0 0.0
        %3935 = vmatpush1.msra.mxu0 0.0
        %3936 = vmatprep.subr.mxu0 0.0
        %3937 = vmatpush1.msra.mxu0 0.0
        %3938 = vmatprep.subr.mxu0 0.0
        %3939 = vmatpush1.msra.mxu0 0.0
        %3940 = vmatprep.subr.mxu0 0.0
        %3941 = vmatpush1.msra.mxu0 0.0
        %3942 = vmatprep.subr.mxu0 0.0
        %3943 = vmatpush1.msra.mxu0 0.0
        %3944 = vmatprep.subr.mxu0 0.0
        %3945 = vmatpush1.msra.mxu0 0.0
        %3946 = vmatprep.subr.mxu0 0.0
        %3947 = vmatpush1.msra.mxu0 0.0
        %3948 = vmatprep.subr.mxu0 0.0
        %3949 = vmatpush1.msra.mxu0 0.0
        %3950 = vmatprep.subr.mxu0 0.0
        %3951 = vmatpush1.msra.mxu0 0.0
        %3952 = vmatprep.subr.mxu0 0.0
        %3953 = vmatpush1.msra.mxu0 0.0
        %3954 = vmatprep.subr.mxu0 0.0
        %3955 = vmatpush1.msra.mxu0 0.0
        %3956 = vmatprep.subr.mxu0 0.0
        %3957 = vmatpush1.msra.mxu0 0.0
        %3958 = vmatprep.subr.mxu0 0.0
        %3959 = vmatpush1.msra.mxu0 0.0
        %3960 = vmatprep.subr.mxu0 0.0
        %3961 = vmatpush1.msra.mxu0 0.0
        %3962 = vmatprep.subr.mxu0 0.0
        %3963 = vmatpush1.msra.mxu0 0.0
        %3964 = vmatprep.subr.mxu0 0.0
        %3965 = vmatpush1.msra.mxu0 0.0
        %3966 = vmatprep.subr.mxu0 0.0
        %3967 = vmatpush1.msra.mxu0 0.0
        %3968 = vmatprep.subr.mxu0 0.0
        %3969 = vmatpush1.msra.mxu0 0.0
        %3970 = vmatprep.subr.mxu0 0.0
        %3971 = vmatpush1.msra.mxu0 0.0
        %3972 = vmatprep.subr.mxu0 0.0
        %3973 = vmatpush1.msra.mxu0 0.0
        %3974 = vmatprep.mubr.f32.mxu0 0.0
        %3975 = vmatmul.mubr.f32.gmra.mrb[0].mxu0 %v3908
        %v3976 = vpop.f32.mrb[0].mxu0
        %v3977 = vadd.f32 %v3904, %v3976
        %v3978 = vpop.f32.mrb[0].mxu0
        %3979 = vdwg.mxu0
        %3980 = vrot.lane.b32.xlu0 %v3501, 112
        %v3981 = vpop.permute.xlu0 %3980
        %3982 = vrot.lane.b32.xlu0 %v3491, 80
        %v3983 = vpop.permute.xlu0 %3982
        %v3984 = vsel %vm1030, %v3981, 0
        %v3986 = vsel %vm1030, %v3983, 0
        %3988 = vmatprep.subr.mxu0 0.0
        %3989 = vmatpush1.xpose.msra.mxu0 %v3986
        %3990 = vmatprep.subr.mxu0 0.0
        %3991 = vmatpush1.xpose.msra.mxu0 0.0
        %3992 = vmatprep.subr.mxu0 0.0
        %3993 = vmatpush1.xpose.msra.mxu0 0.0
        %3994 = vmatprep.subr.mxu0 0.0
        %3995 = vmatpush1.xpose.msra.mxu0 0.0
        %3996 = vmatprep.subr.mxu0 0.0
        %3997 = vmatpush1.xpose.msra.mxu0 0.0
        %3998 = vmatprep.subr.mxu0 0.0
        %3999 = vmatpush1.xpose.msra.mxu0 0.0
        %4000 = vmatprep.subr.mxu0 0.0
        %4001 = vmatpush1.xpose.msra.mxu0 0.0
        %4002 = vmatprep.subr.mxu0 0.0
        %4003 = vmatpush1.xpose.msra.mxu0 0.0
        %4004 = vmatprep.subr.mxu0 0.0
        %4005 = vmatpush1.xpose.msra.mxu0 0.0
        %4006 = vmatprep.subr.mxu0 0.0
        %4007 = vmatpush1.xpose.msra.mxu0 0.0
        %4008 = vmatprep.subr.mxu0 0.0
        %4009 = vmatpush1.xpose.msra.mxu0 0.0
        %4010 = vmatprep.subr.mxu0 0.0
        %4011 = vmatpush1.xpose.msra.mxu0 0.0
        %4012 = vmatprep.subr.mxu0 0.0
        %4013 = vmatpush1.xpose.msra.mxu0 0.0
        %4014 = vmatprep.subr.mxu0 0.0
        %4015 = vmatpush1.xpose.msra.mxu0 0.0
        %4016 = vmatprep.subr.mxu0 0.0
        %4017 = vmatpush1.xpose.msra.mxu0 0.0
        %4018 = vmatprep.subr.mxu0 0.0
        %4019 = vmatpush1.xpose.msra.mxu0 0.0
        %4020 = vmatprep.subr.mxu0 0.0
        %4021 = vmatpush1.xpose.msra.mxu0 0.0
        %4022 = vmatprep.subr.mxu0 0.0
        %4023 = vmatpush1.xpose.msra.mxu0 0.0
        %4024 = vmatprep.subr.mxu0 0.0
        %4025 = vmatpush1.xpose.msra.mxu0 0.0
        %4026 = vmatprep.subr.mxu0 0.0
        %4027 = vmatpush1.xpose.msra.mxu0 0.0
        %4028 = vmatprep.subr.mxu0 0.0
        %4029 = vmatpush1.xpose.msra.mxu0 0.0
        %4030 = vmatprep.subr.mxu0 0.0
        %4031 = vmatpush1.xpose.msra.mxu0 0.0
        %4032 = vmatprep.subr.mxu0 0.0
        %4033 = vmatpush1.xpose.msra.mxu0 0.0
        %4034 = vmatprep.subr.mxu0 0.0
        %4035 = vmatpush1.xpose.msra.mxu0 0.0
        %4036 = vmatprep.subr.mxu0 0.0
        %4037 = vmatpush1.xpose.msra.mxu0 0.0
        %4038 = vmatprep.subr.mxu0 0.0
        %4039 = vmatpush1.xpose.msra.mxu0 0.0
        %4040 = vmatprep.subr.mxu0 0.0
        %4041 = vmatpush1.xpose.msra.mxu0 0.0
        %4042 = vmatprep.subr.mxu0 0.0
        %4043 = vmatpush1.xpose.msra.mxu0 0.0
        %4044 = vmatprep.subr.mxu0 0.0
        %4045 = vmatpush1.xpose.msra.mxu0 0.0
        %4046 = vmatprep.subr.mxu0 0.0
        %4047 = vmatpush1.xpose.msra.mxu0 0.0
        %4048 = vmatprep.subr.mxu0 0.0
        %4049 = vmatpush1.xpose.msra.mxu0 0.0
        %4050 = vmatprep.subr.mxu0 0.0
        %4051 = vmatpush1.xpose.msra.mxu0 0.0
        %4052 = vmatprep.mubr.f32.mxu0 0.0
        %4053 = vmatmul.mubr.f32.gmra.mrb[0].mxu0 %v3984
        %v4054 = vpop.f32.mrb[0].mxu0
        %v4055 = vadd.f32 0.0, %v4054
        %v4056 = vpop.f32.mrb[0].mxu0
        %4057 = vdwg.mxu0
        %v4058 = vsel %vm902, -1e+09, %v4055
        %v4059 = vsel %vm1030, %v4058, -inf
        %4060 = vmax.xlane.f32.xlu0 %v4059
        %v4061 = vpop.xlane.xlu0 %4060
        %v4062 = vsub.f32 %v4058, %v4061
        %v4063 = vmul.f32 %v4062, 1.442695
        %v4064 = vpow.pop %v4063
        %v4065 = vsel %vm1030, %v4064, 0.0
        %4066 = vadd.xlane.f32.xlu0 %v4065
        %v4067 = vpop.xlane.xlu0 %4066
        %v4068 = vrcp.pop %v4067
        %v4069 = vmul.f32 %v4064, %v4068
        %4070 = vrot.lane.b32.xlu0 %v3491, 48
        %v4071 = vpop.permute.xlu0 %4070
        %v4074 = vsel %vm1030, %v4069, 0
        %4076 = vmatprep.subr.mxu0 0.0
        %4077 = vmatpush1.msra.mxu0 %v4071
        %4078 = vmatprep.subr.mxu0 0.0
        %4079 = vmatpush1.msra.mxu0 0.0
        %4080 = vmatprep.subr.mxu0 0.0
        %4081 = vmatpush1.msra.mxu0 0.0
        %4082 = vmatprep.subr.mxu0 0.0
        %4083 = vmatpush1.msra.mxu0 0.0
        %4084 = vmatprep.subr.mxu0 0.0
        %4085 = vmatpush1.msra.mxu0 0.0
        %4086 = vmatprep.subr.mxu0 0.0
        %4087 = vmatpush1.msra.mxu0 0.0
        %4088 = vmatprep.subr.mxu0 0.0
        %4089 = vmatpush1.msra.mxu0 0.0
        %4090 = vmatprep.subr.mxu0 0.0
        %4091 = vmatpush1.msra.mxu0 0.0
        %4092 = vmatprep.subr.mxu0 0.0
        %4093 = vmatpush1.msra.mxu0 0.0
        %4094 = vmatprep.subr.mxu0 0.0
        %4095 = vmatpush1.msra.mxu0 0.0
        %4096 = vmatprep.subr.mxu0 0.0
        %4097 = vmatpush1.msra.mxu0 0.0
        %4098 = vmatprep.subr.mxu0 0.0
        %4099 = vmatpush1.msra.mxu0 0.0
        %4100 = vmatprep.subr.mxu0 0.0
        %4101 = vmatpush1.msra.mxu0 0.0
        %4102 = vmatprep.subr.mxu0 0.0
        %4103 = vmatpush1.msra.mxu0 0.0
        %4104 = vmatprep.subr.mxu0 0.0
        %4105 = vmatpush1.msra.mxu0 0.0
        %4106 = vmatprep.subr.mxu0 0.0
        %4107 = vmatpush1.msra.mxu0 0.0
        %4108 = vmatprep.subr.mxu0 0.0
        %4109 = vmatpush1.msra.mxu0 0.0
        %4110 = vmatprep.subr.mxu0 0.0
        %4111 = vmatpush1.msra.mxu0 0.0
        %4112 = vmatprep.subr.mxu0 0.0
        %4113 = vmatpush1.msra.mxu0 0.0
        %4114 = vmatprep.subr.mxu0 0.0
        %4115 = vmatpush1.msra.mxu0 0.0
        %4116 = vmatprep.subr.mxu0 0.0
        %4117 = vmatpush1.msra.mxu0 0.0
        %4118 = vmatprep.subr.mxu0 0.0
        %4119 = vmatpush1.msra.mxu0 0.0
        %4120 = vmatprep.subr.mxu0 0.0
        %4121 = vmatpush1.msra.mxu0 0.0
        %4122 = vmatprep.subr.mxu0 0.0
        %4123 = vmatpush1.msra.mxu0 0.0
        %4124 = vmatprep.subr.mxu0 0.0
        %4125 = vmatpush1.msra.mxu0 0.0
        %4126 = vmatprep.subr.mxu0 0.0
        %4127 = vmatpush1.msra.mxu0 0.0
        %4128 = vmatprep.subr.mxu0 0.0
        %4129 = vmatpush1.msra.mxu0 0.0
        %4130 = vmatprep.subr.mxu0 0.0
        %4131 = vmatpush1.msra.mxu0 0.0
        %4132 = vmatprep.subr.mxu0 0.0
        %4133 = vmatpush1.msra.mxu0 0.0
        %4134 = vmatprep.subr.mxu0 0.0
        %4135 = vmatpush1.msra.mxu0 0.0
        %4136 = vmatprep.subr.mxu0 0.0
        %4137 = vmatpush1.msra.mxu0 0.0
        %4138 = vmatprep.subr.mxu0 0.0
        %4139 = vmatpush1.msra.mxu0 0.0
        %4140 = vmatprep.mubr.f32.mxu0 0.0
        %4141 = vmatmul.mubr.f32.gmra.mrb[0].mxu0 %v4074
        %v4142 = vpop.f32.mrb[0].mxu0
        %v4143 = vadd.f32 0.0, %v4142
        %v4144 = vpop.f32.mrb[0].mxu0
        %4145 = vdwg.mxu0
        %v4147 = vsel %vm1030, %v4143, 0
        %4149 = vmatprep.subr.mxu0 0.0
        %4150 = vmatpush1.msra.mxu0 %v3497
        %4151 = vmatprep.subr.mxu0 0.0
        %4152 = vmatpush1.msra.mxu0 0.0
        %4153 = vmatprep.subr.mxu0 0.0
        %4154 = vmatpush1.msra.mxu0 0.0
        %4155 = vmatprep.subr.mxu0 0.0
        %4156 = vmatpush1.msra.mxu0 0.0
        %4157 = vmatprep.subr.mxu0 0.0
        %4158 = vmatpush1.msra.mxu0 0.0
        %4159 = vmatprep.subr.mxu0 0.0
        %4160 = vmatpush1.msra.mxu0 0.0
        %4161 = vmatprep.subr.mxu0 0.0
        %4162 = vmatpush1.msra.mxu0 0.0
        %4163 = vmatprep.subr.mxu0 0.0
        %4164 = vmatpush1.msra.mxu0 0.0
        %4165 = vmatprep.subr.mxu0 0.0
        %4166 = vmatpush1.msra.mxu0 0.0
        %4167 = vmatprep.subr.mxu0 0.0
        %4168 = vmatpush1.msra.mxu0 0.0
        %4169 = vmatprep.subr.mxu0 0.0
        %4170 = vmatpush1.msra.mxu0 0.0
        %4171 = vmatprep.subr.mxu0 0.0
        %4172 = vmatpush1.msra.mxu0 0.0
        %4173 = vmatprep.subr.mxu0 0.0
        %4174 = vmatpush1.msra.mxu0 0.0
        %4175 = vmatprep.subr.mxu0 0.0
        %4176 = vmatpush1.msra.mxu0 0.0
        %4177 = vmatprep.subr.mxu0 0.0
        %4178 = vmatpush1.msra.mxu0 0.0
        %4179 = vmatprep.subr.mxu0 0.0
        %4180 = vmatpush1.msra.mxu0 0.0
        %4181 = vmatprep.subr.mxu0 0.0
        %4182 = vmatpush1.msra.mxu0 0.0
        %4183 = vmatprep.subr.mxu0 0.0
        %4184 = vmatpush1.msra.mxu0 0.0
        %4185 = vmatprep.subr.mxu0 0.0
        %4186 = vmatpush1.msra.mxu0 0.0
        %4187 = vmatprep.subr.mxu0 0.0
        %4188 = vmatpush1.msra.mxu0 0.0
        %4189 = vmatprep.subr.mxu0 0.0
        %4190 = vmatpush1.msra.mxu0 0.0
        %4191 = vmatprep.subr.mxu0 0.0
        %4192 = vmatpush1.msra.mxu0 0.0
        %4193 = vmatprep.subr.mxu0 0.0
        %4194 = vmatpush1.msra.mxu0 0.0
        %4195 = vmatprep.subr.mxu0 0.0
        %4196 = vmatpush1.msra.mxu0 0.0
        %4197 = vmatprep.subr.mxu0 0.0
        %4198 = vmatpush1.msra.mxu0 0.0
        %4199 = vmatprep.subr.mxu0 0.0
        %4200 = vmatpush1.msra.mxu0 0.0
        %4201 = vmatprep.subr.mxu0 0.0
        %4202 = vmatpush1.msra.mxu0 0.0
        %4203 = vmatprep.subr.mxu0 0.0
        %4204 = vmatpush1.msra.mxu0 0.0
        %4205 = vmatprep.subr.mxu0 0.0
        %4206 = vmatpush1.msra.mxu0 0.0
        %4207 = vmatprep.subr.mxu0 0.0
        %4208 = vmatpush1.msra.mxu0 0.0
        %4209 = vmatprep.subr.mxu0 0.0
        %4210 = vmatpush1.msra.mxu0 0.0
        %4211 = vmatprep.subr.mxu0 0.0
        %4212 = vmatpush1.msra.mxu0 0.0
        %4213 = vmatprep.mubr.f32.mxu0 0.0
        %4214 = vmatmul.mubr.f32.gmra.mrb[0].mxu0 %v4147
        %v4215 = vpop.f32.mrb[0].mxu0
        %v4216 = vadd.f32 0.0, %v4215
        %v4217 = vpop.f32.mrb[0].mxu0
        %4218 = vdwg.mxu0
        %v4219 = vadd.f32 %v3977, %v4216
        %4220 = vrot.lane.b32.xlu0 %v3501, 104
        %v4221 = vpop.permute.xlu0 %4220
        %4222 = vrot.lane.b32.xlu0 %v3491, 72
        %v4223 = vpop.permute.xlu0 %4222
        %v4224 = vsel %vm1030, %v4221, 0
        %v4226 = vsel %vm1030, %v4223, 0
        %4228 = vmatprep.subr.mxu0 0.0
        %4229 = vmatpush1.xpose.msra.mxu0 %v4226
        %4230 = vmatprep.subr.mxu0 0.0
        %4231 = vmatpush1.xpose.msra.mxu0 0.0
        %4232 = vmatprep.subr.mxu0 0.0
        %4233 = vmatpush1.xpose.msra.mxu0 0.0
        %4234 = vmatprep.subr.mxu0 0.0
        %4235 = vmatpush1.xpose.msra.mxu0 0.0
        %4236 = vmatprep.subr.mxu0 0.0
        %4237 = vmatpush1.xpose.msra.mxu0 0.0
        %4238 = vmatprep.subr.mxu0 0.0
        %4239 = vmatpush1.xpose.msra.mxu0 0.0
        %4240 = vmatprep.subr.mxu0 0.0
        %4241 = vmatpush1.xpose.msra.mxu0 0.0
        %4242 = vmatprep.subr.mxu0 0.0
        %4243 = vmatpush1.xpose.msra.mxu0 0.0
        %4244 = vmatprep.subr.mxu0 0.0
        %4245 = vmatpush1.xpose.msra.mxu0 0.0
        %4246 = vmatprep.subr.mxu0 0.0
        %4247 = vmatpush1.xpose.msra.mxu0 0.0
        %4248 = vmatprep.subr.mxu0 0.0
        %4249 = vmatpush1.xpose.msra.mxu0 0.0
        %4250 = vmatprep.subr.mxu0 0.0
        %4251 = vmatpush1.xpose.msra.mxu0 0.0
        %4252 = vmatprep.subr.mxu0 0.0
        %4253 = vmatpush1.xpose.msra.mxu0 0.0
        %4254 = vmatprep.subr.mxu0 0.0
        %4255 = vmatpush1.xpose.msra.mxu0 0.0
        %4256 = vmatprep.subr.mxu0 0.0
        %4257 = vmatpush1.xpose.msra.mxu0 0.0
        %4258 = vmatprep.subr.mxu0 0.0
        %4259 = vmatpush1.xpose.msra.mxu0 0.0
        %4260 = vmatprep.subr.mxu0 0.0
        %4261 = vmatpush1.xpose.msra.mxu0 0.0
        %4262 = vmatprep.subr.mxu0 0.0
        %4263 = vmatpush1.xpose.msra.mxu0 0.0
        %4264 = vmatprep.subr.mxu0 0.0
        %4265 = vmatpush1.xpose.msra.mxu0 0.0
        %4266 = vmatprep.subr.mxu0 0.0
        %4267 = vmatpush1.xpose.msra.mxu0 0.0
        %4268 = vmatprep.subr.mxu0 0.0
        %4269 = vmatpush1.xpose.msra.mxu0 0.0
        %4270 = vmatprep.subr.mxu0 0.0
        %4271 = vmatpush1.xpose.msra.mxu0 0.0
        %4272 = vmatprep.subr.mxu0 0.0
        %4273 = vmatpush1.xpose.msra.mxu0 0.0
        %4274 = vmatprep.subr.mxu0 0.0
        %4275 = vmatpush1.xpose.msra.mxu0 0.0
        %4276 = vmatprep.subr.mxu0 0.0
        %4277 = vmatpush1.xpose.msra.mxu0 0.0
        %4278 = vmatprep.subr.mxu0 0.0
        %4279 = vmatpush1.xpose.msra.mxu0 0.0
        %4280 = vmatprep.subr.mxu0 0.0
        %4281 = vmatpush1.xpose.msra.mxu0 0.0
        %4282 = vmatprep.subr.mxu0 0.0
        %4283 = vmatpush1.xpose.msra.mxu0 0.0
        %4284 = vmatprep.subr.mxu0 0.0
        %4285 = vmatpush1.xpose.msra.mxu0 0.0
        %4286 = vmatprep.subr.mxu0 0.0
        %4287 = vmatpush1.xpose.msra.mxu0 0.0
        %4288 = vmatprep.subr.mxu0 0.0
        %4289 = vmatpush1.xpose.msra.mxu0 0.0
        %4290 = vmatprep.subr.mxu0 0.0
        %4291 = vmatpush1.xpose.msra.mxu0 0.0
        %4292 = vmatprep.mubr.f32.mxu0 0.0
        %4293 = vmatmul.mubr.f32.gmra.mrb[0].mxu0 %v4224
        %v4294 = vpop.f32.mrb[0].mxu0
        %v4295 = vadd.f32 0.0, %v4294
        %v4296 = vpop.f32.mrb[0].mxu0
        %4297 = vdwg.mxu0
        %v4298 = vsel %vm902, -1e+09, %v4295
        %v4299 = vsel %vm1030, %v4298, -inf
        %4300 = vmax.xlane.f32.xlu0 %v4299
        %v4301 = vpop.xlane.xlu0 %4300
        %v4302 = vsub.f32 %v4298, %v4301
        %v4303 = vmul.f32 %v4302, 1.442695
        %v4304 = vpow.pop %v4303
        %v4305 = vsel %vm1030, %v4304, 0.0
        %4306 = vadd.xlane.f32.xlu0 %v4305
        %v4307 = vpop.xlane.xlu0 %4306
        %v4308 = vrcp.pop %v4307
        %v4309 = vmul.f32 %v4304, %v4308
        %4310 = vrot.lane.b32.xlu0 %v3491, 40
        %v4311 = vpop.permute.xlu0 %4310
        %v4314 = vsel %vm1030, %v4309, 0
        %4316 = vmatprep.subr.mxu0 0.0
        %4317 = vmatpush1.msra.mxu0 %v4311
        %4318 = vmatprep.subr.mxu0 0.0
        %4319 = vmatpush1.msra.mxu0 0.0
        %4320 = vmatprep.subr.mxu0 0.0
        %4321 = vmatpush1.msra.mxu0 0.0
        %4322 = vmatprep.subr.mxu0 0.0
        %4323 = vmatpush1.msra.mxu0 0.0
        %4324 = vmatprep.subr.mxu0 0.0
        %4325 = vmatpush1.msra.mxu0 0.0
        %4326 = vmatprep.subr.mxu0 0.0
        %4327 = vmatpush1.msra.mxu0 0.0
        %4328 = vmatprep.subr.mxu0 0.0
        %4329 = vmatpush1.msra.mxu0 0.0
        %4330 = vmatprep.subr.mxu0 0.0
        %4331 = vmatpush1.msra.mxu0 0.0
        %4332 = vmatprep.subr.mxu0 0.0
        %4333 = vmatpush1.msra.mxu0 0.0
        %4334 = vmatprep.subr.mxu0 0.0
        %4335 = vmatpush1.msra.mxu0 0.0
        %4336 = vmatprep.subr.mxu0 0.0
        %4337 = vmatpush1.msra.mxu0 0.0
        %4338 = vmatprep.subr.mxu0 0.0
        %4339 = vmatpush1.msra.mxu0 0.0
        %4340 = vmatprep.subr.mxu0 0.0
        %4341 = vmatpush1.msra.mxu0 0.0
        %4342 = vmatprep.subr.mxu0 0.0
        %4343 = vmatpush1.msra.mxu0 0.0
        %4344 = vmatprep.subr.mxu0 0.0
        %4345 = vmatpush1.msra.mxu0 0.0
        %4346 = vmatprep.subr.mxu0 0.0
        %4347 = vmatpush1.msra.mxu0 0.0
        %4348 = vmatprep.subr.mxu0 0.0
        %4349 = vmatpush1.msra.mxu0 0.0
        %4350 = vmatprep.subr.mxu0 0.0
        %4351 = vmatpush1.msra.mxu0 0.0
        %4352 = vmatprep.subr.mxu0 0.0
        %4353 = vmatpush1.msra.mxu0 0.0
        %4354 = vmatprep.subr.mxu0 0.0
        %4355 = vmatpush1.msra.mxu0 0.0
        %4356 = vmatprep.subr.mxu0 0.0
        %4357 = vmatpush1.msra.mxu0 0.0
        %4358 = vmatprep.subr.mxu0 0.0
        %4359 = vmatpush1.msra.mxu0 0.0
        %4360 = vmatprep.subr.mxu0 0.0
        %4361 = vmatpush1.msra.mxu0 0.0
        %4362 = vmatprep.subr.mxu0 0.0
        %4363 = vmatpush1.msra.mxu0 0.0
        %4364 = vmatprep.subr.mxu0 0.0
        %4365 = vmatpush1.msra.mxu0 0.0
        %4366 = vmatprep.subr.mxu0 0.0
        %4367 = vmatpush1.msra.mxu0 0.0
        %4368 = vmatprep.subr.mxu0 0.0
        %4369 = vmatpush1.msra.mxu0 0.0
        %4370 = vmatprep.subr.mxu0 0.0
        %4371 = vmatpush1.msra.mxu0 0.0
        %4372 = vmatprep.subr.mxu0 0.0
        %4373 = vmatpush1.msra.mxu0 0.0
        %4374 = vmatprep.subr.mxu0 0.0
        %4375 = vmatpush1.msra.mxu0 0.0
        %4376 = vmatprep.subr.mxu0 0.0
        %4377 = vmatpush1.msra.mxu0 0.0
        %4378 = vmatprep.subr.mxu0 0.0
        %4379 = vmatpush1.msra.mxu0 0.0
        %4380 = vmatprep.mubr.f32.mxu0 0.0
        %4381 = vmatmul.mubr.f32.gmra.mrb[0].mxu0 %v4314
        %v4382 = vpop.f32.mrb[0].mxu0
        %v4383 = vadd.f32 0.0, %v4382
        %v4384 = vpop.f32.mrb[0].mxu0
        %4385 = vdwg.mxu0
        %v4387 = vsel %vm1030, %v4383, 0
        %4389 = vmatprep.subr.mxu0 0.0
        %4390 = vmatpush1.msra.mxu0 %v3498
        %4391 = vmatprep.subr.mxu0 0.0
        %4392 = vmatpush1.msra.mxu0 0.0
        %4393 = vmatprep.subr.mxu0 0.0
        %4394 = vmatpush1.msra.mxu0 0.0
        %4395 = vmatprep.subr.mxu0 0.0
        %4396 = vmatpush1.msra.mxu0 0.0
        %4397 = vmatprep.subr.mxu0 0.0
        %4398 = vmatpush1.msra.mxu0 0.0
        %4399 = vmatprep.subr.mxu0 0.0
        %4400 = vmatpush1.msra.mxu0 0.0
        %4401 = vmatprep.subr.mxu0 0.0
        %4402 = vmatpush1.msra.mxu0 0.0
        %4403 = vmatprep.subr.mxu0 0.0
        %4404 = vmatpush1.msra.mxu0 0.0
        %4405 = vmatprep.subr.mxu0 0.0
        %4406 = vmatpush1.msra.mxu0 0.0
        %4407 = vmatprep.subr.mxu0 0.0
        %4408 = vmatpush1.msra.mxu0 0.0
        %4409 = vmatprep.subr.mxu0 0.0
        %4410 = vmatpush1.msra.mxu0 0.0
        %4411 = vmatprep.subr.mxu0 0.0
        %4412 = vmatpush1.msra.mxu0 0.0
        %4413 = vmatprep.subr.mxu0 0.0
        %4414 = vmatpush1.msra.mxu0 0.0
        %4415 = vmatprep.subr.mxu0 0.0
        %4416 = vmatpush1.msra.mxu0 0.0
        %4417 = vmatprep.subr.mxu0 0.0
        %4418 = vmatpush1.msra.mxu0 0.0
        %4419 = vmatprep.subr.mxu0 0.0
        %4420 = vmatpush1.msra.mxu0 0.0
        %4421 = vmatprep.subr.mxu0 0.0
        %4422 = vmatpush1.msra.mxu0 0.0
        %4423 = vmatprep.subr.mxu0 0.0
        %4424 = vmatpush1.msra.mxu0 0.0
        %4425 = vmatprep.subr.mxu0 0.0
        %4426 = vmatpush1.msra.mxu0 0.0
        %4427 = vmatprep.subr.mxu0 0.0
        %4428 = vmatpush1.msra.mxu0 0.0
        %4429 = vmatprep.subr.mxu0 0.0
        %4430 = vmatpush1.msra.mxu0 0.0
        %4431 = vmatprep.subr.mxu0 0.0
        %4432 = vmatpush1.msra.mxu0 0.0
        %4433 = vmatprep.subr.mxu0 0.0
        %4434 = vmatpush1.msra.mxu0 0.0
        %4435 = vmatprep.subr.mxu0 0.0
        %4436 = vmatpush1.msra.mxu0 0.0
        %4437 = vmatprep.subr.mxu0 0.0
        %4438 = vmatpush1.msra.mxu0 0.0
        %4439 = vmatprep.subr.mxu0 0.0
        %4440 = vmatpush1.msra.mxu0 0.0
        %4441 = vmatprep.subr.mxu0 0.0
        %4442 = vmatpush1.msra.mxu0 0.0
        %4443 = vmatprep.subr.mxu0 0.0
        %4444 = vmatpush1.msra.mxu0 0.0
        %4445 = vmatprep.subr.mxu0 0.0
        %4446 = vmatpush1.msra.mxu0 0.0
        %4447 = vmatprep.subr.mxu0 0.0
        %4448 = vmatpush1.msra.mxu0 0.0
        %4449 = vmatprep.subr.mxu0 0.0
        %4450 = vmatpush1.msra.mxu0 0.0
        %4451 = vmatprep.subr.mxu0 0.0
        %4452 = vmatpush1.msra.mxu0 0.0
        %4453 = vmatprep.mubr.f32.mxu0 0.0
        %4454 = vmatmul.mubr.f32.gmra.mrb[0].mxu0 %v4387
        %v4455 = vpop.f32.mrb[0].mxu0
        %v4456 = vadd.f32 0.0, %v4455
        %v4457 = vpop.f32.mrb[0].mxu0
        %4458 = vdwg.mxu0
        %v4459 = vadd.f32 %v4219, %v4456
        %v4461 = vlaneseq
        %v4462 = vshrl.u32 %v4461, 7
        %v4463 = vsub.s32 0, %v4462
        %v4464 = vrot.slane %v3500, %v4463
        %v4466 = vadd.f32 %v4459, %v4464
        %v4467 = vadd.f32 %v3373, %v4466
        %v4468 = vsel %vm905, %v4467, 0.0
        %4469 = vadd.xlane.f32.xlu0 %v4468
        %v4470 = vpop.xlane.xlu0 %4469
        %v4471 = vmul.f32 %v4470, %v909
        %v4472 = vsub.f32 %v4467, %v4471
        %v4473 = vmul.f32 %v4472, %v4472
        %v4474 = vsel %vm905, %v4473, 0.0
        %4475 = vadd.xlane.f32.xlu0 %v4474
        %v4476 = vpop.xlane.xlu0 %4475
        %v4477 = vmul.f32 %v4476, 0.032258064
        %v4478 = vrsqrt.pop %v4477
        %v4479 = vmul.f32 %v4477, %v4478
        %vm4480 = vcmp.eq.f32.partialorder %v4477, inf
        %v4481 = vsel %vm4480, %v4477, %v4479
        %vm4482 = vcmp.eq.f32.partialorder %v4477, 0.0
        %v4483 = vand.u32 %v4477, 2147483648
        %v4484 = vsel %vm4482, %v4483, %v4481
        %v4485 = vlaneseq
        %v4486 = vshrl.u32 %v4485, 7
        %v4487 = vsub.s32 1, %v4486
        %v4488 = vrot.slane %v3375, %v4487
        %v4489 = vmul.f32 %v4488, %v4472
        %v4490 = vadd.f32 %v4484, 1e-06
        %v4491 = vrcp.pop %v4490
        %v4492 = vmul.f32 %v4489, %v4491
        %v4493 = vlaneseq
        %v4494 = vshrl.u32 %v4493, 7
        %v4495 = vsub.s32 1, %v4494
        %v4496 = vrot.slane %v3377, %v4495
        %v4497 = vadd.f32 %v4492, %v4496
        %s4498 = scalar_lea.vmem %s8, 32
        %v4499 = vld [vmem:[%s4498] sm:$0xff]
        %v4500 = vld [vmem:[%s4498 + $0x8] sm:$0xff]
        %v4501 = vld [vmem:[%s4498 + $0x10] sm:$0xff]
        %v4502 = vld [vmem:[%s4498 + $0x18] sm:$0xff]
        %s4503 = scalar_lea.vmem [#allocation10], 1
        %v4504 = vld [vmem:[%s4503] sm:$0x1]
        %v4506 = vlaneseq
        %v4507 = vshrl.u32 %v4506, 7
        %v4508 = vsub.s32 0, %v4507
        %v4509 = vrot.slane %v4504, %v4508
        %v4512 = vsel %vm905, %v4497, 0
        %4514 = vmatprep.subr.mxu0 0.0
        %4515 = vmatpush1.msra.mxu0 %v4499
        %4516 = vmatprep.subr.mxu0 0.0
        %4517 = vmatpush1.msra.mxu0 %v4500
        %4518 = vmatprep.subr.mxu0 0.0
        %4519 = vmatpush1.msra.mxu0 %v4501
        %4520 = vmatprep.subr.mxu0 0.0
        %4521 = vmatpush1.msra.mxu0 %v4502
        %4522 = vmatprep.subr.mxu0 0.0
        %4523 = vmatpush1.msra.mxu0 0.0
        %4524 = vmatprep.subr.mxu0 0.0
        %4525 = vmatpush1.msra.mxu0 0.0
        %4526 = vmatprep.subr.mxu0 0.0
        %4527 = vmatpush1.msra.mxu0 0.0
        %4528 = vmatprep.subr.mxu0 0.0
        %4529 = vmatpush1.msra.mxu0 0.0
        %4530 = vmatprep.subr.mxu0 0.0
        %4531 = vmatpush1.msra.mxu0 0.0
        %4532 = vmatprep.subr.mxu0 0.0
        %4533 = vmatpush1.msra.mxu0 0.0
        %4534 = vmatprep.subr.mxu0 0.0
        %4535 = vmatpush1.msra.mxu0 0.0
        %4536 = vmatprep.subr.mxu0 0.0
        %4537 = vmatpush1.msra.mxu0 0.0
        %4538 = vmatprep.subr.mxu0 0.0
        %4539 = vmatpush1.msra.mxu0 0.0
        %4540 = vmatprep.subr.mxu0 0.0
        %4541 = vmatpush1.msra.mxu0 0.0
        %4542 = vmatprep.subr.mxu0 0.0
        %4543 = vmatpush1.msra.mxu0 0.0
        %4544 = vmatprep.subr.mxu0 0.0
        %4545 = vmatpush1.msra.mxu0 0.0
        %4546 = vmatprep.subr.mxu0 0.0
        %4547 = vmatpush1.msra.mxu0 0.0
        %4548 = vmatprep.subr.mxu0 0.0
        %4549 = vmatpush1.msra.mxu0 0.0
        %4550 = vmatprep.subr.mxu0 0.0
        %4551 = vmatpush1.msra.mxu0 0.0
        %4552 = vmatprep.subr.mxu0 0.0
        %4553 = vmatpush1.msra.mxu0 0.0
        %4554 = vmatprep.subr.mxu0 0.0
        %4555 = vmatpush1.msra.mxu0 0.0
        %4556 = vmatprep.subr.mxu0 0.0
        %4557 = vmatpush1.msra.mxu0 0.0
        %4558 = vmatprep.subr.mxu0 0.0
        %4559 = vmatpush1.msra.mxu0 0.0
        %4560 = vmatprep.subr.mxu0 0.0
        %4561 = vmatpush1.msra.mxu0 0.0
        %4562 = vmatprep.subr.mxu0 0.0
        %4563 = vmatpush1.msra.mxu0 0.0
        %4564 = vmatprep.subr.mxu0 0.0
        %4565 = vmatpush1.msra.mxu0 0.0
        %4566 = vmatprep.subr.mxu0 0.0
        %4567 = vmatpush1.msra.mxu0 0.0
        %4568 = vmatprep.subr.mxu0 0.0
        %4569 = vmatpush1.msra.mxu0 0.0
        %4570 = vmatprep.subr.mxu0 0.0
        %4571 = vmatpush1.msra.mxu0 0.0
        %4572 = vmatprep.subr.mxu0 0.0
        %4573 = vmatpush1.msra.mxu0 0.0
        %4574 = vmatprep.subr.mxu0 0.0
        %4575 = vmatpush1.msra.mxu0 0.0
        %4576 = vmatprep.subr.mxu0 0.0
        %4577 = vmatpush1.msra.mxu0 0.0
        %4578 = vmatprep.mubr.f32.mxu0 0.0
        %4579 = vmatmul.mubr.f32.gmra.mrb[0].mxu0 %v4512
        %v4580 = vpop.f32.mrb[0].mxu0
        %v4581 = vadd.f32 %v4509, %v4580
        %v4582 = vpop.f32.mrb[0].mxu0
        %4583 = vdwg.mxu0
        %s4584 = scalar_lea.vmem [#allocation11], 32
        %v4585 = vld [vmem:[%s4584] sm:$0xff]
        %v4586 = vld [vmem:[%s4584 + $0x8] sm:$0xff]
        %v4587 = vld [vmem:[%s4584 + $0x10] sm:$0xff]
        %v4588 = vld [vmem:[%s4584 + $0x18] sm:$0xff]
        %s4589 = scalar_lea.vmem [#allocation13], 1
        %v4590 = vld [vmem:[%s4589] sm:$0x1]
        %v4592 = vlaneseq
        %v4593 = vshrl.u32 %v4592, 7
        %v4594 = vsub.s32 0, %v4593
        %v4595 = vrot.slane %v4590, %v4594
        %4597 = vmatprep.subr.mxu0 0.0
        %4598 = vmatpush1.msra.mxu0 %v4585
        %4599 = vmatprep.subr.mxu0 0.0
        %4600 = vmatpush1.msra.mxu0 %v4586
        %4601 = vmatprep.subr.mxu0 0.0
        %4602 = vmatpush1.msra.mxu0 %v4587
        %4603 = vmatprep.subr.mxu0 0.0
        %4604 = vmatpush1.msra.mxu0 %v4588
        %4605 = vmatprep.subr.mxu0 0.0
        %4606 = vmatpush1.msra.mxu0 0.0
        %4607 = vmatprep.subr.mxu0 0.0
        %4608 = vmatpush1.msra.mxu0 0.0
        %4609 = vmatprep.subr.mxu0 0.0
        %4610 = vmatpush1.msra.mxu0 0.0
        %4611 = vmatprep.subr.mxu0 0.0
        %4612 = vmatpush1.msra.mxu0 0.0
        %4613 = vmatprep.subr.mxu0 0.0
        %4614 = vmatpush1.msra.mxu0 0.0
        %4615 = vmatprep.subr.mxu0 0.0
        %4616 = vmatpush1.msra.mxu0 0.0
        %4617 = vmatprep.subr.mxu0 0.0
        %4618 = vmatpush1.msra.mxu0 0.0
        %4619 = vmatprep.subr.mxu0 0.0
        %4620 = vmatpush1.msra.mxu0 0.0
        %4621 = vmatprep.subr.mxu0 0.0
        %4622 = vmatpush1.msra.mxu0 0.0
        %4623 = vmatprep.subr.mxu0 0.0
        %4624 = vmatpush1.msra.mxu0 0.0
        %4625 = vmatprep.subr.mxu0 0.0
        %4626 = vmatpush1.msra.mxu0 0.0
        %4627 = vmatprep.subr.mxu0 0.0
        %4628 = vmatpush1.msra.mxu0 0.0
        %4629 = vmatprep.subr.mxu0 0.0
        %4630 = vmatpush1.msra.mxu0 0.0
        %4631 = vmatprep.subr.mxu0 0.0
        %4632 = vmatpush1.msra.mxu0 0.0
        %4633 = vmatprep.subr.mxu0 0.0
        %4634 = vmatpush1.msra.mxu0 0.0
        %4635 = vmatprep.subr.mxu0 0.0
        %4636 = vmatpush1.msra.mxu0 0.0
        %4637 = vmatprep.subr.mxu0 0.0
        %4638 = vmatpush1.msra.mxu0 0.0
        %4639 = vmatprep.subr.mxu0 0.0
        %4640 = vmatpush1.msra.mxu0 0.0
        %4641 = vmatprep.subr.mxu0 0.0
        %4642 = vmatpush1.msra.mxu0 0.0
        %4643 = vmatprep.subr.mxu0 0.0
        %4644 = vmatpush1.msra.mxu0 0.0
        %4645 = vmatprep.subr.mxu0 0.0
        %4646 = vmatpush1.msra.mxu0 0.0
        %4647 = vmatprep.subr.mxu0 0.0
        %4648 = vmatpush1.msra.mxu0 0.0
        %4649 = vmatprep.subr.mxu0 0.0
        %4650 = vmatpush1.msra.mxu0 0.0
        %4651 = vmatprep.subr.mxu0 0.0
        %4652 = vmatpush1.msra.mxu0 0.0
        %4653 = vmatprep.subr.mxu0 0.0
        %4654 = vmatpush1.msra.mxu0 0.0
        %4655 = vmatprep.subr.mxu0 0.0
        %4656 = vmatpush1.msra.mxu0 0.0
        %4657 = vmatprep.subr.mxu0 0.0
        %4658 = vmatpush1.msra.mxu0 0.0
        %4659 = vmatprep.subr.mxu0 0.0
        %4660 = vmatpush1.msra.mxu0 0.0
        %4661 = vmatprep.mubr.f32.mxu0 0.0
        %4662 = vmatmul.mubr.f32.gmra.mrb[0].mxu0 %v2120
        %v4663 = vpop.f32.mrb[0].mxu0
        %v4664 = vadd.f32 %v4595, %v4663
        %v4665 = vpop.f32.mrb[0].mxu0
        %4666 = vdwg.mxu0
        %s4667 = scalar_lea.vmem [#allocation14], 32
        %v4668 = vld [vmem:[%s4667] sm:$0xff]
        %v4669 = vld [vmem:[%s4667 + $0x8] sm:$0xff]
        %v4670 = vld [vmem:[%s4667 + $0x10] sm:$0xff]
        %v4671 = vld [vmem:[%s4667 + $0x18] sm:$0xff]
        %s4672 = scalar_lea.vmem [#allocation16], 1
        %v4673 = vld [vmem:[%s4672] sm:$0x1]
        %v4674 = vmul.f32 %v4581, 0.35355338
        %v4676 = vsel %vm1030, %v4674, 0
        %v4679 = vsel %vm1030, %v4664, 0
        %4681 = vmatprep.subr.mxu0 0.0
        %4682 = vmatpush1.xpose.msra.mxu0 %v4679
        %4683 = vmatprep.subr.mxu0 0.0
        %4684 = vmatpush1.xpose.msra.mxu0 0.0
        %4685 = vmatprep.subr.mxu0 0.0
        %4686 = vmatpush1.xpose.msra.mxu0 0.0
        %4687 = vmatprep.subr.mxu0 0.0
        %4688 = vmatpush1.xpose.msra.mxu0 0.0
        %4689 = vmatprep.subr.mxu0 0.0
        %4690 = vmatpush1.xpose.msra.mxu0 0.0
        %4691 = vmatprep.subr.mxu0 0.0
        %4692 = vmatpush1.xpose.msra.mxu0 0.0
        %4693 = vmatprep.subr.mxu0 0.0
        %4694 = vmatpush1.xpose.msra.mxu0 0.0
        %4695 = vmatprep.subr.mxu0 0.0
        %4696 = vmatpush1.xpose.msra.mxu0 0.0
        %4697 = vmatprep.subr.mxu0 0.0
        %4698 = vmatpush1.xpose.msra.mxu0 0.0
        %4699 = vmatprep.subr.mxu0 0.0
        %4700 = vmatpush1.xpose.msra.mxu0 0.0
        %4701 = vmatprep.subr.mxu0 0.0
        %4702 = vmatpush1.xpose.msra.mxu0 0.0
        %4703 = vmatprep.subr.mxu0 0.0
        %4704 = vmatpush1.xpose.msra.mxu0 0.0
        %4705 = vmatprep.subr.mxu0 0.0
        %4706 = vmatpush1.xpose.msra.mxu0 0.0
        %4707 = vmatprep.subr.mxu0 0.0
        %4708 = vmatpush1.xpose.msra.mxu0 0.0
        %4709 = vmatprep.subr.mxu0 0.0
        %4710 = vmatpush1.xpose.msra.mxu0 0.0
        %4711 = vmatprep.subr.mxu0 0.0
        %4712 = vmatpush1.xpose.msra.mxu0 0.0
        %4713 = vmatprep.subr.mxu0 0.0
        %4714 = vmatpush1.xpose.msra.mxu0 0.0
        %4715 = vmatprep.subr.mxu0 0.0
        %4716 = vmatpush1.xpose.msra.mxu0 0.0
        %4717 = vmatprep.subr.mxu0 0.0
        %4718 = vmatpush1.xpose.msra.mxu0 0.0
        %4719 = vmatprep.subr.mxu0 0.0
        %4720 = vmatpush1.xpose.msra.mxu0 0.0
        %4721 = vmatprep.subr.mxu0 0.0
        %4722 = vmatpush1.xpose.msra.mxu0 0.0
        %4723 = vmatprep.subr.mxu0 0.0
        %4724 = vmatpush1.xpose.msra.mxu0 0.0
        %4725 = vmatprep.subr.mxu0 0.0
        %4726 = vmatpush1.xpose.msra.mxu0 0.0
        %4727 = vmatprep.subr.mxu0 0.0
        %4728 = vmatpush1.xpose.msra.mxu0 0.0
        %4729 = vmatprep.subr.mxu0 0.0
        %4730 = vmatpush1.xpose.msra.mxu0 0.0
        %4731 = vmatprep.subr.mxu0 0.0
        %4732 = vmatpush1.xpose.msra.mxu0 0.0
        %4733 = vmatprep.subr.mxu0 0.0
        %4734 = vmatpush1.xpose.msra.mxu0 0.0
        %4735 = vmatprep.subr.mxu0 0.0
        %4736 = vmatpush1.xpose.msra.mxu0 0.0
        %4737 = vmatprep.subr.mxu0 0.0
        %4738 = vmatpush1.xpose.msra.mxu0 0.0
        %4739 = vmatprep.subr.mxu0 0.0
        %4740 = vmatpush1.xpose.msra.mxu0 0.0
        %4741 = vmatprep.subr.mxu0 0.0
        %4742 = vmatpush1.xpose.msra.mxu0 0.0
        %4743 = vmatprep.subr.mxu0 0.0
        %4744 = vmatpush1.xpose.msra.mxu0 0.0
        %4745 = vmatprep.mubr.f32.mxu0 0.0
        %4746 = vmatmul.mubr.f32.gmra.mrb[0].mxu0 %v4676
        %v4747 = vpop.f32.mrb[0].mxu0
        %v4748 = vadd.f32 0.0, %v4747
        %v4749 = vpop.f32.mrb[0].mxu0
        %4750 = vdwg.mxu0
        %v4751 = vsel %vm2279, -1e+09, %v4748
        %v4752 = vsel %vm1030, %v4751, -inf
        %4753 = vmax.xlane.f32.xlu0 %v4752
        %v4754 = vpop.xlane.xlu0 %4753
        %v4755 = vsub.f32 %v4751, %v4754
        %v4756 = vmul.f32 %v4755, 1.442695
        %v4757 = vpow.pop %v4756
        %v4758 = vsel %vm1030, %v4757, 0.0
        %4759 = vadd.xlane.f32.xlu0 %v4758
        %v4760 = vpop.xlane.xlu0 %4759
        %v4761 = vrcp.pop %v4760
        %v4762 = vmul.f32 %v4757, %v4761
        %4763 = vrot.lane.b32.xlu0 %v4664, 96
        %v4764 = vpop.permute.xlu0 %4763
        %v4767 = vsel %vm1030, %v4762, 0
        %4769 = vmatprep.subr.mxu0 0.0
        %4770 = vmatpush1.msra.mxu0 %v4764
        %4771 = vmatprep.subr.mxu0 0.0
        %4772 = vmatpush1.msra.mxu0 0.0
        %4773 = vmatprep.subr.mxu0 0.0
        %4774 = vmatpush1.msra.mxu0 0.0
        %4775 = vmatprep.subr.mxu0 0.0
        %4776 = vmatpush1.msra.mxu0 0.0
        %4777 = vmatprep.subr.mxu0 0.0
        %4778 = vmatpush1.msra.mxu0 0.0
        %4779 = vmatprep.subr.mxu0 0.0
        %4780 = vmatpush1.msra.mxu0 0.0
        %4781 = vmatprep.subr.mxu0 0.0
        %4782 = vmatpush1.msra.mxu0 0.0
        %4783 = vmatprep.subr.mxu0 0.0
        %4784 = vmatpush1.msra.mxu0 0.0
        %4785 = vmatprep.subr.mxu0 0.0
        %4786 = vmatpush1.msra.mxu0 0.0
        %4787 = vmatprep.subr.mxu0 0.0
        %4788 = vmatpush1.msra.mxu0 0.0
        %4789 = vmatprep.subr.mxu0 0.0
        %4790 = vmatpush1.msra.mxu0 0.0
        %4791 = vmatprep.subr.mxu0 0.0
        %4792 = vmatpush1.msra.mxu0 0.0
        %4793 = vmatprep.subr.mxu0 0.0
        %4794 = vmatpush1.msra.mxu0 0.0
        %4795 = vmatprep.subr.mxu0 0.0
        %4796 = vmatpush1.msra.mxu0 0.0
        %4797 = vmatprep.subr.mxu0 0.0
        %4798 = vmatpush1.msra.mxu0 0.0
        %4799 = vmatprep.subr.mxu0 0.0
        %4800 = vmatpush1.msra.mxu0 0.0
        %4801 = vmatprep.subr.mxu0 0.0
        %4802 = vmatpush1.msra.mxu0 0.0
        %4803 = vmatprep.subr.mxu0 0.0
        %4804 = vmatpush1.msra.mxu0 0.0
        %4805 = vmatprep.subr.mxu0 0.0
        %4806 = vmatpush1.msra.mxu0 0.0
        %4807 = vmatprep.subr.mxu0 0.0
        %4808 = vmatpush1.msra.mxu0 0.0
        %4809 = vmatprep.subr.mxu0 0.0
        %4810 = vmatpush1.msra.mxu0 0.0
        %4811 = vmatprep.subr.mxu0 0.0
        %4812 = vmatpush1.msra.mxu0 0.0
        %4813 = vmatprep.subr.mxu0 0.0
        %4814 = vmatpush1.msra.mxu0 0.0
        %4815 = vmatprep.subr.mxu0 0.0
        %4816 = vmatpush1.msra.mxu0 0.0
        %4817 = vmatprep.subr.mxu0 0.0
        %4818 = vmatpush1.msra.mxu0 0.0
        %4819 = vmatprep.subr.mxu0 0.0
        %4820 = vmatpush1.msra.mxu0 0.0
        %4821 = vmatprep.subr.mxu0 0.0
        %4822 = vmatpush1.msra.mxu0 0.0
        %4823 = vmatprep.subr.mxu0 0.0
        %4824 = vmatpush1.msra.mxu0 0.0
        %4825 = vmatprep.subr.mxu0 0.0
        %4826 = vmatpush1.msra.mxu0 0.0
        %4827 = vmatprep.subr.mxu0 0.0
        %4828 = vmatpush1.msra.mxu0 0.0
        %4829 = vmatprep.subr.mxu0 0.0
        %4830 = vmatpush1.msra.mxu0 0.0
        %4831 = vmatprep.subr.mxu0 0.0
        %4832 = vmatpush1.msra.mxu0 0.0
        %4833 = vmatprep.mubr.f32.mxu0 0.0
        %4834 = vmatmul.mubr.f32.gmra.mrb[0].mxu0 %v4767
        %v4835 = vpop.f32.mrb[0].mxu0
        %v4836 = vadd.f32 0.0, %v4835
        %v4837 = vpop.f32.mrb[0].mxu0
        %4838 = vdwg.mxu0
        %4839 = vrot.lane.b32.xlu0 %v4674, 120
        %v4840 = vpop.permute.xlu0 %4839
        %4841 = vrot.lane.b32.xlu0 %v4664, 120
        %v4842 = vpop.permute.xlu0 %4841
        %v4843 = vsel %vm1030, %v4840, 0
        %v4845 = vsel %vm1030, %v4842, 0
        %4847 = vmatprep.subr.mxu0 0.0
        %4848 = vmatpush1.xpose.msra.mxu0 %v4845
        %4849 = vmatprep.subr.mxu0 0.0
        %4850 = vmatpush1.xpose.msra.mxu0 0.0
        %4851 = vmatprep.subr.mxu0 0.0
        %4852 = vmatpush1.xpose.msra.mxu0 0.0
        %4853 = vmatprep.subr.mxu0 0.0
        %4854 = vmatpush1.xpose.msra.mxu0 0.0
        %4855 = vmatprep.subr.mxu0 0.0
        %4856 = vmatpush1.xpose.msra.mxu0 0.0
        %4857 = vmatprep.subr.mxu0 0.0
        %4858 = vmatpush1.xpose.msra.mxu0 0.0
        %4859 = vmatprep.subr.mxu0 0.0
        %4860 = vmatpush1.xpose.msra.mxu0 0.0
        %4861 = vmatprep.subr.mxu0 0.0
        %4862 = vmatpush1.xpose.msra.mxu0 0.0
        %4863 = vmatprep.subr.mxu0 0.0
        %4864 = vmatpush1.xpose.msra.mxu0 0.0
        %4865 = vmatprep.subr.mxu0 0.0
        %4866 = vmatpush1.xpose.msra.mxu0 0.0
        %4867 = vmatprep.subr.mxu0 0.0
        %4868 = vmatpush1.xpose.msra.mxu0 0.0
        %4869 = vmatprep.subr.mxu0 0.0
        %4870 = vmatpush1.xpose.msra.mxu0 0.0
        %4871 = vmatprep.subr.mxu0 0.0
        %4872 = vmatpush1.xpose.msra.mxu0 0.0
        %4873 = vmatprep.subr.mxu0 0.0
        %4874 = vmatpush1.xpose.msra.mxu0 0.0
        %4875 = vmatprep.subr.mxu0 0.0
        %4876 = vmatpush1.xpose.msra.mxu0 0.0
        %4877 = vmatprep.subr.mxu0 0.0
        %4878 = vmatpush1.xpose.msra.mxu0 0.0
        %4879 = vmatprep.subr.mxu0 0.0
        %4880 = vmatpush1.xpose.msra.mxu0 0.0
        %4881 = vmatprep.subr.mxu0 0.0
        %4882 = vmatpush1.xpose.msra.mxu0 0.0
        %4883 = vmatprep.subr.mxu0 0.0
        %4884 = vmatpush1.xpose.msra.mxu0 0.0
        %4885 = vmatprep.subr.mxu0 0.0
        %4886 = vmatpush1.xpose.msra.mxu0 0.0
        %4887 = vmatprep.subr.mxu0 0.0
        %4888 = vmatpush1.xpose.msra.mxu0 0.0
        %4889 = vmatprep.subr.mxu0 0.0
        %4890 = vmatpush1.xpose.msra.mxu0 0.0
        %4891 = vmatprep.subr.mxu0 0.0
        %4892 = vmatpush1.xpose.msra.mxu0 0.0
        %4893 = vmatprep.subr.mxu0 0.0
        %4894 = vmatpush1.xpose.msra.mxu0 0.0
        %4895 = vmatprep.subr.mxu0 0.0
        %4896 = vmatpush1.xpose.msra.mxu0 0.0
        %4897 = vmatprep.subr.mxu0 0.0
        %4898 = vmatpush1.xpose.msra.mxu0 0.0
        %4899 = vmatprep.subr.mxu0 0.0
        %4900 = vmatpush1.xpose.msra.mxu0 0.0
        %4901 = vmatprep.subr.mxu0 0.0
        %4902 = vmatpush1.xpose.msra.mxu0 0.0
        %4903 = vmatprep.subr.mxu0 0.0
        %4904 = vmatpush1.xpose.msra.mxu0 0.0
        %4905 = vmatprep.subr.mxu0 0.0
        %4906 = vmatpush1.xpose.msra.mxu0 0.0
        %4907 = vmatprep.subr.mxu0 0.0
        %4908 = vmatpush1.xpose.msra.mxu0 0.0
        %4909 = vmatprep.subr.mxu0 0.0
        %4910 = vmatpush1.xpose.msra.mxu0 0.0
        %4911 = vmatprep.mubr.f32.mxu0 0.0
        %4912 = vmatmul.mubr.f32.gmra.mrb[0].mxu0 %v4843
        %v4913 = vpop.f32.mrb[0].mxu0
        %v4914 = vadd.f32 0.0, %v4913
        %v4915 = vpop.f32.mrb[0].mxu0
        %4916 = vdwg.mxu0
        %v4917 = vsel %vm2279, -1e+09, %v4914
        %v4918 = vsel %vm1030, %v4917, -inf
        %4919 = vmax.xlane.f32.xlu0 %v4918
        %v4920 = vpop.xlane.xlu0 %4919
        %v4921 = vsub.f32 %v4917, %v4920
        %v4922 = vmul.f32 %v4921, 1.442695
        %v4923 = vpow.pop %v4922
        %v4924 = vsel %vm1030, %v4923, 0.0
        %4925 = vadd.xlane.f32.xlu0 %v4924
        %v4926 = vpop.xlane.xlu0 %4925
        %v4927 = vrcp.pop %v4926
        %v4928 = vmul.f32 %v4923, %v4927
        %4929 = vrot.lane.b32.xlu0 %v4664, 88
        %v4930 = vpop.permute.xlu0 %4929
        %v4933 = vsel %vm1030, %v4928, 0
        %4935 = vmatprep.subr.mxu0 0.0
        %4936 = vmatpush1.msra.mxu0 %v4930
        %4937 = vmatprep.subr.mxu0 0.0
        %4938 = vmatpush1.msra.mxu0 0.0
        %4939 = vmatprep.subr.mxu0 0.0
        %4940 = vmatpush1.msra.mxu0 0.0
        %4941 = vmatprep.subr.mxu0 0.0
        %4942 = vmatpush1.msra.mxu0 0.0
        %4943 = vmatprep.subr.mxu0 0.0
        %4944 = vmatpush1.msra.mxu0 0.0
        %4945 = vmatprep.subr.mxu0 0.0
        %4946 = vmatpush1.msra.mxu0 0.0
        %4947 = vmatprep.subr.mxu0 0.0
        %4948 = vmatpush1.msra.mxu0 0.0
        %4949 = vmatprep.subr.mxu0 0.0
        %4950 = vmatpush1.msra.mxu0 0.0
        %4951 = vmatprep.subr.mxu0 0.0
        %4952 = vmatpush1.msra.mxu0 0.0
        %4953 = vmatprep.subr.mxu0 0.0
        %4954 = vmatpush1.msra.mxu0 0.0
        %4955 = vmatprep.subr.mxu0 0.0
        %4956 = vmatpush1.msra.mxu0 0.0
        %4957 = vmatprep.subr.mxu0 0.0
        %4958 = vmatpush1.msra.mxu0 0.0
        %4959 = vmatprep.subr.mxu0 0.0
        %4960 = vmatpush1.msra.mxu0 0.0
        %4961 = vmatprep.subr.mxu0 0.0
        %4962 = vmatpush1.msra.mxu0 0.0
        %4963 = vmatprep.subr.mxu0 0.0
        %4964 = vmatpush1.msra.mxu0 0.0
        %4965 = vmatprep.subr.mxu0 0.0
        %4966 = vmatpush1.msra.mxu0 0.0
        %4967 = vmatprep.subr.mxu0 0.0
        %4968 = vmatpush1.msra.mxu0 0.0
        %4969 = vmatprep.subr.mxu0 0.0
        %4970 = vmatpush1.msra.mxu0 0.0
        %4971 = vmatprep.subr.mxu0 0.0
        %4972 = vmatpush1.msra.mxu0 0.0
        %4973 = vmatprep.subr.mxu0 0.0
        %4974 = vmatpush1.msra.mxu0 0.0
        %4975 = vmatprep.subr.mxu0 0.0
        %4976 = vmatpush1.msra.mxu0 0.0
        %4977 = vmatprep.subr.mxu0 0.0
        %4978 = vmatpush1.msra.mxu0 0.0
        %4979 = vmatprep.subr.mxu0 0.0
        %4980 = vmatpush1.msra.mxu0 0.0
        %4981 = vmatprep.subr.mxu0 0.0
        %4982 = vmatpush1.msra.mxu0 0.0
        %4983 = vmatprep.subr.mxu0 0.0
        %4984 = vmatpush1.msra.mxu0 0.0
        %4985 = vmatprep.subr.mxu0 0.0
        %4986 = vmatpush1.msra.mxu0 0.0
        %4987 = vmatprep.subr.mxu0 0.0
        %4988 = vmatpush1.msra.mxu0 0.0
        %4989 = vmatprep.subr.mxu0 0.0
        %4990 = vmatpush1.msra.mxu0 0.0
        %4991 = vmatprep.subr.mxu0 0.0
        %4992 = vmatpush1.msra.mxu0 0.0
        %4993 = vmatprep.subr.mxu0 0.0
        %4994 = vmatpush1.msra.mxu0 0.0
        %4995 = vmatprep.subr.mxu0 0.0
        %4996 = vmatpush1.msra.mxu0 0.0
        %4997 = vmatprep.subr.mxu0 0.0
        %4998 = vmatpush1.msra.mxu0 0.0
        %4999 = vmatprep.mubr.f32.mxu0 0.0
        %5000 = vmatmul.mubr.f32.gmra.mrb[0].mxu0 %v4933
        %v5001 = vpop.f32.mrb[0].mxu0
        %v5002 = vadd.f32 0.0, %v5001
        %v5003 = vpop.f32.mrb[0].mxu0
        %5004 = vdwg.mxu0
        %v5006 = vsel %vm1030, %v5002, 0
        %5008 = vmatprep.subr.mxu0 0.0
        %5009 = vmatpush1.msra.mxu0 %v4669
        %5010 = vmatprep.subr.mxu0 0.0
        %5011 = vmatpush1.msra.mxu0 0.0
        %5012 = vmatprep.subr.mxu0 0.0
        %5013 = vmatpush1.msra.mxu0 0.0
        %5014 = vmatprep.subr.mxu0 0.0
        %5015 = vmatpush1.msra.mxu0 0.0
        %5016 = vmatprep.subr.mxu0 0.0
        %5017 = vmatpush1.msra.mxu0 0.0
        %5018 = vmatprep.subr.mxu0 0.0
        %5019 = vmatpush1.msra.mxu0 0.0
        %5020 = vmatprep.subr.mxu0 0.0
        %5021 = vmatpush1.msra.mxu0 0.0
        %5022 = vmatprep.subr.mxu0 0.0
        %5023 = vmatpush1.msra.mxu0 0.0
        %5024 = vmatprep.subr.mxu0 0.0
        %5025 = vmatpush1.msra.mxu0 0.0
        %5026 = vmatprep.subr.mxu0 0.0
        %5027 = vmatpush1.msra.mxu0 0.0
        %5028 = vmatprep.subr.mxu0 0.0
        %5029 = vmatpush1.msra.mxu0 0.0
        %5030 = vmatprep.subr.mxu0 0.0
        %5031 = vmatpush1.msra.mxu0 0.0
        %5032 = vmatprep.subr.mxu0 0.0
        %5033 = vmatpush1.msra.mxu0 0.0
        %5034 = vmatprep.subr.mxu0 0.0
        %5035 = vmatpush1.msra.mxu0 0.0
        %5036 = vmatprep.subr.mxu0 0.0
        %5037 = vmatpush1.msra.mxu0 0.0
        %5038 = vmatprep.subr.mxu0 0.0
        %5039 = vmatpush1.msra.mxu0 0.0
        %5040 = vmatprep.subr.mxu0 0.0
        %5041 = vmatpush1.msra.mxu0 0.0
        %5042 = vmatprep.subr.mxu0 0.0
        %5043 = vmatpush1.msra.mxu0 0.0
        %5044 = vmatprep.subr.mxu0 0.0
        %5045 = vmatpush1.msra.mxu0 0.0
        %5046 = vmatprep.subr.mxu0 0.0
        %5047 = vmatpush1.msra.mxu0 0.0
        %5048 = vmatprep.subr.mxu0 0.0
        %5049 = vmatpush1.msra.mxu0 0.0
        %5050 = vmatprep.subr.mxu0 0.0
        %5051 = vmatpush1.msra.mxu0 0.0
        %5052 = vmatprep.subr.mxu0 0.0
        %5053 = vmatpush1.msra.mxu0 0.0
        %5054 = vmatprep.subr.mxu0 0.0
        %5055 = vmatpush1.msra.mxu0 0.0
        %5056 = vmatprep.subr.mxu0 0.0
        %5057 = vmatpush1.msra.mxu0 0.0
        %5058 = vmatprep.subr.mxu0 0.0
        %5059 = vmatpush1.msra.mxu0 0.0
        %5060 = vmatprep.subr.mxu0 0.0
        %5061 = vmatpush1.msra.mxu0 0.0
        %5062 = vmatprep.subr.mxu0 0.0
        %5063 = vmatpush1.msra.mxu0 0.0
        %5064 = vmatprep.subr.mxu0 0.0
        %5065 = vmatpush1.msra.mxu0 0.0
        %5066 = vmatprep.subr.mxu0 0.0
        %5067 = vmatpush1.msra.mxu0 0.0
        %5068 = vmatprep.subr.mxu0 0.0
        %5069 = vmatpush1.msra.mxu0 0.0
        %5070 = vmatprep.subr.mxu0 0.0
        %5071 = vmatpush1.msra.mxu0 0.0
        %5072 = vmatprep.mubr.f32.mxu0 0.0
        %5073 = vmatmul.mubr.f32.gmra.mrb[0].mxu0 %v5006
        %v5074 = vpop.f32.mrb[0].mxu0
        %v5075 = vadd.f32 0.0, %v5074
        %v5076 = vpop.f32.mrb[0].mxu0
        %5077 = vdwg.mxu0
        %v5079 = vsel %vm1030, %v4836, 0
        %5081 = vmatprep.subr.mxu0 0.0
        %5082 = vmatpush1.msra.mxu0 %v4668
        %5083 = vmatprep.subr.mxu0 0.0
        %5084 = vmatpush1.msra.mxu0 0.0
        %5085 = vmatprep.subr.mxu0 0.0
        %5086 = vmatpush1.msra.mxu0 0.0
        %5087 = vmatprep.subr.mxu0 0.0
        %5088 = vmatpush1.msra.mxu0 0.0
        %5089 = vmatprep.subr.mxu0 0.0
        %5090 = vmatpush1.msra.mxu0 0.0
        %5091 = vmatprep.subr.mxu0 0.0
        %5092 = vmatpush1.msra.mxu0 0.0
        %5093 = vmatprep.subr.mxu0 0.0
        %5094 = vmatpush1.msra.mxu0 0.0
        %5095 = vmatprep.subr.mxu0 0.0
        %5096 = vmatpush1.msra.mxu0 0.0
        %5097 = vmatprep.subr.mxu0 0.0
        %5098 = vmatpush1.msra.mxu0 0.0
        %5099 = vmatprep.subr.mxu0 0.0
        %5100 = vmatpush1.msra.mxu0 0.0
        %5101 = vmatprep.subr.mxu0 0.0
        %5102 = vmatpush1.msra.mxu0 0.0
        %5103 = vmatprep.subr.mxu0 0.0
        %5104 = vmatpush1.msra.mxu0 0.0
        %5105 = vmatprep.subr.mxu0 0.0
        %5106 = vmatpush1.msra.mxu0 0.0
        %5107 = vmatprep.subr.mxu0 0.0
        %5108 = vmatpush1.msra.mxu0 0.0
        %5109 = vmatprep.subr.mxu0 0.0
        %5110 = vmatpush1.msra.mxu0 0.0
        %5111 = vmatprep.subr.mxu0 0.0
        %5112 = vmatpush1.msra.mxu0 0.0
        %5113 = vmatprep.subr.mxu0 0.0
        %5114 = vmatpush1.msra.mxu0 0.0
        %5115 = vmatprep.subr.mxu0 0.0
        %5116 = vmatpush1.msra.mxu0 0.0
        %5117 = vmatprep.subr.mxu0 0.0
        %5118 = vmatpush1.msra.mxu0 0.0
        %5119 = vmatprep.subr.mxu0 0.0
        %5120 = vmatpush1.msra.mxu0 0.0
        %5121 = vmatprep.subr.mxu0 0.0
        %5122 = vmatpush1.msra.mxu0 0.0
        %5123 = vmatprep.subr.mxu0 0.0
        %5124 = vmatpush1.msra.mxu0 0.0
        %5125 = vmatprep.subr.mxu0 0.0
        %5126 = vmatpush1.msra.mxu0 0.0
        %5127 = vmatprep.subr.mxu0 0.0
        %5128 = vmatpush1.msra.mxu0 0.0
        %5129 = vmatprep.subr.mxu0 0.0
        %5130 = vmatpush1.msra.mxu0 0.0
        %5131 = vmatprep.subr.mxu0 0.0
        %5132 = vmatpush1.msra.mxu0 0.0
        %5133 = vmatprep.subr.mxu0 0.0
        %5134 = vmatpush1.msra.mxu0 0.0
        %5135 = vmatprep.subr.mxu0 0.0
        %5136 = vmatpush1.msra.mxu0 0.0
        %5137 = vmatprep.subr.mxu0 0.0
        %5138 = vmatpush1.msra.mxu0 0.0
        %5139 = vmatprep.subr.mxu0 0.0
        %5140 = vmatpush1.msra.mxu0 0.0
        %5141 = vmatprep.subr.mxu0 0.0
        %5142 = vmatpush1.msra.mxu0 0.0
        %5143 = vmatprep.subr.mxu0 0.0
        %5144 = vmatpush1.msra.mxu0 0.0
        %5145 = vmatprep.mubr.f32.mxu0 0.0
        %5146 = vmatmul.mubr.f32.gmra.mrb[0].mxu0 %v5079
        %v5147 = vpop.f32.mrb[0].mxu0
        %v5148 = vadd.f32 %v5075, %v5147
        %v5149 = vpop.f32.mrb[0].mxu0
        %5150 = vdwg.mxu0
        %5151 = vrot.lane.b32.xlu0 %v4674, 112
        %v5152 = vpop.permute.xlu0 %5151
        %5153 = vrot.lane.b32.xlu0 %v4664, 112
        %v5154 = vpop.permute.xlu0 %5153
        %v5155 = vsel %vm1030, %v5152, 0
        %v5157 = vsel %vm1030, %v5154, 0
        %5159 = vmatprep.subr.mxu0 0.0
        %5160 = vmatpush1.xpose.msra.mxu0 %v5157
        %5161 = vmatprep.subr.mxu0 0.0
        %5162 = vmatpush1.xpose.msra.mxu0 0.0
        %5163 = vmatprep.subr.mxu0 0.0
        %5164 = vmatpush1.xpose.msra.mxu0 0.0
        %5165 = vmatprep.subr.mxu0 0.0
        %5166 = vmatpush1.xpose.msra.mxu0 0.0
        %5167 = vmatprep.subr.mxu0 0.0
        %5168 = vmatpush1.xpose.msra.mxu0 0.0
        %5169 = vmatprep.subr.mxu0 0.0
        %5170 = vmatpush1.xpose.msra.mxu0 0.0
        %5171 = vmatprep.subr.mxu0 0.0
        %5172 = vmatpush1.xpose.msra.mxu0 0.0
        %5173 = vmatprep.subr.mxu0 0.0
        %5174 = vmatpush1.xpose.msra.mxu0 0.0
        %5175 = vmatprep.subr.mxu0 0.0
        %5176 = vmatpush1.xpose.msra.mxu0 0.0
        %5177 = vmatprep.subr.mxu0 0.0
        %5178 = vmatpush1.xpose.msra.mxu0 0.0
        %5179 = vmatprep.subr.mxu0 0.0
        %5180 = vmatpush1.xpose.msra.mxu0 0.0
        %5181 = vmatprep.subr.mxu0 0.0
        %5182 = vmatpush1.xpose.msra.mxu0 0.0
        %5183 = vmatprep.subr.mxu0 0.0
        %5184 = vmatpush1.xpose.msra.mxu0 0.0
        %5185 = vmatprep.subr.mxu0 0.0
        %5186 = vmatpush1.xpose.msra.mxu0 0.0
        %5187 = vmatprep.subr.mxu0 0.0
        %5188 = vmatpush1.xpose.msra.mxu0 0.0
        %5189 = vmatprep.subr.mxu0 0.0
        %5190 = vmatpush1.xpose.msra.mxu0 0.0
        %5191 = vmatprep.subr.mxu0 0.0
        %5192 = vmatpush1.xpose.msra.mxu0 0.0
        %5193 = vmatprep.subr.mxu0 0.0
        %5194 = vmatpush1.xpose.msra.mxu0 0.0
        %5195 = vmatprep.subr.mxu0 0.0
        %5196 = vmatpush1.xpose.msra.mxu0 0.0
        %5197 = vmatprep.subr.mxu0 0.0
        %5198 = vmatpush1.xpose.msra.mxu0 0.0
        %5199 = vmatprep.subr.mxu0 0.0
        %5200 = vmatpush1.xpose.msra.mxu0 0.0
        %5201 = vmatprep.subr.mxu0 0.0
        %5202 = vmatpush1.xpose.msra.mxu0 0.0
        %5203 = vmatprep.subr.mxu0 0.0
        %5204 = vmatpush1.xpose.msra.mxu0 0.0
        %5205 = vmatprep.subr.mxu0 0.0
        %5206 = vmatpush1.xpose.msra.mxu0 0.0
        %5207 = vmatprep.subr.mxu0 0.0
        %5208 = vmatpush1.xpose.msra.mxu0 0.0
        %5209 = vmatprep.subr.mxu0 0.0
        %5210 = vmatpush1.xpose.msra.mxu0 0.0
        %5211 = vmatprep.subr.mxu0 0.0
        %5212 = vmatpush1.xpose.msra.mxu0 0.0
        %5213 = vmatprep.subr.mxu0 0.0
        %5214 = vmatpush1.xpose.msra.mxu0 0.0
        %5215 = vmatprep.subr.mxu0 0.0
        %5216 = vmatpush1.xpose.msra.mxu0 0.0
        %5217 = vmatprep.subr.mxu0 0.0
        %5218 = vmatpush1.xpose.msra.mxu0 0.0
        %5219 = vmatprep.subr.mxu0 0.0
        %5220 = vmatpush1.xpose.msra.mxu0 0.0
        %5221 = vmatprep.subr.mxu0 0.0
        %5222 = vmatpush1.xpose.msra.mxu0 0.0
        %5223 = vmatprep.mubr.f32.mxu0 0.0
        %5224 = vmatmul.mubr.f32.gmra.mrb[0].mxu0 %v5155
        %v5225 = vpop.f32.mrb[0].mxu0
        %v5226 = vadd.f32 0.0, %v5225
        %v5227 = vpop.f32.mrb[0].mxu0
        %5228 = vdwg.mxu0
        %v5229 = vsel %vm2279, -1e+09, %v5226
        %v5230 = vsel %vm1030, %v5229, -inf
        %5231 = vmax.xlane.f32.xlu0 %v5230
        %v5232 = vpop.xlane.xlu0 %5231
        %v5233 = vsub.f32 %v5229, %v5232
        %v5234 = vmul.f32 %v5233, 1.442695
        %v5235 = vpow.pop %v5234
        %v5236 = vsel %vm1030, %v5235, 0.0
        %5237 = vadd.xlane.f32.xlu0 %v5236
        %v5238 = vpop.xlane.xlu0 %5237
        %v5239 = vrcp.pop %v5238
        %v5240 = vmul.f32 %v5235, %v5239
        %5241 = vrot.lane.b32.xlu0 %v4664, 80
        %v5242 = vpop.permute.xlu0 %5241
        %v5245 = vsel %vm1030, %v5240, 0
        %5247 = vmatprep.subr.mxu0 0.0
        %5248 = vmatpush1.msra.mxu0 %v5242
        %5249 = vmatprep.subr.mxu0 0.0
        %5250 = vmatpush1.msra.mxu0 0.0
        %5251 = vmatprep.subr.mxu0 0.0
        %5252 = vmatpush1.msra.mxu0 0.0
        %5253 = vmatprep.subr.mxu0 0.0
        %5254 = vmatpush1.msra.mxu0 0.0
        %5255 = vmatprep.subr.mxu0 0.0
        %5256 = vmatpush1.msra.mxu0 0.0
        %5257 = vmatprep.subr.mxu0 0.0
        %5258 = vmatpush1.msra.mxu0 0.0
        %5259 = vmatprep.subr.mxu0 0.0
        %5260 = vmatpush1.msra.mxu0 0.0
        %5261 = vmatprep.subr.mxu0 0.0
        %5262 = vmatpush1.msra.mxu0 0.0
        %5263 = vmatprep.subr.mxu0 0.0
        %5264 = vmatpush1.msra.mxu0 0.0
        %5265 = vmatprep.subr.mxu0 0.0
        %5266 = vmatpush1.msra.mxu0 0.0
        %5267 = vmatprep.subr.mxu0 0.0
        %5268 = vmatpush1.msra.mxu0 0.0
        %5269 = vmatprep.subr.mxu0 0.0
        %5270 = vmatpush1.msra.mxu0 0.0
        %5271 = vmatprep.subr.mxu0 0.0
        %5272 = vmatpush1.msra.mxu0 0.0
        %5273 = vmatprep.subr.mxu0 0.0
        %5274 = vmatpush1.msra.mxu0 0.0
        %5275 = vmatprep.subr.mxu0 0.0
        %5276 = vmatpush1.msra.mxu0 0.0
        %5277 = vmatprep.subr.mxu0 0.0
        %5278 = vmatpush1.msra.mxu0 0.0
        %5279 = vmatprep.subr.mxu0 0.0
        %5280 = vmatpush1.msra.mxu0 0.0
        %5281 = vmatprep.subr.mxu0 0.0
        %5282 = vmatpush1.msra.mxu0 0.0
        %5283 = vmatprep.subr.mxu0 0.0
        %5284 = vmatpush1.msra.mxu0 0.0
        %5285 = vmatprep.subr.mxu0 0.0
        %5286 = vmatpush1.msra.mxu0 0.0
        %5287 = vmatprep.subr.mxu0 0.0
        %5288 = vmatpush1.msra.mxu0 0.0
        %5289 = vmatprep.subr.mxu0 0.0
        %5290 = vmatpush1.msra.mxu0 0.0
        %5291 = vmatprep.subr.mxu0 0.0
        %5292 = vmatpush1.msra.mxu0 0.0
        %5293 = vmatprep.subr.mxu0 0.0
        %5294 = vmatpush1.msra.mxu0 0.0
        %5295 = vmatprep.subr.mxu0 0.0
        %5296 = vmatpush1.msra.mxu0 0.0
        %5297 = vmatprep.subr.mxu0 0.0
        %5298 = vmatpush1.msra.mxu0 0.0
        %5299 = vmatprep.subr.mxu0 0.0
        %5300 = vmatpush1.msra.mxu0 0.0
        %5301 = vmatprep.subr.mxu0 0.0
        %5302 = vmatpush1.msra.mxu0 0.0
        %5303 = vmatprep.subr.mxu0 0.0
        %5304 = vmatpush1.msra.mxu0 0.0
        %5305 = vmatprep.subr.mxu0 0.0
        %5306 = vmatpush1.msra.mxu0 0.0
        %5307 = vmatprep.subr.mxu0 0.0
        %5308 = vmatpush1.msra.mxu0 0.0
        %5309 = vmatprep.subr.mxu0 0.0
        %5310 = vmatpush1.msra.mxu0 0.0
        %5311 = vmatprep.mubr.f32.mxu0 0.0
        %5312 = vmatmul.mubr.f32.gmra.mrb[0].mxu0 %v5245
        %v5313 = vpop.f32.mrb[0].mxu0
        %v5314 = vadd.f32 0.0, %v5313
        %v5315 = vpop.f32.mrb[0].mxu0
        %5316 = vdwg.mxu0
        %v5318 = vsel %vm1030, %v5314, 0
        %5320 = vmatprep.subr.mxu0 0.0
        %5321 = vmatpush1.msra.mxu0 %v4670
        %5322 = vmatprep.subr.mxu0 0.0
        %5323 = vmatpush1.msra.mxu0 0.0
        %5324 = vmatprep.subr.mxu0 0.0
        %5325 = vmatpush1.msra.mxu0 0.0
        %5326 = vmatprep.subr.mxu0 0.0
        %5327 = vmatpush1.msra.mxu0 0.0
        %5328 = vmatprep.subr.mxu0 0.0
        %5329 = vmatpush1.msra.mxu0 0.0
        %5330 = vmatprep.subr.mxu0 0.0
        %5331 = vmatpush1.msra.mxu0 0.0
        %5332 = vmatprep.subr.mxu0 0.0
        %5333 = vmatpush1.msra.mxu0 0.0
        %5334 = vmatprep.subr.mxu0 0.0
        %5335 = vmatpush1.msra.mxu0 0.0
        %5336 = vmatprep.subr.mxu0 0.0
        %5337 = vmatpush1.msra.mxu0 0.0
        %5338 = vmatprep.subr.mxu0 0.0
        %5339 = vmatpush1.msra.mxu0 0.0
        %5340 = vmatprep.subr.mxu0 0.0
        %5341 = vmatpush1.msra.mxu0 0.0
        %5342 = vmatprep.subr.mxu0 0.0
        %5343 = vmatpush1.msra.mxu0 0.0
        %5344 = vmatprep.subr.mxu0 0.0
        %5345 = vmatpush1.msra.mxu0 0.0
        %5346 = vmatprep.subr.mxu0 0.0
        %5347 = vmatpush1.msra.mxu0 0.0
        %5348 = vmatprep.subr.mxu0 0.0
        %5349 = vmatpush1.msra.mxu0 0.0
        %5350 = vmatprep.subr.mxu0 0.0
        %5351 = vmatpush1.msra.mxu0 0.0
        %5352 = vmatprep.subr.mxu0 0.0
        %5353 = vmatpush1.msra.mxu0 0.0
        %5354 = vmatprep.subr.mxu0 0.0
        %5355 = vmatpush1.msra.mxu0 0.0
        %5356 = vmatprep.subr.mxu0 0.0
        %5357 = vmatpush1.msra.mxu0 0.0
        %5358 = vmatprep.subr.mxu0 0.0
        %5359 = vmatpush1.msra.mxu0 0.0
        %5360 = vmatprep.subr.mxu0 0.0
        %5361 = vmatpush1.msra.mxu0 0.0
        %5362 = vmatprep.subr.mxu0 0.0
        %5363 = vmatpush1.msra.mxu0 0.0
        %5364 = vmatprep.subr.mxu0 0.0
        %5365 = vmatpush1.msra.mxu0 0.0
        %5366 = vmatprep.subr.mxu0 0.0
        %5367 = vmatpush1.msra.mxu0 0.0
        %5368 = vmatprep.subr.mxu0 0.0
        %5369 = vmatpush1.msra.mxu0 0.0
        %5370 = vmatprep.subr.mxu0 0.0
        %5371 = vmatpush1.msra.mxu0 0.0
        %5372 = vmatprep.subr.mxu0 0.0
        %5373 = vmatpush1.msra.mxu0 0.0
        %5374 = vmatprep.subr.mxu0 0.0
        %5375 = vmatpush1.msra.mxu0 0.0
        %5376 = vmatprep.subr.mxu0 0.0
        %5377 = vmatpush1.msra.mxu0 0.0
        %5378 = vmatprep.subr.mxu0 0.0
        %5379 = vmatpush1.msra.mxu0 0.0
        %5380 = vmatprep.subr.mxu0 0.0
        %5381 = vmatpush1.msra.mxu0 0.0
        %5382 = vmatprep.subr.mxu0 0.0
        %5383 = vmatpush1.msra.mxu0 0.0
        %5384 = vmatprep.mubr.f32.mxu0 0.0
        %5385 = vmatmul.mubr.f32.gmra.mrb[0].mxu0 %v5318
        %v5386 = vpop.f32.mrb[0].mxu0
        %v5387 = vadd.f32 0.0, %v5386
        %v5388 = vpop.f32.mrb[0].mxu0
        %5389 = vdwg.mxu0
        %v5390 = vadd.f32 %v5148, %v5387
        %5391 = vrot.lane.b32.xlu0 %v4674, 104
        %v5392 = vpop.permute.xlu0 %5391
        %5393 = vrot.lane.b32.xlu0 %v4664, 104
        %v5394 = vpop.permute.xlu0 %5393
        %v5395 = vsel %vm1030, %v5392, 0
        %v5397 = vsel %vm1030, %v5394, 0
        %5399 = vmatprep.subr.mxu0 0.0
        %5400 = vmatpush1.xpose.msra.mxu0 %v5397
        %5401 = vmatprep.subr.mxu0 0.0
        %5402 = vmatpush1.xpose.msra.mxu0 0.0
        %5403 = vmatprep.subr.mxu0 0.0
        %5404 = vmatpush1.xpose.msra.mxu0 0.0
        %5405 = vmatprep.subr.mxu0 0.0
        %5406 = vmatpush1.xpose.msra.mxu0 0.0
        %5407 = vmatprep.subr.mxu0 0.0
        %5408 = vmatpush1.xpose.msra.mxu0 0.0
        %5409 = vmatprep.subr.mxu0 0.0
        %5410 = vmatpush1.xpose.msra.mxu0 0.0
        %5411 = vmatprep.subr.mxu0 0.0
        %5412 = vmatpush1.xpose.msra.mxu0 0.0
        %5413 = vmatprep.subr.mxu0 0.0
        %5414 = vmatpush1.xpose.msra.mxu0 0.0
        %5415 = vmatprep.subr.mxu0 0.0
        %5416 = vmatpush1.xpose.msra.mxu0 0.0
        %5417 = vmatprep.subr.mxu0 0.0
        %5418 = vmatpush1.xpose.msra.mxu0 0.0
        %5419 = vmatprep.subr.mxu0 0.0
        %5420 = vmatpush1.xpose.msra.mxu0 0.0
        %5421 = vmatprep.subr.mxu0 0.0
        %5422 = vmatpush1.xpose.msra.mxu0 0.0
        %5423 = vmatprep.subr.mxu0 0.0
        %5424 = vmatpush1.xpose.msra.mxu0 0.0
        %5425 = vmatprep.subr.mxu0 0.0
        %5426 = vmatpush1.xpose.msra.mxu0 0.0
        %5427 = vmatprep.subr.mxu0 0.0
        %5428 = vmatpush1.xpose.msra.mxu0 0.0
        %5429 = vmatprep.subr.mxu0 0.0
        %5430 = vmatpush1.xpose.msra.mxu0 0.0
        %5431 = vmatprep.subr.mxu0 0.0
        %5432 = vmatpush1.xpose.msra.mxu0 0.0
        %5433 = vmatprep.subr.mxu0 0.0
        %5434 = vmatpush1.xpose.msra.mxu0 0.0
        %5435 = vmatprep.subr.mxu0 0.0
        %5436 = vmatpush1.xpose.msra.mxu0 0.0
        %5437 = vmatprep.subr.mxu0 0.0
        %5438 = vmatpush1.xpose.msra.mxu0 0.0
        %5439 = vmatprep.subr.mxu0 0.0
        %5440 = vmatpush1.xpose.msra.mxu0 0.0
        %5441 = vmatprep.subr.mxu0 0.0
        %5442 = vmatpush1.xpose.msra.mxu0 0.0
        %5443 = vmatprep.subr.mxu0 0.0
        %5444 = vmatpush1.xpose.msra.mxu0 0.0
        %5445 = vmatprep.subr.mxu0 0.0
        %5446 = vmatpush1.xpose.msra.mxu0 0.0
        %5447 = vmatprep.subr.mxu0 0.0
        %5448 = vmatpush1.xpose.msra.mxu0 0.0
        %5449 = vmatprep.subr.mxu0 0.0
        %5450 = vmatpush1.xpose.msra.mxu0 0.0
        %5451 = vmatprep.subr.mxu0 0.0
        %5452 = vmatpush1.xpose.msra.mxu0 0.0
        %5453 = vmatprep.subr.mxu0 0.0
        %5454 = vmatpush1.xpose.msra.mxu0 0.0
        %5455 = vmatprep.subr.mxu0 0.0
        %5456 = vmatpush1.xpose.msra.mxu0 0.0
        %5457 = vmatprep.subr.mxu0 0.0
        %5458 = vmatpush1.xpose.msra.mxu0 0.0
        %5459 = vmatprep.subr.mxu0 0.0
        %5460 = vmatpush1.xpose.msra.mxu0 0.0
        %5461 = vmatprep.subr.mxu0 0.0
        %5462 = vmatpush1.xpose.msra.mxu0 0.0
        %5463 = vmatprep.mubr.f32.mxu0 0.0
        %5464 = vmatmul.mubr.f32.gmra.mrb[0].mxu0 %v5395
        %v5465 = vpop.f32.mrb[0].mxu0
        %v5466 = vadd.f32 0.0, %v5465
        %v5467 = vpop.f32.mrb[0].mxu0
        %5468 = vdwg.mxu0
        %v5469 = vsel %vm2279, -1e+09, %v5466
        %v5470 = vsel %vm1030, %v5469, -inf
        %5471 = vmax.xlane.f32.xlu0 %v5470
        %v5472 = vpop.xlane.xlu0 %5471
        %v5473 = vsub.f32 %v5469, %v5472
        %v5474 = vmul.f32 %v5473, 1.442695
        %v5475 = vpow.pop %v5474
        %v5476 = vsel %vm1030, %v5475, 0.0
        %5477 = vadd.xlane.f32.xlu0 %v5476
        %v5478 = vpop.xlane.xlu0 %5477
        %v5479 = vrcp.pop %v5478
        %v5480 = vmul.f32 %v5475, %v5479
        %5481 = vrot.lane.b32.xlu0 %v4664, 72
        %v5482 = vpop.permute.xlu0 %5481
        %v5485 = vsel %vm1030, %v5480, 0
        %5487 = vmatprep.subr.mxu0 0.0
        %5488 = vmatpush1.msra.mxu0 %v5482
        %5489 = vmatprep.subr.mxu0 0.0
        %5490 = vmatpush1.msra.mxu0 0.0
        %5491 = vmatprep.subr.mxu0 0.0
        %5492 = vmatpush1.msra.mxu0 0.0
        %5493 = vmatprep.subr.mxu0 0.0
        %5494 = vmatpush1.msra.mxu0 0.0
        %5495 = vmatprep.subr.mxu0 0.0
        %5496 = vmatpush1.msra.mxu0 0.0
        %5497 = vmatprep.subr.mxu0 0.0
        %5498 = vmatpush1.msra.mxu0 0.0
        %5499 = vmatprep.subr.mxu0 0.0
        %5500 = vmatpush1.msra.mxu0 0.0
        %5501 = vmatprep.subr.mxu0 0.0
        %5502 = vmatpush1.msra.mxu0 0.0
        %5503 = vmatprep.subr.mxu0 0.0
        %5504 = vmatpush1.msra.mxu0 0.0
        %5505 = vmatprep.subr.mxu0 0.0
        %5506 = vmatpush1.msra.mxu0 0.0
        %5507 = vmatprep.subr.mxu0 0.0
        %5508 = vmatpush1.msra.mxu0 0.0
        %5509 = vmatprep.subr.mxu0 0.0
        %5510 = vmatpush1.msra.mxu0 0.0
        %5511 = vmatprep.subr.mxu0 0.0
        %5512 = vmatpush1.msra.mxu0 0.0
        %5513 = vmatprep.subr.mxu0 0.0
        %5514 = vmatpush1.msra.mxu0 0.0
        %5515 = vmatprep.subr.mxu0 0.0
        %5516 = vmatpush1.msra.mxu0 0.0
        %5517 = vmatprep.subr.mxu0 0.0
        %5518 = vmatpush1.msra.mxu0 0.0
        %5519 = vmatprep.subr.mxu0 0.0
        %5520 = vmatpush1.msra.mxu0 0.0
        %5521 = vmatprep.subr.mxu0 0.0
        %5522 = vmatpush1.msra.mxu0 0.0
        %5523 = vmatprep.subr.mxu0 0.0
        %5524 = vmatpush1.msra.mxu0 0.0
        %5525 = vmatprep.subr.mxu0 0.0
        %5526 = vmatpush1.msra.mxu0 0.0
        %5527 = vmatprep.subr.mxu0 0.0
        %5528 = vmatpush1.msra.mxu0 0.0
        %5529 = vmatprep.subr.mxu0 0.0
        %5530 = vmatpush1.msra.mxu0 0.0
        %5531 = vmatprep.subr.mxu0 0.0
        %5532 = vmatpush1.msra.mxu0 0.0
        %5533 = vmatprep.subr.mxu0 0.0
        %5534 = vmatpush1.msra.mxu0 0.0
        %5535 = vmatprep.subr.mxu0 0.0
        %5536 = vmatpush1.msra.mxu0 0.0
        %5537 = vmatprep.subr.mxu0 0.0
        %5538 = vmatpush1.msra.mxu0 0.0
        %5539 = vmatprep.subr.mxu0 0.0
        %5540 = vmatpush1.msra.mxu0 0.0
        %5541 = vmatprep.subr.mxu0 0.0
        %5542 = vmatpush1.msra.mxu0 0.0
        %5543 = vmatprep.subr.mxu0 0.0
        %5544 = vmatpush1.msra.mxu0 0.0
        %5545 = vmatprep.subr.mxu0 0.0
        %5546 = vmatpush1.msra.mxu0 0.0
        %5547 = vmatprep.subr.mxu0 0.0
        %5548 = vmatpush1.msra.mxu0 0.0
        %5549 = vmatprep.subr.mxu0 0.0
        %5550 = vmatpush1.msra.mxu0 0.0
        %5551 = vmatprep.mubr.f32.mxu0 0.0
        %5552 = vmatmul.mubr.f32.gmra.mrb[0].mxu0 %v5485
        %v5553 = vpop.f32.mrb[0].mxu0
        %v5554 = vadd.f32 0.0, %v5553
        %v5555 = vpop.f32.mrb[0].mxu0
        %5556 = vdwg.mxu0
        %v5558 = vsel %vm1030, %v5554, 0
        %5560 = vmatprep.subr.mxu0 0.0
        %5561 = vmatpush1.msra.mxu0 %v4671
        %5562 = vmatprep.subr.mxu0 0.0
        %5563 = vmatpush1.msra.mxu0 0.0
        %5564 = vmatprep.subr.mxu0 0.0
        %5565 = vmatpush1.msra.mxu0 0.0
        %5566 = vmatprep.subr.mxu0 0.0
        %5567 = vmatpush1.msra.mxu0 0.0
        %5568 = vmatprep.subr.mxu0 0.0
        %5569 = vmatpush1.msra.mxu0 0.0
        %5570 = vmatprep.subr.mxu0 0.0
        %5571 = vmatpush1.msra.mxu0 0.0
        %5572 = vmatprep.subr.mxu0 0.0
        %5573 = vmatpush1.msra.mxu0 0.0
        %5574 = vmatprep.subr.mxu0 0.0
        %5575 = vmatpush1.msra.mxu0 0.0
        %5576 = vmatprep.subr.mxu0 0.0
        %5577 = vmatpush1.msra.mxu0 0.0
        %5578 = vmatprep.subr.mxu0 0.0
        %5579 = vmatpush1.msra.mxu0 0.0
        %5580 = vmatprep.subr.mxu0 0.0
        %5581 = vmatpush1.msra.mxu0 0.0
        %5582 = vmatprep.subr.mxu0 0.0
        %5583 = vmatpush1.msra.mxu0 0.0
        %5584 = vmatprep.subr.mxu0 0.0
        %5585 = vmatpush1.msra.mxu0 0.0
        %5586 = vmatprep.subr.mxu0 0.0
        %5587 = vmatpush1.msra.mxu0 0.0
        %5588 = vmatprep.subr.mxu0 0.0
        %5589 = vmatpush1.msra.mxu0 0.0
        %5590 = vmatprep.subr.mxu0 0.0
        %5591 = vmatpush1.msra.mxu0 0.0
        %5592 = vmatprep.subr.mxu0 0.0
        %5593 = vmatpush1.msra.mxu0 0.0
        %5594 = vmatprep.subr.mxu0 0.0
        %5595 = vmatpush1.msra.mxu0 0.0
        %5596 = vmatprep.subr.mxu0 0.0
        %5597 = vmatpush1.msra.mxu0 0.0
        %5598 = vmatprep.subr.mxu0 0.0
        %5599 = vmatpush1.msra.mxu0 0.0
        %5600 = vmatprep.subr.mxu0 0.0
        %5601 = vmatpush1.msra.mxu0 0.0
        %5602 = vmatprep.subr.mxu0 0.0
        %5603 = vmatpush1.msra.mxu0 0.0
        %5604 = vmatprep.subr.mxu0 0.0
        %5605 = vmatpush1.msra.mxu0 0.0
        %5606 = vmatprep.subr.mxu0 0.0
        %5607 = vmatpush1.msra.mxu0 0.0
        %5608 = vmatprep.subr.mxu0 0.0
        %5609 = vmatpush1.msra.mxu0 0.0
        %5610 = vmatprep.subr.mxu0 0.0
        %5611 = vmatpush1.msra.mxu0 0.0
        %5612 = vmatprep.subr.mxu0 0.0
        %5613 = vmatpush1.msra.mxu0 0.0
        %5614 = vmatprep.subr.mxu0 0.0
        %5615 = vmatpush1.msra.mxu0 0.0
        %5616 = vmatprep.subr.mxu0 0.0
        %5617 = vmatpush1.msra.mxu0 0.0
        %5618 = vmatprep.subr.mxu0 0.0
        %5619 = vmatpush1.msra.mxu0 0.0
        %5620 = vmatprep.subr.mxu0 0.0
        %5621 = vmatpush1.msra.mxu0 0.0
        %5622 = vmatprep.subr.mxu0 0.0
        %5623 = vmatpush1.msra.mxu0 0.0
        %5624 = vmatprep.mubr.f32.mxu0 0.0
        %5625 = vmatmul.mubr.f32.gmra.mrb[0].mxu0 %v5558
        %v5626 = vpop.f32.mrb[0].mxu0
        %v5627 = vadd.f32 0.0, %v5626
        %v5628 = vpop.f32.mrb[0].mxu0
        %5629 = vdwg.mxu0
        %v5630 = vadd.f32 %v5390, %v5627
        %v5632 = vlaneseq
        %v5633 = vshrl.u32 %v5632, 7
        %v5634 = vsub.s32 0, %v5633
        %v5635 = vrot.slane %v4673, %v5634
        %v5637 = vadd.f32 %v5630, %v5635
        %v5638 = vadd.f32 %v4467, %v5637
        %v5639 = vsel %vm905, %v5638, 0.0
        %5640 = vadd.xlane.f32.xlu0 %v5639
        %v5641 = vpop.xlane.xlu0 %5640
        %v5642 = vmul.f32 %v5641, %v909
        %v5643 = vsub.f32 %v5638, %v5642
        %v5644 = vmul.f32 %v5643, %v5643
        %v5645 = vsel %vm905, %v5644, 0.0
        %5646 = vadd.xlane.f32.xlu0 %v5645
        %v5647 = vpop.xlane.xlu0 %5646
        %v5648 = vmul.f32 %v5647, 0.032258064
        %v5649 = vrsqrt.pop %v5648
        %v5650 = vmul.f32 %v5648, %v5649
        %vm5651 = vcmp.eq.f32.partialorder %v5648, inf
        %v5652 = vsel %vm5651, %v5648, %v5650
        %vm5653 = vcmp.eq.f32.partialorder %v5648, 0.0
        %v5654 = vand.u32 %v5648, 2147483648
        %v5655 = vsel %vm5653, %v5654, %v5652
        %v5656 = vlaneseq
        %v5657 = vshrl.u32 %v5656, 7
        %v5658 = vsub.s32 2, %v5657
        %v5659 = vrot.slane %v3375, %v5658
        %v5660 = vmul.f32 %v5659, %v5643
        %v5661 = vadd.f32 %v5655, 1e-06
        %v5662 = vrcp.pop %v5661
        %v5663 = vmul.f32 %v5660, %v5662
        %v5664 = vlaneseq
        %v5665 = vshrl.u32 %v5664, 7
        %v5666 = vsub.s32 2, %v5665
        %v5667 = vrot.slane %v3377, %v5666
        %v5668 = vadd.f32 %v5663, %v5667
        %s5669 = scalar_lea.vmem [#allocation17], 32
        %v5670 = vld [vmem:[%s5669] sm:$0xff]
        %v5671 = vld [vmem:[%s5669 + $0x8] sm:$0xff]
        %v5672 = vld [vmem:[%s5669 + $0x10] sm:$0xff]
        %v5673 = vld [vmem:[%s5669 + $0x18] sm:$0xff]
        %s5674 = scalar_lea.vmem [#allocation19], 1
        %v5675 = vld [vmem:[%s5674] sm:$0x1]
        %v5677 = vlaneseq
        %v5678 = vshrl.u32 %v5677, 7
        %v5679 = vsub.s32 0, %v5678
        %v5680 = vrot.slane %v5675, %v5679
        %v5683 = vsel %vm905, %v5668, 0
        %5685 = vmatprep.subr.mxu0 0.0
        %5686 = vmatpush1.msra.mxu0 %v5670
        %5687 = vmatprep.subr.mxu0 0.0
        %5688 = vmatpush1.msra.mxu0 %v5671
        %5689 = vmatprep.subr.mxu0 0.0
        %5690 = vmatpush1.msra.mxu0 %v5672
        %5691 = vmatprep.subr.mxu0 0.0
        %5692 = vmatpush1.msra.mxu0 %v5673
        %5693 = vmatprep.subr.mxu0 0.0
        %5694 = vmatpush1.msra.mxu0 0.0
        %5695 = vmatprep.subr.mxu0 0.0
        %5696 = vmatpush1.msra.mxu0 0.0
        %5697 = vmatprep.subr.mxu0 0.0
        %5698 = vmatpush1.msra.mxu0 0.0
        %5699 = vmatprep.subr.mxu0 0.0
        %5700 = vmatpush1.msra.mxu0 0.0
        %5701 = vmatprep.subr.mxu0 0.0
        %5702 = vmatpush1.msra.mxu0 0.0
        %5703 = vmatprep.subr.mxu0 0.0
        %5704 = vmatpush1.msra.mxu0 0.0
        %5705 = vmatprep.subr.mxu0 0.0
        %5706 = vmatpush1.msra.mxu0 0.0
        %5707 = vmatprep.subr.mxu0 0.0
        %5708 = vmatpush1.msra.mxu0 0.0
        %5709 = vmatprep.subr.mxu0 0.0
        %5710 = vmatpush1.msra.mxu0 0.0
        %5711 = vmatprep.subr.mxu0 0.0
        %5712 = vmatpush1.msra.mxu0 0.0
        %5713 = vmatprep.subr.mxu0 0.0
        %5714 = vmatpush1.msra.mxu0 0.0
        %5715 = vmatprep.subr.mxu0 0.0
        %5716 = vmatpush1.msra.mxu0 0.0
        %5717 = vmatprep.subr.mxu0 0.0
        %5718 = vmatpush1.msra.mxu0 0.0
        %5719 = vmatprep.subr.mxu0 0.0
        %5720 = vmatpush1.msra.mxu0 0.0
        %5721 = vmatprep.subr.mxu0 0.0
        %5722 = vmatpush1.msra.mxu0 0.0
        %5723 = vmatprep.subr.mxu0 0.0
        %5724 = vmatpush1.msra.mxu0 0.0
        %5725 = vmatprep.subr.mxu0 0.0
        %5726 = vmatpush1.msra.mxu0 0.0
        %5727 = vmatprep.subr.mxu0 0.0
        %5728 = vmatpush1.msra.mxu0 0.0
        %5729 = vmatprep.subr.mxu0 0.0
        %5730 = vmatpush1.msra.mxu0 0.0
        %5731 = vmatprep.subr.mxu0 0.0
        %5732 = vmatpush1.msra.mxu0 0.0
        %5733 = vmatprep.subr.mxu0 0.0
        %5734 = vmatpush1.msra.mxu0 0.0
        %5735 = vmatprep.subr.mxu0 0.0
        %5736 = vmatpush1.msra.mxu0 0.0
        %5737 = vmatprep.subr.mxu0 0.0
        %5738 = vmatpush1.msra.mxu0 0.0
        %5739 = vmatprep.subr.mxu0 0.0
        %5740 = vmatpush1.msra.mxu0 0.0
        %5741 = vmatprep.subr.mxu0 0.0
        %5742 = vmatpush1.msra.mxu0 0.0
        %5743 = vmatprep.subr.mxu0 0.0
        %5744 = vmatpush1.msra.mxu0 0.0
        %5745 = vmatprep.subr.mxu0 0.0
        %5746 = vmatpush1.msra.mxu0 0.0
        %5747 = vmatprep.subr.mxu0 0.0
        %5748 = vmatpush1.msra.mxu0 0.0
        %5749 = vmatprep.mubr.f32.mxu0 0.0
        %5750 = vmatmul.mubr.f32.gmra.mrb[0].mxu0 %v5683
        %v5751 = vpop.f32.mrb[0].mxu0
        %v5752 = vadd.f32 %v5680, %v5751
        %v5753 = vpop.f32.mrb[0].mxu0
        %5754 = vdwg.mxu0
        %v5755 = vmax.f32 %v5752, 0.0
        %s5756 = scalar_lea.vmem %s18, 64
        %v5757 = vld [vmem:[%s5756] sm:$0xff]
        %v5758 = vld [vmem:[%s5756 + $0x8] sm:$0xff]
        %v5759 = vld [vmem:[%s5756 + $0x10] sm:$0xff]
        %v5760 = vld [vmem:[%s5756 + $0x18] sm:$0xff]
        %v5761 = vld [vmem:[%s5756 + $0x20] sm:$0xff]
        %v5762 = vld [vmem:[%s5756 + $0x28] sm:$0xff]
        %v5763 = vld [vmem:[%s5756 + $0x30] sm:$0xff]
        %v5764 = vld [vmem:[%s5756 + $0x38] sm:$0xff]
        %v5766 = vsel %vm3291, %v5755, 0
        %5768 = vmatprep.subr.mxu0 0.0
        %5769 = vmatpush1.msra.mxu0 %v5757
        %5770 = vmatprep.subr.mxu0 0.0
        %5771 = vmatpush1.msra.mxu0 %v5758
        %5772 = vmatprep.subr.mxu0 0.0
        %5773 = vmatpush1.msra.mxu0 %v5759
        %5774 = vmatprep.subr.mxu0 0.0
        %5775 = vmatpush1.msra.mxu0 %v5760
        %5776 = vmatprep.subr.mxu0 0.0
        %5777 = vmatpush1.msra.mxu0 %v5761
        %5778 = vmatprep.subr.mxu0 0.0
        %5779 = vmatpush1.msra.mxu0 %v5762
        %5780 = vmatprep.subr.mxu0 0.0
        %5781 = vmatpush1.msra.mxu0 %v5763
        %5782 = vmatprep.subr.mxu0 0.0
        %5783 = vmatpush1.msra.mxu0 %v5764
        %5784 = vmatprep.subr.mxu0 0.0
        %5785 = vmatpush1.msra.mxu0 0.0
        %5786 = vmatprep.subr.mxu0 0.0
        %5787 = vmatpush1.msra.mxu0 0.0
        %5788 = vmatprep.subr.mxu0 0.0
        %5789 = vmatpush1.msra.mxu0 0.0
        %5790 = vmatprep.subr.mxu0 0.0
        %5791 = vmatpush1.msra.mxu0 0.0
        %5792 = vmatprep.subr.mxu0 0.0
        %5793 = vmatpush1.msra.mxu0 0.0
        %5794 = vmatprep.subr.mxu0 0.0
        %5795 = vmatpush1.msra.mxu0 0.0
        %5796 = vmatprep.subr.mxu0 0.0
        %5797 = vmatpush1.msra.mxu0 0.0
        %5798 = vmatprep.subr.mxu0 0.0
        %5799 = vmatpush1.msra.mxu0 0.0
        %5800 = vmatprep.subr.mxu0 0.0
        %5801 = vmatpush1.msra.mxu0 0.0
        %5802 = vmatprep.subr.mxu0 0.0
        %5803 = vmatpush1.msra.mxu0 0.0
        %5804 = vmatprep.subr.mxu0 0.0
        %5805 = vmatpush1.msra.mxu0 0.0
        %5806 = vmatprep.subr.mxu0 0.0
        %5807 = vmatpush1.msra.mxu0 0.0
        %5808 = vmatprep.subr.mxu0 0.0
        %5809 = vmatpush1.msra.mxu0 0.0
        %5810 = vmatprep.subr.mxu0 0.0
        %5811 = vmatpush1.msra.mxu0 0.0
        %5812 = vmatprep.subr.mxu0 0.0
        %5813 = vmatpush1.msra.mxu0 0.0
        %5814 = vmatprep.subr.mxu0 0.0
        %5815 = vmatpush1.msra.mxu0 0.0
        %5816 = vmatprep.subr.mxu0 0.0
        %5817 = vmatpush1.msra.mxu0 0.0
        %5818 = vmatprep.subr.mxu0 0.0
        %5819 = vmatpush1.msra.mxu0 0.0
        %5820 = vmatprep.subr.mxu0 0.0
        %5821 = vmatpush1.msra.mxu0 0.0
        %5822 = vmatprep.subr.mxu0 0.0
        %5823 = vmatpush1.msra.mxu0 0.0
        %5824 = vmatprep.subr.mxu0 0.0
        %5825 = vmatpush1.msra.mxu0 0.0
        %5826 = vmatprep.subr.mxu0 0.0
        %5827 = vmatpush1.msra.mxu0 0.0
        %5828 = vmatprep.subr.mxu0 0.0
        %5829 = vmatpush1.msra.mxu0 0.0
        %5830 = vmatprep.subr.mxu0 0.0
        %5831 = vmatpush1.msra.mxu0 0.0
        %5832 = vmatprep.mubr.f32.mxu0 0.0
        %5833 = vmatmul.mubr.f32.gmra.mrb[0].mxu0 %v5766
        %v5834 = vpop.f32.mrb[0].mxu0
        %v5835 = vadd.f32 0.0, %v5834
        %v5836 = vpop.f32.mrb[0].mxu0
        %5837 = vdwg.mxu0
        %v5838 = vadd.f32 %v5638, %v5835
        %s5839 = scalar_lea.vmem %s19, 1
        %v5840 = vld [vmem:[%s5839] sm:$0x1]
        %v5842 = vlaneseq
        %v5843 = vshrl.u32 %v5842, 7
        %v5844 = vsub.s32 0, %v5843
        %v5845 = vrot.slane %v5840, %v5844
        %v5847 = vadd.f32 %v5838, %v5845
        %v5848 = vld [vmem:[%s20] sm:$0x1]
        %v5849 = vld [vmem:[%s21] sm:$0x1]
        %v5850 = vsel %vm905, %v5847, 0.0
        %5851 = vadd.xlane.f32.xlu0 %v5850
        %v5852 = vpop.xlane.xlu0 %5851
        %v5853 = vmul.f32 %v5852, %v909
        %v5854 = vsub.f32 %v5847, %v5853
        %v5855 = vmul.f32 %v5854, %v5854
        %v5856 = vsel %vm905, %v5855, 0.0
        %5857 = vadd.xlane.f32.xlu0 %v5856
        %v5858 = vpop.xlane.xlu0 %5857
        %v5859 = vmul.f32 %v5858, 0.032258064
        %v5860 = vrsqrt.pop %v5859
        %v5861 = vmul.f32 %v5859, %v5860
        %vm5862 = vcmp.eq.f32.partialorder %v5859, inf
        %v5863 = vsel %vm5862, %v5859, %v5861
        %vm5864 = vcmp.eq.f32.partialorder %v5859, 0.0
        %v5865 = vand.u32 %v5859, 2147483648
        %v5866 = vsel %vm5864, %v5865, %v5863
        %v5868 = vlaneseq
        %v5869 = vshrl.u32 %v5868, 7
        %v5870 = vsub.s32 0, %v5869
        %v5871 = vrot.slane %v5848, %v5870
        %v5873 = vmul.f32 %v5871, %v5854
        %v5874 = vadd.f32 %v5866, 1e-06
        %v5875 = vrcp.pop %v5874
        %v5876 = vmul.f32 %v5873, %v5875
        %v5878 = vlaneseq
        %v5879 = vshrl.u32 %v5878, 7
        %v5880 = vsub.s32 0, %v5879
        %v5881 = vrot.slane %v5849, %v5880
        %v5883 = vadd.f32 %v5876, %v5881
        %5884 = vst.msk [vmem:[%s888] sm:$0xff] %vm905, %v5883
        %s5885 = sand.u32 %s536, 1
        %s5886 = scalar_lea.sflag [#allocation4], %s5885
        %s5887 = sand.u32 %s536, 1
        %s5888 = smul.addr %s5887, 8
        %s5889 = scalar_lea.vmem [#allocation20], %s5888
        // Predicated region
        $region153: #{tpu_custom_call.1} parent=107 // pred_check
          %p5890 = pneg %p546
        $region154: #{tpu_custom_call.1} parent=107 // pred_check_branch
          %5892 = sbr.rel (%p5890) target = $region156
        $region155: #{tpu_custom_call.1} parent=107 // pred_region
          %s5894 = ssub.s32 128, 128
          %5895 = vsyncadd %s5886, %s5894
          %s5896 = smul.addr %s46, 128
          %s5897 = scalar_lea.hbm %s22, %s5896
          %s5899 = sshll.u32 %s5889, 4
          %s5900 = int_to_ptr.vmem [resolvable:$true] %s5899
          %5902 = dma.vmem_to_hbm [thread:$0]  %s5900, 128, %s5897, %s5886
        $region156: #{tpu_custom_call.1} parent=107 // pred_fallthru
          _
      $region108: #{tpu_custom_call.1} parent=5 // pred_fallthru
        _
      %p5903 = scmp.le.s32.totalorder 2, %s41
      // Predicated region
      $region157: #{tpu_custom_call.1} parent=5 // pred_check
        %p5904 = pneg %p5903
      $region158: #{tpu_custom_call.1} parent=5 // pred_check_branch
        %5906 = sbr.rel (%p5904) target = $region160
      $region159: #{tpu_custom_call.1} parent=5 // pred_region
        %s5907 = ssub.s32 %s41, 2
        // Predicated region
        $region161: #{tpu_custom_call.1} parent=159 // pred_check
          %p5908 = pneg %p552
        $region162: #{tpu_custom_call.1} parent=159 // pred_check_branch
          %5910 = sbr.rel (%p5908) target = $region164
        $region163: #{tpu_custom_call.1} parent=159 // pred_region
          %s5911 = sand.u32 %s537, 1
          %s5912 = scalar_lea.sflag [#allocation4], %s5911
          %s5913 = sand.u32 %s537, 1
          %s5914 = smul.addr %s5913, 8
          %s5915 = scalar_lea.vmem [#allocation20], %s5914
          %5916 = dma.done %s5912, 128
        $region164: #{tpu_custom_call.1} parent=159 // pred_fallthru
          _
      $region160: #{tpu_custom_call.1} parent=5 // pred_fallthru
        _
    $region6: #{tpu_custom_call.1} parent=1 // loop_footer
      %s45 = sadd.s32 1, %s41
    $region7: #{tpu_custom_call.1} parent=1 // loop_footer_branch
      %40 = sbr.rel target = $region3
    $region8: #{tpu_custom_call.1} parent=1 // loop_exit
      _
    %5917 = vsyncpa [#allocation3], 1
    %s5918 = scalar_lea.sflag [#allocation3], 1
    %5919 = vsyncpa %s5918, 1
    %5920 = vsyncpa [#allocation6], 1
    %s5921 = scalar_lea.sflag [#allocation6], 1
    %5922 = vsyncpa %s5921, 1
    %5923 = vsyncpa [#allocation9], 1
    %5924 = vsyncpa [#allocation12], 1
    %5925 = vsyncpa [#allocation15], 1
    %5926 = vsyncpa [#allocation18], 1
    %5927 = vsyncpa [#allocation4], 1
    %s5928 = scalar_lea.sflag [#allocation4], 1
    %5929 = vsyncpa %s5928, 1

</llo_original>
